<compile_context>
chip_gen: v7x
topology: tpu7x:2x2x1
jax: 0.10.0
libtpu: 0.0.40
codegen_flags: <defaults>
</compile_context>

<pallas_src>
import numpy as np
import jax
import jax.numpy as jnp
from jax.experimental import pallas as pl
from jax.experimental.pallas import tpu as pltpu


# (20, 26) 0/1 selection matrix: row (kx*5 + ox) picks column (4*ox + 2*kx).
# It applies pool1's stride-2 downsample AND conv2's stride-2 im2col column
# selection in one tiny matmul (the row downsample uses a leading-axis reshape).
_SELW = np.zeros((20, 26), np.float32)
for _kx in range(4):
    for _ox in range(5):
        _SELW[_kx * 5 + _ox, 4 * _ox + 2 * _kx] = 1.0


# ----------------------------- the fused kernel -----------------------------
def _cnn_kernel(x_ref, w1_ref, b1_ref, selw_ref, w2k_ref, b2_ref,
                fc1_ref, bfc1_ref, fc2_ref, bfc2_ref, fc3_ref, bfc3_ref,
                out_ref):
    f32 = jnp.float32
    x = x_ref[...]                                   # (bn, 28, 28, 1) NHWC
    bn = x.shape[0]

    # ---- conv1 (1->8, k=2, s=1) + ReLU: 4 broadcast FMAs on the VPU ----
    w1 = w1_ref[...]                                 # (4, 8)  rows = (ky, kx) tap
    y = None
    t = 0
    for ky in range(2):
        for kx in range(2):
            tap = x[:, ky:ky + 27, kx:kx + 27, :]    # (bn, 27, 27, 1)
            term = tap * w1[t:t + 1, :]              # (bn, 27, 27, 8)
            y = term if y is None else y + term
            t += 1
    y = jnp.maximum(y + b1_ref[...], 0.0)            # (bn, 27, 27, 8)

    # ---- pool1 window max (2x2); its stride-2 downsample is fused into conv2 ----
    m = jnp.maximum(jnp.maximum(y[:, 0:26, 0:26, :], y[:, 0:26, 1:27, :]),
                    jnp.maximum(y[:, 1:27, 0:26, :], y[:, 1:27, 1:27, :]))  # (bn,26,26,8)
    # pool1[b,i,j,c]                 == m[b, 2i, 2j, c]
    # conv2 patch (oy,ox,ky,kx,c)    == pool1[b, 2oy+ky, 2ox+kx, c]
    #                                == m[b, 4oy+2ky, 4ox+2kx, c]

    # ---- conv2 (8->14, k=4, s=2) + ReLU ----
    g = bn * 5                                        # fold (batch, oy) into one batch axis
    selw = jnp.broadcast_to(selw_ref[...], (g, 20, 26))
    w2k = w2k_ref[...]                                # (4, 32, 14): [ky, kx*8+c, d]
    acc = None
    for ky in range(4):
        rows = m[:, 2 * ky:2 * ky + 20, :, :]                    # rows 2ky .. 2ky+19
        rows = rows.reshape(bn, 5, 4, 26, 8)[:, :, 0]            # rows 4*oy + 2*ky -> (bn,5,26,8)
        rows = rows.reshape(g, 26, 8)                            # (g, 26, 8)
        s = jnp.einsum('gvw,gwc->gvc', selw, rows,
                       preferred_element_type=f32)               # (g, 20, 8), v = (kx, ox)
        cat = jnp.concatenate(
            [s[:, kx * 5:kx * 5 + 5, :] for kx in range(4)],
            axis=-1)                                             # (g, 5, 32), lanes = (kx, c)
        wk = jnp.broadcast_to(w2k[ky], (g, 32, 14))
        part = jnp.einsum('gxf,gfd->gxd', cat, wk,
                          preferred_element_type=f32)            # (g, 5, 14)
        acc = part if acc is None else acc + part
    acc = jnp.maximum(acc + b2_ref[...], 0.0)                    # (g, 5, 14)
    co = acc.reshape(bn, 5, 5, 14)                               # (bn, oy, ox, d)

    # ---- pool2: MaxPool2d(2, stride=1) ----
    hm = jnp.maximum(co[:, 0:4], co[:, 1:5])                     # (bn, 4, 5, 14)
    p2 = jnp.maximum(hm[:, :, 0:4, :], hm[:, :, 1:5, :])         # (bn, 4, 4, 14)

    # ---- flatten (h, w, c) + fc1/fc2/fc3 + log_softmax ----
    zf = jnp.concatenate(
        [p2[:, i, j:j + 1, :] for i in range(4) for j in range(4)],
        axis=-1)                                                 # (bn, 1, 224)
    h = jnp.einsum('bxk,bkd->bxd', zf,
                   jnp.broadcast_to(fc1_ref[...], (bn, 224, 120)),
                   preferred_element_type=f32) + bfc1_ref[...]
    h = jnp.maximum(h, 0.0)
    h = jnp.einsum('bxk,bkd->bxd', h,
                   jnp.broadcast_to(fc2_ref[...], (bn, 120, 84)),
                   preferred_element_type=f32) + bfc2_ref[...]
    h = jnp.maximum(h, 0.0)
    logits = jnp.einsum('bxk,bkd->bxd', h,
                        jnp.broadcast_to(fc3_ref[...], (bn, 84, 10)),
                        preferred_element_type=f32) + bfc3_ref[...]   # (bn, 1, 10)
    zmax = jnp.max(logits, axis=-1, keepdims=True)
    zc = logits - zmax
    lse = jnp.log(jnp.sum(jnp.exp(zc), axis=-1, keepdims=True))
    out_ref[...] = zc - lse                                      # log_softmax over classes


# ----------------------------- wrapper -----------------------------
def _const_spec(a):
    nd = a.ndim
    return pl.BlockSpec(a.shape, lambda i, _nd=nd: (0,) * _nd)


@jax.jit
def cnn_forward(params, x):
    N = x.shape[0]
    bn = min(N, 4)                       # batch tile per grid step
    n_blocks = -(-N // bn)
    n_pad = n_blocks * bn

    # NCHW (C=1) -> NHWC is a pure reshape (no transpose needed).
    x4 = x.reshape(N, 28, 28, 1)
    if n_pad != N:
        x4 = jnp.pad(x4, ((0, n_pad - N), (0, 0), (0, 0), (0, 0)))

    # ---- one-time (tiny) weight layout prep so the kernel sees GEMM-ready layouts ----
    w1r = params["conv1_w"].reshape(8, 4).T                                    # (4, 8)
    b1r = params["conv1_b"].reshape(1, 8)
    w2k = params["conv2_w"].transpose(2, 3, 1, 0).reshape(4, 32, 14)           # [ky, kx*8+c, d]
    b2r = params["conv2_b"].reshape(1, 14)
    fc1r = params["fc1_w"].reshape(120, 14, 4, 4).transpose(0, 2, 3, 1).reshape(120, 224).T
    bfc1 = params["fc1_b"].reshape(1, 120)
    fc2r = params["fc2_w"].T
    bfc2 = params["fc2_b"].reshape(1, 84)
    fc3r = params["fc3_w"].T
    bfc3 = params["fc3_b"].reshape(1, 10)
    selw = jnp.asarray(_SELW)

    consts = (w1r, b1r, selw, w2k, b2r, fc1r, bfc1, fc2r, bfc2, fc3r, bfc3)
    out = pl.pallas_call(
        _cnn_kernel,
        out_shape=jax.ShapeDtypeStruct((n_pad, 1, 10), jnp.float32),
        grid=(n_blocks,),
        in_specs=[pl.BlockSpec((bn, 28, 28, 1), lambda i: (i, 0, 0, 0))]
                 + [_const_spec(c) for c in consts],
        out_specs=pl.BlockSpec((bn, 1, 10), lambda i: (i, 0, 0)),
        compiler_params=pltpu.CompilerParams(
            dimension_semantics=("parallel",),
            vmem_limit_bytes=48 * 1024 * 1024),
    )(x4, *consts)
    return out.reshape(n_pad, 10)[:N]


# ----------------------------- params & pure-JAX reference -----------------------------
def init_params(key):
    ks = jax.random.split(key, 10)

    def u(k, shape, fan_in):
        bound = 1.0 / jnp.sqrt(jnp.float32(fan_in))
        return jax.random.uniform(k, shape, jnp.float32, -bound, bound)

    return dict(
        conv1_w=u(ks[0], (8, 1, 2, 2), 1 * 2 * 2),
        conv1_b=u(ks[1], (8,), 1 * 2 * 2),
        conv2_w=u(ks[2], (14, 8, 4, 4), 8 * 4 * 4),
        conv2_b=u(ks[3], (14,), 8 * 4 * 4),
        fc1_w=u(ks[4], (120, 14 * 4 * 4), 14 * 4 * 4),
        fc1_b=u(ks[5], (120,), 14 * 4 * 4),
        fc2_w=u(ks[6], (84, 120), 120),
        fc2_b=u(ks[7], (84,), 120),
        fc3_w=u(ks[8], (10, 84), 84),
        fc3_b=u(ks[9], (10,), 84),
    )


def _ref_forward(params, x):
    # plain-JAX reference with the exact PyTorch semantics (no Pallas).
    N = x.shape[0]

    def im2col(a, k, s):
        n, c, hh, ww = a.shape
        oh = (hh - k) // s + 1
        ow = (ww - k) // s + 1
        cols = [a[:, :, ky:ky + s * oh:s, kx:kx + s * ow:s]
                for ky in range(k) for kx in range(k)]
        p = jnp.stack(cols, axis=2)
        p = p.transpose(0, 3, 4, 1, 2).reshape(n * oh * ow, c * k * k)
        return p, oh, ow

    def maxpool(a, k, s):
        n, c, hh, ww = a.shape
        oh = (hh - k) // s + 1
        ow = (ww - k) // s + 1
        vals = [a[:, :, dy:dy + s * oh:s, dx:dx + s * ow:s]
                for dy in range(k) for dx in range(k)]
        out = vals[0]
        for v in vals[1:]:
            out = jnp.maximum(out, v)
        return out

    p, oh, ow = im2col(x, 2, 1)
    y = jnp.maximum(p @ params["conv1_w"].reshape(8, -1).T + params["conv1_b"], 0.0)
    y = y.reshape(N, oh, ow, 8).transpose(0, 3, 1, 2)
    y = maxpool(y, 2, 2)
    p, oh, ow = im2col(y, 4, 2)
    y = jnp.maximum(p @ params["conv2_w"].reshape(14, -1).T + params["conv2_b"], 0.0)
    y = y.reshape(N, oh, ow, 14).transpose(0, 3, 1, 2)
    y = maxpool(y, 2, 1)
    y = y.reshape(N, 14 * 4 * 4)
    y = jnp.maximum(y @ params["fc1_w"].T + params["fc1_b"], 0.0)
    y = jnp.maximum(y @ params["fc2_w"].T + params["fc2_b"], 0.0)
    logits = y @ params["fc3_w"].T + params["fc3_b"]
    return jax.nn.log_softmax(logits, axis=1)


if __name__ == "__main__":
    key = jax.random.PRNGKey(0)
    pkey, xkey = jax.random.split(key)
    params = init_params(pkey)
    # fc1 expects 14*4*4 features => input spatial size must be 28x28 (MNIST-like), NCHW.
    x = jax.random.normal(xkey, (2, 1, 28, 28), jnp.float32)

    out = jax.block_until_ready(cnn_forward(params, x))
    ref = jax.block_until_ready(_ref_forward(params, x))

    assert out.shape == (2, 10)
    assert bool(jnp.all(jnp.isfinite(out)))
    # rows of log_softmax should sum to 1 in probability space
    assert bool(jnp.allclose(jnp.sum(jnp.exp(out), axis=1), 1.0, atol=1e-5))
    # fused Pallas kernel matches the plain-JAX reference of the PyTorch module
    assert bool(jnp.allclose(out, ref, atol=1e-3, rtol=1e-3))
    print("KERNEL_OK")
</pallas_src>

<mosaic_0001>
module attributes {stable_mosaic.version = 11 : i64} {
  func.func @_cnn_kernel(%arg0: i32, %arg1: memref<2x28x28x1xf32, #tpu.memory_space<vmem>>, %arg2: memref<4x8xf32, #tpu.memory_space<vmem>>, %arg3: memref<1x8xf32, #tpu.memory_space<vmem>>, %arg4: memref<20x26xf32, #tpu.memory_space<vmem>>, %arg5: memref<4x32x14xf32, #tpu.memory_space<vmem>>, %arg6: memref<1x14xf32, #tpu.memory_space<vmem>>, %arg7: memref<224x120xf32, #tpu.memory_space<vmem>>, %arg8: memref<1x120xf32, #tpu.memory_space<vmem>>, %arg9: memref<120x84xf32, #tpu.memory_space<vmem>>, %arg10: memref<1x84xf32, #tpu.memory_space<vmem>>, %arg11: memref<84x10xf32, #tpu.memory_space<vmem>>, %arg12: memref<1x10xf32, #tpu.memory_space<vmem>>, %arg13: memref<2x1x10xf32, #tpu.memory_space<vmem>>) attributes {dimension_semantics = [#tpu.dimension_semantics<parallel>], iteration_bounds = array<i64: 1>, scalar_prefetch = 0 : i64, scratch_operands = 0 : i64, tpu.core_type = #tpu.core_type<tc>, window_params = [{transform_indices = @transform_0, window_bounds = array<i64: 2, 28, 28, 1>}, {pipeline_mode = #tpu.pipeline_mode<synchronous>, transform_indices = @transform_1, window_bounds = array<i64: 4, 8>}, {pipeline_mode = #tpu.pipeline_mode<synchronous>, transform_indices = @transform_2, window_bounds = array<i64: 1, 8>}, {pipeline_mode = #tpu.pipeline_mode<synchronous>, transform_indices = @transform_3, window_bounds = array<i64: 20, 26>}, {pipeline_mode = #tpu.pipeline_mode<synchronous>, transform_indices = @transform_4, window_bounds = array<i64: 4, 32, 14>}, {pipeline_mode = #tpu.pipeline_mode<synchronous>, transform_indices = @transform_5, window_bounds = array<i64: 1, 14>}, {pipeline_mode = #tpu.pipeline_mode<synchronous>, transform_indices = @transform_6, window_bounds = array<i64: 224, 120>}, {pipeline_mode = #tpu.pipeline_mode<synchronous>, transform_indices = @transform_7, window_bounds = array<i64: 1, 120>}, {pipeline_mode = #tpu.pipeline_mode<synchronous>, transform_indices = @transform_8, window_bounds = array<i64: 120, 84>}, {pipeline_mode = #tpu.pipeline_mode<synchronous>, transform_indices = @transform_9, window_bounds = array<i64: 1, 84>}, {pipeline_mode = #tpu.pipeline_mode<synchronous>, transform_indices = @transform_10, window_bounds = array<i64: 84, 10>}, {pipeline_mode = #tpu.pipeline_mode<synchronous>, transform_indices = @transform_11, window_bounds = array<i64: 1, 10>}, {transform_indices = @transform_12, window_bounds = array<i64: 2, 1, 10>}]} {
    %c0 = arith.constant 0 : index
    %c0_0 = arith.constant 0 : index
    %c0_1 = arith.constant 0 : index
    %c0_2 = arith.constant 0 : index
    %0 = vector.load %arg1[%c0, %c0_0, %c0_1, %c0_2] : memref<2x28x28x1xf32, #tpu.memory_space<vmem>>, vector<2x28x28x1xf32>
    %c0_3 = arith.constant 0 : index
    %c0_4 = arith.constant 0 : index
    %1 = vector.load %arg2[%c0_3, %c0_4] : memref<4x8xf32, #tpu.memory_space<vmem>>, vector<4x8xf32>
    %2 = vector.extract_strided_slice %0 {offsets = [0, 0, 0, 0], sizes = [2, 27, 27, 1], strides = [1, 1, 1, 1]} : vector<2x28x28x1xf32> to vector<2x27x27x1xf32>
    %3 = vector.extract_strided_slice %1 {offsets = [0, 0], sizes = [1, 8], strides = [1, 1]} : vector<4x8xf32> to vector<1x8xf32>
    %4 = vector.shape_cast %3 : vector<1x8xf32> to vector<1x1x1x8xf32>
    %5 = vector.broadcast %2 : vector<2x27x27x1xf32> to vector<2x27x27x8xf32>
    %6 = vector.broadcast %4 : vector<1x1x1x8xf32> to vector<2x27x27x8xf32>
    %7 = arith.mulf %5, %6 : vector<2x27x27x8xf32>
    %8 = vector.extract_strided_slice %0 {offsets = [0, 0, 1, 0], sizes = [2, 27, 27, 1], strides = [1, 1, 1, 1]} : vector<2x28x28x1xf32> to vector<2x27x27x1xf32>
    %9 = vector.extract_strided_slice %1 {offsets = [1, 0], sizes = [1, 8], strides = [1, 1]} : vector<4x8xf32> to vector<1x8xf32>
    %10 = vector.shape_cast %9 : vector<1x8xf32> to vector<1x1x1x8xf32>
    %11 = vector.broadcast %8 : vector<2x27x27x1xf32> to vector<2x27x27x8xf32>
    %12 = vector.broadcast %10 : vector<1x1x1x8xf32> to vector<2x27x27x8xf32>
    %13 = arith.mulf %11, %12 : vector<2x27x27x8xf32>
    %14 = arith.addf %7, %13 : vector<2x27x27x8xf32>
    %15 = vector.extract_strided_slice %0 {offsets = [0, 1, 0, 0], sizes = [2, 27, 27, 1], strides = [1, 1, 1, 1]} : vector<2x28x28x1xf32> to vector<2x27x27x1xf32>
    %16 = vector.extract_strided_slice %1 {offsets = [2, 0], sizes = [1, 8], strides = [1, 1]} : vector<4x8xf32> to vector<1x8xf32>
    %17 = vector.shape_cast %16 : vector<1x8xf32> to vector<1x1x1x8xf32>
    %18 = vector.broadcast %15 : vector<2x27x27x1xf32> to vector<2x27x27x8xf32>
    %19 = vector.broadcast %17 : vector<1x1x1x8xf32> to vector<2x27x27x8xf32>
    %20 = arith.mulf %18, %19 : vector<2x27x27x8xf32>
    %21 = arith.addf %14, %20 : vector<2x27x27x8xf32>
    %22 = vector.extract_strided_slice %0 {offsets = [0, 1, 1, 0], sizes = [2, 27, 27, 1], strides = [1, 1, 1, 1]} : vector<2x28x28x1xf32> to vector<2x27x27x1xf32>
    %23 = vector.extract_strided_slice %1 {offsets = [3, 0], sizes = [1, 8], strides = [1, 1]} : vector<4x8xf32> to vector<1x8xf32>
    %24 = vector.shape_cast %23 : vector<1x8xf32> to vector<1x1x1x8xf32>
    %25 = vector.broadcast %22 : vector<2x27x27x1xf32> to vector<2x27x27x8xf32>
    %26 = vector.broadcast %24 : vector<1x1x1x8xf32> to vector<2x27x27x8xf32>
    %27 = arith.mulf %25, %26 : vector<2x27x27x8xf32>
    %28 = arith.addf %21, %27 : vector<2x27x27x8xf32>
    %c0_5 = arith.constant 0 : index
    %c0_6 = arith.constant 0 : index
    %29 = vector.load %arg3[%c0_5, %c0_6] : memref<1x8xf32, #tpu.memory_space<vmem>>, vector<1x8xf32>
    %30 = vector.shape_cast %29 : vector<1x8xf32> to vector<1x1x1x8xf32>
    %31 = vector.broadcast %30 : vector<1x1x1x8xf32> to vector<2x27x27x8xf32>
    %32 = arith.addf %28, %31 : vector<2x27x27x8xf32>
    %cst = arith.constant 0.000000e+00 : f32
    %33 = vector.broadcast %cst : f32 to vector<2x27x27x8xf32>
    %34 = arith.maximumf %32, %33 : vector<2x27x27x8xf32>
    %35 = vector.extract_strided_slice %34 {offsets = [0, 0, 0, 0], sizes = [2, 26, 26, 8], strides = [1, 1, 1, 1]} : vector<2x27x27x8xf32> to vector<2x26x26x8xf32>
    %36 = vector.extract_strided_slice %34 {offsets = [0, 0, 1, 0], sizes = [2, 26, 26, 8], strides = [1, 1, 1, 1]} : vector<2x27x27x8xf32> to vector<2x26x26x8xf32>
    %37 = arith.maximumf %35, %36 : vector<2x26x26x8xf32>
    %38 = vector.extract_strided_slice %34 {offsets = [0, 1, 0, 0], sizes = [2, 26, 26, 8], strides = [1, 1, 1, 1]} : vector<2x27x27x8xf32> to vector<2x26x26x8xf32>
    %39 = vector.extract_strided_slice %34 {offsets = [0, 1, 1, 0], sizes = [2, 26, 26, 8], strides = [1, 1, 1, 1]} : vector<2x27x27x8xf32> to vector<2x26x26x8xf32>
    %40 = arith.maximumf %38, %39 : vector<2x26x26x8xf32>
    %41 = arith.maximumf %37, %40 : vector<2x26x26x8xf32>
    %c0_7 = arith.constant 0 : index
    %c0_8 = arith.constant 0 : index
    %42 = vector.load %arg4[%c0_7, %c0_8] : memref<20x26xf32, #tpu.memory_space<vmem>>, vector<20x26xf32>
    %43 = vector.shape_cast %42 : vector<20x26xf32> to vector<1x20x26xf32>
    %44 = vector.broadcast %43 : vector<1x20x26xf32> to vector<10x20x26xf32>
    %c0_9 = arith.constant 0 : index
    %c0_10 = arith.constant 0 : index
    %c0_11 = arith.constant 0 : index
    %45 = vector.load %arg5[%c0_9, %c0_10, %c0_11] : memref<4x32x14xf32, #tpu.memory_space<vmem>>, vector<4x32x14xf32>
    %46 = vector.extract_strided_slice %41 {offsets = [0, 0, 0, 0], sizes = [2, 20, 26, 8], strides = [1, 1, 1, 1]} : vector<2x26x26x8xf32> to vector<2x20x26x8xf32>
    %47 = vector.shape_cast %46 : vector<2x20x26x8xf32> to vector<2x5x4x26x8xf32>
    %48 = vector.extract_strided_slice %47 {offsets = [0, 0, 0, 0, 0], sizes = [2, 5, 1, 26, 8], strides = [1, 1, 1, 1, 1]} : vector<2x5x4x26x8xf32> to vector<2x5x1x26x8xf32>
    %49 = vector.shape_cast %48 : vector<2x5x1x26x8xf32> to vector<2x5x26x8xf32>
    %50 = vector.shape_cast %49 : vector<2x5x26x8xf32> to vector<10x26x8xf32>
    "tpu.trace_start"() <{level = 10 : i32, message = "gvw,gwc->gvc"}> : () -> ()
    %cst_12 = arith.constant dense<0.000000e+00> : vector<10x20x8xf32>
    %51 = tpu.matmul %44, %50, %cst_12 {dimension_numbers = #tpu.dot_dimension_numbers<[2], [1], [1], [2], [0, 0, 0, 1, 1, 2], [0], [0]>} : vector<10x20x26xf32>, vector<10x26x8xf32>, vector<10x20x8xf32> -> vector<10x20x8xf32>
    "tpu.trace_stop"() : () -> ()
    %52 = vector.extract_strided_slice %51 {offsets = [0, 0, 0], sizes = [10, 5, 8], strides = [1, 1, 1]} : vector<10x20x8xf32> to vector<10x5x8xf32>
    %53 = vector.extract_strided_slice %51 {offsets = [0, 5, 0], sizes = [10, 5, 8], strides = [1, 1, 1]} : vector<10x20x8xf32> to vector<10x5x8xf32>
    %54 = vector.extract_strided_slice %51 {offsets = [0, 10, 0], sizes = [10, 5, 8], strides = [1, 1, 1]} : vector<10x20x8xf32> to vector<10x5x8xf32>
    %55 = vector.extract_strided_slice %51 {offsets = [0, 15, 0], sizes = [10, 5, 8], strides = [1, 1, 1]} : vector<10x20x8xf32> to vector<10x5x8xf32>
    %56 = tpu.concatenate %52, %53, %54, %55 in 2 : vector<10x5x8xf32>, vector<10x5x8xf32>, vector<10x5x8xf32>, vector<10x5x8xf32> -> vector<10x5x32xf32>
    %57 = vector.extract_strided_slice %45 {offsets = [0, 0, 0], sizes = [1, 32, 14], strides = [1, 1, 1]} : vector<4x32x14xf32> to vector<1x32x14xf32>
    %58 = vector.shape_cast %57 : vector<1x32x14xf32> to vector<32x14xf32>
    %59 = vector.shape_cast %58 : vector<32x14xf32> to vector<1x32x14xf32>
    %60 = vector.broadcast %59 : vector<1x32x14xf32> to vector<10x32x14xf32>
    "tpu.trace_start"() <{level = 10 : i32, message = "gxf,gfd->gxd"}> : () -> ()
    %cst_13 = arith.constant dense<0.000000e+00> : vector<10x5x14xf32>
    %61 = tpu.matmul %56, %60, %cst_13 {dimension_numbers = #tpu.dot_dimension_numbers<[2], [1], [1], [2], [0, 0, 0, 1, 1, 2], [0], [0]>} : vector<10x5x32xf32>, vector<10x32x14xf32>, vector<10x5x14xf32> -> vector<10x5x14xf32>
    "tpu.trace_stop"() : () -> ()
    %62 = vector.extract_strided_slice %41 {offsets = [0, 2, 0, 0], sizes = [2, 20, 26, 8], strides = [1, 1, 1, 1]} : vector<2x26x26x8xf32> to vector<2x20x26x8xf32>
    %63 = vector.shape_cast %62 : vector<2x20x26x8xf32> to vector<2x5x4x26x8xf32>
    %64 = vector.extract_strided_slice %63 {offsets = [0, 0, 0, 0, 0], sizes = [2, 5, 1, 26, 8], strides = [1, 1, 1, 1, 1]} : vector<2x5x4x26x8xf32> to vector<2x5x1x26x8xf32>
    %65 = vector.shape_cast %64 : vector<2x5x1x26x8xf32> to vector<2x5x26x8xf32>
    %66 = vector.shape_cast %65 : vector<2x5x26x8xf32> to vector<10x26x8xf32>
    "tpu.trace_start"() <{level = 10 : i32, message = "gvw,gwc->gvc"}> : () -> ()
    %cst_14 = arith.constant dense<0.000000e+00> : vector<10x20x8xf32>
    %67 = tpu.matmul %44, %66, %cst_14 {dimension_numbers = #tpu.dot_dimension_numbers<[2], [1], [1], [2], [0, 0, 0, 1, 1, 2], [0], [0]>} : vector<10x20x26xf32>, vector<10x26x8xf32>, vector<10x20x8xf32> -> vector<10x20x8xf32>
    "tpu.trace_stop"() : () -> ()
    %68 = vector.extract_strided_slice %67 {offsets = [0, 0, 0], sizes = [10, 5, 8], strides = [1, 1, 1]} : vector<10x20x8xf32> to vector<10x5x8xf32>
    %69 = vector.extract_strided_slice %67 {offsets = [0, 5, 0], sizes = [10, 5, 8], strides = [1, 1, 1]} : vector<10x20x8xf32> to vector<10x5x8xf32>
    %70 = vector.extract_strided_slice %67 {offsets = [0, 10, 0], sizes = [10, 5, 8], strides = [1, 1, 1]} : vector<10x20x8xf32> to vector<10x5x8xf32>
    %71 = vector.extract_strided_slice %67 {offsets = [0, 15, 0], sizes = [10, 5, 8], strides = [1, 1, 1]} : vector<10x20x8xf32> to vector<10x5x8xf32>
    %72 = tpu.concatenate %68, %69, %70, %71 in 2 : vector<10x5x8xf32>, vector<10x5x8xf32>, vector<10x5x8xf32>, vector<10x5x8xf32> -> vector<10x5x32xf32>
    %73 = vector.extract_strided_slice %45 {offsets = [1, 0, 0], sizes = [1, 32, 14], strides = [1, 1, 1]} : vector<4x32x14xf32> to vector<1x32x14xf32>
    %74 = vector.shape_cast %73 : vector<1x32x14xf32> to vector<32x14xf32>
    %75 = vector.shape_cast %74 : vector<32x14xf32> to vector<1x32x14xf32>
    %76 = vector.broadcast %75 : vector<1x32x14xf32> to vector<10x32x14xf32>
    "tpu.trace_start"() <{level = 10 : i32, message = "gxf,gfd->gxd"}> : () -> ()
    %cst_15 = arith.constant dense<0.000000e+00> : vector<10x5x14xf32>
    %77 = tpu.matmul %72, %76, %cst_15 {dimension_numbers = #tpu.dot_dimension_numbers<[2], [1], [1], [2], [0, 0, 0, 1, 1, 2], [0], [0]>} : vector<10x5x32xf32>, vector<10x32x14xf32>, vector<10x5x14xf32> -> vector<10x5x14xf32>
    "tpu.trace_stop"() : () -> ()
    %78 = arith.addf %61, %77 : vector<10x5x14xf32>
    %79 = vector.extract_strided_slice %41 {offsets = [0, 4, 0, 0], sizes = [2, 20, 26, 8], strides = [1, 1, 1, 1]} : vector<2x26x26x8xf32> to vector<2x20x26x8xf32>
    %80 = vector.shape_cast %79 : vector<2x20x26x8xf32> to vector<2x5x4x26x8xf32>
    %81 = vector.extract_strided_slice %80 {offsets = [0, 0, 0, 0, 0], sizes = [2, 5, 1, 26, 8], strides = [1, 1, 1, 1, 1]} : vector<2x5x4x26x8xf32> to vector<2x5x1x26x8xf32>
    %82 = vector.shape_cast %81 : vector<2x5x1x26x8xf32> to vector<2x5x26x8xf32>
    %83 = vector.shape_cast %82 : vector<2x5x26x8xf32> to vector<10x26x8xf32>
    "tpu.trace_start"() <{level = 10 : i32, message = "gvw,gwc->gvc"}> : () -> ()
    %cst_16 = arith.constant dense<0.000000e+00> : vector<10x20x8xf32>
    %84 = tpu.matmul %44, %83, %cst_16 {dimension_numbers = #tpu.dot_dimension_numbers<[2], [1], [1], [2], [0, 0, 0, 1, 1, 2], [0], [0]>} : vector<10x20x26xf32>, vector<10x26x8xf32>, vector<10x20x8xf32> -> vector<10x20x8xf32>
    "tpu.trace_stop"() : () -> ()
    %85 = vector.extract_strided_slice %84 {offsets = [0, 0, 0], sizes = [10, 5, 8], strides = [1, 1, 1]} : vector<10x20x8xf32> to vector<10x5x8xf32>
    %86 = vector.extract_strided_slice %84 {offsets = [0, 5, 0], sizes = [10, 5, 8], strides = [1, 1, 1]} : vector<10x20x8xf32> to vector<10x5x8xf32>
    %87 = vector.extract_strided_slice %84 {offsets = [0, 10, 0], sizes = [10, 5, 8], strides = [1, 1, 1]} : vector<10x20x8xf32> to vector<10x5x8xf32>
    %88 = vector.extract_strided_slice %84 {offsets = [0, 15, 0], sizes = [10, 5, 8], strides = [1, 1, 1]} : vector<10x20x8xf32> to vector<10x5x8xf32>
    %89 = tpu.concatenate %85, %86, %87, %88 in 2 : vector<10x5x8xf32>, vector<10x5x8xf32>, vector<10x5x8xf32>, vector<10x5x8xf32> -> vector<10x5x32xf32>
    %90 = vector.extract_strided_slice %45 {offsets = [2, 0, 0], sizes = [1, 32, 14], strides = [1, 1, 1]} : vector<4x32x14xf32> to vector<1x32x14xf32>
    %91 = vector.shape_cast %90 : vector<1x32x14xf32> to vector<32x14xf32>
    %92 = vector.shape_cast %91 : vector<32x14xf32> to vector<1x32x14xf32>
    %93 = vector.broadcast %92 : vector<1x32x14xf32> to vector<10x32x14xf32>
    "tpu.trace_start"() <{level = 10 : i32, message = "gxf,gfd->gxd"}> : () -> ()
    %cst_17 = arith.constant dense<0.000000e+00> : vector<10x5x14xf32>
    %94 = tpu.matmul %89, %93, %cst_17 {dimension_numbers = #tpu.dot_dimension_numbers<[2], [1], [1], [2], [0, 0, 0, 1, 1, 2], [0], [0]>} : vector<10x5x32xf32>, vector<10x32x14xf32>, vector<10x5x14xf32> -> vector<10x5x14xf32>
    "tpu.trace_stop"() : () -> ()
    %95 = arith.addf %78, %94 : vector<10x5x14xf32>
    %96 = vector.extract_strided_slice %41 {offsets = [0, 6, 0, 0], sizes = [2, 20, 26, 8], strides = [1, 1, 1, 1]} : vector<2x26x26x8xf32> to vector<2x20x26x8xf32>
    %97 = vector.shape_cast %96 : vector<2x20x26x8xf32> to vector<2x5x4x26x8xf32>
    %98 = vector.extract_strided_slice %97 {offsets = [0, 0, 0, 0, 0], sizes = [2, 5, 1, 26, 8], strides = [1, 1, 1, 1, 1]} : vector<2x5x4x26x8xf32> to vector<2x5x1x26x8xf32>
    %99 = vector.shape_cast %98 : vector<2x5x1x26x8xf32> to vector<2x5x26x8xf32>
    %100 = vector.shape_cast %99 : vector<2x5x26x8xf32> to vector<10x26x8xf32>
    "tpu.trace_start"() <{level = 10 : i32, message = "gvw,gwc->gvc"}> : () -> ()
    %cst_18 = arith.constant dense<0.000000e+00> : vector<10x20x8xf32>
    %101 = tpu.matmul %44, %100, %cst_18 {dimension_numbers = #tpu.dot_dimension_numbers<[2], [1], [1], [2], [0, 0, 0, 1, 1, 2], [0], [0]>} : vector<10x20x26xf32>, vector<10x26x8xf32>, vector<10x20x8xf32> -> vector<10x20x8xf32>
    "tpu.trace_stop"() : () -> ()
    %102 = vector.extract_strided_slice %101 {offsets = [0, 0, 0], sizes = [10, 5, 8], strides = [1, 1, 1]} : vector<10x20x8xf32> to vector<10x5x8xf32>
    %103 = vector.extract_strided_slice %101 {offsets = [0, 5, 0], sizes = [10, 5, 8], strides = [1, 1, 1]} : vector<10x20x8xf32> to vector<10x5x8xf32>
    %104 = vector.extract_strided_slice %101 {offsets = [0, 10, 0], sizes = [10, 5, 8], strides = [1, 1, 1]} : vector<10x20x8xf32> to vector<10x5x8xf32>
    %105 = vector.extract_strided_slice %101 {offsets = [0, 15, 0], sizes = [10, 5, 8], strides = [1, 1, 1]} : vector<10x20x8xf32> to vector<10x5x8xf32>
    %106 = tpu.concatenate %102, %103, %104, %105 in 2 : vector<10x5x8xf32>, vector<10x5x8xf32>, vector<10x5x8xf32>, vector<10x5x8xf32> -> vector<10x5x32xf32>
    %107 = vector.extract_strided_slice %45 {offsets = [3, 0, 0], sizes = [1, 32, 14], strides = [1, 1, 1]} : vector<4x32x14xf32> to vector<1x32x14xf32>
    %108 = vector.shape_cast %107 : vector<1x32x14xf32> to vector<32x14xf32>
    %109 = vector.shape_cast %108 : vector<32x14xf32> to vector<1x32x14xf32>
    %110 = vector.broadcast %109 : vector<1x32x14xf32> to vector<10x32x14xf32>
    "tpu.trace_start"() <{level = 10 : i32, message = "gxf,gfd->gxd"}> : () -> ()
    %cst_19 = arith.constant dense<0.000000e+00> : vector<10x5x14xf32>
    %111 = tpu.matmul %106, %110, %cst_19 {dimension_numbers = #tpu.dot_dimension_numbers<[2], [1], [1], [2], [0, 0, 0, 1, 1, 2], [0], [0]>} : vector<10x5x32xf32>, vector<10x32x14xf32>, vector<10x5x14xf32> -> vector<10x5x14xf32>
    "tpu.trace_stop"() : () -> ()
    %112 = arith.addf %95, %111 : vector<10x5x14xf32>
    %c0_20 = arith.constant 0 : index
    %c0_21 = arith.constant 0 : index
    %113 = vector.load %arg6[%c0_20, %c0_21] : memref<1x14xf32, #tpu.memory_space<vmem>>, vector<1x14xf32>
    %114 = vector.shape_cast %113 : vector<1x14xf32> to vector<1x1x14xf32>
    %115 = vector.broadcast %114 : vector<1x1x14xf32> to vector<10x5x14xf32>
    %116 = arith.addf %112, %115 : vector<10x5x14xf32>
    %cst_22 = arith.constant 0.000000e+00 : f32
    %117 = vector.broadcast %cst_22 : f32 to vector<10x5x14xf32>
    %118 = arith.maximumf %116, %117 : vector<10x5x14xf32>
    %119 = vector.shape_cast %118 : vector<10x5x14xf32> to vector<2x5x5x14xf32>
    %120 = vector.extract_strided_slice %119 {offsets = [0, 0, 0, 0], sizes = [2, 4, 5, 14], strides = [1, 1, 1, 1]} : vector<2x5x5x14xf32> to vector<2x4x5x14xf32>
    %121 = vector.extract_strided_slice %119 {offsets = [0, 1, 0, 0], sizes = [2, 4, 5, 14], strides = [1, 1, 1, 1]} : vector<2x5x5x14xf32> to vector<2x4x5x14xf32>
    %122 = arith.maximumf %120, %121 : vector<2x4x5x14xf32>
    %123 = vector.extract_strided_slice %122 {offsets = [0, 0, 0, 0], sizes = [2, 4, 4, 14], strides = [1, 1, 1, 1]} : vector<2x4x5x14xf32> to vector<2x4x4x14xf32>
    %124 = vector.extract_strided_slice %122 {offsets = [0, 0, 1, 0], sizes = [2, 4, 4, 14], strides = [1, 1, 1, 1]} : vector<2x4x5x14xf32> to vector<2x4x4x14xf32>
    %125 = arith.maximumf %123, %124 : vector<2x4x4x14xf32>
    %126 = vector.extract_strided_slice %125 {offsets = [0, 0, 0, 0], sizes = [2, 1, 1, 14], strides = [1, 1, 1, 1]} : vector<2x4x4x14xf32> to vector<2x1x1x14xf32>
    %127 = vector.shape_cast %126 : vector<2x1x1x14xf32> to vector<2x1x14xf32>
    %128 = vector.extract_strided_slice %125 {offsets = [0, 0, 1, 0], sizes = [2, 1, 1, 14], strides = [1, 1, 1, 1]} : vector<2x4x4x14xf32> to vector<2x1x1x14xf32>
    %129 = vector.shape_cast %128 : vector<2x1x1x14xf32> to vector<2x1x14xf32>
    %130 = vector.extract_strided_slice %125 {offsets = [0, 0, 2, 0], sizes = [2, 1, 1, 14], strides = [1, 1, 1, 1]} : vector<2x4x4x14xf32> to vector<2x1x1x14xf32>
    %131 = vector.shape_cast %130 : vector<2x1x1x14xf32> to vector<2x1x14xf32>
    %132 = vector.extract_strided_slice %125 {offsets = [0, 0, 3, 0], sizes = [2, 1, 1, 14], strides = [1, 1, 1, 1]} : vector<2x4x4x14xf32> to vector<2x1x1x14xf32>
    %133 = vector.shape_cast %132 : vector<2x1x1x14xf32> to vector<2x1x14xf32>
    %134 = vector.extract_strided_slice %125 {offsets = [0, 1, 0, 0], sizes = [2, 1, 1, 14], strides = [1, 1, 1, 1]} : vector<2x4x4x14xf32> to vector<2x1x1x14xf32>
    %135 = vector.shape_cast %134 : vector<2x1x1x14xf32> to vector<2x1x14xf32>
    %136 = vector.extract_strided_slice %125 {offsets = [0, 1, 1, 0], sizes = [2, 1, 1, 14], strides = [1, 1, 1, 1]} : vector<2x4x4x14xf32> to vector<2x1x1x14xf32>
    %137 = vector.shape_cast %136 : vector<2x1x1x14xf32> to vector<2x1x14xf32>
    %138 = vector.extract_strided_slice %125 {offsets = [0, 1, 2, 0], sizes = [2, 1, 1, 14], strides = [1, 1, 1, 1]} : vector<2x4x4x14xf32> to vector<2x1x1x14xf32>
    %139 = vector.shape_cast %138 : vector<2x1x1x14xf32> to vector<2x1x14xf32>
    %140 = vector.extract_strided_slice %125 {offsets = [0, 1, 3, 0], sizes = [2, 1, 1, 14], strides = [1, 1, 1, 1]} : vector<2x4x4x14xf32> to vector<2x1x1x14xf32>
    %141 = vector.shape_cast %140 : vector<2x1x1x14xf32> to vector<2x1x14xf32>
    %142 = vector.extract_strided_slice %125 {offsets = [0, 2, 0, 0], sizes = [2, 1, 1, 14], strides = [1, 1, 1, 1]} : vector<2x4x4x14xf32> to vector<2x1x1x14xf32>
    %143 = vector.shape_cast %142 : vector<2x1x1x14xf32> to vector<2x1x14xf32>
    %144 = vector.extract_strided_slice %125 {offsets = [0, 2, 1, 0], sizes = [2, 1, 1, 14], strides = [1, 1, 1, 1]} : vector<2x4x4x14xf32> to vector<2x1x1x14xf32>
    %145 = vector.shape_cast %144 : vector<2x1x1x14xf32> to vector<2x1x14xf32>
    %146 = vector.extract_strided_slice %125 {offsets = [0, 2, 2, 0], sizes = [2, 1, 1, 14], strides = [1, 1, 1, 1]} : vector<2x4x4x14xf32> to vector<2x1x1x14xf32>
    %147 = vector.shape_cast %146 : vector<2x1x1x14xf32> to vector<2x1x14xf32>
    %148 = vector.extract_strided_slice %125 {offsets = [0, 2, 3, 0], sizes = [2, 1, 1, 14], strides = [1, 1, 1, 1]} : vector<2x4x4x14xf32> to vector<2x1x1x14xf32>
    %149 = vector.shape_cast %148 : vector<2x1x1x14xf32> to vector<2x1x14xf32>
    %150 = vector.extract_strided_slice %125 {offsets = [0, 3, 0, 0], sizes = [2, 1, 1, 14], strides = [1, 1, 1, 1]} : vector<2x4x4x14xf32> to vector<2x1x1x14xf32>
    %151 = vector.shape_cast %150 : vector<2x1x1x14xf32> to vector<2x1x14xf32>
    %152 = vector.extract_strided_slice %125 {offsets = [0, 3, 1, 0], sizes = [2, 1, 1, 14], strides = [1, 1, 1, 1]} : vector<2x4x4x14xf32> to vector<2x1x1x14xf32>
    %153 = vector.shape_cast %152 : vector<2x1x1x14xf32> to vector<2x1x14xf32>
    %154 = vector.extract_strided_slice %125 {offsets = [0, 3, 2, 0], sizes = [2, 1, 1, 14], strides = [1, 1, 1, 1]} : vector<2x4x4x14xf32> to vector<2x1x1x14xf32>
    %155 = vector.shape_cast %154 : vector<2x1x1x14xf32> to vector<2x1x14xf32>
    %156 = vector.extract_strided_slice %125 {offsets = [0, 3, 3, 0], sizes = [2, 1, 1, 14], strides = [1, 1, 1, 1]} : vector<2x4x4x14xf32> to vector<2x1x1x14xf32>
    %157 = vector.shape_cast %156 : vector<2x1x1x14xf32> to vector<2x1x14xf32>
    %158 = tpu.concatenate %127, %129, %131, %133, %135, %137, %139, %141, %143, %145, %147, %149, %151, %153, %155, %157 in 2 : vector<2x1x14xf32>, vector<2x1x14xf32>, vector<2x1x14xf32>, vector<2x1x14xf32>, vector<2x1x14xf32>, vector<2x1x14xf32>, vector<2x1x14xf32>, vector<2x1x14xf32>, vector<2x1x14xf32>, vector<2x1x14xf32>, vector<2x1x14xf32>, vector<2x1x14xf32>, vector<2x1x14xf32>, vector<2x1x14xf32>, vector<2x1x14xf32>, vector<2x1x14xf32> -> vector<2x1x224xf32>
    %c0_23 = arith.constant 0 : index
    %c0_24 = arith.constant 0 : index
    %159 = vector.load %arg7[%c0_23, %c0_24] : memref<224x120xf32, #tpu.memory_space<vmem>>, vector<224x120xf32>
    %160 = vector.shape_cast %159 : vector<224x120xf32> to vector<1x224x120xf32>
    %161 = vector.broadcast %160 : vector<1x224x120xf32> to vector<2x224x120xf32>
    "tpu.trace_start"() <{level = 10 : i32, message = "bxk,bkd->bxd"}> : () -> ()
    %cst_25 = arith.constant dense<0.000000e+00> : vector<2x1x120xf32>
    %162 = tpu.matmul %158, %161, %cst_25 {dimension_numbers = #tpu.dot_dimension_numbers<[2], [1], [1], [2], [0, 0, 0, 1, 1, 2], [0], [0]>} : vector<2x1x224xf32>, vector<2x224x120xf32>, vector<2x1x120xf32> -> vector<2x1x120xf32>
    "tpu.trace_stop"() : () -> ()
    %c0_26 = arith.constant 0 : index
    %c0_27 = arith.constant 0 : index
    %163 = vector.load %arg8[%c0_26, %c0_27] : memref<1x120xf32, #tpu.memory_space<vmem>>, vector<1x120xf32>
    %164 = vector.shape_cast %163 : vector<1x120xf32> to vector<1x1x120xf32>
    %165 = vector.broadcast %164 : vector<1x1x120xf32> to vector<2x1x120xf32>
    %166 = arith.addf %162, %165 : vector<2x1x120xf32>
    %cst_28 = arith.constant 0.000000e+00 : f32
    %167 = vector.broadcast %cst_28 : f32 to vector<2x1x120xf32>
    %168 = arith.maximumf %166, %167 : vector<2x1x120xf32>
    %c0_29 = arith.constant 0 : index
    %c0_30 = arith.constant 0 : index
    %169 = vector.load %arg9[%c0_29, %c0_30] : memref<120x84xf32, #tpu.memory_space<vmem>>, vector<120x84xf32>
    %170 = vector.shape_cast %169 : vector<120x84xf32> to vector<1x120x84xf32>
    %171 = vector.broadcast %170 : vector<1x120x84xf32> to vector<2x120x84xf32>
    "tpu.trace_start"() <{level = 10 : i32, message = "bxk,bkd->bxd"}> : () -> ()
    %cst_31 = arith.constant dense<0.000000e+00> : vector<2x1x84xf32>
    %172 = tpu.matmul %168, %171, %cst_31 {dimension_numbers = #tpu.dot_dimension_numbers<[2], [1], [1], [2], [0, 0, 0, 1, 1, 2], [0], [0]>} : vector<2x1x120xf32>, vector<2x120x84xf32>, vector<2x1x84xf32> -> vector<2x1x84xf32>
    "tpu.trace_stop"() : () -> ()
    %c0_32 = arith.constant 0 : index
    %c0_33 = arith.constant 0 : index
    %173 = vector.load %arg10[%c0_32, %c0_33] : memref<1x84xf32, #tpu.memory_space<vmem>>, vector<1x84xf32>
    %174 = vector.shape_cast %173 : vector<1x84xf32> to vector<1x1x84xf32>
    %175 = vector.broadcast %174 : vector<1x1x84xf32> to vector<2x1x84xf32>
    %176 = arith.addf %172, %175 : vector<2x1x84xf32>
    %cst_34 = arith.constant 0.000000e+00 : f32
    %177 = vector.broadcast %cst_34 : f32 to vector<2x1x84xf32>
    %178 = arith.maximumf %176, %177 : vector<2x1x84xf32>
    %c0_35 = arith.constant 0 : index
    %c0_36 = arith.constant 0 : index
    %179 = vector.load %arg11[%c0_35, %c0_36] : memref<84x10xf32, #tpu.memory_space<vmem>>, vector<84x10xf32>
    %180 = vector.shape_cast %179 : vector<84x10xf32> to vector<1x84x10xf32>
    %181 = vector.broadcast %180 : vector<1x84x10xf32> to vector<2x84x10xf32>
    "tpu.trace_start"() <{level = 10 : i32, message = "bxk,bkd->bxd"}> : () -> ()
    %cst_37 = arith.constant dense<0.000000e+00> : vector<2x1x10xf32>
    %182 = tpu.matmul %178, %181, %cst_37 {dimension_numbers = #tpu.dot_dimension_numbers<[2], [1], [1], [2], [0, 0, 0, 1, 1, 2], [0], [0]>} : vector<2x1x84xf32>, vector<2x84x10xf32>, vector<2x1x10xf32> -> vector<2x1x10xf32>
    "tpu.trace_stop"() : () -> ()
    %c0_38 = arith.constant 0 : index
    %c0_39 = arith.constant 0 : index
    %183 = vector.load %arg12[%c0_38, %c0_39] : memref<1x10xf32, #tpu.memory_space<vmem>>, vector<1x10xf32>
    %184 = vector.shape_cast %183 : vector<1x10xf32> to vector<1x1x10xf32>
    %185 = vector.broadcast %184 : vector<1x1x10xf32> to vector<2x1x10xf32>
    %186 = arith.addf %182, %185 : vector<2x1x10xf32>
    %cst_40 = arith.constant dense<0xFF800000> : vector<2x1xf32>
    %187 = vector.multi_reduction <maximumf>, %186, %cst_40 [2] : vector<2x1x10xf32> to vector<2x1xf32>
    %188 = vector.shape_cast %187 : vector<2x1xf32> to vector<2x1x1xf32>
    %189 = vector.broadcast %188 : vector<2x1x1xf32> to vector<2x1x10xf32>
    %190 = arith.subf %186, %189 : vector<2x1x10xf32>
    %191 = math.exp %190 : vector<2x1x10xf32>
    %cst_41 = arith.constant dense<0.000000e+00> : vector<2x1xf32>
    %192 = vector.multi_reduction <add>, %191, %cst_41 [2] : vector<2x1x10xf32> to vector<2x1xf32>
    %193 = vector.shape_cast %192 : vector<2x1xf32> to vector<2x1x1xf32>
    %194 = math.log %193 : vector<2x1x1xf32>
    %195 = vector.broadcast %194 : vector<2x1x1xf32> to vector<2x1x10xf32>
    %196 = arith.subf %190, %195 : vector<2x1x10xf32>
    %c0_42 = arith.constant 0 : index
    %c0_43 = arith.constant 0 : index
    %c0_44 = arith.constant 0 : index
    %197 = vector.load %arg13[%c0_42, %c0_43, %c0_44] : memref<2x1x10xf32, #tpu.memory_space<vmem>>, vector<2x1x10xf32>
    tpu.vector_store %arg13[%c0_42, %c0_43, %c0_44], %196 {strides = array<i32>} : memref<2x1x10xf32, #tpu.memory_space<vmem>>, vector<2x1x10xf32>,
    return
  }
  func.func @transform_0(%arg0: i32) -> (i32, i32, i32, i32) {
    %c0_i32 = arith.constant 0 : i32
    %c0_i32_0 = arith.constant 0 : i32
    %c0_i32_1 = arith.constant 0 : i32
    %c0_i32_2 = arith.constant 0 : i32
    return %arg0, %c0_i32, %c0_i32_0, %c0_i32_1 : i32, i32, i32, i32
  }
  func.func @transform_1(%arg0: i32) -> (i32, i32) {
    %c0_i32 = arith.constant 0 : i32
    %c0_i32_0 = arith.constant 0 : i32
    %c0_i32_1 = arith.constant 0 : i32
    return %c0_i32, %c0_i32_0 : i32, i32
  }
  func.func @transform_2(%arg0: i32) -> (i32, i32) {
    %c0_i32 = arith.constant 0 : i32
    %c0_i32_0 = arith.constant 0 : i32
    %c0_i32_1 = arith.constant 0 : i32
    return %c0_i32, %c0_i32_0 : i32, i32
  }
  func.func @transform_3(%arg0: i32) -> (i32, i32) {
    %c0_i32 = arith.constant 0 : i32
    %c0_i32_0 = arith.constant 0 : i32
    %c0_i32_1 = arith.constant 0 : i32
    return %c0_i32, %c0_i32_0 : i32, i32
  }
  func.func @transform_4(%arg0: i32) -> (i32, i32, i32) {
    %c0_i32 = arith.constant 0 : i32
    %c0_i32_0 = arith.constant 0 : i32
    %c0_i32_1 = arith.constant 0 : i32
    %c0_i32_2 = arith.constant 0 : i32
    return %c0_i32, %c0_i32_0, %c0_i32_1 : i32, i32, i32
  }
  func.func @transform_5(%arg0: i32) -> (i32, i32) {
    %c0_i32 = arith.constant 0 : i32
    %c0_i32_0 = arith.constant 0 : i32
    %c0_i32_1 = arith.constant 0 : i32
    return %c0_i32, %c0_i32_0 : i32, i32
  }
  func.func @transform_6(%arg0: i32) -> (i32, i32) {
    %c0_i32 = arith.constant 0 : i32
    %c0_i32_0 = arith.constant 0 : i32
    %c0_i32_1 = arith.constant 0 : i32
    return %c0_i32, %c0_i32_0 : i32, i32
  }
  func.func @transform_7(%arg0: i32) -> (i32, i32) {
    %c0_i32 = arith.constant 0 : i32
    %c0_i32_0 = arith.constant 0 : i32
    %c0_i32_1 = arith.constant 0 : i32
    return %c0_i32, %c0_i32_0 : i32, i32
  }
  func.func @transform_8(%arg0: i32) -> (i32, i32) {
    %c0_i32 = arith.constant 0 : i32
    %c0_i32_0 = arith.constant 0 : i32
    %c0_i32_1 = arith.constant 0 : i32
    return %c0_i32, %c0_i32_0 : i32, i32
  }
  func.func @transform_9(%arg0: i32) -> (i32, i32) {
    %c0_i32 = arith.constant 0 : i32
    %c0_i32_0 = arith.constant 0 : i32
    %c0_i32_1 = arith.constant 0 : i32
    return %c0_i32, %c0_i32_0 : i32, i32
  }
  func.func @transform_10(%arg0: i32) -> (i32, i32) {
    %c0_i32 = arith.constant 0 : i32
    %c0_i32_0 = arith.constant 0 : i32
    %c0_i32_1 = arith.constant 0 : i32
    return %c0_i32, %c0_i32_0 : i32, i32
  }
  func.func @transform_11(%arg0: i32) -> (i32, i32) {
    %c0_i32 = arith.constant 0 : i32
    %c0_i32_0 = arith.constant 0 : i32
    %c0_i32_1 = arith.constant 0 : i32
    return %c0_i32, %c0_i32_0 : i32, i32
  }
  func.func @transform_12(%arg0: i32) -> (i32, i32, i32) {
    %c0_i32 = arith.constant 0 : i32
    %c0_i32_0 = arith.constant 0 : i32
    %c0_i32_1 = arith.constant 0 : i32
    return %arg0, %c0_i32, %c0_i32_0 : i32, i32, i32
  }
}

</mosaic_0001>

<llo_original>
// kernel: cnn_forward.1
$region0: #{cnn_forward.1}
  #allocation0 [shape = 'u32[]', space=smem, size = 0x4, offset = 0x4, fixed_abs, tag = 'smem constant byte address 0x4 - core index']
  #allocation1 [shape = 'u32[144,128]{1,0:T(1,128)}', space=vmem, size = 0x12000, scoped, tag = 'internal scratch']
  %s0 = inlined_call_operand.vmem [shape: f32[2,28,28,1], index: 0, kind: input, shape index: {}]
  %s1 = inlined_call_operand.vmem [shape: f32[4,8], index: 1, kind: input, shape index: {}]
  %s2 = inlined_call_operand.vmem [shape: f32[1,8], index: 2, kind: input, shape index: {}]
  %s3 = inlined_call_operand.vmem [shape: f32[20,26], index: 3, kind: input, shape index: {}]
  %s4 = inlined_call_operand.vmem [shape: f32[4,32,14], index: 4, kind: input, shape index: {}]
  %s5 = inlined_call_operand.vmem [shape: f32[1,14], index: 5, kind: input, shape index: {}]
  %s6 = inlined_call_operand.vmem [shape: f32[224,120], index: 6, kind: input, shape index: {}]
  %s7 = inlined_call_operand.vmem [shape: f32[1,120], index: 7, kind: input, shape index: {}]
  %s8 = inlined_call_operand.vmem [shape: f32[120,84], index: 8, kind: input, shape index: {}]
  %s9 = inlined_call_operand.vmem [shape: f32[1,84], index: 9, kind: input, shape index: {}]
  %s10 = inlined_call_operand.vmem [shape: f32[84,10], index: 10, kind: input, shape index: {}]
  %s11 = inlined_call_operand.vmem [shape: f32[1,10], index: 11, kind: input, shape index: {}]
  %s12 = inlined_call_operand.hbm [shape: f32[2,1,10], index: 12, kind: output, shape index: {}]
  %s13 = sld [smem:[#allocation0]]
  $region58: #{cnn_forward.1} parent=0
    _
  %s15 = ssub.s32 1, %s13
  %s16 = scalar_select 0, %s15, %s13
  $region1: #{cnn_forward.1} parent=0
    #allocation2 [shape = 'u8[1024]{0}', space=vmem, size = 0x400, scoped, tag = 'output window, operand 0, single buffered']
    #allocation3 [shape = 's32[1]{0}', space=sflag, size = 0x4, scoped, tag = 'scoped memory for cnn_forward.1']
    %17 = vsyncpa [#allocation3], 0
    // Predicated region
    $region2: #{cnn_forward.1} parent=1 // pred_check
      _
    $region3: #{cnn_forward.1} parent=1 // pred_check_branch
      %19 = sbr.rel (0) target = $region5
    $region4: #{cnn_forward.1} parent=1 // pred_region
      _
    $region5: #{cnn_forward.1} parent=1 // pred_fallthru
      _
    // Predicated region
    $region6: #{cnn_forward.1} parent=1 // pred_check
      _
    $region7: #{cnn_forward.1} parent=1 // pred_check_branch
      %21 = sbr.rel (0) target = $region9
    $region8: #{cnn_forward.1} parent=1 // pred_region
      _
    $region9: #{cnn_forward.1} parent=1 // pred_fallthru
      _
    // Predicated region
    $region10: #{cnn_forward.1} parent=1 // pred_check
      _
    $region11: #{cnn_forward.1} parent=1 // pred_check_branch
      %23 = sbr.rel (0) target = $region13
    $region12: #{cnn_forward.1} parent=1 // pred_region
      _
    $region13: #{cnn_forward.1} parent=1 // pred_fallthru
      _
    // Predicated region
    $region14: #{cnn_forward.1} parent=1 // pred_check
      _
    $region15: #{cnn_forward.1} parent=1 // pred_check_branch
      %25 = sbr.rel (0) target = $region17
    $region16: #{cnn_forward.1} parent=1 // pred_region
      _
    $region17: #{cnn_forward.1} parent=1 // pred_fallthru
      _
    // Predicated region
    $region18: #{cnn_forward.1} parent=1 // pred_check
      _
    $region19: #{cnn_forward.1} parent=1 // pred_check_branch
      %27 = sbr.rel (0) target = $region21
    $region20: #{cnn_forward.1} parent=1 // pred_region
      _
    $region21: #{cnn_forward.1} parent=1 // pred_fallthru
      _
    // Predicated region
    $region22: #{cnn_forward.1} parent=1 // pred_check
      _
    $region23: #{cnn_forward.1} parent=1 // pred_check_branch
      %29 = sbr.rel (0) target = $region25
    $region24: #{cnn_forward.1} parent=1 // pred_region
      _
    $region25: #{cnn_forward.1} parent=1 // pred_fallthru
      _
    // Predicated region
    $region26: #{cnn_forward.1} parent=1 // pred_check
      _
    $region27: #{cnn_forward.1} parent=1 // pred_check_branch
      %31 = sbr.rel (0) target = $region29
    $region28: #{cnn_forward.1} parent=1 // pred_region
      _
    $region29: #{cnn_forward.1} parent=1 // pred_fallthru
      _
    // Predicated region
    $region30: #{cnn_forward.1} parent=1 // pred_check
      _
    $region31: #{cnn_forward.1} parent=1 // pred_check_branch
      %33 = sbr.rel (0) target = $region33
    $region32: #{cnn_forward.1} parent=1 // pred_region
      _
    $region33: #{cnn_forward.1} parent=1 // pred_fallthru
      _
    // Predicated region
    $region34: #{cnn_forward.1} parent=1 // pred_check
      _
    $region35: #{cnn_forward.1} parent=1 // pred_check_branch
      %35 = sbr.rel (0) target = $region37
    $region36: #{cnn_forward.1} parent=1 // pred_region
      _
    $region37: #{cnn_forward.1} parent=1 // pred_fallthru
      _
    // Predicated region
    $region38: #{cnn_forward.1} parent=1 // pred_check
      _
    $region39: #{cnn_forward.1} parent=1 // pred_check_branch
      %37 = sbr.rel (0) target = $region41
    $region40: #{cnn_forward.1} parent=1 // pred_region
      _
    $region41: #{cnn_forward.1} parent=1 // pred_fallthru
      _
    // Predicated region
    $region42: #{cnn_forward.1} parent=1 // pred_check
      _
    $region43: #{cnn_forward.1} parent=1 // pred_check_branch
      %39 = sbr.rel (0) target = $region45
    $region44: #{cnn_forward.1} parent=1 // pred_region
      _
    $region45: #{cnn_forward.1} parent=1 // pred_fallthru
      _
    // Predicated region
    $region46: #{cnn_forward.1} parent=1 // pred_check
      _
    $region47: #{cnn_forward.1} parent=1 // pred_check_branch
      %41 = sbr.rel (0) target = $region49
    $region48: #{cnn_forward.1} parent=1 // pred_region
      _
    $region49: #{cnn_forward.1} parent=1 // pred_fallthru
      _
    %v42 = vld [vmem:[%s0] sm:$0xff]
    %v43 = vld [vmem:[%s0 + $0x8] sm:$0xff]
    %v44 = vld [vmem:[%s0 + $0x10] sm:$0xff]
    %v45 = vld [vmem:[%s0 + $0x18] sm:$0xf]
    %v46 = vld [vmem:[%s0 + $0x20] sm:$0xff]
    %v47 = vld [vmem:[%s0 + $0x28] sm:$0xff]
    %v48 = vld [vmem:[%s0 + $0x30] sm:$0xff]
    %v49 = vld [vmem:[%s0 + $0x38] sm:$0xf]
    %v50 = vld [vmem:[%s0 + $0x40] sm:$0xff]
    %v51 = vld [vmem:[%s0 + $0x48] sm:$0xff]
    %v52 = vld [vmem:[%s0 + $0x50] sm:$0xff]
    %v53 = vld [vmem:[%s0 + $0x58] sm:$0xf]
    %v54 = vld [vmem:[%s0 + $0x60] sm:$0xff]
    %v55 = vld [vmem:[%s0 + $0x68] sm:$0xff]
    %v56 = vld [vmem:[%s0 + $0x70] sm:$0xff]
    %v57 = vld [vmem:[%s0 + $0x78] sm:$0xf]
    %v58 = vld [vmem:[%s0 + $0x80] sm:$0xff]
    %v59 = vld [vmem:[%s0 + $0x88] sm:$0xff]
    %v60 = vld [vmem:[%s0 + $0x90] sm:$0xff]
    %v61 = vld [vmem:[%s0 + $0x98] sm:$0xf]
    %v62 = vld [vmem:[%s0 + $0xa0] sm:$0xff]
    %v63 = vld [vmem:[%s0 + $0xa8] sm:$0xff]
    %v64 = vld [vmem:[%s0 + $0xb0] sm:$0xff]
    %v65 = vld [vmem:[%s0 + $0xb8] sm:$0xf]
    %v66 = vld [vmem:[%s0 + $0xc0] sm:$0xff]
    %v67 = vld [vmem:[%s0 + $0xc8] sm:$0xff]
    %v68 = vld [vmem:[%s0 + $0xd0] sm:$0xff]
    %v69 = vld [vmem:[%s0 + $0xd8] sm:$0xf]
    %v70 = vld [vmem:[%s0 + $0xe0] sm:$0xff]
    %v71 = vld [vmem:[%s0 + $0xe8] sm:$0xff]
    %v72 = vld [vmem:[%s0 + $0xf0] sm:$0xff]
    %v73 = vld [vmem:[%s0 + $0xf8] sm:$0xf]
    %v74 = vld [vmem:[%s0 + $0x100] sm:$0xff]
    %v75 = vld [vmem:[%s0 + $0x108] sm:$0xff]
    %v76 = vld [vmem:[%s0 + $0x110] sm:$0xff]
    %v77 = vld [vmem:[%s0 + $0x118] sm:$0xf]
    %v78 = vld [vmem:[%s0 + $0x120] sm:$0xff]
    %v79 = vld [vmem:[%s0 + $0x128] sm:$0xff]
    %v80 = vld [vmem:[%s0 + $0x130] sm:$0xff]
    %v81 = vld [vmem:[%s0 + $0x138] sm:$0xf]
    %v82 = vld [vmem:[%s0 + $0x140] sm:$0xff]
    %v83 = vld [vmem:[%s0 + $0x148] sm:$0xff]
    %v84 = vld [vmem:[%s0 + $0x150] sm:$0xff]
    %v85 = vld [vmem:[%s0 + $0x158] sm:$0xf]
    %v86 = vld [vmem:[%s0 + $0x160] sm:$0xff]
    %v87 = vld [vmem:[%s0 + $0x168] sm:$0xff]
    %v88 = vld [vmem:[%s0 + $0x170] sm:$0xff]
    %v89 = vld [vmem:[%s0 + $0x178] sm:$0xf]
    %v90 = vld [vmem:[%s0 + $0x180] sm:$0xff]
    %v91 = vld [vmem:[%s0 + $0x188] sm:$0xff]
    %v92 = vld [vmem:[%s0 + $0x190] sm:$0xff]
    %v93 = vld [vmem:[%s0 + $0x198] sm:$0xf]
    %v94 = vld [vmem:[%s0 + $0x1a0] sm:$0xff]
    %v95 = vld [vmem:[%s0 + $0x1a8] sm:$0xff]
    %v96 = vld [vmem:[%s0 + $0x1b0] sm:$0xff]
    %v97 = vld [vmem:[%s0 + $0x1b8] sm:$0xf]
    %v98 = vld [vmem:[%s0 + $0x1c0] sm:$0xff]
    %v99 = vld [vmem:[%s0 + $0x1c8] sm:$0xff]
    %v100 = vld [vmem:[%s0 + $0x1d0] sm:$0xff]
    %v101 = vld [vmem:[%s0 + $0x1d8] sm:$0xf]
    %v102 = vld [vmem:[%s0 + $0x1e0] sm:$0xff]
    %v103 = vld [vmem:[%s0 + $0x1e8] sm:$0xff]
    %v104 = vld [vmem:[%s0 + $0x1f0] sm:$0xff]
    %v105 = vld [vmem:[%s0 + $0x1f8] sm:$0xf]
    %v106 = vld [vmem:[%s0 + $0x200] sm:$0xff]
    %v107 = vld [vmem:[%s0 + $0x208] sm:$0xff]
    %v108 = vld [vmem:[%s0 + $0x210] sm:$0xff]
    %v109 = vld [vmem:[%s0 + $0x218] sm:$0xf]
    %v110 = vld [vmem:[%s0 + $0x220] sm:$0xff]
    %v111 = vld [vmem:[%s0 + $0x228] sm:$0xff]
    %v112 = vld [vmem:[%s0 + $0x230] sm:$0xff]
    %v113 = vld [vmem:[%s0 + $0x238] sm:$0xf]
    %v114 = vld [vmem:[%s0 + $0x240] sm:$0xff]
    %v115 = vld [vmem:[%s0 + $0x248] sm:$0xff]
    %v116 = vld [vmem:[%s0 + $0x250] sm:$0xff]
    %v117 = vld [vmem:[%s0 + $0x258] sm:$0xf]
    %v118 = vld [vmem:[%s0 + $0x260] sm:$0xff]
    %v119 = vld [vmem:[%s0 + $0x268] sm:$0xff]
    %v120 = vld [vmem:[%s0 + $0x270] sm:$0xff]
    %v121 = vld [vmem:[%s0 + $0x278] sm:$0xf]
    %v122 = vld [vmem:[%s0 + $0x280] sm:$0xff]
    %v123 = vld [vmem:[%s0 + $0x288] sm:$0xff]
    %v124 = vld [vmem:[%s0 + $0x290] sm:$0xff]
    %v125 = vld [vmem:[%s0 + $0x298] sm:$0xf]
    %v126 = vld [vmem:[%s0 + $0x2a0] sm:$0xff]
    %v127 = vld [vmem:[%s0 + $0x2a8] sm:$0xff]
    %v128 = vld [vmem:[%s0 + $0x2b0] sm:$0xff]
    %v129 = vld [vmem:[%s0 + $0x2b8] sm:$0xf]
    %v130 = vld [vmem:[%s0 + $0x2c0] sm:$0xff]
    %v131 = vld [vmem:[%s0 + $0x2c8] sm:$0xff]
    %v132 = vld [vmem:[%s0 + $0x2d0] sm:$0xff]
    %v133 = vld [vmem:[%s0 + $0x2d8] sm:$0xf]
    %v134 = vld [vmem:[%s0 + $0x2e0] sm:$0xff]
    %v135 = vld [vmem:[%s0 + $0x2e8] sm:$0xff]
    %v136 = vld [vmem:[%s0 + $0x2f0] sm:$0xff]
    %v137 = vld [vmem:[%s0 + $0x2f8] sm:$0xf]
    %v138 = vld [vmem:[%s0 + $0x300] sm:$0xff]
    %v139 = vld [vmem:[%s0 + $0x308] sm:$0xff]
    %v140 = vld [vmem:[%s0 + $0x310] sm:$0xff]
    %v141 = vld [vmem:[%s0 + $0x318] sm:$0xf]
    %v142 = vld [vmem:[%s0 + $0x380] sm:$0xff]
    %v143 = vld [vmem:[%s0 + $0x388] sm:$0xff]
    %v144 = vld [vmem:[%s0 + $0x390] sm:$0xff]
    %v145 = vld [vmem:[%s0 + $0x398] sm:$0xf]
    %v146 = vld [vmem:[%s0 + $0x3a0] sm:$0xff]
    %v147 = vld [vmem:[%s0 + $0x3a8] sm:$0xff]
    %v148 = vld [vmem:[%s0 + $0x3b0] sm:$0xff]
    %v149 = vld [vmem:[%s0 + $0x3b8] sm:$0xf]
    %v150 = vld [vmem:[%s0 + $0x3c0] sm:$0xff]
    %v151 = vld [vmem:[%s0 + $0x3c8] sm:$0xff]
    %v152 = vld [vmem:[%s0 + $0x3d0] sm:$0xff]
    %v153 = vld [vmem:[%s0 + $0x3d8] sm:$0xf]
    %v154 = vld [vmem:[%s0 + $0x3e0] sm:$0xff]
    %v155 = vld [vmem:[%s0 + $0x3e8] sm:$0xff]
    %v156 = vld [vmem:[%s0 + $0x3f0] sm:$0xff]
    %v157 = vld [vmem:[%s0 + $0x3f8] sm:$0xf]
    %v158 = vld [vmem:[%s0 + $0x400] sm:$0xff]
    %v159 = vld [vmem:[%s0 + $0x408] sm:$0xff]
    %v160 = vld [vmem:[%s0 + $0x410] sm:$0xff]
    %v161 = vld [vmem:[%s0 + $0x418] sm:$0xf]
    %v162 = vld [vmem:[%s0 + $0x420] sm:$0xff]
    %v163 = vld [vmem:[%s0 + $0x428] sm:$0xff]
    %v164 = vld [vmem:[%s0 + $0x430] sm:$0xff]
    %v165 = vld [vmem:[%s0 + $0x438] sm:$0xf]
    %v166 = vld [vmem:[%s0 + $0x440] sm:$0xff]
    %v167 = vld [vmem:[%s0 + $0x448] sm:$0xff]
    %v168 = vld [vmem:[%s0 + $0x450] sm:$0xff]
    %v169 = vld [vmem:[%s0 + $0x458] sm:$0xf]
    %v170 = vld [vmem:[%s0 + $0x460] sm:$0xff]
    %v171 = vld [vmem:[%s0 + $0x468] sm:$0xff]
    %v172 = vld [vmem:[%s0 + $0x470] sm:$0xff]
    %v173 = vld [vmem:[%s0 + $0x478] sm:$0xf]
    %v174 = vld [vmem:[%s0 + $0x480] sm:$0xff]
    %v175 = vld [vmem:[%s0 + $0x488] sm:$0xff]
    %v176 = vld [vmem:[%s0 + $0x490] sm:$0xff]
    %v177 = vld [vmem:[%s0 + $0x498] sm:$0xf]
    %v178 = vld [vmem:[%s0 + $0x4a0] sm:$0xff]
    %v179 = vld [vmem:[%s0 + $0x4a8] sm:$0xff]
    %v180 = vld [vmem:[%s0 + $0x4b0] sm:$0xff]
    %v181 = vld [vmem:[%s0 + $0x4b8] sm:$0xf]
    %v182 = vld [vmem:[%s0 + $0x4c0] sm:$0xff]
    %v183 = vld [vmem:[%s0 + $0x4c8] sm:$0xff]
    %v184 = vld [vmem:[%s0 + $0x4d0] sm:$0xff]
    %v185 = vld [vmem:[%s0 + $0x4d8] sm:$0xf]
    %v186 = vld [vmem:[%s0 + $0x4e0] sm:$0xff]
    %v187 = vld [vmem:[%s0 + $0x4e8] sm:$0xff]
    %v188 = vld [vmem:[%s0 + $0x4f0] sm:$0xff]
    %v189 = vld [vmem:[%s0 + $0x4f8] sm:$0xf]
    %v190 = vld [vmem:[%s0 + $0x500] sm:$0xff]
    %v191 = vld [vmem:[%s0 + $0x508] sm:$0xff]
    %v192 = vld [vmem:[%s0 + $0x510] sm:$0xff]
    %v193 = vld [vmem:[%s0 + $0x518] sm:$0xf]
    %v194 = vld [vmem:[%s0 + $0x520] sm:$0xff]
    %v195 = vld [vmem:[%s0 + $0x528] sm:$0xff]
    %v196 = vld [vmem:[%s0 + $0x530] sm:$0xff]
    %v197 = vld [vmem:[%s0 + $0x538] sm:$0xf]
    %v198 = vld [vmem:[%s0 + $0x540] sm:$0xff]
    %v199 = vld [vmem:[%s0 + $0x548] sm:$0xff]
    %v200 = vld [vmem:[%s0 + $0x550] sm:$0xff]
    %v201 = vld [vmem:[%s0 + $0x558] sm:$0xf]
    %v202 = vld [vmem:[%s0 + $0x560] sm:$0xff]
    %v203 = vld [vmem:[%s0 + $0x568] sm:$0xff]
    %v204 = vld [vmem:[%s0 + $0x570] sm:$0xff]
    %v205 = vld [vmem:[%s0 + $0x578] sm:$0xf]
    %v206 = vld [vmem:[%s0 + $0x580] sm:$0xff]
    %v207 = vld [vmem:[%s0 + $0x588] sm:$0xff]
    %v208 = vld [vmem:[%s0 + $0x590] sm:$0xff]
    %v209 = vld [vmem:[%s0 + $0x598] sm:$0xf]
    %v210 = vld [vmem:[%s0 + $0x5a0] sm:$0xff]
    %v211 = vld [vmem:[%s0 + $0x5a8] sm:$0xff]
    %v212 = vld [vmem:[%s0 + $0x5b0] sm:$0xff]
    %v213 = vld [vmem:[%s0 + $0x5b8] sm:$0xf]
    %v214 = vld [vmem:[%s0 + $0x5c0] sm:$0xff]
    %v215 = vld [vmem:[%s0 + $0x5c8] sm:$0xff]
    %v216 = vld [vmem:[%s0 + $0x5d0] sm:$0xff]
    %v217 = vld [vmem:[%s0 + $0x5d8] sm:$0xf]
    %v218 = vld [vmem:[%s0 + $0x5e0] sm:$0xff]
    %v219 = vld [vmem:[%s0 + $0x5e8] sm:$0xff]
    %v220 = vld [vmem:[%s0 + $0x5f0] sm:$0xff]
    %v221 = vld [vmem:[%s0 + $0x5f8] sm:$0xf]
    %v222 = vld [vmem:[%s0 + $0x600] sm:$0xff]
    %v223 = vld [vmem:[%s0 + $0x608] sm:$0xff]
    %v224 = vld [vmem:[%s0 + $0x610] sm:$0xff]
    %v225 = vld [vmem:[%s0 + $0x618] sm:$0xf]
    %v226 = vld [vmem:[%s0 + $0x620] sm:$0xff]
    %v227 = vld [vmem:[%s0 + $0x628] sm:$0xff]
    %v228 = vld [vmem:[%s0 + $0x630] sm:$0xff]
    %v229 = vld [vmem:[%s0 + $0x638] sm:$0xf]
    %v230 = vld [vmem:[%s0 + $0x640] sm:$0xff]
    %v231 = vld [vmem:[%s0 + $0x648] sm:$0xff]
    %v232 = vld [vmem:[%s0 + $0x650] sm:$0xff]
    %v233 = vld [vmem:[%s0 + $0x658] sm:$0xf]
    %v234 = vld [vmem:[%s0 + $0x660] sm:$0xff]
    %v235 = vld [vmem:[%s0 + $0x668] sm:$0xff]
    %v236 = vld [vmem:[%s0 + $0x670] sm:$0xff]
    %v237 = vld [vmem:[%s0 + $0x678] sm:$0xf]
    %v238 = vld [vmem:[%s0 + $0x680] sm:$0xff]
    %v239 = vld [vmem:[%s0 + $0x688] sm:$0xff]
    %v240 = vld [vmem:[%s0 + $0x690] sm:$0xff]
    %v241 = vld [vmem:[%s0 + $0x698] sm:$0xf]
    %v242 = vld [vmem:[%s1] sm:$0xf]
    %244 = vset.pattern.permute.xlu0 0
    %245 = vperm.xlu0 %244, %v42
    %v246 = vpop.permute.xlu0 %245
    %249 = vset.pattern.permute.xlu0 0
    %250 = vperm.xlu0 %249, %v43
    %v251 = vpop.permute.xlu0 %250
    %254 = vset.pattern.permute.xlu0 0
    %255 = vperm.xlu0 %254, %v44
    %v256 = vpop.permute.xlu0 %255
    %259 = vset.pattern.permute.xlu0 0
    %260 = vperm.xlu0 %259, %v45
    %v261 = vpop.permute.xlu0 %260
    %264 = vset.pattern.permute.xlu0 0
    %265 = vperm.xlu0 %264, %v46
    %v266 = vpop.permute.xlu0 %265
    %269 = vset.pattern.permute.xlu0 0
    %270 = vperm.xlu0 %269, %v47
    %v271 = vpop.permute.xlu0 %270
    %274 = vset.pattern.permute.xlu0 0
    %275 = vperm.xlu0 %274, %v48
    %v276 = vpop.permute.xlu0 %275
    %279 = vset.pattern.permute.xlu0 0
    %280 = vperm.xlu0 %279, %v49
    %v281 = vpop.permute.xlu0 %280
    %284 = vset.pattern.permute.xlu0 0
    %285 = vperm.xlu0 %284, %v50
    %v286 = vpop.permute.xlu0 %285
    %289 = vset.pattern.permute.xlu0 0
    %290 = vperm.xlu0 %289, %v51
    %v291 = vpop.permute.xlu0 %290
    %294 = vset.pattern.permute.xlu0 0
    %295 = vperm.xlu0 %294, %v52
    %v296 = vpop.permute.xlu0 %295
    %299 = vset.pattern.permute.xlu0 0
    %300 = vperm.xlu0 %299, %v53
    %v301 = vpop.permute.xlu0 %300
    %304 = vset.pattern.permute.xlu0 0
    %305 = vperm.xlu0 %304, %v54
    %v306 = vpop.permute.xlu0 %305
    %309 = vset.pattern.permute.xlu0 0
    %310 = vperm.xlu0 %309, %v55
    %v311 = vpop.permute.xlu0 %310
    %314 = vset.pattern.permute.xlu0 0
    %315 = vperm.xlu0 %314, %v56
    %v316 = vpop.permute.xlu0 %315
    %319 = vset.pattern.permute.xlu0 0
    %320 = vperm.xlu0 %319, %v57
    %v321 = vpop.permute.xlu0 %320
    %324 = vset.pattern.permute.xlu0 0
    %325 = vperm.xlu0 %324, %v58
    %v326 = vpop.permute.xlu0 %325
    %329 = vset.pattern.permute.xlu0 0
    %330 = vperm.xlu0 %329, %v59
    %v331 = vpop.permute.xlu0 %330
    %334 = vset.pattern.permute.xlu0 0
    %335 = vperm.xlu0 %334, %v60
    %v336 = vpop.permute.xlu0 %335
    %339 = vset.pattern.permute.xlu0 0
    %340 = vperm.xlu0 %339, %v61
    %v341 = vpop.permute.xlu0 %340
    %344 = vset.pattern.permute.xlu0 0
    %345 = vperm.xlu0 %344, %v62
    %v346 = vpop.permute.xlu0 %345
    %349 = vset.pattern.permute.xlu0 0
    %350 = vperm.xlu0 %349, %v63
    %v351 = vpop.permute.xlu0 %350
    %354 = vset.pattern.permute.xlu0 0
    %355 = vperm.xlu0 %354, %v64
    %v356 = vpop.permute.xlu0 %355
    %359 = vset.pattern.permute.xlu0 0
    %360 = vperm.xlu0 %359, %v65
    %v361 = vpop.permute.xlu0 %360
    %364 = vset.pattern.permute.xlu0 0
    %365 = vperm.xlu0 %364, %v66
    %v366 = vpop.permute.xlu0 %365
    %369 = vset.pattern.permute.xlu0 0
    %370 = vperm.xlu0 %369, %v67
    %v371 = vpop.permute.xlu0 %370
    %374 = vset.pattern.permute.xlu0 0
    %375 = vperm.xlu0 %374, %v68
    %v376 = vpop.permute.xlu0 %375
    %379 = vset.pattern.permute.xlu0 0
    %380 = vperm.xlu0 %379, %v69
    %v381 = vpop.permute.xlu0 %380
    %384 = vset.pattern.permute.xlu0 0
    %385 = vperm.xlu0 %384, %v70
    %v386 = vpop.permute.xlu0 %385
    %389 = vset.pattern.permute.xlu0 0
    %390 = vperm.xlu0 %389, %v71
    %v391 = vpop.permute.xlu0 %390
    %394 = vset.pattern.permute.xlu0 0
    %395 = vperm.xlu0 %394, %v72
    %v396 = vpop.permute.xlu0 %395
    %399 = vset.pattern.permute.xlu0 0
    %400 = vperm.xlu0 %399, %v73
    %v401 = vpop.permute.xlu0 %400
    %404 = vset.pattern.permute.xlu0 0
    %405 = vperm.xlu0 %404, %v74
    %v406 = vpop.permute.xlu0 %405
    %409 = vset.pattern.permute.xlu0 0
    %410 = vperm.xlu0 %409, %v75
    %v411 = vpop.permute.xlu0 %410
    %414 = vset.pattern.permute.xlu0 0
    %415 = vperm.xlu0 %414, %v76
    %v416 = vpop.permute.xlu0 %415
    %419 = vset.pattern.permute.xlu0 0
    %420 = vperm.xlu0 %419, %v77
    %v421 = vpop.permute.xlu0 %420
    %424 = vset.pattern.permute.xlu0 0
    %425 = vperm.xlu0 %424, %v78
    %v426 = vpop.permute.xlu0 %425
    %429 = vset.pattern.permute.xlu0 0
    %430 = vperm.xlu0 %429, %v79
    %v431 = vpop.permute.xlu0 %430
    %434 = vset.pattern.permute.xlu0 0
    %435 = vperm.xlu0 %434, %v80
    %v436 = vpop.permute.xlu0 %435
    %439 = vset.pattern.permute.xlu0 0
    %440 = vperm.xlu0 %439, %v81
    %v441 = vpop.permute.xlu0 %440
    %444 = vset.pattern.permute.xlu0 0
    %445 = vperm.xlu0 %444, %v82
    %v446 = vpop.permute.xlu0 %445
    %449 = vset.pattern.permute.xlu0 0
    %450 = vperm.xlu0 %449, %v83
    %v451 = vpop.permute.xlu0 %450
    %454 = vset.pattern.permute.xlu0 0
    %455 = vperm.xlu0 %454, %v84
    %v456 = vpop.permute.xlu0 %455
    %459 = vset.pattern.permute.xlu0 0
    %460 = vperm.xlu0 %459, %v85
    %v461 = vpop.permute.xlu0 %460
    %464 = vset.pattern.permute.xlu0 0
    %465 = vperm.xlu0 %464, %v86
    %v466 = vpop.permute.xlu0 %465
    %469 = vset.pattern.permute.xlu0 0
    %470 = vperm.xlu0 %469, %v87
    %v471 = vpop.permute.xlu0 %470
    %474 = vset.pattern.permute.xlu0 0
    %475 = vperm.xlu0 %474, %v88
    %v476 = vpop.permute.xlu0 %475
    %479 = vset.pattern.permute.xlu0 0
    %480 = vperm.xlu0 %479, %v89
    %v481 = vpop.permute.xlu0 %480
    %484 = vset.pattern.permute.xlu0 0
    %485 = vperm.xlu0 %484, %v90
    %v486 = vpop.permute.xlu0 %485
    %489 = vset.pattern.permute.xlu0 0
    %490 = vperm.xlu0 %489, %v91
    %v491 = vpop.permute.xlu0 %490
    %494 = vset.pattern.permute.xlu0 0
    %495 = vperm.xlu0 %494, %v92
    %v496 = vpop.permute.xlu0 %495
    %499 = vset.pattern.permute.xlu0 0
    %500 = vperm.xlu0 %499, %v93
    %v501 = vpop.permute.xlu0 %500
    %504 = vset.pattern.permute.xlu0 0
    %505 = vperm.xlu0 %504, %v94
    %v506 = vpop.permute.xlu0 %505
    %509 = vset.pattern.permute.xlu0 0
    %510 = vperm.xlu0 %509, %v95
    %v511 = vpop.permute.xlu0 %510
    %514 = vset.pattern.permute.xlu0 0
    %515 = vperm.xlu0 %514, %v96
    %v516 = vpop.permute.xlu0 %515
    %519 = vset.pattern.permute.xlu0 0
    %520 = vperm.xlu0 %519, %v97
    %v521 = vpop.permute.xlu0 %520
    %524 = vset.pattern.permute.xlu0 0
    %525 = vperm.xlu0 %524, %v98
    %v526 = vpop.permute.xlu0 %525
    %529 = vset.pattern.permute.xlu0 0
    %530 = vperm.xlu0 %529, %v99
    %v531 = vpop.permute.xlu0 %530
    %534 = vset.pattern.permute.xlu0 0
    %535 = vperm.xlu0 %534, %v100
    %v536 = vpop.permute.xlu0 %535
    %539 = vset.pattern.permute.xlu0 0
    %540 = vperm.xlu0 %539, %v101
    %v541 = vpop.permute.xlu0 %540
    %544 = vset.pattern.permute.xlu0 0
    %545 = vperm.xlu0 %544, %v102
    %v546 = vpop.permute.xlu0 %545
    %549 = vset.pattern.permute.xlu0 0
    %550 = vperm.xlu0 %549, %v103
    %v551 = vpop.permute.xlu0 %550
    %554 = vset.pattern.permute.xlu0 0
    %555 = vperm.xlu0 %554, %v104
    %v556 = vpop.permute.xlu0 %555
    %559 = vset.pattern.permute.xlu0 0
    %560 = vperm.xlu0 %559, %v105
    %v561 = vpop.permute.xlu0 %560
    %564 = vset.pattern.permute.xlu0 0
    %565 = vperm.xlu0 %564, %v106
    %v566 = vpop.permute.xlu0 %565
    %569 = vset.pattern.permute.xlu0 0
    %570 = vperm.xlu0 %569, %v107
    %v571 = vpop.permute.xlu0 %570
    %574 = vset.pattern.permute.xlu0 0
    %575 = vperm.xlu0 %574, %v108
    %v576 = vpop.permute.xlu0 %575
    %579 = vset.pattern.permute.xlu0 0
    %580 = vperm.xlu0 %579, %v109
    %v581 = vpop.permute.xlu0 %580
    %584 = vset.pattern.permute.xlu0 0
    %585 = vperm.xlu0 %584, %v110
    %v586 = vpop.permute.xlu0 %585
    %589 = vset.pattern.permute.xlu0 0
    %590 = vperm.xlu0 %589, %v111
    %v591 = vpop.permute.xlu0 %590
    %594 = vset.pattern.permute.xlu0 0
    %595 = vperm.xlu0 %594, %v112
    %v596 = vpop.permute.xlu0 %595
    %599 = vset.pattern.permute.xlu0 0
    %600 = vperm.xlu0 %599, %v113
    %v601 = vpop.permute.xlu0 %600
    %604 = vset.pattern.permute.xlu0 0
    %605 = vperm.xlu0 %604, %v114
    %v606 = vpop.permute.xlu0 %605
    %609 = vset.pattern.permute.xlu0 0
    %610 = vperm.xlu0 %609, %v115
    %v611 = vpop.permute.xlu0 %610
    %614 = vset.pattern.permute.xlu0 0
    %615 = vperm.xlu0 %614, %v116
    %v616 = vpop.permute.xlu0 %615
    %619 = vset.pattern.permute.xlu0 0
    %620 = vperm.xlu0 %619, %v117
    %v621 = vpop.permute.xlu0 %620
    %624 = vset.pattern.permute.xlu0 0
    %625 = vperm.xlu0 %624, %v118
    %v626 = vpop.permute.xlu0 %625
    %629 = vset.pattern.permute.xlu0 0
    %630 = vperm.xlu0 %629, %v119
    %v631 = vpop.permute.xlu0 %630
    %634 = vset.pattern.permute.xlu0 0
    %635 = vperm.xlu0 %634, %v120
    %v636 = vpop.permute.xlu0 %635
    %639 = vset.pattern.permute.xlu0 0
    %640 = vperm.xlu0 %639, %v121
    %v641 = vpop.permute.xlu0 %640
    %644 = vset.pattern.permute.xlu0 0
    %645 = vperm.xlu0 %644, %v122
    %v646 = vpop.permute.xlu0 %645
    %649 = vset.pattern.permute.xlu0 0
    %650 = vperm.xlu0 %649, %v123
    %v651 = vpop.permute.xlu0 %650
    %654 = vset.pattern.permute.xlu0 0
    %655 = vperm.xlu0 %654, %v124
    %v656 = vpop.permute.xlu0 %655
    %659 = vset.pattern.permute.xlu0 0
    %660 = vperm.xlu0 %659, %v125
    %v661 = vpop.permute.xlu0 %660
    %664 = vset.pattern.permute.xlu0 0
    %665 = vperm.xlu0 %664, %v126
    %v666 = vpop.permute.xlu0 %665
    %669 = vset.pattern.permute.xlu0 0
    %670 = vperm.xlu0 %669, %v127
    %v671 = vpop.permute.xlu0 %670
    %674 = vset.pattern.permute.xlu0 0
    %675 = vperm.xlu0 %674, %v128
    %v676 = vpop.permute.xlu0 %675
    %679 = vset.pattern.permute.xlu0 0
    %680 = vperm.xlu0 %679, %v129
    %v681 = vpop.permute.xlu0 %680
    %684 = vset.pattern.permute.xlu0 0
    %685 = vperm.xlu0 %684, %v130
    %v686 = vpop.permute.xlu0 %685
    %689 = vset.pattern.permute.xlu0 0
    %690 = vperm.xlu0 %689, %v131
    %v691 = vpop.permute.xlu0 %690
    %694 = vset.pattern.permute.xlu0 0
    %695 = vperm.xlu0 %694, %v132
    %v696 = vpop.permute.xlu0 %695
    %699 = vset.pattern.permute.xlu0 0
    %700 = vperm.xlu0 %699, %v133
    %v701 = vpop.permute.xlu0 %700
    %704 = vset.pattern.permute.xlu0 0
    %705 = vperm.xlu0 %704, %v134
    %v706 = vpop.permute.xlu0 %705
    %709 = vset.pattern.permute.xlu0 0
    %710 = vperm.xlu0 %709, %v135
    %v711 = vpop.permute.xlu0 %710
    %714 = vset.pattern.permute.xlu0 0
    %715 = vperm.xlu0 %714, %v136
    %v716 = vpop.permute.xlu0 %715
    %719 = vset.pattern.permute.xlu0 0
    %720 = vperm.xlu0 %719, %v137
    %v721 = vpop.permute.xlu0 %720
    %724 = vset.pattern.permute.xlu0 0
    %725 = vperm.xlu0 %724, %v142
    %v726 = vpop.permute.xlu0 %725
    %729 = vset.pattern.permute.xlu0 0
    %730 = vperm.xlu0 %729, %v143
    %v731 = vpop.permute.xlu0 %730
    %734 = vset.pattern.permute.xlu0 0
    %735 = vperm.xlu0 %734, %v144
    %v736 = vpop.permute.xlu0 %735
    %739 = vset.pattern.permute.xlu0 0
    %740 = vperm.xlu0 %739, %v145
    %v741 = vpop.permute.xlu0 %740
    %744 = vset.pattern.permute.xlu0 0
    %745 = vperm.xlu0 %744, %v146
    %v746 = vpop.permute.xlu0 %745
    %749 = vset.pattern.permute.xlu0 0
    %750 = vperm.xlu0 %749, %v147
    %v751 = vpop.permute.xlu0 %750
    %754 = vset.pattern.permute.xlu0 0
    %755 = vperm.xlu0 %754, %v148
    %v756 = vpop.permute.xlu0 %755
    %759 = vset.pattern.permute.xlu0 0
    %760 = vperm.xlu0 %759, %v149
    %v761 = vpop.permute.xlu0 %760
    %764 = vset.pattern.permute.xlu0 0
    %765 = vperm.xlu0 %764, %v150
    %v766 = vpop.permute.xlu0 %765
    %769 = vset.pattern.permute.xlu0 0
    %770 = vperm.xlu0 %769, %v151
    %v771 = vpop.permute.xlu0 %770
    %774 = vset.pattern.permute.xlu0 0
    %775 = vperm.xlu0 %774, %v152
    %v776 = vpop.permute.xlu0 %775
    %779 = vset.pattern.permute.xlu0 0
    %780 = vperm.xlu0 %779, %v153
    %v781 = vpop.permute.xlu0 %780
    %784 = vset.pattern.permute.xlu0 0
    %785 = vperm.xlu0 %784, %v154
    %v786 = vpop.permute.xlu0 %785
    %789 = vset.pattern.permute.xlu0 0
    %790 = vperm.xlu0 %789, %v155
    %v791 = vpop.permute.xlu0 %790
    %794 = vset.pattern.permute.xlu0 0
    %795 = vperm.xlu0 %794, %v156
    %v796 = vpop.permute.xlu0 %795
    %799 = vset.pattern.permute.xlu0 0
    %800 = vperm.xlu0 %799, %v157
    %v801 = vpop.permute.xlu0 %800
    %804 = vset.pattern.permute.xlu0 0
    %805 = vperm.xlu0 %804, %v158
    %v806 = vpop.permute.xlu0 %805
    %809 = vset.pattern.permute.xlu0 0
    %810 = vperm.xlu0 %809, %v159
    %v811 = vpop.permute.xlu0 %810
    %814 = vset.pattern.permute.xlu0 0
    %815 = vperm.xlu0 %814, %v160
    %v816 = vpop.permute.xlu0 %815
    %819 = vset.pattern.permute.xlu0 0
    %820 = vperm.xlu0 %819, %v161
    %v821 = vpop.permute.xlu0 %820
    %824 = vset.pattern.permute.xlu0 0
    %825 = vperm.xlu0 %824, %v162
    %v826 = vpop.permute.xlu0 %825
    %829 = vset.pattern.permute.xlu0 0
    %830 = vperm.xlu0 %829, %v163
    %v831 = vpop.permute.xlu0 %830
    %834 = vset.pattern.permute.xlu0 0
    %835 = vperm.xlu0 %834, %v164
    %v836 = vpop.permute.xlu0 %835
    %839 = vset.pattern.permute.xlu0 0
    %840 = vperm.xlu0 %839, %v165
    %v841 = vpop.permute.xlu0 %840
    %844 = vset.pattern.permute.xlu0 0
    %845 = vperm.xlu0 %844, %v166
    %v846 = vpop.permute.xlu0 %845
    %849 = vset.pattern.permute.xlu0 0
    %850 = vperm.xlu0 %849, %v167
    %v851 = vpop.permute.xlu0 %850
    %854 = vset.pattern.permute.xlu0 0
    %855 = vperm.xlu0 %854, %v168
    %v856 = vpop.permute.xlu0 %855
    %859 = vset.pattern.permute.xlu0 0
    %860 = vperm.xlu0 %859, %v169
    %v861 = vpop.permute.xlu0 %860
    %864 = vset.pattern.permute.xlu0 0
    %865 = vperm.xlu0 %864, %v170
    %v866 = vpop.permute.xlu0 %865
    %869 = vset.pattern.permute.xlu0 0
    %870 = vperm.xlu0 %869, %v171
    %v871 = vpop.permute.xlu0 %870
    %874 = vset.pattern.permute.xlu0 0
    %875 = vperm.xlu0 %874, %v172
    %v876 = vpop.permute.xlu0 %875
    %879 = vset.pattern.permute.xlu0 0
    %880 = vperm.xlu0 %879, %v173
    %v881 = vpop.permute.xlu0 %880
    %884 = vset.pattern.permute.xlu0 0
    %885 = vperm.xlu0 %884, %v174
    %v886 = vpop.permute.xlu0 %885
    %889 = vset.pattern.permute.xlu0 0
    %890 = vperm.xlu0 %889, %v175
    %v891 = vpop.permute.xlu0 %890
    %894 = vset.pattern.permute.xlu0 0
    %895 = vperm.xlu0 %894, %v176
    %v896 = vpop.permute.xlu0 %895
    %899 = vset.pattern.permute.xlu0 0
    %900 = vperm.xlu0 %899, %v177
    %v901 = vpop.permute.xlu0 %900
    %904 = vset.pattern.permute.xlu0 0
    %905 = vperm.xlu0 %904, %v178
    %v906 = vpop.permute.xlu0 %905
    %909 = vset.pattern.permute.xlu0 0
    %910 = vperm.xlu0 %909, %v179
    %v911 = vpop.permute.xlu0 %910
    %914 = vset.pattern.permute.xlu0 0
    %915 = vperm.xlu0 %914, %v180
    %v916 = vpop.permute.xlu0 %915
    %919 = vset.pattern.permute.xlu0 0
    %920 = vperm.xlu0 %919, %v181
    %v921 = vpop.permute.xlu0 %920
    %924 = vset.pattern.permute.xlu0 0
    %925 = vperm.xlu0 %924, %v182
    %v926 = vpop.permute.xlu0 %925
    %929 = vset.pattern.permute.xlu0 0
    %930 = vperm.xlu0 %929, %v183
    %v931 = vpop.permute.xlu0 %930
    %934 = vset.pattern.permute.xlu0 0
    %935 = vperm.xlu0 %934, %v184
    %v936 = vpop.permute.xlu0 %935
    %939 = vset.pattern.permute.xlu0 0
    %940 = vperm.xlu0 %939, %v185
    %v941 = vpop.permute.xlu0 %940
    %944 = vset.pattern.permute.xlu0 0
    %945 = vperm.xlu0 %944, %v186
    %v946 = vpop.permute.xlu0 %945
    %949 = vset.pattern.permute.xlu0 0
    %950 = vperm.xlu0 %949, %v187
    %v951 = vpop.permute.xlu0 %950
    %954 = vset.pattern.permute.xlu0 0
    %955 = vperm.xlu0 %954, %v188
    %v956 = vpop.permute.xlu0 %955
    %959 = vset.pattern.permute.xlu0 0
    %960 = vperm.xlu0 %959, %v189
    %v961 = vpop.permute.xlu0 %960
    %964 = vset.pattern.permute.xlu0 0
    %965 = vperm.xlu0 %964, %v190
    %v966 = vpop.permute.xlu0 %965
    %969 = vset.pattern.permute.xlu0 0
    %970 = vperm.xlu0 %969, %v191
    %v971 = vpop.permute.xlu0 %970
    %974 = vset.pattern.permute.xlu0 0
    %975 = vperm.xlu0 %974, %v192
    %v976 = vpop.permute.xlu0 %975
    %979 = vset.pattern.permute.xlu0 0
    %980 = vperm.xlu0 %979, %v193
    %v981 = vpop.permute.xlu0 %980
    %984 = vset.pattern.permute.xlu0 0
    %985 = vperm.xlu0 %984, %v194
    %v986 = vpop.permute.xlu0 %985
    %989 = vset.pattern.permute.xlu0 0
    %990 = vperm.xlu0 %989, %v195
    %v991 = vpop.permute.xlu0 %990
    %994 = vset.pattern.permute.xlu0 0
    %995 = vperm.xlu0 %994, %v196
    %v996 = vpop.permute.xlu0 %995
    %999 = vset.pattern.permute.xlu0 0
    %1000 = vperm.xlu0 %999, %v197
    %v1001 = vpop.permute.xlu0 %1000
    %1004 = vset.pattern.permute.xlu0 0
    %1005 = vperm.xlu0 %1004, %v198
    %v1006 = vpop.permute.xlu0 %1005
    %1009 = vset.pattern.permute.xlu0 0
    %1010 = vperm.xlu0 %1009, %v199
    %v1011 = vpop.permute.xlu0 %1010
    %1014 = vset.pattern.permute.xlu0 0
    %1015 = vperm.xlu0 %1014, %v200
    %v1016 = vpop.permute.xlu0 %1015
    %1019 = vset.pattern.permute.xlu0 0
    %1020 = vperm.xlu0 %1019, %v201
    %v1021 = vpop.permute.xlu0 %1020
    %1024 = vset.pattern.permute.xlu0 0
    %1025 = vperm.xlu0 %1024, %v202
    %v1026 = vpop.permute.xlu0 %1025
    %1029 = vset.pattern.permute.xlu0 0
    %1030 = vperm.xlu0 %1029, %v203
    %v1031 = vpop.permute.xlu0 %1030
    %1034 = vset.pattern.permute.xlu0 0
    %1035 = vperm.xlu0 %1034, %v204
    %v1036 = vpop.permute.xlu0 %1035
    %1039 = vset.pattern.permute.xlu0 0
    %1040 = vperm.xlu0 %1039, %v205
    %v1041 = vpop.permute.xlu0 %1040
    %1044 = vset.pattern.permute.xlu0 0
    %1045 = vperm.xlu0 %1044, %v206
    %v1046 = vpop.permute.xlu0 %1045
    %1049 = vset.pattern.permute.xlu0 0
    %1050 = vperm.xlu0 %1049, %v207
    %v1051 = vpop.permute.xlu0 %1050
    %1054 = vset.pattern.permute.xlu0 0
    %1055 = vperm.xlu0 %1054, %v208
    %v1056 = vpop.permute.xlu0 %1055
    %1059 = vset.pattern.permute.xlu0 0
    %1060 = vperm.xlu0 %1059, %v209
    %v1061 = vpop.permute.xlu0 %1060
    %1064 = vset.pattern.permute.xlu0 0
    %1065 = vperm.xlu0 %1064, %v210
    %v1066 = vpop.permute.xlu0 %1065
    %1069 = vset.pattern.permute.xlu0 0
    %1070 = vperm.xlu0 %1069, %v211
    %v1071 = vpop.permute.xlu0 %1070
    %1074 = vset.pattern.permute.xlu0 0
    %1075 = vperm.xlu0 %1074, %v212
    %v1076 = vpop.permute.xlu0 %1075
    %1079 = vset.pattern.permute.xlu0 0
    %1080 = vperm.xlu0 %1079, %v213
    %v1081 = vpop.permute.xlu0 %1080
    %1084 = vset.pattern.permute.xlu0 0
    %1085 = vperm.xlu0 %1084, %v214
    %v1086 = vpop.permute.xlu0 %1085
    %1089 = vset.pattern.permute.xlu0 0
    %1090 = vperm.xlu0 %1089, %v215
    %v1091 = vpop.permute.xlu0 %1090
    %1094 = vset.pattern.permute.xlu0 0
    %1095 = vperm.xlu0 %1094, %v216
    %v1096 = vpop.permute.xlu0 %1095
    %1099 = vset.pattern.permute.xlu0 0
    %1100 = vperm.xlu0 %1099, %v217
    %v1101 = vpop.permute.xlu0 %1100
    %1104 = vset.pattern.permute.xlu0 0
    %1105 = vperm.xlu0 %1104, %v218
    %v1106 = vpop.permute.xlu0 %1105
    %1109 = vset.pattern.permute.xlu0 0
    %1110 = vperm.xlu0 %1109, %v219
    %v1111 = vpop.permute.xlu0 %1110
    %1114 = vset.pattern.permute.xlu0 0
    %1115 = vperm.xlu0 %1114, %v220
    %v1116 = vpop.permute.xlu0 %1115
    %1119 = vset.pattern.permute.xlu0 0
    %1120 = vperm.xlu0 %1119, %v221
    %v1121 = vpop.permute.xlu0 %1120
    %1124 = vset.pattern.permute.xlu0 0
    %1125 = vperm.xlu0 %1124, %v222
    %v1126 = vpop.permute.xlu0 %1125
    %1129 = vset.pattern.permute.xlu0 0
    %1130 = vperm.xlu0 %1129, %v223
    %v1131 = vpop.permute.xlu0 %1130
    %1134 = vset.pattern.permute.xlu0 0
    %1135 = vperm.xlu0 %1134, %v224
    %v1136 = vpop.permute.xlu0 %1135
    %1139 = vset.pattern.permute.xlu0 0
    %1140 = vperm.xlu0 %1139, %v225
    %v1141 = vpop.permute.xlu0 %1140
    %1144 = vset.pattern.permute.xlu0 0
    %1145 = vperm.xlu0 %1144, %v226
    %v1146 = vpop.permute.xlu0 %1145
    %1149 = vset.pattern.permute.xlu0 0
    %1150 = vperm.xlu0 %1149, %v227
    %v1151 = vpop.permute.xlu0 %1150
    %1154 = vset.pattern.permute.xlu0 0
    %1155 = vperm.xlu0 %1154, %v228
    %v1156 = vpop.permute.xlu0 %1155
    %1159 = vset.pattern.permute.xlu0 0
    %1160 = vperm.xlu0 %1159, %v229
    %v1161 = vpop.permute.xlu0 %1160
    %1164 = vset.pattern.permute.xlu0 0
    %1165 = vperm.xlu0 %1164, %v230
    %v1166 = vpop.permute.xlu0 %1165
    %1169 = vset.pattern.permute.xlu0 0
    %1170 = vperm.xlu0 %1169, %v231
    %v1171 = vpop.permute.xlu0 %1170
    %1174 = vset.pattern.permute.xlu0 0
    %1175 = vperm.xlu0 %1174, %v232
    %v1176 = vpop.permute.xlu0 %1175
    %1179 = vset.pattern.permute.xlu0 0
    %1180 = vperm.xlu0 %1179, %v233
    %v1181 = vpop.permute.xlu0 %1180
    %1184 = vset.pattern.permute.xlu0 0
    %1185 = vperm.xlu0 %1184, %v234
    %v1186 = vpop.permute.xlu0 %1185
    %1189 = vset.pattern.permute.xlu0 0
    %1190 = vperm.xlu0 %1189, %v235
    %v1191 = vpop.permute.xlu0 %1190
    %1194 = vset.pattern.permute.xlu0 0
    %1195 = vperm.xlu0 %1194, %v236
    %v1196 = vpop.permute.xlu0 %1195
    %1199 = vset.pattern.permute.xlu0 0
    %1200 = vperm.xlu0 %1199, %v237
    %v1201 = vpop.permute.xlu0 %1200
    %v1203 = vlaneseq
    %v1204 = vshrl.u32 %v1203, 7
    %v1205 = vsub.s32 0, %v1204
    %v1206 = vrot.slane %v242, %v1205
    %v1207 = vmul.f32 %v246, %v1206
    %v1208 = vmul.f32 %v251, %v1206
    %v1209 = vmul.f32 %v256, %v1206
    %v1210 = vmul.f32 %v261, %v1206
    %v1211 = vmul.f32 %v266, %v1206
    %v1212 = vmul.f32 %v271, %v1206
    %v1213 = vmul.f32 %v276, %v1206
    %v1214 = vmul.f32 %v281, %v1206
    %v1215 = vmul.f32 %v286, %v1206
    %v1216 = vmul.f32 %v291, %v1206
    %v1217 = vmul.f32 %v296, %v1206
    %v1218 = vmul.f32 %v301, %v1206
    %v1219 = vmul.f32 %v306, %v1206
    %v1220 = vmul.f32 %v311, %v1206
    %v1221 = vmul.f32 %v316, %v1206
    %v1222 = vmul.f32 %v321, %v1206
    %v1223 = vmul.f32 %v326, %v1206
    %v1224 = vmul.f32 %v331, %v1206
    %v1225 = vmul.f32 %v336, %v1206
    %v1226 = vmul.f32 %v341, %v1206
    %v1227 = vmul.f32 %v346, %v1206
    %v1228 = vmul.f32 %v351, %v1206
    %v1229 = vmul.f32 %v356, %v1206
    %v1230 = vmul.f32 %v361, %v1206
    %v1231 = vmul.f32 %v366, %v1206
    %v1232 = vmul.f32 %v371, %v1206
    %v1233 = vmul.f32 %v376, %v1206
    %v1234 = vmul.f32 %v381, %v1206
    %v1235 = vmul.f32 %v386, %v1206
    %v1236 = vmul.f32 %v391, %v1206
    %v1237 = vmul.f32 %v396, %v1206
    %v1238 = vmul.f32 %v401, %v1206
    %v1239 = vmul.f32 %v406, %v1206
    %v1240 = vmul.f32 %v411, %v1206
    %v1241 = vmul.f32 %v416, %v1206
    %v1242 = vmul.f32 %v421, %v1206
    %v1243 = vmul.f32 %v426, %v1206
    %v1244 = vmul.f32 %v431, %v1206
    %v1245 = vmul.f32 %v436, %v1206
    %v1246 = vmul.f32 %v441, %v1206
    %v1247 = vmul.f32 %v446, %v1206
    %v1248 = vmul.f32 %v451, %v1206
    %v1249 = vmul.f32 %v456, %v1206
    %v1250 = vmul.f32 %v461, %v1206
    %v1251 = vmul.f32 %v466, %v1206
    %v1252 = vmul.f32 %v471, %v1206
    %v1253 = vmul.f32 %v476, %v1206
    %v1254 = vmul.f32 %v481, %v1206
    %v1255 = vmul.f32 %v486, %v1206
    %v1256 = vmul.f32 %v491, %v1206
    %v1257 = vmul.f32 %v496, %v1206
    %v1258 = vmul.f32 %v501, %v1206
    %v1259 = vmul.f32 %v506, %v1206
    %v1260 = vmul.f32 %v511, %v1206
    %v1261 = vmul.f32 %v516, %v1206
    %v1262 = vmul.f32 %v521, %v1206
    %v1263 = vmul.f32 %v526, %v1206
    %v1264 = vmul.f32 %v531, %v1206
    %v1265 = vmul.f32 %v536, %v1206
    %v1266 = vmul.f32 %v541, %v1206
    %v1267 = vmul.f32 %v546, %v1206
    %v1268 = vmul.f32 %v551, %v1206
    %v1269 = vmul.f32 %v556, %v1206
    %v1270 = vmul.f32 %v561, %v1206
    %v1271 = vmul.f32 %v566, %v1206
    %v1272 = vmul.f32 %v571, %v1206
    %v1273 = vmul.f32 %v576, %v1206
    %v1274 = vmul.f32 %v581, %v1206
    %v1275 = vmul.f32 %v586, %v1206
    %v1276 = vmul.f32 %v591, %v1206
    %v1277 = vmul.f32 %v596, %v1206
    %v1278 = vmul.f32 %v601, %v1206
    %v1279 = vmul.f32 %v606, %v1206
    %v1280 = vmul.f32 %v611, %v1206
    %v1281 = vmul.f32 %v616, %v1206
    %v1282 = vmul.f32 %v621, %v1206
    %v1283 = vmul.f32 %v626, %v1206
    %v1284 = vmul.f32 %v631, %v1206
    %v1285 = vmul.f32 %v636, %v1206
    %v1286 = vmul.f32 %v641, %v1206
    %v1287 = vmul.f32 %v646, %v1206
    %v1288 = vmul.f32 %v651, %v1206
    %v1289 = vmul.f32 %v656, %v1206
    %v1290 = vmul.f32 %v661, %v1206
    %v1291 = vmul.f32 %v666, %v1206
    %v1292 = vmul.f32 %v671, %v1206
    %v1293 = vmul.f32 %v676, %v1206
    %v1294 = vmul.f32 %v681, %v1206
    %v1295 = vmul.f32 %v686, %v1206
    %v1296 = vmul.f32 %v691, %v1206
    %v1297 = vmul.f32 %v696, %v1206
    %v1298 = vmul.f32 %v701, %v1206
    %v1299 = vmul.f32 %v706, %v1206
    %v1300 = vmul.f32 %v711, %v1206
    %v1301 = vmul.f32 %v716, %v1206
    %v1302 = vmul.f32 %v721, %v1206
    %v1303 = vmul.f32 %v726, %v1206
    %v1304 = vmul.f32 %v731, %v1206
    %v1305 = vmul.f32 %v736, %v1206
    %v1306 = vmul.f32 %v741, %v1206
    %v1307 = vmul.f32 %v746, %v1206
    %v1308 = vmul.f32 %v751, %v1206
    %v1309 = vmul.f32 %v756, %v1206
    %v1310 = vmul.f32 %v761, %v1206
    %v1311 = vmul.f32 %v766, %v1206
    %v1312 = vmul.f32 %v771, %v1206
    %v1313 = vmul.f32 %v776, %v1206
    %v1314 = vmul.f32 %v781, %v1206
    %v1315 = vmul.f32 %v786, %v1206
    %v1316 = vmul.f32 %v791, %v1206
    %v1317 = vmul.f32 %v796, %v1206
    %v1318 = vmul.f32 %v801, %v1206
    %v1319 = vmul.f32 %v806, %v1206
    %v1320 = vmul.f32 %v811, %v1206
    %v1321 = vmul.f32 %v816, %v1206
    %v1322 = vmul.f32 %v821, %v1206
    %v1323 = vmul.f32 %v826, %v1206
    %v1324 = vmul.f32 %v831, %v1206
    %v1325 = vmul.f32 %v836, %v1206
    %v1326 = vmul.f32 %v841, %v1206
    %v1327 = vmul.f32 %v846, %v1206
    %v1328 = vmul.f32 %v851, %v1206
    %v1329 = vmul.f32 %v856, %v1206
    %v1330 = vmul.f32 %v861, %v1206
    %v1331 = vmul.f32 %v866, %v1206
    %v1332 = vmul.f32 %v871, %v1206
    %v1333 = vmul.f32 %v876, %v1206
    %v1334 = vmul.f32 %v881, %v1206
    %v1335 = vmul.f32 %v886, %v1206
    %v1336 = vmul.f32 %v891, %v1206
    %v1337 = vmul.f32 %v896, %v1206
    %v1338 = vmul.f32 %v901, %v1206
    %v1339 = vmul.f32 %v906, %v1206
    %v1340 = vmul.f32 %v911, %v1206
    %v1341 = vmul.f32 %v916, %v1206
    %v1342 = vmul.f32 %v921, %v1206
    %v1343 = vmul.f32 %v926, %v1206
    %v1344 = vmul.f32 %v931, %v1206
    %v1345 = vmul.f32 %v936, %v1206
    %v1346 = vmul.f32 %v941, %v1206
    %v1347 = vmul.f32 %v946, %v1206
    %v1348 = vmul.f32 %v951, %v1206
    %v1349 = vmul.f32 %v956, %v1206
    %v1350 = vmul.f32 %v961, %v1206
    %v1351 = vmul.f32 %v966, %v1206
    %v1352 = vmul.f32 %v971, %v1206
    %v1353 = vmul.f32 %v976, %v1206
    %v1354 = vmul.f32 %v981, %v1206
    %v1355 = vmul.f32 %v986, %v1206
    %v1356 = vmul.f32 %v991, %v1206
    %v1357 = vmul.f32 %v996, %v1206
    %v1358 = vmul.f32 %v1001, %v1206
    %v1359 = vmul.f32 %v1006, %v1206
    %v1360 = vmul.f32 %v1011, %v1206
    %v1361 = vmul.f32 %v1016, %v1206
    %v1362 = vmul.f32 %v1021, %v1206
    %v1363 = vmul.f32 %v1026, %v1206
    %v1364 = vmul.f32 %v1031, %v1206
    %v1365 = vmul.f32 %v1036, %v1206
    %v1366 = vmul.f32 %v1041, %v1206
    %v1367 = vmul.f32 %v1046, %v1206
    %v1368 = vmul.f32 %v1051, %v1206
    %v1369 = vmul.f32 %v1056, %v1206
    %v1370 = vmul.f32 %v1061, %v1206
    %v1371 = vmul.f32 %v1066, %v1206
    %v1372 = vmul.f32 %v1071, %v1206
    %v1373 = vmul.f32 %v1076, %v1206
    %v1374 = vmul.f32 %v1081, %v1206
    %v1375 = vmul.f32 %v1086, %v1206
    %v1376 = vmul.f32 %v1091, %v1206
    %v1377 = vmul.f32 %v1096, %v1206
    %v1378 = vmul.f32 %v1101, %v1206
    %v1379 = vmul.f32 %v1106, %v1206
    %v1380 = vmul.f32 %v1111, %v1206
    %v1381 = vmul.f32 %v1116, %v1206
    %v1382 = vmul.f32 %v1121, %v1206
    %v1383 = vmul.f32 %v1126, %v1206
    %v1384 = vmul.f32 %v1131, %v1206
    %v1385 = vmul.f32 %v1136, %v1206
    %v1386 = vmul.f32 %v1141, %v1206
    %v1387 = vmul.f32 %v1146, %v1206
    %v1388 = vmul.f32 %v1151, %v1206
    %v1389 = vmul.f32 %v1156, %v1206
    %v1390 = vmul.f32 %v1161, %v1206
    %v1391 = vmul.f32 %v1166, %v1206
    %v1392 = vmul.f32 %v1171, %v1206
    %v1393 = vmul.f32 %v1176, %v1206
    %v1394 = vmul.f32 %v1181, %v1206
    %v1395 = vmul.f32 %v1186, %v1206
    %v1396 = vmul.f32 %v1191, %v1206
    %v1397 = vmul.f32 %v1196, %v1206
    %v1398 = vmul.f32 %v1201, %v1206
    %v1399 = vlaneseq
    %v1400 = vshrl.u32 %v1399, 7
    %v1401 = vsub.s32 1, %v1400
    %v1402 = vrot.slane %v242, %v1401
    %v1403 = vmul.f32 %v246, %v1402
    %v1404 = vmul.f32 %v251, %v1402
    %v1405 = vmul.f32 %v256, %v1402
    %v1406 = vmul.f32 %v261, %v1402
    %v1407 = vmul.f32 %v266, %v1402
    %v1408 = vmul.f32 %v271, %v1402
    %v1409 = vmul.f32 %v276, %v1402
    %v1410 = vmul.f32 %v281, %v1402
    %v1411 = vmul.f32 %v286, %v1402
    %v1412 = vmul.f32 %v291, %v1402
    %v1413 = vmul.f32 %v296, %v1402
    %v1414 = vmul.f32 %v301, %v1402
    %v1415 = vmul.f32 %v306, %v1402
    %v1416 = vmul.f32 %v311, %v1402
    %v1417 = vmul.f32 %v316, %v1402
    %v1418 = vmul.f32 %v321, %v1402
    %v1419 = vmul.f32 %v326, %v1402
    %v1420 = vmul.f32 %v331, %v1402
    %v1421 = vmul.f32 %v336, %v1402
    %v1422 = vmul.f32 %v341, %v1402
    %v1423 = vmul.f32 %v346, %v1402
    %v1424 = vmul.f32 %v351, %v1402
    %v1425 = vmul.f32 %v356, %v1402
    %v1426 = vmul.f32 %v361, %v1402
    %v1427 = vmul.f32 %v366, %v1402
    %v1428 = vmul.f32 %v371, %v1402
    %v1429 = vmul.f32 %v376, %v1402
    %v1430 = vmul.f32 %v381, %v1402
    %v1431 = vmul.f32 %v386, %v1402
    %v1432 = vmul.f32 %v391, %v1402
    %v1433 = vmul.f32 %v396, %v1402
    %v1434 = vmul.f32 %v401, %v1402
    %v1435 = vmul.f32 %v406, %v1402
    %v1436 = vmul.f32 %v411, %v1402
    %v1437 = vmul.f32 %v416, %v1402
    %v1438 = vmul.f32 %v421, %v1402
    %v1439 = vmul.f32 %v426, %v1402
    %v1440 = vmul.f32 %v431, %v1402
    %v1441 = vmul.f32 %v436, %v1402
    %v1442 = vmul.f32 %v441, %v1402
    %v1443 = vmul.f32 %v446, %v1402
    %v1444 = vmul.f32 %v451, %v1402
    %v1445 = vmul.f32 %v456, %v1402
    %v1446 = vmul.f32 %v461, %v1402
    %v1447 = vmul.f32 %v466, %v1402
    %v1448 = vmul.f32 %v471, %v1402
    %v1449 = vmul.f32 %v476, %v1402
    %v1450 = vmul.f32 %v481, %v1402
    %v1451 = vmul.f32 %v486, %v1402
    %v1452 = vmul.f32 %v491, %v1402
    %v1453 = vmul.f32 %v496, %v1402
    %v1454 = vmul.f32 %v501, %v1402
    %v1455 = vmul.f32 %v506, %v1402
    %v1456 = vmul.f32 %v511, %v1402
    %v1457 = vmul.f32 %v516, %v1402
    %v1458 = vmul.f32 %v521, %v1402
    %v1459 = vmul.f32 %v526, %v1402
    %v1460 = vmul.f32 %v531, %v1402
    %v1461 = vmul.f32 %v536, %v1402
    %v1462 = vmul.f32 %v541, %v1402
    %v1463 = vmul.f32 %v546, %v1402
    %v1464 = vmul.f32 %v551, %v1402
    %v1465 = vmul.f32 %v556, %v1402
    %v1466 = vmul.f32 %v561, %v1402
    %v1467 = vmul.f32 %v566, %v1402
    %v1468 = vmul.f32 %v571, %v1402
    %v1469 = vmul.f32 %v576, %v1402
    %v1470 = vmul.f32 %v581, %v1402
    %v1471 = vmul.f32 %v586, %v1402
    %v1472 = vmul.f32 %v591, %v1402
    %v1473 = vmul.f32 %v596, %v1402
    %v1474 = vmul.f32 %v601, %v1402
    %v1475 = vmul.f32 %v606, %v1402
    %v1476 = vmul.f32 %v611, %v1402
    %v1477 = vmul.f32 %v616, %v1402
    %v1478 = vmul.f32 %v621, %v1402
    %v1479 = vmul.f32 %v626, %v1402
    %v1480 = vmul.f32 %v631, %v1402
    %v1481 = vmul.f32 %v636, %v1402
    %v1482 = vmul.f32 %v641, %v1402
    %v1483 = vmul.f32 %v646, %v1402
    %v1484 = vmul.f32 %v651, %v1402
    %v1485 = vmul.f32 %v656, %v1402
    %v1486 = vmul.f32 %v661, %v1402
    %v1487 = vmul.f32 %v666, %v1402
    %v1488 = vmul.f32 %v671, %v1402
    %v1489 = vmul.f32 %v676, %v1402
    %v1490 = vmul.f32 %v681, %v1402
    %v1491 = vmul.f32 %v686, %v1402
    %v1492 = vmul.f32 %v691, %v1402
    %v1493 = vmul.f32 %v696, %v1402
    %v1494 = vmul.f32 %v701, %v1402
    %v1495 = vmul.f32 %v706, %v1402
    %v1496 = vmul.f32 %v711, %v1402
    %v1497 = vmul.f32 %v716, %v1402
    %v1498 = vmul.f32 %v721, %v1402
    %v1499 = vmul.f32 %v726, %v1402
    %v1500 = vmul.f32 %v731, %v1402
    %v1501 = vmul.f32 %v736, %v1402
    %v1502 = vmul.f32 %v741, %v1402
    %v1503 = vmul.f32 %v746, %v1402
    %v1504 = vmul.f32 %v751, %v1402
    %v1505 = vmul.f32 %v756, %v1402
    %v1506 = vmul.f32 %v761, %v1402
    %v1507 = vmul.f32 %v766, %v1402
    %v1508 = vmul.f32 %v771, %v1402
    %v1509 = vmul.f32 %v776, %v1402
    %v1510 = vmul.f32 %v781, %v1402
    %v1511 = vmul.f32 %v786, %v1402
    %v1512 = vmul.f32 %v791, %v1402
    %v1513 = vmul.f32 %v796, %v1402
    %v1514 = vmul.f32 %v801, %v1402
    %v1515 = vmul.f32 %v806, %v1402
    %v1516 = vmul.f32 %v811, %v1402
    %v1517 = vmul.f32 %v816, %v1402
    %v1518 = vmul.f32 %v821, %v1402
    %v1519 = vmul.f32 %v826, %v1402
    %v1520 = vmul.f32 %v831, %v1402
    %v1521 = vmul.f32 %v836, %v1402
    %v1522 = vmul.f32 %v841, %v1402
    %v1523 = vmul.f32 %v846, %v1402
    %v1524 = vmul.f32 %v851, %v1402
    %v1525 = vmul.f32 %v856, %v1402
    %v1526 = vmul.f32 %v861, %v1402
    %v1527 = vmul.f32 %v866, %v1402
    %v1528 = vmul.f32 %v871, %v1402
    %v1529 = vmul.f32 %v876, %v1402
    %v1530 = vmul.f32 %v881, %v1402
    %v1531 = vmul.f32 %v886, %v1402
    %v1532 = vmul.f32 %v891, %v1402
    %v1533 = vmul.f32 %v896, %v1402
    %v1534 = vmul.f32 %v901, %v1402
    %v1535 = vmul.f32 %v906, %v1402
    %v1536 = vmul.f32 %v911, %v1402
    %v1537 = vmul.f32 %v916, %v1402
    %v1538 = vmul.f32 %v921, %v1402
    %v1539 = vmul.f32 %v926, %v1402
    %v1540 = vmul.f32 %v931, %v1402
    %v1541 = vmul.f32 %v936, %v1402
    %v1542 = vmul.f32 %v941, %v1402
    %v1543 = vmul.f32 %v946, %v1402
    %v1544 = vmul.f32 %v951, %v1402
    %v1545 = vmul.f32 %v956, %v1402
    %v1546 = vmul.f32 %v961, %v1402
    %v1547 = vmul.f32 %v966, %v1402
    %v1548 = vmul.f32 %v971, %v1402
    %v1549 = vmul.f32 %v976, %v1402
    %v1550 = vmul.f32 %v981, %v1402
    %v1551 = vmul.f32 %v986, %v1402
    %v1552 = vmul.f32 %v991, %v1402
    %v1553 = vmul.f32 %v996, %v1402
    %v1554 = vmul.f32 %v1001, %v1402
    %v1555 = vmul.f32 %v1006, %v1402
    %v1556 = vmul.f32 %v1011, %v1402
    %v1557 = vmul.f32 %v1016, %v1402
    %v1558 = vmul.f32 %v1021, %v1402
    %v1559 = vmul.f32 %v1026, %v1402
    %v1560 = vmul.f32 %v1031, %v1402
    %v1561 = vmul.f32 %v1036, %v1402
    %v1562 = vmul.f32 %v1041, %v1402
    %v1563 = vmul.f32 %v1046, %v1402
    %v1564 = vmul.f32 %v1051, %v1402
    %v1565 = vmul.f32 %v1056, %v1402
    %v1566 = vmul.f32 %v1061, %v1402
    %v1567 = vmul.f32 %v1066, %v1402
    %v1568 = vmul.f32 %v1071, %v1402
    %v1569 = vmul.f32 %v1076, %v1402
    %v1570 = vmul.f32 %v1081, %v1402
    %v1571 = vmul.f32 %v1086, %v1402
    %v1572 = vmul.f32 %v1091, %v1402
    %v1573 = vmul.f32 %v1096, %v1402
    %v1574 = vmul.f32 %v1101, %v1402
    %v1575 = vmul.f32 %v1106, %v1402
    %v1576 = vmul.f32 %v1111, %v1402
    %v1577 = vmul.f32 %v1116, %v1402
    %v1578 = vmul.f32 %v1121, %v1402
    %v1579 = vmul.f32 %v1126, %v1402
    %v1580 = vmul.f32 %v1131, %v1402
    %v1581 = vmul.f32 %v1136, %v1402
    %v1582 = vmul.f32 %v1141, %v1402
    %v1583 = vmul.f32 %v1146, %v1402
    %v1584 = vmul.f32 %v1151, %v1402
    %v1585 = vmul.f32 %v1156, %v1402
    %v1586 = vmul.f32 %v1161, %v1402
    %v1587 = vmul.f32 %v1166, %v1402
    %v1588 = vmul.f32 %v1171, %v1402
    %v1589 = vmul.f32 %v1176, %v1402
    %v1590 = vmul.f32 %v1181, %v1402
    %v1591 = vmul.f32 %v1186, %v1402
    %v1592 = vmul.f32 %v1191, %v1402
    %v1593 = vmul.f32 %v1196, %v1402
    %v1594 = vmul.f32 %v1201, %v1402
    %vm1787 = vcmask 1046528
    %v1788 = vrot.slane %v1403, 1
    %v1789 = vrot.slane %v1404, 1
    %v1790 = vsel %vm1787, %v1788, %v1789
    %v1791 = vrot.slane %v1405, 1
    %v1792 = vsel %vm1787, %v1789, %v1791
    %v1793 = vrot.slane %v1406, 1
    %v1794 = vsel %vm1787, %v1791, %v1793
    %v1795 = vrot.slane %v1407, 1
    %v1796 = vrot.slane %v1408, 1
    %v1797 = vsel %vm1787, %v1795, %v1796
    %v1798 = vrot.slane %v1409, 1
    %v1799 = vsel %vm1787, %v1796, %v1798
    %v1800 = vrot.slane %v1410, 1
    %v1801 = vsel %vm1787, %v1798, %v1800
    %v1802 = vrot.slane %v1411, 1
    %v1803 = vrot.slane %v1412, 1
    %v1804 = vsel %vm1787, %v1802, %v1803
    %v1805 = vrot.slane %v1413, 1
    %v1806 = vsel %vm1787, %v1803, %v1805
    %v1807 = vrot.slane %v1414, 1
    %v1808 = vsel %vm1787, %v1805, %v1807
    %v1809 = vrot.slane %v1415, 1
    %v1810 = vrot.slane %v1416, 1
    %v1811 = vsel %vm1787, %v1809, %v1810
    %v1812 = vrot.slane %v1417, 1
    %v1813 = vsel %vm1787, %v1810, %v1812
    %v1814 = vrot.slane %v1418, 1
    %v1815 = vsel %vm1787, %v1812, %v1814
    %v1816 = vrot.slane %v1419, 1
    %v1817 = vrot.slane %v1420, 1
    %v1818 = vsel %vm1787, %v1816, %v1817
    %v1819 = vrot.slane %v1421, 1
    %v1820 = vsel %vm1787, %v1817, %v1819
    %v1821 = vrot.slane %v1422, 1
    %v1822 = vsel %vm1787, %v1819, %v1821
    %v1823 = vrot.slane %v1423, 1
    %v1824 = vrot.slane %v1424, 1
    %v1825 = vsel %vm1787, %v1823, %v1824
    %v1826 = vrot.slane %v1425, 1
    %v1827 = vsel %vm1787, %v1824, %v1826
    %v1828 = vrot.slane %v1426, 1
    %v1829 = vsel %vm1787, %v1826, %v1828
    %v1830 = vrot.slane %v1427, 1
    %v1831 = vrot.slane %v1428, 1
    %v1832 = vsel %vm1787, %v1830, %v1831
    %v1833 = vrot.slane %v1429, 1
    %v1834 = vsel %vm1787, %v1831, %v1833
    %v1835 = vrot.slane %v1430, 1
    %v1836 = vsel %vm1787, %v1833, %v1835
    %v1837 = vrot.slane %v1431, 1
    %v1838 = vrot.slane %v1432, 1
    %v1839 = vsel %vm1787, %v1837, %v1838
    %v1840 = vrot.slane %v1433, 1
    %v1841 = vsel %vm1787, %v1838, %v1840
    %v1842 = vrot.slane %v1434, 1
    %v1843 = vsel %vm1787, %v1840, %v1842
    %v1844 = vrot.slane %v1435, 1
    %v1845 = vrot.slane %v1436, 1
    %v1846 = vsel %vm1787, %v1844, %v1845
    %v1847 = vrot.slane %v1437, 1
    %v1848 = vsel %vm1787, %v1845, %v1847
    %v1849 = vrot.slane %v1438, 1
    %v1850 = vsel %vm1787, %v1847, %v1849
    %v1851 = vrot.slane %v1439, 1
    %v1852 = vrot.slane %v1440, 1
    %v1853 = vsel %vm1787, %v1851, %v1852
    %v1854 = vrot.slane %v1441, 1
    %v1855 = vsel %vm1787, %v1852, %v1854
    %v1856 = vrot.slane %v1442, 1
    %v1857 = vsel %vm1787, %v1854, %v1856
    %v1858 = vrot.slane %v1443, 1
    %v1859 = vrot.slane %v1444, 1
    %v1860 = vsel %vm1787, %v1858, %v1859
    %v1861 = vrot.slane %v1445, 1
    %v1862 = vsel %vm1787, %v1859, %v1861
    %v1863 = vrot.slane %v1446, 1
    %v1864 = vsel %vm1787, %v1861, %v1863
    %v1865 = vrot.slane %v1447, 1
    %v1866 = vrot.slane %v1448, 1
    %v1867 = vsel %vm1787, %v1865, %v1866
    %v1868 = vrot.slane %v1449, 1
    %v1869 = vsel %vm1787, %v1866, %v1868
    %v1870 = vrot.slane %v1450, 1
    %v1871 = vsel %vm1787, %v1868, %v1870
    %v1872 = vrot.slane %v1451, 1
    %v1873 = vrot.slane %v1452, 1
    %v1874 = vsel %vm1787, %v1872, %v1873
    %v1875 = vrot.slane %v1453, 1
    %v1876 = vsel %vm1787, %v1873, %v1875
    %v1877 = vrot.slane %v1454, 1
    %v1878 = vsel %vm1787, %v1875, %v1877
    %v1879 = vrot.slane %v1455, 1
    %v1880 = vrot.slane %v1456, 1
    %v1881 = vsel %vm1787, %v1879, %v1880
    %v1882 = vrot.slane %v1457, 1
    %v1883 = vsel %vm1787, %v1880, %v1882
    %v1884 = vrot.slane %v1458, 1
    %v1885 = vsel %vm1787, %v1882, %v1884
    %v1886 = vrot.slane %v1459, 1
    %v1887 = vrot.slane %v1460, 1
    %v1888 = vsel %vm1787, %v1886, %v1887
    %v1889 = vrot.slane %v1461, 1
    %v1890 = vsel %vm1787, %v1887, %v1889
    %v1891 = vrot.slane %v1462, 1
    %v1892 = vsel %vm1787, %v1889, %v1891
    %v1893 = vrot.slane %v1463, 1
    %v1894 = vrot.slane %v1464, 1
    %v1895 = vsel %vm1787, %v1893, %v1894
    %v1896 = vrot.slane %v1465, 1
    %v1897 = vsel %vm1787, %v1894, %v1896
    %v1898 = vrot.slane %v1466, 1
    %v1899 = vsel %vm1787, %v1896, %v1898
    %v1900 = vrot.slane %v1467, 1
    %v1901 = vrot.slane %v1468, 1
    %v1902 = vsel %vm1787, %v1900, %v1901
    %v1903 = vrot.slane %v1469, 1
    %v1904 = vsel %vm1787, %v1901, %v1903
    %v1905 = vrot.slane %v1470, 1
    %v1906 = vsel %vm1787, %v1903, %v1905
    %v1907 = vrot.slane %v1471, 1
    %v1908 = vrot.slane %v1472, 1
    %v1909 = vsel %vm1787, %v1907, %v1908
    %v1910 = vrot.slane %v1473, 1
    %v1911 = vsel %vm1787, %v1908, %v1910
    %v1912 = vrot.slane %v1474, 1
    %v1913 = vsel %vm1787, %v1910, %v1912
    %v1914 = vrot.slane %v1475, 1
    %v1915 = vrot.slane %v1476, 1
    %v1916 = vsel %vm1787, %v1914, %v1915
    %v1917 = vrot.slane %v1477, 1
    %v1918 = vsel %vm1787, %v1915, %v1917
    %v1919 = vrot.slane %v1478, 1
    %v1920 = vsel %vm1787, %v1917, %v1919
    %v1921 = vrot.slane %v1479, 1
    %v1922 = vrot.slane %v1480, 1
    %v1923 = vsel %vm1787, %v1921, %v1922
    %v1924 = vrot.slane %v1481, 1
    %v1925 = vsel %vm1787, %v1922, %v1924
    %v1926 = vrot.slane %v1482, 1
    %v1927 = vsel %vm1787, %v1924, %v1926
    %v1928 = vrot.slane %v1483, 1
    %v1929 = vrot.slane %v1484, 1
    %v1930 = vsel %vm1787, %v1928, %v1929
    %v1931 = vrot.slane %v1485, 1
    %v1932 = vsel %vm1787, %v1929, %v1931
    %v1933 = vrot.slane %v1486, 1
    %v1934 = vsel %vm1787, %v1931, %v1933
    %v1935 = vrot.slane %v1487, 1
    %v1936 = vrot.slane %v1488, 1
    %v1937 = vsel %vm1787, %v1935, %v1936
    %v1938 = vrot.slane %v1489, 1
    %v1939 = vsel %vm1787, %v1936, %v1938
    %v1940 = vrot.slane %v1490, 1
    %v1941 = vsel %vm1787, %v1938, %v1940
    %v1942 = vrot.slane %v1491, 1
    %v1943 = vrot.slane %v1492, 1
    %v1944 = vsel %vm1787, %v1942, %v1943
    %v1945 = vrot.slane %v1493, 1
    %v1946 = vsel %vm1787, %v1943, %v1945
    %v1947 = vrot.slane %v1494, 1
    %v1948 = vsel %vm1787, %v1945, %v1947
    %v1949 = vrot.slane %v1495, 1
    %v1950 = vrot.slane %v1496, 1
    %v1951 = vsel %vm1787, %v1949, %v1950
    %v1952 = vrot.slane %v1497, 1
    %v1953 = vsel %vm1787, %v1950, %v1952
    %v1954 = vrot.slane %v1498, 1
    %v1955 = vsel %vm1787, %v1952, %v1954
    %v1956 = vrot.slane %v1499, 1
    %v1957 = vrot.slane %v1500, 1
    %v1958 = vsel %vm1787, %v1956, %v1957
    %v1959 = vrot.slane %v1501, 1
    %v1960 = vsel %vm1787, %v1957, %v1959
    %v1961 = vrot.slane %v1502, 1
    %v1962 = vsel %vm1787, %v1959, %v1961
    %v1963 = vrot.slane %v1503, 1
    %v1964 = vrot.slane %v1504, 1
    %v1965 = vsel %vm1787, %v1963, %v1964
    %v1966 = vrot.slane %v1505, 1
    %v1967 = vsel %vm1787, %v1964, %v1966
    %v1968 = vrot.slane %v1506, 1
    %v1969 = vsel %vm1787, %v1966, %v1968
    %v1970 = vrot.slane %v1507, 1
    %v1971 = vrot.slane %v1508, 1
    %v1972 = vsel %vm1787, %v1970, %v1971
    %v1973 = vrot.slane %v1509, 1
    %v1974 = vsel %vm1787, %v1971, %v1973
    %v1975 = vrot.slane %v1510, 1
    %v1976 = vsel %vm1787, %v1973, %v1975
    %v1977 = vrot.slane %v1511, 1
    %v1978 = vrot.slane %v1512, 1
    %v1979 = vsel %vm1787, %v1977, %v1978
    %v1980 = vrot.slane %v1513, 1
    %v1981 = vsel %vm1787, %v1978, %v1980
    %v1982 = vrot.slane %v1514, 1
    %v1983 = vsel %vm1787, %v1980, %v1982
    %v1984 = vrot.slane %v1515, 1
    %v1985 = vrot.slane %v1516, 1
    %v1986 = vsel %vm1787, %v1984, %v1985
    %v1987 = vrot.slane %v1517, 1
    %v1988 = vsel %vm1787, %v1985, %v1987
    %v1989 = vrot.slane %v1518, 1
    %v1990 = vsel %vm1787, %v1987, %v1989
    %v1991 = vrot.slane %v1519, 1
    %v1992 = vrot.slane %v1520, 1
    %v1993 = vsel %vm1787, %v1991, %v1992
    %v1994 = vrot.slane %v1521, 1
    %v1995 = vsel %vm1787, %v1992, %v1994
    %v1996 = vrot.slane %v1522, 1
    %v1997 = vsel %vm1787, %v1994, %v1996
    %v1998 = vrot.slane %v1523, 1
    %v1999 = vrot.slane %v1524, 1
    %v2000 = vsel %vm1787, %v1998, %v1999
    %v2001 = vrot.slane %v1525, 1
    %v2002 = vsel %vm1787, %v1999, %v2001
    %v2003 = vrot.slane %v1526, 1
    %v2004 = vsel %vm1787, %v2001, %v2003
    %v2005 = vrot.slane %v1527, 1
    %v2006 = vrot.slane %v1528, 1
    %v2007 = vsel %vm1787, %v2005, %v2006
    %v2008 = vrot.slane %v1529, 1
    %v2009 = vsel %vm1787, %v2006, %v2008
    %v2010 = vrot.slane %v1530, 1
    %v2011 = vsel %vm1787, %v2008, %v2010
    %v2012 = vrot.slane %v1531, 1
    %v2013 = vrot.slane %v1532, 1
    %v2014 = vsel %vm1787, %v2012, %v2013
    %v2015 = vrot.slane %v1533, 1
    %v2016 = vsel %vm1787, %v2013, %v2015
    %v2017 = vrot.slane %v1534, 1
    %v2018 = vsel %vm1787, %v2015, %v2017
    %v2019 = vrot.slane %v1535, 1
    %v2020 = vrot.slane %v1536, 1
    %v2021 = vsel %vm1787, %v2019, %v2020
    %v2022 = vrot.slane %v1537, 1
    %v2023 = vsel %vm1787, %v2020, %v2022
    %v2024 = vrot.slane %v1538, 1
    %v2025 = vsel %vm1787, %v2022, %v2024
    %v2026 = vrot.slane %v1539, 1
    %v2027 = vrot.slane %v1540, 1
    %v2028 = vsel %vm1787, %v2026, %v2027
    %v2029 = vrot.slane %v1541, 1
    %v2030 = vsel %vm1787, %v2027, %v2029
    %v2031 = vrot.slane %v1542, 1
    %v2032 = vsel %vm1787, %v2029, %v2031
    %v2033 = vrot.slane %v1543, 1
    %v2034 = vrot.slane %v1544, 1
    %v2035 = vsel %vm1787, %v2033, %v2034
    %v2036 = vrot.slane %v1545, 1
    %v2037 = vsel %vm1787, %v2034, %v2036
    %v2038 = vrot.slane %v1546, 1
    %v2039 = vsel %vm1787, %v2036, %v2038
    %v2040 = vrot.slane %v1547, 1
    %v2041 = vrot.slane %v1548, 1
    %v2042 = vsel %vm1787, %v2040, %v2041
    %v2043 = vrot.slane %v1549, 1
    %v2044 = vsel %vm1787, %v2041, %v2043
    %v2045 = vrot.slane %v1550, 1
    %v2046 = vsel %vm1787, %v2043, %v2045
    %v2047 = vrot.slane %v1551, 1
    %v2048 = vrot.slane %v1552, 1
    %v2049 = vsel %vm1787, %v2047, %v2048
    %v2050 = vrot.slane %v1553, 1
    %v2051 = vsel %vm1787, %v2048, %v2050
    %v2052 = vrot.slane %v1554, 1
    %v2053 = vsel %vm1787, %v2050, %v2052
    %v2054 = vrot.slane %v1555, 1
    %v2055 = vrot.slane %v1556, 1
    %v2056 = vsel %vm1787, %v2054, %v2055
    %v2057 = vrot.slane %v1557, 1
    %v2058 = vsel %vm1787, %v2055, %v2057
    %v2059 = vrot.slane %v1558, 1
    %v2060 = vsel %vm1787, %v2057, %v2059
    %v2061 = vrot.slane %v1559, 1
    %v2062 = vrot.slane %v1560, 1
    %v2063 = vsel %vm1787, %v2061, %v2062
    %v2064 = vrot.slane %v1561, 1
    %v2065 = vsel %vm1787, %v2062, %v2064
    %v2066 = vrot.slane %v1562, 1
    %v2067 = vsel %vm1787, %v2064, %v2066
    %v2068 = vrot.slane %v1563, 1
    %v2069 = vrot.slane %v1564, 1
    %v2070 = vsel %vm1787, %v2068, %v2069
    %v2071 = vrot.slane %v1565, 1
    %v2072 = vsel %vm1787, %v2069, %v2071
    %v2073 = vrot.slane %v1566, 1
    %v2074 = vsel %vm1787, %v2071, %v2073
    %v2075 = vrot.slane %v1567, 1
    %v2076 = vrot.slane %v1568, 1
    %v2077 = vsel %vm1787, %v2075, %v2076
    %v2078 = vrot.slane %v1569, 1
    %v2079 = vsel %vm1787, %v2076, %v2078
    %v2080 = vrot.slane %v1570, 1
    %v2081 = vsel %vm1787, %v2078, %v2080
    %v2082 = vrot.slane %v1571, 1
    %v2083 = vrot.slane %v1572, 1
    %v2084 = vsel %vm1787, %v2082, %v2083
    %v2085 = vrot.slane %v1573, 1
    %v2086 = vsel %vm1787, %v2083, %v2085
    %v2087 = vrot.slane %v1574, 1
    %v2088 = vsel %vm1787, %v2085, %v2087
    %v2089 = vrot.slane %v1575, 1
    %v2090 = vrot.slane %v1576, 1
    %v2091 = vsel %vm1787, %v2089, %v2090
    %v2092 = vrot.slane %v1577, 1
    %v2093 = vsel %vm1787, %v2090, %v2092
    %v2094 = vrot.slane %v1578, 1
    %v2095 = vsel %vm1787, %v2092, %v2094
    %v2096 = vrot.slane %v1579, 1
    %v2097 = vrot.slane %v1580, 1
    %v2098 = vsel %vm1787, %v2096, %v2097
    %v2099 = vrot.slane %v1581, 1
    %v2100 = vsel %vm1787, %v2097, %v2099
    %v2101 = vrot.slane %v1582, 1
    %v2102 = vsel %vm1787, %v2099, %v2101
    %v2103 = vrot.slane %v1583, 1
    %v2104 = vrot.slane %v1584, 1
    %v2105 = vsel %vm1787, %v2103, %v2104
    %v2106 = vrot.slane %v1585, 1
    %v2107 = vsel %vm1787, %v2104, %v2106
    %v2108 = vrot.slane %v1586, 1
    %v2109 = vsel %vm1787, %v2106, %v2108
    %v2110 = vrot.slane %v1587, 1
    %v2111 = vrot.slane %v1588, 1
    %v2112 = vsel %vm1787, %v2110, %v2111
    %v2113 = vrot.slane %v1589, 1
    %v2114 = vsel %vm1787, %v2111, %v2113
    %v2115 = vrot.slane %v1590, 1
    %v2116 = vsel %vm1787, %v2113, %v2115
    %v2117 = vrot.slane %v1591, 1
    %v2118 = vrot.slane %v1592, 1
    %v2119 = vsel %vm1787, %v2117, %v2118
    %v2120 = vrot.slane %v1593, 1
    %v2121 = vsel %vm1787, %v2118, %v2120
    %v2122 = vrot.slane %v1594, 1
    %v2123 = vsel %vm1787, %v2120, %v2122
    %v2316 = vadd.f32 %v1207, %v1790
    %v2317 = vadd.f32 %v1208, %v1792
    %v2318 = vadd.f32 %v1209, %v1794
    %v2319 = vadd.f32 %v1210, %v1793
    %v2320 = vadd.f32 %v1211, %v1797
    %v2321 = vadd.f32 %v1212, %v1799
    %v2322 = vadd.f32 %v1213, %v1801
    %v2323 = vadd.f32 %v1214, %v1800
    %v2324 = vadd.f32 %v1215, %v1804
    %v2325 = vadd.f32 %v1216, %v1806
    %v2326 = vadd.f32 %v1217, %v1808
    %v2327 = vadd.f32 %v1218, %v1807
    %v2328 = vadd.f32 %v1219, %v1811
    %v2329 = vadd.f32 %v1220, %v1813
    %v2330 = vadd.f32 %v1221, %v1815
    %v2331 = vadd.f32 %v1222, %v1814
    %v2332 = vadd.f32 %v1223, %v1818
    %v2333 = vadd.f32 %v1224, %v1820
    %v2334 = vadd.f32 %v1225, %v1822
    %v2335 = vadd.f32 %v1226, %v1821
    %v2336 = vadd.f32 %v1227, %v1825
    %v2337 = vadd.f32 %v1228, %v1827
    %v2338 = vadd.f32 %v1229, %v1829
    %v2339 = vadd.f32 %v1230, %v1828
    %v2340 = vadd.f32 %v1231, %v1832
    %v2341 = vadd.f32 %v1232, %v1834
    %v2342 = vadd.f32 %v1233, %v1836
    %v2343 = vadd.f32 %v1234, %v1835
    %v2344 = vadd.f32 %v1235, %v1839
    %v2345 = vadd.f32 %v1236, %v1841
    %v2346 = vadd.f32 %v1237, %v1843
    %v2347 = vadd.f32 %v1238, %v1842
    %v2348 = vadd.f32 %v1239, %v1846
    %v2349 = vadd.f32 %v1240, %v1848
    %v2350 = vadd.f32 %v1241, %v1850
    %v2351 = vadd.f32 %v1242, %v1849
    %v2352 = vadd.f32 %v1243, %v1853
    %v2353 = vadd.f32 %v1244, %v1855
    %v2354 = vadd.f32 %v1245, %v1857
    %v2355 = vadd.f32 %v1246, %v1856
    %v2356 = vadd.f32 %v1247, %v1860
    %v2357 = vadd.f32 %v1248, %v1862
    %v2358 = vadd.f32 %v1249, %v1864
    %v2359 = vadd.f32 %v1250, %v1863
    %v2360 = vadd.f32 %v1251, %v1867
    %v2361 = vadd.f32 %v1252, %v1869
    %v2362 = vadd.f32 %v1253, %v1871
    %v2363 = vadd.f32 %v1254, %v1870
    %v2364 = vadd.f32 %v1255, %v1874
    %v2365 = vadd.f32 %v1256, %v1876
    %v2366 = vadd.f32 %v1257, %v1878
    %v2367 = vadd.f32 %v1258, %v1877
    %v2368 = vadd.f32 %v1259, %v1881
    %v2369 = vadd.f32 %v1260, %v1883
    %v2370 = vadd.f32 %v1261, %v1885
    %v2371 = vadd.f32 %v1262, %v1884
    %v2372 = vadd.f32 %v1263, %v1888
    %v2373 = vadd.f32 %v1264, %v1890
    %v2374 = vadd.f32 %v1265, %v1892
    %v2375 = vadd.f32 %v1266, %v1891
    %v2376 = vadd.f32 %v1267, %v1895
    %v2377 = vadd.f32 %v1268, %v1897
    %v2378 = vadd.f32 %v1269, %v1899
    %v2379 = vadd.f32 %v1270, %v1898
    %v2380 = vadd.f32 %v1271, %v1902
    %v2381 = vadd.f32 %v1272, %v1904
    %v2382 = vadd.f32 %v1273, %v1906
    %v2383 = vadd.f32 %v1274, %v1905
    %v2384 = vadd.f32 %v1275, %v1909
    %v2385 = vadd.f32 %v1276, %v1911
    %v2386 = vadd.f32 %v1277, %v1913
    %v2387 = vadd.f32 %v1278, %v1912
    %v2388 = vadd.f32 %v1279, %v1916
    %v2389 = vadd.f32 %v1280, %v1918
    %v2390 = vadd.f32 %v1281, %v1920
    %v2391 = vadd.f32 %v1282, %v1919
    %v2392 = vadd.f32 %v1283, %v1923
    %v2393 = vadd.f32 %v1284, %v1925
    %v2394 = vadd.f32 %v1285, %v1927
    %v2395 = vadd.f32 %v1286, %v1926
    %v2396 = vadd.f32 %v1287, %v1930
    %v2397 = vadd.f32 %v1288, %v1932
    %v2398 = vadd.f32 %v1289, %v1934
    %v2399 = vadd.f32 %v1290, %v1933
    %v2400 = vadd.f32 %v1291, %v1937
    %v2401 = vadd.f32 %v1292, %v1939
    %v2402 = vadd.f32 %v1293, %v1941
    %v2403 = vadd.f32 %v1294, %v1940
    %v2404 = vadd.f32 %v1295, %v1944
    %v2405 = vadd.f32 %v1296, %v1946
    %v2406 = vadd.f32 %v1297, %v1948
    %v2407 = vadd.f32 %v1298, %v1947
    %v2408 = vadd.f32 %v1299, %v1951
    %v2409 = vadd.f32 %v1300, %v1953
    %v2410 = vadd.f32 %v1301, %v1955
    %v2411 = vadd.f32 %v1302, %v1954
    %v2412 = vadd.f32 %v1303, %v1958
    %v2413 = vadd.f32 %v1304, %v1960
    %v2414 = vadd.f32 %v1305, %v1962
    %v2415 = vadd.f32 %v1306, %v1961
    %v2416 = vadd.f32 %v1307, %v1965
    %v2417 = vadd.f32 %v1308, %v1967
    %v2418 = vadd.f32 %v1309, %v1969
    %v2419 = vadd.f32 %v1310, %v1968
    %v2420 = vadd.f32 %v1311, %v1972
    %v2421 = vadd.f32 %v1312, %v1974
    %v2422 = vadd.f32 %v1313, %v1976
    %v2423 = vadd.f32 %v1314, %v1975
    %v2424 = vadd.f32 %v1315, %v1979
    %v2425 = vadd.f32 %v1316, %v1981
    %v2426 = vadd.f32 %v1317, %v1983
    %v2427 = vadd.f32 %v1318, %v1982
    %v2428 = vadd.f32 %v1319, %v1986
    %v2429 = vadd.f32 %v1320, %v1988
    %v2430 = vadd.f32 %v1321, %v1990
    %v2431 = vadd.f32 %v1322, %v1989
    %v2432 = vadd.f32 %v1323, %v1993
    %v2433 = vadd.f32 %v1324, %v1995
    %v2434 = vadd.f32 %v1325, %v1997
    %v2435 = vadd.f32 %v1326, %v1996
    %v2436 = vadd.f32 %v1327, %v2000
    %v2437 = vadd.f32 %v1328, %v2002
    %v2438 = vadd.f32 %v1329, %v2004
    %v2439 = vadd.f32 %v1330, %v2003
    %v2440 = vadd.f32 %v1331, %v2007
    %v2441 = vadd.f32 %v1332, %v2009
    %v2442 = vadd.f32 %v1333, %v2011
    %v2443 = vadd.f32 %v1334, %v2010
    %v2444 = vadd.f32 %v1335, %v2014
    %v2445 = vadd.f32 %v1336, %v2016
    %v2446 = vadd.f32 %v1337, %v2018
    %v2447 = vadd.f32 %v1338, %v2017
    %v2448 = vadd.f32 %v1339, %v2021
    %v2449 = vadd.f32 %v1340, %v2023
    %v2450 = vadd.f32 %v1341, %v2025
    %v2451 = vadd.f32 %v1342, %v2024
    %v2452 = vadd.f32 %v1343, %v2028
    %v2453 = vadd.f32 %v1344, %v2030
    %v2454 = vadd.f32 %v1345, %v2032
    %v2455 = vadd.f32 %v1346, %v2031
    %v2456 = vadd.f32 %v1347, %v2035
    %v2457 = vadd.f32 %v1348, %v2037
    %v2458 = vadd.f32 %v1349, %v2039
    %v2459 = vadd.f32 %v1350, %v2038
    %v2460 = vadd.f32 %v1351, %v2042
    %v2461 = vadd.f32 %v1352, %v2044
    %v2462 = vadd.f32 %v1353, %v2046
    %v2463 = vadd.f32 %v1354, %v2045
    %v2464 = vadd.f32 %v1355, %v2049
    %v2465 = vadd.f32 %v1356, %v2051
    %v2466 = vadd.f32 %v1357, %v2053
    %v2467 = vadd.f32 %v1358, %v2052
    %v2468 = vadd.f32 %v1359, %v2056
    %v2469 = vadd.f32 %v1360, %v2058
    %v2470 = vadd.f32 %v1361, %v2060
    %v2471 = vadd.f32 %v1362, %v2059
    %v2472 = vadd.f32 %v1363, %v2063
    %v2473 = vadd.f32 %v1364, %v2065
    %v2474 = vadd.f32 %v1365, %v2067
    %v2475 = vadd.f32 %v1366, %v2066
    %v2476 = vadd.f32 %v1367, %v2070
    %v2477 = vadd.f32 %v1368, %v2072
    %v2478 = vadd.f32 %v1369, %v2074
    %v2479 = vadd.f32 %v1370, %v2073
    %v2480 = vadd.f32 %v1371, %v2077
    %v2481 = vadd.f32 %v1372, %v2079
    %v2482 = vadd.f32 %v1373, %v2081
    %v2483 = vadd.f32 %v1374, %v2080
    %v2484 = vadd.f32 %v1375, %v2084
    %v2485 = vadd.f32 %v1376, %v2086
    %v2486 = vadd.f32 %v1377, %v2088
    %v2487 = vadd.f32 %v1378, %v2087
    %v2488 = vadd.f32 %v1379, %v2091
    %v2489 = vadd.f32 %v1380, %v2093
    %v2490 = vadd.f32 %v1381, %v2095
    %v2491 = vadd.f32 %v1382, %v2094
    %v2492 = vadd.f32 %v1383, %v2098
    %v2493 = vadd.f32 %v1384, %v2100
    %v2494 = vadd.f32 %v1385, %v2102
    %v2495 = vadd.f32 %v1386, %v2101
    %v2496 = vadd.f32 %v1387, %v2105
    %v2497 = vadd.f32 %v1388, %v2107
    %v2498 = vadd.f32 %v1389, %v2109
    %v2499 = vadd.f32 %v1390, %v2108
    %v2500 = vadd.f32 %v1391, %v2112
    %v2501 = vadd.f32 %v1392, %v2114
    %v2502 = vadd.f32 %v1393, %v2116
    %v2503 = vadd.f32 %v1394, %v2115
    %v2504 = vadd.f32 %v1395, %v2119
    %v2505 = vadd.f32 %v1396, %v2121
    %v2506 = vadd.f32 %v1397, %v2123
    %v2507 = vadd.f32 %v1398, %v2122
    %2509 = vset.pattern.permute.xlu0 0
    %2510 = vperm.xlu0 %2509, %v138
    %v2511 = vpop.permute.xlu0 %2510
    %2514 = vset.pattern.permute.xlu0 0
    %2515 = vperm.xlu0 %2514, %v139
    %v2516 = vpop.permute.xlu0 %2515
    %2519 = vset.pattern.permute.xlu0 0
    %2520 = vperm.xlu0 %2519, %v140
    %v2521 = vpop.permute.xlu0 %2520
    %2524 = vset.pattern.permute.xlu0 0
    %2525 = vperm.xlu0 %2524, %v141
    %v2526 = vpop.permute.xlu0 %2525
    %2529 = vset.pattern.permute.xlu0 0
    %2530 = vperm.xlu0 %2529, %v238
    %v2531 = vpop.permute.xlu0 %2530
    %2534 = vset.pattern.permute.xlu0 0
    %2535 = vperm.xlu0 %2534, %v239
    %v2536 = vpop.permute.xlu0 %2535
    %2539 = vset.pattern.permute.xlu0 0
    %2540 = vperm.xlu0 %2539, %v240
    %v2541 = vpop.permute.xlu0 %2540
    %2544 = vset.pattern.permute.xlu0 0
    %2545 = vperm.xlu0 %2544, %v241
    %v2546 = vpop.permute.xlu0 %2545
    %v2548 = vlaneseq
    %v2549 = vshrl.u32 %v2548, 7
    %v2550 = vsub.s32 2, %v2549
    %v2551 = vrot.slane %v242, %v2550
    %v2552 = vmul.f32 %v266, %v2551
    %v2553 = vmul.f32 %v271, %v2551
    %v2554 = vmul.f32 %v276, %v2551
    %v2555 = vmul.f32 %v281, %v2551
    %v2556 = vmul.f32 %v286, %v2551
    %v2557 = vmul.f32 %v291, %v2551
    %v2558 = vmul.f32 %v296, %v2551
    %v2559 = vmul.f32 %v301, %v2551
    %v2560 = vmul.f32 %v306, %v2551
    %v2561 = vmul.f32 %v311, %v2551
    %v2562 = vmul.f32 %v316, %v2551
    %v2563 = vmul.f32 %v321, %v2551
    %v2564 = vmul.f32 %v326, %v2551
    %v2565 = vmul.f32 %v331, %v2551
    %v2566 = vmul.f32 %v336, %v2551
    %v2567 = vmul.f32 %v341, %v2551
    %v2568 = vmul.f32 %v346, %v2551
    %v2569 = vmul.f32 %v351, %v2551
    %v2570 = vmul.f32 %v356, %v2551
    %v2571 = vmul.f32 %v361, %v2551
    %v2572 = vmul.f32 %v366, %v2551
    %v2573 = vmul.f32 %v371, %v2551
    %v2574 = vmul.f32 %v376, %v2551
    %v2575 = vmul.f32 %v381, %v2551
    %v2576 = vmul.f32 %v386, %v2551
    %v2577 = vmul.f32 %v391, %v2551
    %v2578 = vmul.f32 %v396, %v2551
    %v2579 = vmul.f32 %v401, %v2551
    %v2580 = vmul.f32 %v406, %v2551
    %v2581 = vmul.f32 %v411, %v2551
    %v2582 = vmul.f32 %v416, %v2551
    %v2583 = vmul.f32 %v421, %v2551
    %v2584 = vmul.f32 %v426, %v2551
    %v2585 = vmul.f32 %v431, %v2551
    %v2586 = vmul.f32 %v436, %v2551
    %v2587 = vmul.f32 %v441, %v2551
    %v2588 = vmul.f32 %v446, %v2551
    %v2589 = vmul.f32 %v451, %v2551
    %v2590 = vmul.f32 %v456, %v2551
    %v2591 = vmul.f32 %v461, %v2551
    %v2592 = vmul.f32 %v466, %v2551
    %v2593 = vmul.f32 %v471, %v2551
    %v2594 = vmul.f32 %v476, %v2551
    %v2595 = vmul.f32 %v481, %v2551
    %v2596 = vmul.f32 %v486, %v2551
    %v2597 = vmul.f32 %v491, %v2551
    %v2598 = vmul.f32 %v496, %v2551
    %v2599 = vmul.f32 %v501, %v2551
    %v2600 = vmul.f32 %v506, %v2551
    %v2601 = vmul.f32 %v511, %v2551
    %v2602 = vmul.f32 %v516, %v2551
    %v2603 = vmul.f32 %v521, %v2551
    %v2604 = vmul.f32 %v526, %v2551
    %v2605 = vmul.f32 %v531, %v2551
    %v2606 = vmul.f32 %v536, %v2551
    %v2607 = vmul.f32 %v541, %v2551
    %v2608 = vmul.f32 %v546, %v2551
    %v2609 = vmul.f32 %v551, %v2551
    %v2610 = vmul.f32 %v556, %v2551
    %v2611 = vmul.f32 %v561, %v2551
    %v2612 = vmul.f32 %v566, %v2551
    %v2613 = vmul.f32 %v571, %v2551
    %v2614 = vmul.f32 %v576, %v2551
    %v2615 = vmul.f32 %v581, %v2551
    %v2616 = vmul.f32 %v586, %v2551
    %v2617 = vmul.f32 %v591, %v2551
    %v2618 = vmul.f32 %v596, %v2551
    %v2619 = vmul.f32 %v601, %v2551
    %v2620 = vmul.f32 %v606, %v2551
    %v2621 = vmul.f32 %v611, %v2551
    %v2622 = vmul.f32 %v616, %v2551
    %v2623 = vmul.f32 %v621, %v2551
    %v2624 = vmul.f32 %v626, %v2551
    %v2625 = vmul.f32 %v631, %v2551
    %v2626 = vmul.f32 %v636, %v2551
    %v2627 = vmul.f32 %v641, %v2551
    %v2628 = vmul.f32 %v646, %v2551
    %v2629 = vmul.f32 %v651, %v2551
    %v2630 = vmul.f32 %v656, %v2551
    %v2631 = vmul.f32 %v661, %v2551
    %v2632 = vmul.f32 %v666, %v2551
    %v2633 = vmul.f32 %v671, %v2551
    %v2634 = vmul.f32 %v676, %v2551
    %v2635 = vmul.f32 %v681, %v2551
    %v2636 = vmul.f32 %v686, %v2551
    %v2637 = vmul.f32 %v691, %v2551
    %v2638 = vmul.f32 %v696, %v2551
    %v2639 = vmul.f32 %v701, %v2551
    %v2640 = vmul.f32 %v706, %v2551
    %v2641 = vmul.f32 %v711, %v2551
    %v2642 = vmul.f32 %v716, %v2551
    %v2643 = vmul.f32 %v721, %v2551
    %v2644 = vmul.f32 %v2511, %v2551
    %v2645 = vmul.f32 %v2516, %v2551
    %v2646 = vmul.f32 %v2521, %v2551
    %v2647 = vmul.f32 %v2526, %v2551
    %v2648 = vmul.f32 %v746, %v2551
    %v2649 = vmul.f32 %v751, %v2551
    %v2650 = vmul.f32 %v756, %v2551
    %v2651 = vmul.f32 %v761, %v2551
    %v2652 = vmul.f32 %v766, %v2551
    %v2653 = vmul.f32 %v771, %v2551
    %v2654 = vmul.f32 %v776, %v2551
    %v2655 = vmul.f32 %v781, %v2551
    %v2656 = vmul.f32 %v786, %v2551
    %v2657 = vmul.f32 %v791, %v2551
    %v2658 = vmul.f32 %v796, %v2551
    %v2659 = vmul.f32 %v801, %v2551
    %v2660 = vmul.f32 %v806, %v2551
    %v2661 = vmul.f32 %v811, %v2551
    %v2662 = vmul.f32 %v816, %v2551
    %v2663 = vmul.f32 %v821, %v2551
    %v2664 = vmul.f32 %v826, %v2551
    %v2665 = vmul.f32 %v831, %v2551
    %v2666 = vmul.f32 %v836, %v2551
    %v2667 = vmul.f32 %v841, %v2551
    %v2668 = vmul.f32 %v846, %v2551
    %v2669 = vmul.f32 %v851, %v2551
    %v2670 = vmul.f32 %v856, %v2551
    %v2671 = vmul.f32 %v861, %v2551
    %v2672 = vmul.f32 %v866, %v2551
    %v2673 = vmul.f32 %v871, %v2551
    %v2674 = vmul.f32 %v876, %v2551
    %v2675 = vmul.f32 %v881, %v2551
    %v2676 = vmul.f32 %v886, %v2551
    %v2677 = vmul.f32 %v891, %v2551
    %v2678 = vmul.f32 %v896, %v2551
    %v2679 = vmul.f32 %v901, %v2551
    %v2680 = vmul.f32 %v906, %v2551
    %v2681 = vmul.f32 %v911, %v2551
    %v2682 = vmul.f32 %v916, %v2551
    %v2683 = vmul.f32 %v921, %v2551
    %v2684 = vmul.f32 %v926, %v2551
    %v2685 = vmul.f32 %v931, %v2551
    %v2686 = vmul.f32 %v936, %v2551
    %v2687 = vmul.f32 %v941, %v2551
    %v2688 = vmul.f32 %v946, %v2551
    %v2689 = vmul.f32 %v951, %v2551
    %v2690 = vmul.f32 %v956, %v2551
    %v2691 = vmul.f32 %v961, %v2551
    %v2692 = vmul.f32 %v966, %v2551
    %v2693 = vmul.f32 %v971, %v2551
    %v2694 = vmul.f32 %v976, %v2551
    %v2695 = vmul.f32 %v981, %v2551
    %v2696 = vmul.f32 %v986, %v2551
    %v2697 = vmul.f32 %v991, %v2551
    %v2698 = vmul.f32 %v996, %v2551
    %v2699 = vmul.f32 %v1001, %v2551
    %v2700 = vmul.f32 %v1006, %v2551
    %v2701 = vmul.f32 %v1011, %v2551
    %v2702 = vmul.f32 %v1016, %v2551
    %v2703 = vmul.f32 %v1021, %v2551
    %v2704 = vmul.f32 %v1026, %v2551
    %v2705 = vmul.f32 %v1031, %v2551
    %v2706 = vmul.f32 %v1036, %v2551
    %v2707 = vmul.f32 %v1041, %v2551
    %v2708 = vmul.f32 %v1046, %v2551
    %v2709 = vmul.f32 %v1051, %v2551
    %v2710 = vmul.f32 %v1056, %v2551
    %v2711 = vmul.f32 %v1061, %v2551
    %v2712 = vmul.f32 %v1066, %v2551
    %v2713 = vmul.f32 %v1071, %v2551
    %v2714 = vmul.f32 %v1076, %v2551
    %v2715 = vmul.f32 %v1081, %v2551
    %v2716 = vmul.f32 %v1086, %v2551
    %v2717 = vmul.f32 %v1091, %v2551
    %v2718 = vmul.f32 %v1096, %v2551
    %v2719 = vmul.f32 %v1101, %v2551
    %v2720 = vmul.f32 %v1106, %v2551
    %v2721 = vmul.f32 %v1111, %v2551
    %v2722 = vmul.f32 %v1116, %v2551
    %v2723 = vmul.f32 %v1121, %v2551
    %v2724 = vmul.f32 %v1126, %v2551
    %v2725 = vmul.f32 %v1131, %v2551
    %v2726 = vmul.f32 %v1136, %v2551
    %v2727 = vmul.f32 %v1141, %v2551
    %v2728 = vmul.f32 %v1146, %v2551
    %v2729 = vmul.f32 %v1151, %v2551
    %v2730 = vmul.f32 %v1156, %v2551
    %v2731 = vmul.f32 %v1161, %v2551
    %v2732 = vmul.f32 %v1166, %v2551
    %v2733 = vmul.f32 %v1171, %v2551
    %v2734 = vmul.f32 %v1176, %v2551
    %v2735 = vmul.f32 %v1181, %v2551
    %v2736 = vmul.f32 %v1186, %v2551
    %v2737 = vmul.f32 %v1191, %v2551
    %v2738 = vmul.f32 %v1196, %v2551
    %v2739 = vmul.f32 %v1201, %v2551
    %v2740 = vmul.f32 %v2531, %v2551
    %v2741 = vmul.f32 %v2536, %v2551
    %v2742 = vmul.f32 %v2541, %v2551
    %v2743 = vmul.f32 %v2546, %v2551
    %v2744 = vadd.f32 %v2316, %v2552
    %v2745 = vadd.f32 %v2317, %v2553
    %v2746 = vadd.f32 %v2318, %v2554
    %v2747 = vadd.f32 %v2319, %v2555
    %v2748 = vadd.f32 %v2320, %v2556
    %v2749 = vadd.f32 %v2321, %v2557
    %v2750 = vadd.f32 %v2322, %v2558
    %v2751 = vadd.f32 %v2323, %v2559
    %v2752 = vadd.f32 %v2324, %v2560
    %v2753 = vadd.f32 %v2325, %v2561
    %v2754 = vadd.f32 %v2326, %v2562
    %v2755 = vadd.f32 %v2327, %v2563
    %v2756 = vadd.f32 %v2328, %v2564
    %v2757 = vadd.f32 %v2329, %v2565
    %v2758 = vadd.f32 %v2330, %v2566
    %v2759 = vadd.f32 %v2331, %v2567
    %v2760 = vadd.f32 %v2332, %v2568
    %v2761 = vadd.f32 %v2333, %v2569
    %v2762 = vadd.f32 %v2334, %v2570
    %v2763 = vadd.f32 %v2335, %v2571
    %v2764 = vadd.f32 %v2336, %v2572
    %v2765 = vadd.f32 %v2337, %v2573
    %v2766 = vadd.f32 %v2338, %v2574
    %v2767 = vadd.f32 %v2339, %v2575
    %v2768 = vadd.f32 %v2340, %v2576
    %v2769 = vadd.f32 %v2341, %v2577
    %v2770 = vadd.f32 %v2342, %v2578
    %v2771 = vadd.f32 %v2343, %v2579
    %v2772 = vadd.f32 %v2344, %v2580
    %v2773 = vadd.f32 %v2345, %v2581
    %v2774 = vadd.f32 %v2346, %v2582
    %v2775 = vadd.f32 %v2347, %v2583
    %v2776 = vadd.f32 %v2348, %v2584
    %v2777 = vadd.f32 %v2349, %v2585
    %v2778 = vadd.f32 %v2350, %v2586
    %v2779 = vadd.f32 %v2351, %v2587
    %v2780 = vadd.f32 %v2352, %v2588
    %v2781 = vadd.f32 %v2353, %v2589
    %v2782 = vadd.f32 %v2354, %v2590
    %v2783 = vadd.f32 %v2355, %v2591
    %v2784 = vadd.f32 %v2356, %v2592
    %v2785 = vadd.f32 %v2357, %v2593
    %v2786 = vadd.f32 %v2358, %v2594
    %v2787 = vadd.f32 %v2359, %v2595
    %v2788 = vadd.f32 %v2360, %v2596
    %v2789 = vadd.f32 %v2361, %v2597
    %v2790 = vadd.f32 %v2362, %v2598
    %v2791 = vadd.f32 %v2363, %v2599
    %v2792 = vadd.f32 %v2364, %v2600
    %v2793 = vadd.f32 %v2365, %v2601
    %v2794 = vadd.f32 %v2366, %v2602
    %v2795 = vadd.f32 %v2367, %v2603
    %v2796 = vadd.f32 %v2368, %v2604
    %v2797 = vadd.f32 %v2369, %v2605
    %v2798 = vadd.f32 %v2370, %v2606
    %v2799 = vadd.f32 %v2371, %v2607
    %v2800 = vadd.f32 %v2372, %v2608
    %v2801 = vadd.f32 %v2373, %v2609
    %v2802 = vadd.f32 %v2374, %v2610
    %v2803 = vadd.f32 %v2375, %v2611
    %v2804 = vadd.f32 %v2376, %v2612
    %v2805 = vadd.f32 %v2377, %v2613
    %v2806 = vadd.f32 %v2378, %v2614
    %v2807 = vadd.f32 %v2379, %v2615
    %v2808 = vadd.f32 %v2380, %v2616
    %v2809 = vadd.f32 %v2381, %v2617
    %v2810 = vadd.f32 %v2382, %v2618
    %v2811 = vadd.f32 %v2383, %v2619
    %v2812 = vadd.f32 %v2384, %v2620
    %v2813 = vadd.f32 %v2385, %v2621
    %v2814 = vadd.f32 %v2386, %v2622
    %v2815 = vadd.f32 %v2387, %v2623
    %v2816 = vadd.f32 %v2388, %v2624
    %v2817 = vadd.f32 %v2389, %v2625
    %v2818 = vadd.f32 %v2390, %v2626
    %v2819 = vadd.f32 %v2391, %v2627
    %v2820 = vadd.f32 %v2392, %v2628
    %v2821 = vadd.f32 %v2393, %v2629
    %v2822 = vadd.f32 %v2394, %v2630
    %v2823 = vadd.f32 %v2395, %v2631
    %v2824 = vadd.f32 %v2396, %v2632
    %v2825 = vadd.f32 %v2397, %v2633
    %v2826 = vadd.f32 %v2398, %v2634
    %v2827 = vadd.f32 %v2399, %v2635
    %v2828 = vadd.f32 %v2400, %v2636
    %v2829 = vadd.f32 %v2401, %v2637
    %v2830 = vadd.f32 %v2402, %v2638
    %v2831 = vadd.f32 %v2403, %v2639
    %v2832 = vadd.f32 %v2404, %v2640
    %v2833 = vadd.f32 %v2405, %v2641
    %v2834 = vadd.f32 %v2406, %v2642
    %v2835 = vadd.f32 %v2407, %v2643
    %v2836 = vadd.f32 %v2408, %v2644
    %v2837 = vadd.f32 %v2409, %v2645
    %v2838 = vadd.f32 %v2410, %v2646
    %v2839 = vadd.f32 %v2411, %v2647
    %v2840 = vadd.f32 %v2412, %v2648
    %v2841 = vadd.f32 %v2413, %v2649
    %v2842 = vadd.f32 %v2414, %v2650
    %v2843 = vadd.f32 %v2415, %v2651
    %v2844 = vadd.f32 %v2416, %v2652
    %v2845 = vadd.f32 %v2417, %v2653
    %v2846 = vadd.f32 %v2418, %v2654
    %v2847 = vadd.f32 %v2419, %v2655
    %v2848 = vadd.f32 %v2420, %v2656
    %v2849 = vadd.f32 %v2421, %v2657
    %v2850 = vadd.f32 %v2422, %v2658
    %v2851 = vadd.f32 %v2423, %v2659
    %v2852 = vadd.f32 %v2424, %v2660
    %v2853 = vadd.f32 %v2425, %v2661
    %v2854 = vadd.f32 %v2426, %v2662
    %v2855 = vadd.f32 %v2427, %v2663
    %v2856 = vadd.f32 %v2428, %v2664
    %v2857 = vadd.f32 %v2429, %v2665
    %v2858 = vadd.f32 %v2430, %v2666
    %v2859 = vadd.f32 %v2431, %v2667
    %v2860 = vadd.f32 %v2432, %v2668
    %v2861 = vadd.f32 %v2433, %v2669
    %v2862 = vadd.f32 %v2434, %v2670
    %v2863 = vadd.f32 %v2435, %v2671
    %v2864 = vadd.f32 %v2436, %v2672
    %v2865 = vadd.f32 %v2437, %v2673
    %v2866 = vadd.f32 %v2438, %v2674
    %v2867 = vadd.f32 %v2439, %v2675
    %v2868 = vadd.f32 %v2440, %v2676
    %v2869 = vadd.f32 %v2441, %v2677
    %v2870 = vadd.f32 %v2442, %v2678
    %v2871 = vadd.f32 %v2443, %v2679
    %v2872 = vadd.f32 %v2444, %v2680
    %v2873 = vadd.f32 %v2445, %v2681
    %v2874 = vadd.f32 %v2446, %v2682
    %v2875 = vadd.f32 %v2447, %v2683
    %v2876 = vadd.f32 %v2448, %v2684
    %v2877 = vadd.f32 %v2449, %v2685
    %v2878 = vadd.f32 %v2450, %v2686
    %v2879 = vadd.f32 %v2451, %v2687
    %v2880 = vadd.f32 %v2452, %v2688
    %v2881 = vadd.f32 %v2453, %v2689
    %v2882 = vadd.f32 %v2454, %v2690
    %v2883 = vadd.f32 %v2455, %v2691
    %v2884 = vadd.f32 %v2456, %v2692
    %v2885 = vadd.f32 %v2457, %v2693
    %v2886 = vadd.f32 %v2458, %v2694
    %v2887 = vadd.f32 %v2459, %v2695
    %v2888 = vadd.f32 %v2460, %v2696
    %v2889 = vadd.f32 %v2461, %v2697
    %v2890 = vadd.f32 %v2462, %v2698
    %v2891 = vadd.f32 %v2463, %v2699
    %v2892 = vadd.f32 %v2464, %v2700
    %v2893 = vadd.f32 %v2465, %v2701
    %v2894 = vadd.f32 %v2466, %v2702
    %v2895 = vadd.f32 %v2467, %v2703
    %v2896 = vadd.f32 %v2468, %v2704
    %v2897 = vadd.f32 %v2469, %v2705
    %v2898 = vadd.f32 %v2470, %v2706
    %v2899 = vadd.f32 %v2471, %v2707
    %v2900 = vadd.f32 %v2472, %v2708
    %v2901 = vadd.f32 %v2473, %v2709
    %v2902 = vadd.f32 %v2474, %v2710
    %v2903 = vadd.f32 %v2475, %v2711
    %v2904 = vadd.f32 %v2476, %v2712
    %v2905 = vadd.f32 %v2477, %v2713
    %v2906 = vadd.f32 %v2478, %v2714
    %v2907 = vadd.f32 %v2479, %v2715
    %v2908 = vadd.f32 %v2480, %v2716
    %v2909 = vadd.f32 %v2481, %v2717
    %v2910 = vadd.f32 %v2482, %v2718
    %v2911 = vadd.f32 %v2483, %v2719
    %v2912 = vadd.f32 %v2484, %v2720
    %v2913 = vadd.f32 %v2485, %v2721
    %v2914 = vadd.f32 %v2486, %v2722
    %v2915 = vadd.f32 %v2487, %v2723
    %v2916 = vadd.f32 %v2488, %v2724
    %v2917 = vadd.f32 %v2489, %v2725
    %v2918 = vadd.f32 %v2490, %v2726
    %v2919 = vadd.f32 %v2491, %v2727
    %v2920 = vadd.f32 %v2492, %v2728
    %v2921 = vadd.f32 %v2493, %v2729
    %v2922 = vadd.f32 %v2494, %v2730
    %v2923 = vadd.f32 %v2495, %v2731
    %v2924 = vadd.f32 %v2496, %v2732
    %v2925 = vadd.f32 %v2497, %v2733
    %v2926 = vadd.f32 %v2498, %v2734
    %v2927 = vadd.f32 %v2499, %v2735
    %v2928 = vadd.f32 %v2500, %v2736
    %v2929 = vadd.f32 %v2501, %v2737
    %v2930 = vadd.f32 %v2502, %v2738
    %v2931 = vadd.f32 %v2503, %v2739
    %v2932 = vadd.f32 %v2504, %v2740
    %v2933 = vadd.f32 %v2505, %v2741
    %v2934 = vadd.f32 %v2506, %v2742
    %v2935 = vadd.f32 %v2507, %v2743
    %v2936 = vlaneseq
    %v2937 = vshrl.u32 %v2936, 7
    %v2938 = vsub.s32 3, %v2937
    %v2939 = vrot.slane %v242, %v2938
    %v2940 = vmul.f32 %v266, %v2939
    %v2941 = vmul.f32 %v271, %v2939
    %v2942 = vmul.f32 %v276, %v2939
    %v2943 = vmul.f32 %v281, %v2939
    %v2944 = vmul.f32 %v286, %v2939
    %v2945 = vmul.f32 %v291, %v2939
    %v2946 = vmul.f32 %v296, %v2939
    %v2947 = vmul.f32 %v301, %v2939
    %v2948 = vmul.f32 %v306, %v2939
    %v2949 = vmul.f32 %v311, %v2939
    %v2950 = vmul.f32 %v316, %v2939
    %v2951 = vmul.f32 %v321, %v2939
    %v2952 = vmul.f32 %v326, %v2939
    %v2953 = vmul.f32 %v331, %v2939
    %v2954 = vmul.f32 %v336, %v2939
    %v2955 = vmul.f32 %v341, %v2939
    %v2956 = vmul.f32 %v346, %v2939
    %v2957 = vmul.f32 %v351, %v2939
    %v2958 = vmul.f32 %v356, %v2939
    %v2959 = vmul.f32 %v361, %v2939
    %v2960 = vmul.f32 %v366, %v2939
    %v2961 = vmul.f32 %v371, %v2939
    %v2962 = vmul.f32 %v376, %v2939
    %v2963 = vmul.f32 %v381, %v2939
    %v2964 = vmul.f32 %v386, %v2939
    %v2965 = vmul.f32 %v391, %v2939
    %v2966 = vmul.f32 %v396, %v2939
    %v2967 = vmul.f32 %v401, %v2939
    %v2968 = vmul.f32 %v406, %v2939
    %v2969 = vmul.f32 %v411, %v2939
    %v2970 = vmul.f32 %v416, %v2939
    %v2971 = vmul.f32 %v421, %v2939
    %v2972 = vmul.f32 %v426, %v2939
    %v2973 = vmul.f32 %v431, %v2939
    %v2974 = vmul.f32 %v436, %v2939
    %v2975 = vmul.f32 %v441, %v2939
    %v2976 = vmul.f32 %v446, %v2939
    %v2977 = vmul.f32 %v451, %v2939
    %v2978 = vmul.f32 %v456, %v2939
    %v2979 = vmul.f32 %v461, %v2939
    %v2980 = vmul.f32 %v466, %v2939
    %v2981 = vmul.f32 %v471, %v2939
    %v2982 = vmul.f32 %v476, %v2939
    %v2983 = vmul.f32 %v481, %v2939
    %v2984 = vmul.f32 %v486, %v2939
    %v2985 = vmul.f32 %v491, %v2939
    %v2986 = vmul.f32 %v496, %v2939
    %v2987 = vmul.f32 %v501, %v2939
    %v2988 = vmul.f32 %v506, %v2939
    %v2989 = vmul.f32 %v511, %v2939
    %v2990 = vmul.f32 %v516, %v2939
    %v2991 = vmul.f32 %v521, %v2939
    %v2992 = vmul.f32 %v526, %v2939
    %v2993 = vmul.f32 %v531, %v2939
    %v2994 = vmul.f32 %v536, %v2939
    %v2995 = vmul.f32 %v541, %v2939
    %v2996 = vmul.f32 %v546, %v2939
    %v2997 = vmul.f32 %v551, %v2939
    %v2998 = vmul.f32 %v556, %v2939
    %v2999 = vmul.f32 %v561, %v2939
    %v3000 = vmul.f32 %v566, %v2939
    %v3001 = vmul.f32 %v571, %v2939
    %v3002 = vmul.f32 %v576, %v2939
    %v3003 = vmul.f32 %v581, %v2939
    %v3004 = vmul.f32 %v586, %v2939
    %v3005 = vmul.f32 %v591, %v2939
    %v3006 = vmul.f32 %v596, %v2939
    %v3007 = vmul.f32 %v601, %v2939
    %v3008 = vmul.f32 %v606, %v2939
    %v3009 = vmul.f32 %v611, %v2939
    %v3010 = vmul.f32 %v616, %v2939
    %v3011 = vmul.f32 %v621, %v2939
    %v3012 = vmul.f32 %v626, %v2939
    %v3013 = vmul.f32 %v631, %v2939
    %v3014 = vmul.f32 %v636, %v2939
    %v3015 = vmul.f32 %v641, %v2939
    %v3016 = vmul.f32 %v646, %v2939
    %v3017 = vmul.f32 %v651, %v2939
    %v3018 = vmul.f32 %v656, %v2939
    %v3019 = vmul.f32 %v661, %v2939
    %v3020 = vmul.f32 %v666, %v2939
    %v3021 = vmul.f32 %v671, %v2939
    %v3022 = vmul.f32 %v676, %v2939
    %v3023 = vmul.f32 %v681, %v2939
    %v3024 = vmul.f32 %v686, %v2939
    %v3025 = vmul.f32 %v691, %v2939
    %v3026 = vmul.f32 %v696, %v2939
    %v3027 = vmul.f32 %v701, %v2939
    %v3028 = vmul.f32 %v706, %v2939
    %v3029 = vmul.f32 %v711, %v2939
    %v3030 = vmul.f32 %v716, %v2939
    %v3031 = vmul.f32 %v721, %v2939
    %v3032 = vmul.f32 %v2511, %v2939
    %v3033 = vmul.f32 %v2516, %v2939
    %v3034 = vmul.f32 %v2521, %v2939
    %v3035 = vmul.f32 %v2526, %v2939
    %v3036 = vmul.f32 %v746, %v2939
    %v3037 = vmul.f32 %v751, %v2939
    %v3038 = vmul.f32 %v756, %v2939
    %v3039 = vmul.f32 %v761, %v2939
    %v3040 = vmul.f32 %v766, %v2939
    %v3041 = vmul.f32 %v771, %v2939
    %v3042 = vmul.f32 %v776, %v2939
    %v3043 = vmul.f32 %v781, %v2939
    %v3044 = vmul.f32 %v786, %v2939
    %v3045 = vmul.f32 %v791, %v2939
    %v3046 = vmul.f32 %v796, %v2939
    %v3047 = vmul.f32 %v801, %v2939
    %v3048 = vmul.f32 %v806, %v2939
    %v3049 = vmul.f32 %v811, %v2939
    %v3050 = vmul.f32 %v816, %v2939
    %v3051 = vmul.f32 %v821, %v2939
    %v3052 = vmul.f32 %v826, %v2939
    %v3053 = vmul.f32 %v831, %v2939
    %v3054 = vmul.f32 %v836, %v2939
    %v3055 = vmul.f32 %v841, %v2939
    %v3056 = vmul.f32 %v846, %v2939
    %v3057 = vmul.f32 %v851, %v2939
    %v3058 = vmul.f32 %v856, %v2939
    %v3059 = vmul.f32 %v861, %v2939
    %v3060 = vmul.f32 %v866, %v2939
    %v3061 = vmul.f32 %v871, %v2939
    %v3062 = vmul.f32 %v876, %v2939
    %v3063 = vmul.f32 %v881, %v2939
    %v3064 = vmul.f32 %v886, %v2939
    %v3065 = vmul.f32 %v891, %v2939
    %v3066 = vmul.f32 %v896, %v2939
    %v3067 = vmul.f32 %v901, %v2939
    %v3068 = vmul.f32 %v906, %v2939
    %v3069 = vmul.f32 %v911, %v2939
    %v3070 = vmul.f32 %v916, %v2939
    %v3071 = vmul.f32 %v921, %v2939
    %v3072 = vmul.f32 %v926, %v2939
    %v3073 = vmul.f32 %v931, %v2939
    %v3074 = vmul.f32 %v936, %v2939
    %v3075 = vmul.f32 %v941, %v2939
    %v3076 = vmul.f32 %v946, %v2939
    %v3077 = vmul.f32 %v951, %v2939
    %v3078 = vmul.f32 %v956, %v2939
    %v3079 = vmul.f32 %v961, %v2939
    %v3080 = vmul.f32 %v966, %v2939
    %v3081 = vmul.f32 %v971, %v2939
    %v3082 = vmul.f32 %v976, %v2939
    %v3083 = vmul.f32 %v981, %v2939
    %v3084 = vmul.f32 %v986, %v2939
    %v3085 = vmul.f32 %v991, %v2939
    %v3086 = vmul.f32 %v996, %v2939
    %v3087 = vmul.f32 %v1001, %v2939
    %v3088 = vmul.f32 %v1006, %v2939
    %v3089 = vmul.f32 %v1011, %v2939
    %v3090 = vmul.f32 %v1016, %v2939
    %v3091 = vmul.f32 %v1021, %v2939
    %v3092 = vmul.f32 %v1026, %v2939
    %v3093 = vmul.f32 %v1031, %v2939
    %v3094 = vmul.f32 %v1036, %v2939
    %v3095 = vmul.f32 %v1041, %v2939
    %v3096 = vmul.f32 %v1046, %v2939
    %v3097 = vmul.f32 %v1051, %v2939
    %v3098 = vmul.f32 %v1056, %v2939
    %v3099 = vmul.f32 %v1061, %v2939
    %v3100 = vmul.f32 %v1066, %v2939
    %v3101 = vmul.f32 %v1071, %v2939
    %v3102 = vmul.f32 %v1076, %v2939
    %v3103 = vmul.f32 %v1081, %v2939
    %v3104 = vmul.f32 %v1086, %v2939
    %v3105 = vmul.f32 %v1091, %v2939
    %v3106 = vmul.f32 %v1096, %v2939
    %v3107 = vmul.f32 %v1101, %v2939
    %v3108 = vmul.f32 %v1106, %v2939
    %v3109 = vmul.f32 %v1111, %v2939
    %v3110 = vmul.f32 %v1116, %v2939
    %v3111 = vmul.f32 %v1121, %v2939
    %v3112 = vmul.f32 %v1126, %v2939
    %v3113 = vmul.f32 %v1131, %v2939
    %v3114 = vmul.f32 %v1136, %v2939
    %v3115 = vmul.f32 %v1141, %v2939
    %v3116 = vmul.f32 %v1146, %v2939
    %v3117 = vmul.f32 %v1151, %v2939
    %v3118 = vmul.f32 %v1156, %v2939
    %v3119 = vmul.f32 %v1161, %v2939
    %v3120 = vmul.f32 %v1166, %v2939
    %v3121 = vmul.f32 %v1171, %v2939
    %v3122 = vmul.f32 %v1176, %v2939
    %v3123 = vmul.f32 %v1181, %v2939
    %v3124 = vmul.f32 %v1186, %v2939
    %v3125 = vmul.f32 %v1191, %v2939
    %v3126 = vmul.f32 %v1196, %v2939
    %v3127 = vmul.f32 %v1201, %v2939
    %v3128 = vmul.f32 %v2531, %v2939
    %v3129 = vmul.f32 %v2536, %v2939
    %v3130 = vmul.f32 %v2541, %v2939
    %v3131 = vmul.f32 %v2546, %v2939
    %v3324 = vrot.slane %v2940, 1
    %v3325 = vrot.slane %v2941, 1
    %v3326 = vsel %vm1787, %v3324, %v3325
    %v3327 = vrot.slane %v2942, 1
    %v3328 = vsel %vm1787, %v3325, %v3327
    %v3329 = vrot.slane %v2943, 1
    %v3330 = vsel %vm1787, %v3327, %v3329
    %v3331 = vrot.slane %v2944, 1
    %v3332 = vrot.slane %v2945, 1
    %v3333 = vsel %vm1787, %v3331, %v3332
    %v3334 = vrot.slane %v2946, 1
    %v3335 = vsel %vm1787, %v3332, %v3334
    %v3336 = vrot.slane %v2947, 1
    %v3337 = vsel %vm1787, %v3334, %v3336
    %v3338 = vrot.slane %v2948, 1
    %v3339 = vrot.slane %v2949, 1
    %v3340 = vsel %vm1787, %v3338, %v3339
    %v3341 = vrot.slane %v2950, 1
    %v3342 = vsel %vm1787, %v3339, %v3341
    %v3343 = vrot.slane %v2951, 1
    %v3344 = vsel %vm1787, %v3341, %v3343
    %v3345 = vrot.slane %v2952, 1
    %v3346 = vrot.slane %v2953, 1
    %v3347 = vsel %vm1787, %v3345, %v3346
    %v3348 = vrot.slane %v2954, 1
    %v3349 = vsel %vm1787, %v3346, %v3348
    %v3350 = vrot.slane %v2955, 1
    %v3351 = vsel %vm1787, %v3348, %v3350
    %v3352 = vrot.slane %v2956, 1
    %v3353 = vrot.slane %v2957, 1
    %v3354 = vsel %vm1787, %v3352, %v3353
    %v3355 = vrot.slane %v2958, 1
    %v3356 = vsel %vm1787, %v3353, %v3355
    %v3357 = vrot.slane %v2959, 1
    %v3358 = vsel %vm1787, %v3355, %v3357
    %v3359 = vrot.slane %v2960, 1
    %v3360 = vrot.slane %v2961, 1
    %v3361 = vsel %vm1787, %v3359, %v3360
    %v3362 = vrot.slane %v2962, 1
    %v3363 = vsel %vm1787, %v3360, %v3362
    %v3364 = vrot.slane %v2963, 1
    %v3365 = vsel %vm1787, %v3362, %v3364
    %v3366 = vrot.slane %v2964, 1
    %v3367 = vrot.slane %v2965, 1
    %v3368 = vsel %vm1787, %v3366, %v3367
    %v3369 = vrot.slane %v2966, 1
    %v3370 = vsel %vm1787, %v3367, %v3369
    %v3371 = vrot.slane %v2967, 1
    %v3372 = vsel %vm1787, %v3369, %v3371
    %v3373 = vrot.slane %v2968, 1
    %v3374 = vrot.slane %v2969, 1
    %v3375 = vsel %vm1787, %v3373, %v3374
    %v3376 = vrot.slane %v2970, 1
    %v3377 = vsel %vm1787, %v3374, %v3376
    %v3378 = vrot.slane %v2971, 1
    %v3379 = vsel %vm1787, %v3376, %v3378
    %v3380 = vrot.slane %v2972, 1
    %v3381 = vrot.slane %v2973, 1
    %v3382 = vsel %vm1787, %v3380, %v3381
    %v3383 = vrot.slane %v2974, 1
    %v3384 = vsel %vm1787, %v3381, %v3383
    %v3385 = vrot.slane %v2975, 1
    %v3386 = vsel %vm1787, %v3383, %v3385
    %v3387 = vrot.slane %v2976, 1
    %v3388 = vrot.slane %v2977, 1
    %v3389 = vsel %vm1787, %v3387, %v3388
    %v3390 = vrot.slane %v2978, 1
    %v3391 = vsel %vm1787, %v3388, %v3390
    %v3392 = vrot.slane %v2979, 1
    %v3393 = vsel %vm1787, %v3390, %v3392
    %v3394 = vrot.slane %v2980, 1
    %v3395 = vrot.slane %v2981, 1
    %v3396 = vsel %vm1787, %v3394, %v3395
    %v3397 = vrot.slane %v2982, 1
    %v3398 = vsel %vm1787, %v3395, %v3397
    %v3399 = vrot.slane %v2983, 1
    %v3400 = vsel %vm1787, %v3397, %v3399
    %v3401 = vrot.slane %v2984, 1
    %v3402 = vrot.slane %v2985, 1
    %v3403 = vsel %vm1787, %v3401, %v3402
    %v3404 = vrot.slane %v2986, 1
    %v3405 = vsel %vm1787, %v3402, %v3404
    %v3406 = vrot.slane %v2987, 1
    %v3407 = vsel %vm1787, %v3404, %v3406
    %v3408 = vrot.slane %v2988, 1
    %v3409 = vrot.slane %v2989, 1
    %v3410 = vsel %vm1787, %v3408, %v3409
    %v3411 = vrot.slane %v2990, 1
    %v3412 = vsel %vm1787, %v3409, %v3411
    %v3413 = vrot.slane %v2991, 1
    %v3414 = vsel %vm1787, %v3411, %v3413
    %v3415 = vrot.slane %v2992, 1
    %v3416 = vrot.slane %v2993, 1
    %v3417 = vsel %vm1787, %v3415, %v3416
    %v3418 = vrot.slane %v2994, 1
    %v3419 = vsel %vm1787, %v3416, %v3418
    %v3420 = vrot.slane %v2995, 1
    %v3421 = vsel %vm1787, %v3418, %v3420
    %v3422 = vrot.slane %v2996, 1
    %v3423 = vrot.slane %v2997, 1
    %v3424 = vsel %vm1787, %v3422, %v3423
    %v3425 = vrot.slane %v2998, 1
    %v3426 = vsel %vm1787, %v3423, %v3425
    %v3427 = vrot.slane %v2999, 1
    %v3428 = vsel %vm1787, %v3425, %v3427
    %v3429 = vrot.slane %v3000, 1
    %v3430 = vrot.slane %v3001, 1
    %v3431 = vsel %vm1787, %v3429, %v3430
    %v3432 = vrot.slane %v3002, 1
    %v3433 = vsel %vm1787, %v3430, %v3432
    %v3434 = vrot.slane %v3003, 1
    %v3435 = vsel %vm1787, %v3432, %v3434
    %v3436 = vrot.slane %v3004, 1
    %v3437 = vrot.slane %v3005, 1
    %v3438 = vsel %vm1787, %v3436, %v3437
    %v3439 = vrot.slane %v3006, 1
    %v3440 = vsel %vm1787, %v3437, %v3439
    %v3441 = vrot.slane %v3007, 1
    %v3442 = vsel %vm1787, %v3439, %v3441
    %v3443 = vrot.slane %v3008, 1
    %v3444 = vrot.slane %v3009, 1
    %v3445 = vsel %vm1787, %v3443, %v3444
    %v3446 = vrot.slane %v3010, 1
    %v3447 = vsel %vm1787, %v3444, %v3446
    %v3448 = vrot.slane %v3011, 1
    %v3449 = vsel %vm1787, %v3446, %v3448
    %v3450 = vrot.slane %v3012, 1
    %v3451 = vrot.slane %v3013, 1
    %v3452 = vsel %vm1787, %v3450, %v3451
    %v3453 = vrot.slane %v3014, 1
    %v3454 = vsel %vm1787, %v3451, %v3453
    %v3455 = vrot.slane %v3015, 1
    %v3456 = vsel %vm1787, %v3453, %v3455
    %v3457 = vrot.slane %v3016, 1
    %v3458 = vrot.slane %v3017, 1
    %v3459 = vsel %vm1787, %v3457, %v3458
    %v3460 = vrot.slane %v3018, 1
    %v3461 = vsel %vm1787, %v3458, %v3460
    %v3462 = vrot.slane %v3019, 1
    %v3463 = vsel %vm1787, %v3460, %v3462
    %v3464 = vrot.slane %v3020, 1
    %v3465 = vrot.slane %v3021, 1
    %v3466 = vsel %vm1787, %v3464, %v3465
    %v3467 = vrot.slane %v3022, 1
    %v3468 = vsel %vm1787, %v3465, %v3467
    %v3469 = vrot.slane %v3023, 1
    %v3470 = vsel %vm1787, %v3467, %v3469
    %v3471 = vrot.slane %v3024, 1
    %v3472 = vrot.slane %v3025, 1
    %v3473 = vsel %vm1787, %v3471, %v3472
    %v3474 = vrot.slane %v3026, 1
    %v3475 = vsel %vm1787, %v3472, %v3474
    %v3476 = vrot.slane %v3027, 1
    %v3477 = vsel %vm1787, %v3474, %v3476
    %v3478 = vrot.slane %v3028, 1
    %v3479 = vrot.slane %v3029, 1
    %v3480 = vsel %vm1787, %v3478, %v3479
    %v3481 = vrot.slane %v3030, 1
    %v3482 = vsel %vm1787, %v3479, %v3481
    %v3483 = vrot.slane %v3031, 1
    %v3484 = vsel %vm1787, %v3481, %v3483
    %v3485 = vrot.slane %v3032, 1
    %v3486 = vrot.slane %v3033, 1
    %v3487 = vsel %vm1787, %v3485, %v3486
    %v3488 = vrot.slane %v3034, 1
    %v3489 = vsel %vm1787, %v3486, %v3488
    %v3490 = vrot.slane %v3035, 1
    %v3491 = vsel %vm1787, %v3488, %v3490
    %v3492 = vrot.slane %v3036, 1
    %v3493 = vrot.slane %v3037, 1
    %v3494 = vsel %vm1787, %v3492, %v3493
    %v3495 = vrot.slane %v3038, 1
    %v3496 = vsel %vm1787, %v3493, %v3495
    %v3497 = vrot.slane %v3039, 1
    %v3498 = vsel %vm1787, %v3495, %v3497
    %v3499 = vrot.slane %v3040, 1
    %v3500 = vrot.slane %v3041, 1
    %v3501 = vsel %vm1787, %v3499, %v3500
    %v3502 = vrot.slane %v3042, 1
    %v3503 = vsel %vm1787, %v3500, %v3502
    %v3504 = vrot.slane %v3043, 1
    %v3505 = vsel %vm1787, %v3502, %v3504
    %v3506 = vrot.slane %v3044, 1
    %v3507 = vrot.slane %v3045, 1
    %v3508 = vsel %vm1787, %v3506, %v3507
    %v3509 = vrot.slane %v3046, 1
    %v3510 = vsel %vm1787, %v3507, %v3509
    %v3511 = vrot.slane %v3047, 1
    %v3512 = vsel %vm1787, %v3509, %v3511
    %v3513 = vrot.slane %v3048, 1
    %v3514 = vrot.slane %v3049, 1
    %v3515 = vsel %vm1787, %v3513, %v3514
    %v3516 = vrot.slane %v3050, 1
    %v3517 = vsel %vm1787, %v3514, %v3516
    %v3518 = vrot.slane %v3051, 1
    %v3519 = vsel %vm1787, %v3516, %v3518
    %v3520 = vrot.slane %v3052, 1
    %v3521 = vrot.slane %v3053, 1
    %v3522 = vsel %vm1787, %v3520, %v3521
    %v3523 = vrot.slane %v3054, 1
    %v3524 = vsel %vm1787, %v3521, %v3523
    %v3525 = vrot.slane %v3055, 1
    %v3526 = vsel %vm1787, %v3523, %v3525
    %v3527 = vrot.slane %v3056, 1
    %v3528 = vrot.slane %v3057, 1
    %v3529 = vsel %vm1787, %v3527, %v3528
    %v3530 = vrot.slane %v3058, 1
    %v3531 = vsel %vm1787, %v3528, %v3530
    %v3532 = vrot.slane %v3059, 1
    %v3533 = vsel %vm1787, %v3530, %v3532
    %v3534 = vrot.slane %v3060, 1
    %v3535 = vrot.slane %v3061, 1
    %v3536 = vsel %vm1787, %v3534, %v3535
    %v3537 = vrot.slane %v3062, 1
    %v3538 = vsel %vm1787, %v3535, %v3537
    %v3539 = vrot.slane %v3063, 1
    %v3540 = vsel %vm1787, %v3537, %v3539
    %v3541 = vrot.slane %v3064, 1
    %v3542 = vrot.slane %v3065, 1
    %v3543 = vsel %vm1787, %v3541, %v3542
    %v3544 = vrot.slane %v3066, 1
    %v3545 = vsel %vm1787, %v3542, %v3544
    %v3546 = vrot.slane %v3067, 1
    %v3547 = vsel %vm1787, %v3544, %v3546
    %v3548 = vrot.slane %v3068, 1
    %v3549 = vrot.slane %v3069, 1
    %v3550 = vsel %vm1787, %v3548, %v3549
    %v3551 = vrot.slane %v3070, 1
    %v3552 = vsel %vm1787, %v3549, %v3551
    %v3553 = vrot.slane %v3071, 1
    %v3554 = vsel %vm1787, %v3551, %v3553
    %v3555 = vrot.slane %v3072, 1
    %v3556 = vrot.slane %v3073, 1
    %v3557 = vsel %vm1787, %v3555, %v3556
    %v3558 = vrot.slane %v3074, 1
    %v3559 = vsel %vm1787, %v3556, %v3558
    %v3560 = vrot.slane %v3075, 1
    %v3561 = vsel %vm1787, %v3558, %v3560
    %v3562 = vrot.slane %v3076, 1
    %v3563 = vrot.slane %v3077, 1
    %v3564 = vsel %vm1787, %v3562, %v3563
    %v3565 = vrot.slane %v3078, 1
    %v3566 = vsel %vm1787, %v3563, %v3565
    %v3567 = vrot.slane %v3079, 1
    %v3568 = vsel %vm1787, %v3565, %v3567
    %v3569 = vrot.slane %v3080, 1
    %v3570 = vrot.slane %v3081, 1
    %v3571 = vsel %vm1787, %v3569, %v3570
    %v3572 = vrot.slane %v3082, 1
    %v3573 = vsel %vm1787, %v3570, %v3572
    %v3574 = vrot.slane %v3083, 1
    %v3575 = vsel %vm1787, %v3572, %v3574
    %v3576 = vrot.slane %v3084, 1
    %v3577 = vrot.slane %v3085, 1
    %v3578 = vsel %vm1787, %v3576, %v3577
    %v3579 = vrot.slane %v3086, 1
    %v3580 = vsel %vm1787, %v3577, %v3579
    %v3581 = vrot.slane %v3087, 1
    %v3582 = vsel %vm1787, %v3579, %v3581
    %v3583 = vrot.slane %v3088, 1
    %v3584 = vrot.slane %v3089, 1
    %v3585 = vsel %vm1787, %v3583, %v3584
    %v3586 = vrot.slane %v3090, 1
    %v3587 = vsel %vm1787, %v3584, %v3586
    %v3588 = vrot.slane %v3091, 1
    %v3589 = vsel %vm1787, %v3586, %v3588
    %v3590 = vrot.slane %v3092, 1
    %v3591 = vrot.slane %v3093, 1
    %v3592 = vsel %vm1787, %v3590, %v3591
    %v3593 = vrot.slane %v3094, 1
    %v3594 = vsel %vm1787, %v3591, %v3593
    %v3595 = vrot.slane %v3095, 1
    %v3596 = vsel %vm1787, %v3593, %v3595
    %v3597 = vrot.slane %v3096, 1
    %v3598 = vrot.slane %v3097, 1
    %v3599 = vsel %vm1787, %v3597, %v3598
    %v3600 = vrot.slane %v3098, 1
    %v3601 = vsel %vm1787, %v3598, %v3600
    %v3602 = vrot.slane %v3099, 1
    %v3603 = vsel %vm1787, %v3600, %v3602
    %v3604 = vrot.slane %v3100, 1
    %v3605 = vrot.slane %v3101, 1
    %v3606 = vsel %vm1787, %v3604, %v3605
    %v3607 = vrot.slane %v3102, 1
    %v3608 = vsel %vm1787, %v3605, %v3607
    %v3609 = vrot.slane %v3103, 1
    %v3610 = vsel %vm1787, %v3607, %v3609
    %v3611 = vrot.slane %v3104, 1
    %v3612 = vrot.slane %v3105, 1
    %v3613 = vsel %vm1787, %v3611, %v3612
    %v3614 = vrot.slane %v3106, 1
    %v3615 = vsel %vm1787, %v3612, %v3614
    %v3616 = vrot.slane %v3107, 1
    %v3617 = vsel %vm1787, %v3614, %v3616
    %v3618 = vrot.slane %v3108, 1
    %v3619 = vrot.slane %v3109, 1
    %v3620 = vsel %vm1787, %v3618, %v3619
    %v3621 = vrot.slane %v3110, 1
    %v3622 = vsel %vm1787, %v3619, %v3621
    %v3623 = vrot.slane %v3111, 1
    %v3624 = vsel %vm1787, %v3621, %v3623
    %v3625 = vrot.slane %v3112, 1
    %v3626 = vrot.slane %v3113, 1
    %v3627 = vsel %vm1787, %v3625, %v3626
    %v3628 = vrot.slane %v3114, 1
    %v3629 = vsel %vm1787, %v3626, %v3628
    %v3630 = vrot.slane %v3115, 1
    %v3631 = vsel %vm1787, %v3628, %v3630
    %v3632 = vrot.slane %v3116, 1
    %v3633 = vrot.slane %v3117, 1
    %v3634 = vsel %vm1787, %v3632, %v3633
    %v3635 = vrot.slane %v3118, 1
    %v3636 = vsel %vm1787, %v3633, %v3635
    %v3637 = vrot.slane %v3119, 1
    %v3638 = vsel %vm1787, %v3635, %v3637
    %v3639 = vrot.slane %v3120, 1
    %v3640 = vrot.slane %v3121, 1
    %v3641 = vsel %vm1787, %v3639, %v3640
    %v3642 = vrot.slane %v3122, 1
    %v3643 = vsel %vm1787, %v3640, %v3642
    %v3644 = vrot.slane %v3123, 1
    %v3645 = vsel %vm1787, %v3642, %v3644
    %v3646 = vrot.slane %v3124, 1
    %v3647 = vrot.slane %v3125, 1
    %v3648 = vsel %vm1787, %v3646, %v3647
    %v3649 = vrot.slane %v3126, 1
    %v3650 = vsel %vm1787, %v3647, %v3649
    %v3651 = vrot.slane %v3127, 1
    %v3652 = vsel %vm1787, %v3649, %v3651
    %v3653 = vrot.slane %v3128, 1
    %v3654 = vrot.slane %v3129, 1
    %v3655 = vsel %vm1787, %v3653, %v3654
    %v3656 = vrot.slane %v3130, 1
    %v3657 = vsel %vm1787, %v3654, %v3656
    %v3658 = vrot.slane %v3131, 1
    %v3659 = vsel %vm1787, %v3656, %v3658
    %v3852 = vadd.f32 %v2744, %v3326
    %v3853 = vadd.f32 %v2745, %v3328
    %v3854 = vadd.f32 %v2746, %v3330
    %v3855 = vadd.f32 %v2747, %v3329
    %v3856 = vadd.f32 %v2748, %v3333
    %v3857 = vadd.f32 %v2749, %v3335
    %v3858 = vadd.f32 %v2750, %v3337
    %v3859 = vadd.f32 %v2751, %v3336
    %v3860 = vadd.f32 %v2752, %v3340
    %v3861 = vadd.f32 %v2753, %v3342
    %v3862 = vadd.f32 %v2754, %v3344
    %v3863 = vadd.f32 %v2755, %v3343
    %v3864 = vadd.f32 %v2756, %v3347
    %v3865 = vadd.f32 %v2757, %v3349
    %v3866 = vadd.f32 %v2758, %v3351
    %v3867 = vadd.f32 %v2759, %v3350
    %v3868 = vadd.f32 %v2760, %v3354
    %v3869 = vadd.f32 %v2761, %v3356
    %v3870 = vadd.f32 %v2762, %v3358
    %v3871 = vadd.f32 %v2763, %v3357
    %v3872 = vadd.f32 %v2764, %v3361
    %v3873 = vadd.f32 %v2765, %v3363
    %v3874 = vadd.f32 %v2766, %v3365
    %v3875 = vadd.f32 %v2767, %v3364
    %v3876 = vadd.f32 %v2768, %v3368
    %v3877 = vadd.f32 %v2769, %v3370
    %v3878 = vadd.f32 %v2770, %v3372
    %v3879 = vadd.f32 %v2771, %v3371
    %v3880 = vadd.f32 %v2772, %v3375
    %v3881 = vadd.f32 %v2773, %v3377
    %v3882 = vadd.f32 %v2774, %v3379
    %v3883 = vadd.f32 %v2775, %v3378
    %v3884 = vadd.f32 %v2776, %v3382
    %v3885 = vadd.f32 %v2777, %v3384
    %v3886 = vadd.f32 %v2778, %v3386
    %v3887 = vadd.f32 %v2779, %v3385
    %v3888 = vadd.f32 %v2780, %v3389
    %v3889 = vadd.f32 %v2781, %v3391
    %v3890 = vadd.f32 %v2782, %v3393
    %v3891 = vadd.f32 %v2783, %v3392
    %v3892 = vadd.f32 %v2784, %v3396
    %v3893 = vadd.f32 %v2785, %v3398
    %v3894 = vadd.f32 %v2786, %v3400
    %v3895 = vadd.f32 %v2787, %v3399
    %v3896 = vadd.f32 %v2788, %v3403
    %v3897 = vadd.f32 %v2789, %v3405
    %v3898 = vadd.f32 %v2790, %v3407
    %v3899 = vadd.f32 %v2791, %v3406
    %v3900 = vadd.f32 %v2792, %v3410
    %v3901 = vadd.f32 %v2793, %v3412
    %v3902 = vadd.f32 %v2794, %v3414
    %v3903 = vadd.f32 %v2795, %v3413
    %v3904 = vadd.f32 %v2796, %v3417
    %v3905 = vadd.f32 %v2797, %v3419
    %v3906 = vadd.f32 %v2798, %v3421
    %v3907 = vadd.f32 %v2799, %v3420
    %v3908 = vadd.f32 %v2800, %v3424
    %v3909 = vadd.f32 %v2801, %v3426
    %v3910 = vadd.f32 %v2802, %v3428
    %v3911 = vadd.f32 %v2803, %v3427
    %v3912 = vadd.f32 %v2804, %v3431
    %v3913 = vadd.f32 %v2805, %v3433
    %v3914 = vadd.f32 %v2806, %v3435
    %v3915 = vadd.f32 %v2807, %v3434
    %v3916 = vadd.f32 %v2808, %v3438
    %v3917 = vadd.f32 %v2809, %v3440
    %v3918 = vadd.f32 %v2810, %v3442
    %v3919 = vadd.f32 %v2811, %v3441
    %v3920 = vadd.f32 %v2812, %v3445
    %v3921 = vadd.f32 %v2813, %v3447
    %v3922 = vadd.f32 %v2814, %v3449
    %v3923 = vadd.f32 %v2815, %v3448
    %v3924 = vadd.f32 %v2816, %v3452
    %v3925 = vadd.f32 %v2817, %v3454
    %v3926 = vadd.f32 %v2818, %v3456
    %v3927 = vadd.f32 %v2819, %v3455
    %v3928 = vadd.f32 %v2820, %v3459
    %v3929 = vadd.f32 %v2821, %v3461
    %v3930 = vadd.f32 %v2822, %v3463
    %v3931 = vadd.f32 %v2823, %v3462
    %v3932 = vadd.f32 %v2824, %v3466
    %v3933 = vadd.f32 %v2825, %v3468
    %v3934 = vadd.f32 %v2826, %v3470
    %v3935 = vadd.f32 %v2827, %v3469
    %v3936 = vadd.f32 %v2828, %v3473
    %v3937 = vadd.f32 %v2829, %v3475
    %v3938 = vadd.f32 %v2830, %v3477
    %v3939 = vadd.f32 %v2831, %v3476
    %v3940 = vadd.f32 %v2832, %v3480
    %v3941 = vadd.f32 %v2833, %v3482
    %v3942 = vadd.f32 %v2834, %v3484
    %v3943 = vadd.f32 %v2835, %v3483
    %v3944 = vadd.f32 %v2836, %v3487
    %v3945 = vadd.f32 %v2837, %v3489
    %v3946 = vadd.f32 %v2838, %v3491
    %v3947 = vadd.f32 %v2839, %v3490
    %v3948 = vadd.f32 %v2840, %v3494
    %v3949 = vadd.f32 %v2841, %v3496
    %v3950 = vadd.f32 %v2842, %v3498
    %v3951 = vadd.f32 %v2843, %v3497
    %v3952 = vadd.f32 %v2844, %v3501
    %v3953 = vadd.f32 %v2845, %v3503
    %v3954 = vadd.f32 %v2846, %v3505
    %v3955 = vadd.f32 %v2847, %v3504
    %v3956 = vadd.f32 %v2848, %v3508
    %v3957 = vadd.f32 %v2849, %v3510
    %v3958 = vadd.f32 %v2850, %v3512
    %v3959 = vadd.f32 %v2851, %v3511
    %v3960 = vadd.f32 %v2852, %v3515
    %v3961 = vadd.f32 %v2853, %v3517
    %v3962 = vadd.f32 %v2854, %v3519
    %v3963 = vadd.f32 %v2855, %v3518
    %v3964 = vadd.f32 %v2856, %v3522
    %v3965 = vadd.f32 %v2857, %v3524
    %v3966 = vadd.f32 %v2858, %v3526
    %v3967 = vadd.f32 %v2859, %v3525
    %v3968 = vadd.f32 %v2860, %v3529
    %v3969 = vadd.f32 %v2861, %v3531
    %v3970 = vadd.f32 %v2862, %v3533
    %v3971 = vadd.f32 %v2863, %v3532
    %v3972 = vadd.f32 %v2864, %v3536
    %v3973 = vadd.f32 %v2865, %v3538
    %v3974 = vadd.f32 %v2866, %v3540
    %v3975 = vadd.f32 %v2867, %v3539
    %v3976 = vadd.f32 %v2868, %v3543
    %v3977 = vadd.f32 %v2869, %v3545
    %v3978 = vadd.f32 %v2870, %v3547
    %v3979 = vadd.f32 %v2871, %v3546
    %v3980 = vadd.f32 %v2872, %v3550
    %v3981 = vadd.f32 %v2873, %v3552
    %v3982 = vadd.f32 %v2874, %v3554
    %v3983 = vadd.f32 %v2875, %v3553
    %v3984 = vadd.f32 %v2876, %v3557
    %v3985 = vadd.f32 %v2877, %v3559
    %v3986 = vadd.f32 %v2878, %v3561
    %v3987 = vadd.f32 %v2879, %v3560
    %v3988 = vadd.f32 %v2880, %v3564
    %v3989 = vadd.f32 %v2881, %v3566
    %v3990 = vadd.f32 %v2882, %v3568
    %v3991 = vadd.f32 %v2883, %v3567
    %v3992 = vadd.f32 %v2884, %v3571
    %v3993 = vadd.f32 %v2885, %v3573
    %v3994 = vadd.f32 %v2886, %v3575
    %v3995 = vadd.f32 %v2887, %v3574
    %v3996 = vadd.f32 %v2888, %v3578
    %v3997 = vadd.f32 %v2889, %v3580
    %v3998 = vadd.f32 %v2890, %v3582
    %v3999 = vadd.f32 %v2891, %v3581
    %v4000 = vadd.f32 %v2892, %v3585
    %v4001 = vadd.f32 %v2893, %v3587
    %v4002 = vadd.f32 %v2894, %v3589
    %v4003 = vadd.f32 %v2895, %v3588
    %v4004 = vadd.f32 %v2896, %v3592
    %v4005 = vadd.f32 %v2897, %v3594
    %v4006 = vadd.f32 %v2898, %v3596
    %v4007 = vadd.f32 %v2899, %v3595
    %v4008 = vadd.f32 %v2900, %v3599
    %v4009 = vadd.f32 %v2901, %v3601
    %v4010 = vadd.f32 %v2902, %v3603
    %v4011 = vadd.f32 %v2903, %v3602
    %v4012 = vadd.f32 %v2904, %v3606
    %v4013 = vadd.f32 %v2905, %v3608
    %v4014 = vadd.f32 %v2906, %v3610
    %v4015 = vadd.f32 %v2907, %v3609
    %v4016 = vadd.f32 %v2908, %v3613
    %v4017 = vadd.f32 %v2909, %v3615
    %v4018 = vadd.f32 %v2910, %v3617
    %v4019 = vadd.f32 %v2911, %v3616
    %v4020 = vadd.f32 %v2912, %v3620
    %v4021 = vadd.f32 %v2913, %v3622
    %v4022 = vadd.f32 %v2914, %v3624
    %v4023 = vadd.f32 %v2915, %v3623
    %v4024 = vadd.f32 %v2916, %v3627
    %v4025 = vadd.f32 %v2917, %v3629
    %v4026 = vadd.f32 %v2918, %v3631
    %v4027 = vadd.f32 %v2919, %v3630
    %v4028 = vadd.f32 %v2920, %v3634
    %v4029 = vadd.f32 %v2921, %v3636
    %v4030 = vadd.f32 %v2922, %v3638
    %v4031 = vadd.f32 %v2923, %v3637
    %v4032 = vadd.f32 %v2924, %v3641
    %v4033 = vadd.f32 %v2925, %v3643
    %v4034 = vadd.f32 %v2926, %v3645
    %v4035 = vadd.f32 %v2927, %v3644
    %v4036 = vadd.f32 %v2928, %v3648
    %v4037 = vadd.f32 %v2929, %v3650
    %v4038 = vadd.f32 %v2930, %v3652
    %v4039 = vadd.f32 %v2931, %v3651
    %v4040 = vadd.f32 %v2932, %v3655
    %v4041 = vadd.f32 %v2933, %v3657
    %v4042 = vadd.f32 %v2934, %v3659
    %v4043 = vadd.f32 %v2935, %v3658
    %v4044 = vld [vmem:[%s2] sm:$0x1]
    %v4046 = vlaneseq
    %v4047 = vshrl.u32 %v4046, 7
    %v4048 = vsub.s32 0, %v4047
    %v4049 = vrot.slane %v4044, %v4048
    %v4051 = vadd.f32 %v3852, %v4049
    %v4052 = vadd.f32 %v3853, %v4049
    %v4053 = vadd.f32 %v3854, %v4049
    %v4054 = vadd.f32 %v3855, %v4049
    %v4055 = vadd.f32 %v3856, %v4049
    %v4056 = vadd.f32 %v3857, %v4049
    %v4057 = vadd.f32 %v3858, %v4049
    %v4058 = vadd.f32 %v3859, %v4049
    %v4059 = vadd.f32 %v3860, %v4049
    %v4060 = vadd.f32 %v3861, %v4049
    %v4061 = vadd.f32 %v3862, %v4049
    %v4062 = vadd.f32 %v3863, %v4049
    %v4063 = vadd.f32 %v3864, %v4049
    %v4064 = vadd.f32 %v3865, %v4049
    %v4065 = vadd.f32 %v3866, %v4049
    %v4066 = vadd.f32 %v3867, %v4049
    %v4067 = vadd.f32 %v3868, %v4049
    %v4068 = vadd.f32 %v3869, %v4049
    %v4069 = vadd.f32 %v3870, %v4049
    %v4070 = vadd.f32 %v3871, %v4049
    %v4071 = vadd.f32 %v3872, %v4049
    %v4072 = vadd.f32 %v3873, %v4049
    %v4073 = vadd.f32 %v3874, %v4049
    %v4074 = vadd.f32 %v3875, %v4049
    %v4075 = vadd.f32 %v3876, %v4049
    %v4076 = vadd.f32 %v3877, %v4049
    %v4077 = vadd.f32 %v3878, %v4049
    %v4078 = vadd.f32 %v3879, %v4049
    %v4079 = vadd.f32 %v3880, %v4049
    %v4080 = vadd.f32 %v3881, %v4049
    %v4081 = vadd.f32 %v3882, %v4049
    %v4082 = vadd.f32 %v3883, %v4049
    %v4083 = vadd.f32 %v3884, %v4049
    %v4084 = vadd.f32 %v3885, %v4049
    %v4085 = vadd.f32 %v3886, %v4049
    %v4086 = vadd.f32 %v3887, %v4049
    %v4087 = vadd.f32 %v3888, %v4049
    %v4088 = vadd.f32 %v3889, %v4049
    %v4089 = vadd.f32 %v3890, %v4049
    %v4090 = vadd.f32 %v3891, %v4049
    %v4091 = vadd.f32 %v3892, %v4049
    %v4092 = vadd.f32 %v3893, %v4049
    %v4093 = vadd.f32 %v3894, %v4049
    %v4094 = vadd.f32 %v3895, %v4049
    %v4095 = vadd.f32 %v3896, %v4049
    %v4096 = vadd.f32 %v3897, %v4049
    %v4097 = vadd.f32 %v3898, %v4049
    %v4098 = vadd.f32 %v3899, %v4049
    %v4099 = vadd.f32 %v3900, %v4049
    %v4100 = vadd.f32 %v3901, %v4049
    %v4101 = vadd.f32 %v3902, %v4049
    %v4102 = vadd.f32 %v3903, %v4049
    %v4103 = vadd.f32 %v3904, %v4049
    %v4104 = vadd.f32 %v3905, %v4049
    %v4105 = vadd.f32 %v3906, %v4049
    %v4106 = vadd.f32 %v3907, %v4049
    %v4107 = vadd.f32 %v3908, %v4049
    %v4108 = vadd.f32 %v3909, %v4049
    %v4109 = vadd.f32 %v3910, %v4049
    %v4110 = vadd.f32 %v3911, %v4049
    %v4111 = vadd.f32 %v3912, %v4049
    %v4112 = vadd.f32 %v3913, %v4049
    %v4113 = vadd.f32 %v3914, %v4049
    %v4114 = vadd.f32 %v3915, %v4049
    %v4115 = vadd.f32 %v3916, %v4049
    %v4116 = vadd.f32 %v3917, %v4049
    %v4117 = vadd.f32 %v3918, %v4049
    %v4118 = vadd.f32 %v3919, %v4049
    %v4119 = vadd.f32 %v3920, %v4049
    %v4120 = vadd.f32 %v3921, %v4049
    %v4121 = vadd.f32 %v3922, %v4049
    %v4122 = vadd.f32 %v3923, %v4049
    %v4123 = vadd.f32 %v3924, %v4049
    %v4124 = vadd.f32 %v3925, %v4049
    %v4125 = vadd.f32 %v3926, %v4049
    %v4126 = vadd.f32 %v3927, %v4049
    %v4127 = vadd.f32 %v3928, %v4049
    %v4128 = vadd.f32 %v3929, %v4049
    %v4129 = vadd.f32 %v3930, %v4049
    %v4130 = vadd.f32 %v3931, %v4049
    %v4131 = vadd.f32 %v3932, %v4049
    %v4132 = vadd.f32 %v3933, %v4049
    %v4133 = vadd.f32 %v3934, %v4049
    %v4134 = vadd.f32 %v3935, %v4049
    %v4135 = vadd.f32 %v3936, %v4049
    %v4136 = vadd.f32 %v3937, %v4049
    %v4137 = vadd.f32 %v3938, %v4049
    %v4138 = vadd.f32 %v3939, %v4049
    %v4139 = vadd.f32 %v3940, %v4049
    %v4140 = vadd.f32 %v3941, %v4049
    %v4141 = vadd.f32 %v3942, %v4049
    %v4142 = vadd.f32 %v3943, %v4049
    %v4143 = vadd.f32 %v3944, %v4049
    %v4144 = vadd.f32 %v3945, %v4049
    %v4145 = vadd.f32 %v3946, %v4049
    %v4146 = vadd.f32 %v3947, %v4049
    %v4147 = vadd.f32 %v3948, %v4049
    %v4148 = vadd.f32 %v3949, %v4049
    %v4149 = vadd.f32 %v3950, %v4049
    %v4150 = vadd.f32 %v3951, %v4049
    %v4151 = vadd.f32 %v3952, %v4049
    %v4152 = vadd.f32 %v3953, %v4049
    %v4153 = vadd.f32 %v3954, %v4049
    %v4154 = vadd.f32 %v3955, %v4049
    %v4155 = vadd.f32 %v3956, %v4049
    %v4156 = vadd.f32 %v3957, %v4049
    %v4157 = vadd.f32 %v3958, %v4049
    %v4158 = vadd.f32 %v3959, %v4049
    %v4159 = vadd.f32 %v3960, %v4049
    %v4160 = vadd.f32 %v3961, %v4049
    %v4161 = vadd.f32 %v3962, %v4049
    %v4162 = vadd.f32 %v3963, %v4049
    %v4163 = vadd.f32 %v3964, %v4049
    %v4164 = vadd.f32 %v3965, %v4049
    %v4165 = vadd.f32 %v3966, %v4049
    %v4166 = vadd.f32 %v3967, %v4049
    %v4167 = vadd.f32 %v3968, %v4049
    %v4168 = vadd.f32 %v3969, %v4049
    %v4169 = vadd.f32 %v3970, %v4049
    %v4170 = vadd.f32 %v3971, %v4049
    %v4171 = vadd.f32 %v3972, %v4049
    %v4172 = vadd.f32 %v3973, %v4049
    %v4173 = vadd.f32 %v3974, %v4049
    %v4174 = vadd.f32 %v3975, %v4049
    %v4175 = vadd.f32 %v3976, %v4049
    %v4176 = vadd.f32 %v3977, %v4049
    %v4177 = vadd.f32 %v3978, %v4049
    %v4178 = vadd.f32 %v3979, %v4049
    %v4179 = vadd.f32 %v3980, %v4049
    %v4180 = vadd.f32 %v3981, %v4049
    %v4181 = vadd.f32 %v3982, %v4049
    %v4182 = vadd.f32 %v3983, %v4049
    %v4183 = vadd.f32 %v3984, %v4049
    %v4184 = vadd.f32 %v3985, %v4049
    %v4185 = vadd.f32 %v3986, %v4049
    %v4186 = vadd.f32 %v3987, %v4049
    %v4187 = vadd.f32 %v3988, %v4049
    %v4188 = vadd.f32 %v3989, %v4049
    %v4189 = vadd.f32 %v3990, %v4049
    %v4190 = vadd.f32 %v3991, %v4049
    %v4191 = vadd.f32 %v3992, %v4049
    %v4192 = vadd.f32 %v3993, %v4049
    %v4193 = vadd.f32 %v3994, %v4049
    %v4194 = vadd.f32 %v3995, %v4049
    %v4195 = vadd.f32 %v3996, %v4049
    %v4196 = vadd.f32 %v3997, %v4049
    %v4197 = vadd.f32 %v3998, %v4049
    %v4198 = vadd.f32 %v3999, %v4049
    %v4199 = vadd.f32 %v4000, %v4049
    %v4200 = vadd.f32 %v4001, %v4049
    %v4201 = vadd.f32 %v4002, %v4049
    %v4202 = vadd.f32 %v4003, %v4049
    %v4203 = vadd.f32 %v4004, %v4049
    %v4204 = vadd.f32 %v4005, %v4049
    %v4205 = vadd.f32 %v4006, %v4049
    %v4206 = vadd.f32 %v4007, %v4049
    %v4207 = vadd.f32 %v4008, %v4049
    %v4208 = vadd.f32 %v4009, %v4049
    %v4209 = vadd.f32 %v4010, %v4049
    %v4210 = vadd.f32 %v4011, %v4049
    %v4211 = vadd.f32 %v4012, %v4049
    %v4212 = vadd.f32 %v4013, %v4049
    %v4213 = vadd.f32 %v4014, %v4049
    %v4214 = vadd.f32 %v4015, %v4049
    %v4215 = vadd.f32 %v4016, %v4049
    %v4216 = vadd.f32 %v4017, %v4049
    %v4217 = vadd.f32 %v4018, %v4049
    %v4218 = vadd.f32 %v4019, %v4049
    %v4219 = vadd.f32 %v4020, %v4049
    %v4220 = vadd.f32 %v4021, %v4049
    %v4221 = vadd.f32 %v4022, %v4049
    %v4222 = vadd.f32 %v4023, %v4049
    %v4223 = vadd.f32 %v4024, %v4049
    %v4224 = vadd.f32 %v4025, %v4049
    %v4225 = vadd.f32 %v4026, %v4049
    %v4226 = vadd.f32 %v4027, %v4049
    %v4227 = vadd.f32 %v4028, %v4049
    %v4228 = vadd.f32 %v4029, %v4049
    %v4229 = vadd.f32 %v4030, %v4049
    %v4230 = vadd.f32 %v4031, %v4049
    %v4231 = vadd.f32 %v4032, %v4049
    %v4232 = vadd.f32 %v4033, %v4049
    %v4233 = vadd.f32 %v4034, %v4049
    %v4234 = vadd.f32 %v4035, %v4049
    %v4235 = vadd.f32 %v4036, %v4049
    %v4236 = vadd.f32 %v4037, %v4049
    %v4237 = vadd.f32 %v4038, %v4049
    %v4238 = vadd.f32 %v4039, %v4049
    %v4239 = vadd.f32 %v4040, %v4049
    %v4240 = vadd.f32 %v4041, %v4049
    %v4241 = vadd.f32 %v4042, %v4049
    %v4242 = vadd.f32 %v4043, %v4049
    %v4243 = vmax.f32 %v4051, 0.0
    %v4244 = vmax.f32 %v4052, 0.0
    %v4245 = vmax.f32 %v4053, 0.0
    %v4246 = vmax.f32 %v4054, 0.0
    %v4247 = vmax.f32 %v4055, 0.0
    %v4248 = vmax.f32 %v4056, 0.0
    %v4249 = vmax.f32 %v4057, 0.0
    %v4250 = vmax.f32 %v4058, 0.0
    %v4251 = vmax.f32 %v4059, 0.0
    %v4252 = vmax.f32 %v4060, 0.0
    %v4253 = vmax.f32 %v4061, 0.0
    %v4254 = vmax.f32 %v4062, 0.0
    %v4255 = vmax.f32 %v4063, 0.0
    %v4256 = vmax.f32 %v4064, 0.0
    %v4257 = vmax.f32 %v4065, 0.0
    %v4258 = vmax.f32 %v4066, 0.0
    %v4259 = vmax.f32 %v4067, 0.0
    %v4260 = vmax.f32 %v4068, 0.0
    %v4261 = vmax.f32 %v4069, 0.0
    %v4262 = vmax.f32 %v4070, 0.0
    %v4263 = vmax.f32 %v4071, 0.0
    %v4264 = vmax.f32 %v4072, 0.0
    %v4265 = vmax.f32 %v4073, 0.0
    %v4266 = vmax.f32 %v4074, 0.0
    %v4267 = vmax.f32 %v4075, 0.0
    %v4268 = vmax.f32 %v4076, 0.0
    %v4269 = vmax.f32 %v4077, 0.0
    %v4270 = vmax.f32 %v4078, 0.0
    %v4271 = vmax.f32 %v4079, 0.0
    %v4272 = vmax.f32 %v4080, 0.0
    %v4273 = vmax.f32 %v4081, 0.0
    %v4274 = vmax.f32 %v4082, 0.0
    %v4275 = vmax.f32 %v4083, 0.0
    %v4276 = vmax.f32 %v4084, 0.0
    %v4277 = vmax.f32 %v4085, 0.0
    %v4278 = vmax.f32 %v4086, 0.0
    %v4279 = vmax.f32 %v4087, 0.0
    %v4280 = vmax.f32 %v4088, 0.0
    %v4281 = vmax.f32 %v4089, 0.0
    %v4282 = vmax.f32 %v4090, 0.0
    %v4283 = vmax.f32 %v4091, 0.0
    %v4284 = vmax.f32 %v4092, 0.0
    %v4285 = vmax.f32 %v4093, 0.0
    %v4286 = vmax.f32 %v4094, 0.0
    %v4287 = vmax.f32 %v4095, 0.0
    %v4288 = vmax.f32 %v4096, 0.0
    %v4289 = vmax.f32 %v4097, 0.0
    %v4290 = vmax.f32 %v4098, 0.0
    %v4291 = vmax.f32 %v4099, 0.0
    %v4292 = vmax.f32 %v4100, 0.0
    %v4293 = vmax.f32 %v4101, 0.0
    %v4294 = vmax.f32 %v4102, 0.0
    %v4295 = vmax.f32 %v4103, 0.0
    %v4296 = vmax.f32 %v4104, 0.0
    %v4297 = vmax.f32 %v4105, 0.0
    %v4298 = vmax.f32 %v4106, 0.0
    %v4299 = vmax.f32 %v4107, 0.0
    %v4300 = vmax.f32 %v4108, 0.0
    %v4301 = vmax.f32 %v4109, 0.0
    %v4302 = vmax.f32 %v4110, 0.0
    %v4303 = vmax.f32 %v4111, 0.0
    %v4304 = vmax.f32 %v4112, 0.0
    %v4305 = vmax.f32 %v4113, 0.0
    %v4306 = vmax.f32 %v4114, 0.0
    %v4307 = vmax.f32 %v4115, 0.0
    %v4308 = vmax.f32 %v4116, 0.0
    %v4309 = vmax.f32 %v4117, 0.0
    %v4310 = vmax.f32 %v4118, 0.0
    %v4311 = vmax.f32 %v4119, 0.0
    %v4312 = vmax.f32 %v4120, 0.0
    %v4313 = vmax.f32 %v4121, 0.0
    %v4314 = vmax.f32 %v4122, 0.0
    %v4315 = vmax.f32 %v4123, 0.0
    %v4316 = vmax.f32 %v4124, 0.0
    %v4317 = vmax.f32 %v4125, 0.0
    %v4318 = vmax.f32 %v4126, 0.0
    %v4319 = vmax.f32 %v4127, 0.0
    %v4320 = vmax.f32 %v4128, 0.0
    %v4321 = vmax.f32 %v4129, 0.0
    %v4322 = vmax.f32 %v4130, 0.0
    %v4323 = vmax.f32 %v4131, 0.0
    %v4324 = vmax.f32 %v4132, 0.0
    %v4325 = vmax.f32 %v4133, 0.0
    %v4326 = vmax.f32 %v4134, 0.0
    %v4327 = vmax.f32 %v4135, 0.0
    %v4328 = vmax.f32 %v4136, 0.0
    %v4329 = vmax.f32 %v4137, 0.0
    %v4330 = vmax.f32 %v4138, 0.0
    %v4331 = vmax.f32 %v4139, 0.0
    %v4332 = vmax.f32 %v4140, 0.0
    %v4333 = vmax.f32 %v4141, 0.0
    %v4334 = vmax.f32 %v4142, 0.0
    %v4335 = vmax.f32 %v4143, 0.0
    %v4336 = vmax.f32 %v4144, 0.0
    %v4337 = vmax.f32 %v4145, 0.0
    %v4338 = vmax.f32 %v4146, 0.0
    %v4339 = vmax.f32 %v4147, 0.0
    %v4340 = vmax.f32 %v4148, 0.0
    %v4341 = vmax.f32 %v4149, 0.0
    %v4342 = vmax.f32 %v4150, 0.0
    %v4343 = vmax.f32 %v4151, 0.0
    %v4344 = vmax.f32 %v4152, 0.0
    %v4345 = vmax.f32 %v4153, 0.0
    %v4346 = vmax.f32 %v4154, 0.0
    %v4347 = vmax.f32 %v4155, 0.0
    %v4348 = vmax.f32 %v4156, 0.0
    %v4349 = vmax.f32 %v4157, 0.0
    %v4350 = vmax.f32 %v4158, 0.0
    %v4351 = vmax.f32 %v4159, 0.0
    %v4352 = vmax.f32 %v4160, 0.0
    %v4353 = vmax.f32 %v4161, 0.0
    %v4354 = vmax.f32 %v4162, 0.0
    %v4355 = vmax.f32 %v4163, 0.0
    %v4356 = vmax.f32 %v4164, 0.0
    %v4357 = vmax.f32 %v4165, 0.0
    %v4358 = vmax.f32 %v4166, 0.0
    %v4359 = vmax.f32 %v4167, 0.0
    %v4360 = vmax.f32 %v4168, 0.0
    %v4361 = vmax.f32 %v4169, 0.0
    %v4362 = vmax.f32 %v4170, 0.0
    %v4363 = vmax.f32 %v4171, 0.0
    %v4364 = vmax.f32 %v4172, 0.0
    %v4365 = vmax.f32 %v4173, 0.0
    %v4366 = vmax.f32 %v4174, 0.0
    %v4367 = vmax.f32 %v4175, 0.0
    %v4368 = vmax.f32 %v4176, 0.0
    %v4369 = vmax.f32 %v4177, 0.0
    %v4370 = vmax.f32 %v4178, 0.0
    %v4371 = vmax.f32 %v4179, 0.0
    %v4372 = vmax.f32 %v4180, 0.0
    %v4373 = vmax.f32 %v4181, 0.0
    %v4374 = vmax.f32 %v4182, 0.0
    %v4375 = vmax.f32 %v4183, 0.0
    %v4376 = vmax.f32 %v4184, 0.0
    %v4377 = vmax.f32 %v4185, 0.0
    %v4378 = vmax.f32 %v4186, 0.0
    %v4379 = vmax.f32 %v4187, 0.0
    %v4380 = vmax.f32 %v4188, 0.0
    %v4381 = vmax.f32 %v4189, 0.0
    %v4382 = vmax.f32 %v4190, 0.0
    %v4383 = vmax.f32 %v4191, 0.0
    %v4384 = vmax.f32 %v4192, 0.0
    %v4385 = vmax.f32 %v4193, 0.0
    %v4386 = vmax.f32 %v4194, 0.0
    %v4387 = vmax.f32 %v4195, 0.0
    %v4388 = vmax.f32 %v4196, 0.0
    %v4389 = vmax.f32 %v4197, 0.0
    %v4390 = vmax.f32 %v4198, 0.0
    %v4391 = vmax.f32 %v4199, 0.0
    %v4392 = vmax.f32 %v4200, 0.0
    %v4393 = vmax.f32 %v4201, 0.0
    %v4394 = vmax.f32 %v4202, 0.0
    %v4395 = vmax.f32 %v4203, 0.0
    %v4396 = vmax.f32 %v4204, 0.0
    %v4397 = vmax.f32 %v4205, 0.0
    %v4398 = vmax.f32 %v4206, 0.0
    %v4399 = vmax.f32 %v4207, 0.0
    %v4400 = vmax.f32 %v4208, 0.0
    %v4401 = vmax.f32 %v4209, 0.0
    %v4402 = vmax.f32 %v4210, 0.0
    %v4403 = vmax.f32 %v4211, 0.0
    %v4404 = vmax.f32 %v4212, 0.0
    %v4405 = vmax.f32 %v4213, 0.0
    %v4406 = vmax.f32 %v4214, 0.0
    %v4407 = vmax.f32 %v4215, 0.0
    %v4408 = vmax.f32 %v4216, 0.0
    %v4409 = vmax.f32 %v4217, 0.0
    %v4410 = vmax.f32 %v4218, 0.0
    %v4411 = vmax.f32 %v4219, 0.0
    %v4412 = vmax.f32 %v4220, 0.0
    %v4413 = vmax.f32 %v4221, 0.0
    %v4414 = vmax.f32 %v4222, 0.0
    %v4415 = vmax.f32 %v4223, 0.0
    %v4416 = vmax.f32 %v4224, 0.0
    %v4417 = vmax.f32 %v4225, 0.0
    %v4418 = vmax.f32 %v4226, 0.0
    %v4419 = vmax.f32 %v4227, 0.0
    %v4420 = vmax.f32 %v4228, 0.0
    %v4421 = vmax.f32 %v4229, 0.0
    %v4422 = vmax.f32 %v4230, 0.0
    %v4423 = vmax.f32 %v4231, 0.0
    %v4424 = vmax.f32 %v4232, 0.0
    %v4425 = vmax.f32 %v4233, 0.0
    %v4426 = vmax.f32 %v4234, 0.0
    %v4427 = vmax.f32 %v4235, 0.0
    %v4428 = vmax.f32 %v4236, 0.0
    %v4429 = vmax.f32 %v4237, 0.0
    %v4430 = vmax.f32 %v4238, 0.0
    %v4431 = vmax.f32 %v4239, 0.0
    %v4432 = vmax.f32 %v4240, 0.0
    %v4433 = vmax.f32 %v4241, 0.0
    %v4434 = vmax.f32 %v4242, 0.0
    %v4531 = vrot.slane %v4243, 1
    %v4532 = vrot.slane %v4244, 1
    %v4533 = vsel %vm1787, %v4531, %v4532
    %v4534 = vrot.slane %v4245, 1
    %v4535 = vsel %vm1787, %v4532, %v4534
    %v4536 = vrot.slane %v4246, 1
    %v4537 = vsel %vm1787, %v4534, %v4536
    %v4538 = vrot.slane %v4251, 1
    %v4539 = vrot.slane %v4252, 1
    %v4540 = vsel %vm1787, %v4538, %v4539
    %v4541 = vrot.slane %v4253, 1
    %v4542 = vsel %vm1787, %v4539, %v4541
    %v4543 = vrot.slane %v4254, 1
    %v4544 = vsel %vm1787, %v4541, %v4543
    %v4545 = vrot.slane %v4259, 1
    %v4546 = vrot.slane %v4260, 1
    %v4547 = vsel %vm1787, %v4545, %v4546
    %v4548 = vrot.slane %v4261, 1
    %v4549 = vsel %vm1787, %v4546, %v4548
    %v4550 = vrot.slane %v4262, 1
    %v4551 = vsel %vm1787, %v4548, %v4550
    %v4552 = vrot.slane %v4267, 1
    %v4553 = vrot.slane %v4268, 1
    %v4554 = vsel %vm1787, %v4552, %v4553
    %v4555 = vrot.slane %v4269, 1
    %v4556 = vsel %vm1787, %v4553, %v4555
    %v4557 = vrot.slane %v4270, 1
    %v4558 = vsel %vm1787, %v4555, %v4557
    %v4559 = vrot.slane %v4275, 1
    %v4560 = vrot.slane %v4276, 1
    %v4561 = vsel %vm1787, %v4559, %v4560
    %v4562 = vrot.slane %v4277, 1
    %v4563 = vsel %vm1787, %v4560, %v4562
    %v4564 = vrot.slane %v4278, 1
    %v4565 = vsel %vm1787, %v4562, %v4564
    %v4566 = vrot.slane %v4283, 1
    %v4567 = vrot.slane %v4284, 1
    %v4568 = vsel %vm1787, %v4566, %v4567
    %v4569 = vrot.slane %v4285, 1
    %v4570 = vsel %vm1787, %v4567, %v4569
    %v4571 = vrot.slane %v4286, 1
    %v4572 = vsel %vm1787, %v4569, %v4571
    %v4573 = vrot.slane %v4291, 1
    %v4574 = vrot.slane %v4292, 1
    %v4575 = vsel %vm1787, %v4573, %v4574
    %v4576 = vrot.slane %v4293, 1
    %v4577 = vsel %vm1787, %v4574, %v4576
    %v4578 = vrot.slane %v4294, 1
    %v4579 = vsel %vm1787, %v4576, %v4578
    %v4580 = vrot.slane %v4299, 1
    %v4581 = vrot.slane %v4300, 1
    %v4582 = vsel %vm1787, %v4580, %v4581
    %v4583 = vrot.slane %v4301, 1
    %v4584 = vsel %vm1787, %v4581, %v4583
    %v4585 = vrot.slane %v4302, 1
    %v4586 = vsel %vm1787, %v4583, %v4585
    %v4587 = vrot.slane %v4307, 1
    %v4588 = vrot.slane %v4308, 1
    %v4589 = vsel %vm1787, %v4587, %v4588
    %v4590 = vrot.slane %v4309, 1
    %v4591 = vsel %vm1787, %v4588, %v4590
    %v4592 = vrot.slane %v4310, 1
    %v4593 = vsel %vm1787, %v4590, %v4592
    %v4594 = vrot.slane %v4315, 1
    %v4595 = vrot.slane %v4316, 1
    %v4596 = vsel %vm1787, %v4594, %v4595
    %v4597 = vrot.slane %v4317, 1
    %v4598 = vsel %vm1787, %v4595, %v4597
    %v4599 = vrot.slane %v4318, 1
    %v4600 = vsel %vm1787, %v4597, %v4599
    %v4601 = vrot.slane %v4323, 1
    %v4602 = vrot.slane %v4324, 1
    %v4603 = vsel %vm1787, %v4601, %v4602
    %v4604 = vrot.slane %v4325, 1
    %v4605 = vsel %vm1787, %v4602, %v4604
    %v4606 = vrot.slane %v4326, 1
    %v4607 = vsel %vm1787, %v4604, %v4606
    %v4608 = vrot.slane %v4331, 1
    %v4609 = vrot.slane %v4332, 1
    %v4610 = vsel %vm1787, %v4608, %v4609
    %v4611 = vrot.slane %v4333, 1
    %v4612 = vsel %vm1787, %v4609, %v4611
    %v4613 = vrot.slane %v4334, 1
    %v4614 = vsel %vm1787, %v4611, %v4613
    %v4615 = vrot.slane %v4339, 1
    %v4616 = vrot.slane %v4340, 1
    %v4617 = vsel %vm1787, %v4615, %v4616
    %v4618 = vrot.slane %v4341, 1
    %v4619 = vsel %vm1787, %v4616, %v4618
    %v4620 = vrot.slane %v4342, 1
    %v4621 = vsel %vm1787, %v4618, %v4620
    %v4622 = vrot.slane %v4347, 1
    %v4623 = vrot.slane %v4348, 1
    %v4624 = vsel %vm1787, %v4622, %v4623
    %v4625 = vrot.slane %v4349, 1
    %v4626 = vsel %vm1787, %v4623, %v4625
    %v4627 = vrot.slane %v4350, 1
    %v4628 = vsel %vm1787, %v4625, %v4627
    %v4629 = vrot.slane %v4355, 1
    %v4630 = vrot.slane %v4356, 1
    %v4631 = vsel %vm1787, %v4629, %v4630
    %v4632 = vrot.slane %v4357, 1
    %v4633 = vsel %vm1787, %v4630, %v4632
    %v4634 = vrot.slane %v4358, 1
    %v4635 = vsel %vm1787, %v4632, %v4634
    %v4636 = vrot.slane %v4363, 1
    %v4637 = vrot.slane %v4364, 1
    %v4638 = vsel %vm1787, %v4636, %v4637
    %v4639 = vrot.slane %v4365, 1
    %v4640 = vsel %vm1787, %v4637, %v4639
    %v4641 = vrot.slane %v4366, 1
    %v4642 = vsel %vm1787, %v4639, %v4641
    %v4643 = vrot.slane %v4371, 1
    %v4644 = vrot.slane %v4372, 1
    %v4645 = vsel %vm1787, %v4643, %v4644
    %v4646 = vrot.slane %v4373, 1
    %v4647 = vsel %vm1787, %v4644, %v4646
    %v4648 = vrot.slane %v4374, 1
    %v4649 = vsel %vm1787, %v4646, %v4648
    %v4650 = vrot.slane %v4379, 1
    %v4651 = vrot.slane %v4380, 1
    %v4652 = vsel %vm1787, %v4650, %v4651
    %v4653 = vrot.slane %v4381, 1
    %v4654 = vsel %vm1787, %v4651, %v4653
    %v4655 = vrot.slane %v4382, 1
    %v4656 = vsel %vm1787, %v4653, %v4655
    %v4657 = vrot.slane %v4387, 1
    %v4658 = vrot.slane %v4388, 1
    %v4659 = vsel %vm1787, %v4657, %v4658
    %v4660 = vrot.slane %v4389, 1
    %v4661 = vsel %vm1787, %v4658, %v4660
    %v4662 = vrot.slane %v4390, 1
    %v4663 = vsel %vm1787, %v4660, %v4662
    %v4664 = vrot.slane %v4395, 1
    %v4665 = vrot.slane %v4396, 1
    %v4666 = vsel %vm1787, %v4664, %v4665
    %v4667 = vrot.slane %v4397, 1
    %v4668 = vsel %vm1787, %v4665, %v4667
    %v4669 = vrot.slane %v4398, 1
    %v4670 = vsel %vm1787, %v4667, %v4669
    %v4671 = vrot.slane %v4403, 1
    %v4672 = vrot.slane %v4404, 1
    %v4673 = vsel %vm1787, %v4671, %v4672
    %v4674 = vrot.slane %v4405, 1
    %v4675 = vsel %vm1787, %v4672, %v4674
    %v4676 = vrot.slane %v4406, 1
    %v4677 = vsel %vm1787, %v4674, %v4676
    %v4678 = vrot.slane %v4411, 1
    %v4679 = vrot.slane %v4412, 1
    %v4680 = vsel %vm1787, %v4678, %v4679
    %v4681 = vrot.slane %v4413, 1
    %v4682 = vsel %vm1787, %v4679, %v4681
    %v4683 = vrot.slane %v4414, 1
    %v4684 = vsel %vm1787, %v4681, %v4683
    %v4685 = vrot.slane %v4419, 1
    %v4686 = vrot.slane %v4420, 1
    %v4687 = vsel %vm1787, %v4685, %v4686
    %v4688 = vrot.slane %v4421, 1
    %v4689 = vsel %vm1787, %v4686, %v4688
    %v4690 = vrot.slane %v4422, 1
    %v4691 = vsel %vm1787, %v4688, %v4690
    %v4692 = vrot.slane %v4427, 1
    %v4693 = vrot.slane %v4428, 1
    %v4694 = vsel %vm1787, %v4692, %v4693
    %v4695 = vrot.slane %v4429, 1
    %v4696 = vsel %vm1787, %v4693, %v4695
    %v4697 = vrot.slane %v4430, 1
    %v4698 = vsel %vm1787, %v4695, %v4697
    %v4795 = vmax.f32 %v4243, %v4533
    %v4796 = vmax.f32 %v4244, %v4535
    %v4797 = vmax.f32 %v4245, %v4537
    %v4798 = vmax.f32 %v4246, %v4536
    %v4799 = vmax.f32 %v4251, %v4540
    %v4800 = vmax.f32 %v4252, %v4542
    %v4801 = vmax.f32 %v4253, %v4544
    %v4802 = vmax.f32 %v4254, %v4543
    %v4803 = vmax.f32 %v4259, %v4547
    %v4804 = vmax.f32 %v4260, %v4549
    %v4805 = vmax.f32 %v4261, %v4551
    %v4806 = vmax.f32 %v4262, %v4550
    %v4807 = vmax.f32 %v4267, %v4554
    %v4808 = vmax.f32 %v4268, %v4556
    %v4809 = vmax.f32 %v4269, %v4558
    %v4810 = vmax.f32 %v4270, %v4557
    %v4811 = vmax.f32 %v4275, %v4561
    %v4812 = vmax.f32 %v4276, %v4563
    %v4813 = vmax.f32 %v4277, %v4565
    %v4814 = vmax.f32 %v4278, %v4564
    %v4815 = vmax.f32 %v4283, %v4568
    %v4816 = vmax.f32 %v4284, %v4570
    %v4817 = vmax.f32 %v4285, %v4572
    %v4818 = vmax.f32 %v4286, %v4571
    %v4819 = vmax.f32 %v4291, %v4575
    %v4820 = vmax.f32 %v4292, %v4577
    %v4821 = vmax.f32 %v4293, %v4579
    %v4822 = vmax.f32 %v4294, %v4578
    %v4823 = vmax.f32 %v4299, %v4582
    %v4824 = vmax.f32 %v4300, %v4584
    %v4825 = vmax.f32 %v4301, %v4586
    %v4826 = vmax.f32 %v4302, %v4585
    %v4827 = vmax.f32 %v4307, %v4589
    %v4828 = vmax.f32 %v4308, %v4591
    %v4829 = vmax.f32 %v4309, %v4593
    %v4830 = vmax.f32 %v4310, %v4592
    %v4831 = vmax.f32 %v4315, %v4596
    %v4832 = vmax.f32 %v4316, %v4598
    %v4833 = vmax.f32 %v4317, %v4600
    %v4834 = vmax.f32 %v4318, %v4599
    %v4835 = vmax.f32 %v4323, %v4603
    %v4836 = vmax.f32 %v4324, %v4605
    %v4837 = vmax.f32 %v4325, %v4607
    %v4838 = vmax.f32 %v4326, %v4606
    %v4839 = vmax.f32 %v4331, %v4610
    %v4840 = vmax.f32 %v4332, %v4612
    %v4841 = vmax.f32 %v4333, %v4614
    %v4842 = vmax.f32 %v4334, %v4613
    %v4843 = vmax.f32 %v4339, %v4617
    %v4844 = vmax.f32 %v4340, %v4619
    %v4845 = vmax.f32 %v4341, %v4621
    %v4846 = vmax.f32 %v4342, %v4620
    %v4847 = vmax.f32 %v4347, %v4624
    %v4848 = vmax.f32 %v4348, %v4626
    %v4849 = vmax.f32 %v4349, %v4628
    %v4850 = vmax.f32 %v4350, %v4627
    %v4851 = vmax.f32 %v4355, %v4631
    %v4852 = vmax.f32 %v4356, %v4633
    %v4853 = vmax.f32 %v4357, %v4635
    %v4854 = vmax.f32 %v4358, %v4634
    %v4855 = vmax.f32 %v4363, %v4638
    %v4856 = vmax.f32 %v4364, %v4640
    %v4857 = vmax.f32 %v4365, %v4642
    %v4858 = vmax.f32 %v4366, %v4641
    %v4859 = vmax.f32 %v4371, %v4645
    %v4860 = vmax.f32 %v4372, %v4647
    %v4861 = vmax.f32 %v4373, %v4649
    %v4862 = vmax.f32 %v4374, %v4648
    %v4863 = vmax.f32 %v4379, %v4652
    %v4864 = vmax.f32 %v4380, %v4654
    %v4865 = vmax.f32 %v4381, %v4656
    %v4866 = vmax.f32 %v4382, %v4655
    %v4867 = vmax.f32 %v4387, %v4659
    %v4868 = vmax.f32 %v4388, %v4661
    %v4869 = vmax.f32 %v4389, %v4663
    %v4870 = vmax.f32 %v4390, %v4662
    %v4871 = vmax.f32 %v4395, %v4666
    %v4872 = vmax.f32 %v4396, %v4668
    %v4873 = vmax.f32 %v4397, %v4670
    %v4874 = vmax.f32 %v4398, %v4669
    %v4875 = vmax.f32 %v4403, %v4673
    %v4876 = vmax.f32 %v4404, %v4675
    %v4877 = vmax.f32 %v4405, %v4677
    %v4878 = vmax.f32 %v4406, %v4676
    %v4879 = vmax.f32 %v4411, %v4680
    %v4880 = vmax.f32 %v4412, %v4682
    %v4881 = vmax.f32 %v4413, %v4684
    %v4882 = vmax.f32 %v4414, %v4683
    %v4883 = vmax.f32 %v4419, %v4687
    %v4884 = vmax.f32 %v4420, %v4689
    %v4885 = vmax.f32 %v4421, %v4691
    %v4886 = vmax.f32 %v4422, %v4690
    %v4887 = vmax.f32 %v4427, %v4694
    %v4888 = vmax.f32 %v4428, %v4696
    %v4889 = vmax.f32 %v4429, %v4698
    %v4890 = vmax.f32 %v4430, %v4697
    %v4987 = vrot.slane %v4247, 1
    %v4988 = vrot.slane %v4248, 1
    %v4989 = vsel %vm1787, %v4987, %v4988
    %v4990 = vrot.slane %v4249, 1
    %v4991 = vsel %vm1787, %v4988, %v4990
    %v4992 = vrot.slane %v4250, 1
    %v4993 = vsel %vm1787, %v4990, %v4992
    %v4994 = vrot.slane %v4255, 1
    %v4995 = vrot.slane %v4256, 1
    %v4996 = vsel %vm1787, %v4994, %v4995
    %v4997 = vrot.slane %v4257, 1
    %v4998 = vsel %vm1787, %v4995, %v4997
    %v4999 = vrot.slane %v4258, 1
    %v5000 = vsel %vm1787, %v4997, %v4999
    %v5001 = vrot.slane %v4263, 1
    %v5002 = vrot.slane %v4264, 1
    %v5003 = vsel %vm1787, %v5001, %v5002
    %v5004 = vrot.slane %v4265, 1
    %v5005 = vsel %vm1787, %v5002, %v5004
    %v5006 = vrot.slane %v4266, 1
    %v5007 = vsel %vm1787, %v5004, %v5006
    %v5008 = vrot.slane %v4271, 1
    %v5009 = vrot.slane %v4272, 1
    %v5010 = vsel %vm1787, %v5008, %v5009
    %v5011 = vrot.slane %v4273, 1
    %v5012 = vsel %vm1787, %v5009, %v5011
    %v5013 = vrot.slane %v4274, 1
    %v5014 = vsel %vm1787, %v5011, %v5013
    %v5015 = vrot.slane %v4279, 1
    %v5016 = vrot.slane %v4280, 1
    %v5017 = vsel %vm1787, %v5015, %v5016
    %v5018 = vrot.slane %v4281, 1
    %v5019 = vsel %vm1787, %v5016, %v5018
    %v5020 = vrot.slane %v4282, 1
    %v5021 = vsel %vm1787, %v5018, %v5020
    %v5022 = vrot.slane %v4287, 1
    %v5023 = vrot.slane %v4288, 1
    %v5024 = vsel %vm1787, %v5022, %v5023
    %v5025 = vrot.slane %v4289, 1
    %v5026 = vsel %vm1787, %v5023, %v5025
    %v5027 = vrot.slane %v4290, 1
    %v5028 = vsel %vm1787, %v5025, %v5027
    %v5029 = vrot.slane %v4295, 1
    %v5030 = vrot.slane %v4296, 1
    %v5031 = vsel %vm1787, %v5029, %v5030
    %v5032 = vrot.slane %v4297, 1
    %v5033 = vsel %vm1787, %v5030, %v5032
    %v5034 = vrot.slane %v4298, 1
    %v5035 = vsel %vm1787, %v5032, %v5034
    %v5036 = vrot.slane %v4303, 1
    %v5037 = vrot.slane %v4304, 1
    %v5038 = vsel %vm1787, %v5036, %v5037
    %v5039 = vrot.slane %v4305, 1
    %v5040 = vsel %vm1787, %v5037, %v5039
    %v5041 = vrot.slane %v4306, 1
    %v5042 = vsel %vm1787, %v5039, %v5041
    %v5043 = vrot.slane %v4311, 1
    %v5044 = vrot.slane %v4312, 1
    %v5045 = vsel %vm1787, %v5043, %v5044
    %v5046 = vrot.slane %v4313, 1
    %v5047 = vsel %vm1787, %v5044, %v5046
    %v5048 = vrot.slane %v4314, 1
    %v5049 = vsel %vm1787, %v5046, %v5048
    %v5050 = vrot.slane %v4319, 1
    %v5051 = vrot.slane %v4320, 1
    %v5052 = vsel %vm1787, %v5050, %v5051
    %v5053 = vrot.slane %v4321, 1
    %v5054 = vsel %vm1787, %v5051, %v5053
    %v5055 = vrot.slane %v4322, 1
    %v5056 = vsel %vm1787, %v5053, %v5055
    %v5057 = vrot.slane %v4327, 1
    %v5058 = vrot.slane %v4328, 1
    %v5059 = vsel %vm1787, %v5057, %v5058
    %v5060 = vrot.slane %v4329, 1
    %v5061 = vsel %vm1787, %v5058, %v5060
    %v5062 = vrot.slane %v4330, 1
    %v5063 = vsel %vm1787, %v5060, %v5062
    %v5064 = vrot.slane %v4335, 1
    %v5065 = vrot.slane %v4336, 1
    %v5066 = vsel %vm1787, %v5064, %v5065
    %v5067 = vrot.slane %v4337, 1
    %v5068 = vsel %vm1787, %v5065, %v5067
    %v5069 = vrot.slane %v4338, 1
    %v5070 = vsel %vm1787, %v5067, %v5069
    %v5071 = vrot.slane %v4343, 1
    %v5072 = vrot.slane %v4344, 1
    %v5073 = vsel %vm1787, %v5071, %v5072
    %v5074 = vrot.slane %v4345, 1
    %v5075 = vsel %vm1787, %v5072, %v5074
    %v5076 = vrot.slane %v4346, 1
    %v5077 = vsel %vm1787, %v5074, %v5076
    %v5078 = vrot.slane %v4351, 1
    %v5079 = vrot.slane %v4352, 1
    %v5080 = vsel %vm1787, %v5078, %v5079
    %v5081 = vrot.slane %v4353, 1
    %v5082 = vsel %vm1787, %v5079, %v5081
    %v5083 = vrot.slane %v4354, 1
    %v5084 = vsel %vm1787, %v5081, %v5083
    %v5085 = vrot.slane %v4359, 1
    %v5086 = vrot.slane %v4360, 1
    %v5087 = vsel %vm1787, %v5085, %v5086
    %v5088 = vrot.slane %v4361, 1
    %v5089 = vsel %vm1787, %v5086, %v5088
    %v5090 = vrot.slane %v4362, 1
    %v5091 = vsel %vm1787, %v5088, %v5090
    %v5092 = vrot.slane %v4367, 1
    %v5093 = vrot.slane %v4368, 1
    %v5094 = vsel %vm1787, %v5092, %v5093
    %v5095 = vrot.slane %v4369, 1
    %v5096 = vsel %vm1787, %v5093, %v5095
    %v5097 = vrot.slane %v4370, 1
    %v5098 = vsel %vm1787, %v5095, %v5097
    %v5099 = vrot.slane %v4375, 1
    %v5100 = vrot.slane %v4376, 1
    %v5101 = vsel %vm1787, %v5099, %v5100
    %v5102 = vrot.slane %v4377, 1
    %v5103 = vsel %vm1787, %v5100, %v5102
    %v5104 = vrot.slane %v4378, 1
    %v5105 = vsel %vm1787, %v5102, %v5104
    %v5106 = vrot.slane %v4383, 1
    %v5107 = vrot.slane %v4384, 1
    %v5108 = vsel %vm1787, %v5106, %v5107
    %v5109 = vrot.slane %v4385, 1
    %v5110 = vsel %vm1787, %v5107, %v5109
    %v5111 = vrot.slane %v4386, 1
    %v5112 = vsel %vm1787, %v5109, %v5111
    %v5113 = vrot.slane %v4391, 1
    %v5114 = vrot.slane %v4392, 1
    %v5115 = vsel %vm1787, %v5113, %v5114
    %v5116 = vrot.slane %v4393, 1
    %v5117 = vsel %vm1787, %v5114, %v5116
    %v5118 = vrot.slane %v4394, 1
    %v5119 = vsel %vm1787, %v5116, %v5118
    %v5120 = vrot.slane %v4399, 1
    %v5121 = vrot.slane %v4400, 1
    %v5122 = vsel %vm1787, %v5120, %v5121
    %v5123 = vrot.slane %v4401, 1
    %v5124 = vsel %vm1787, %v5121, %v5123
    %v5125 = vrot.slane %v4402, 1
    %v5126 = vsel %vm1787, %v5123, %v5125
    %v5127 = vrot.slane %v4407, 1
    %v5128 = vrot.slane %v4408, 1
    %v5129 = vsel %vm1787, %v5127, %v5128
    %v5130 = vrot.slane %v4409, 1
    %v5131 = vsel %vm1787, %v5128, %v5130
    %v5132 = vrot.slane %v4410, 1
    %v5133 = vsel %vm1787, %v5130, %v5132
    %v5134 = vrot.slane %v4415, 1
    %v5135 = vrot.slane %v4416, 1
    %v5136 = vsel %vm1787, %v5134, %v5135
    %v5137 = vrot.slane %v4417, 1
    %v5138 = vsel %vm1787, %v5135, %v5137
    %v5139 = vrot.slane %v4418, 1
    %v5140 = vsel %vm1787, %v5137, %v5139
    %v5141 = vrot.slane %v4423, 1
    %v5142 = vrot.slane %v4424, 1
    %v5143 = vsel %vm1787, %v5141, %v5142
    %v5144 = vrot.slane %v4425, 1
    %v5145 = vsel %vm1787, %v5142, %v5144
    %v5146 = vrot.slane %v4426, 1
    %v5147 = vsel %vm1787, %v5144, %v5146
    %v5148 = vrot.slane %v4431, 1
    %v5149 = vrot.slane %v4432, 1
    %v5150 = vsel %vm1787, %v5148, %v5149
    %v5151 = vrot.slane %v4433, 1
    %v5152 = vsel %vm1787, %v5149, %v5151
    %v5153 = vrot.slane %v4434, 1
    %v5154 = vsel %vm1787, %v5151, %v5153
    %v5251 = vmax.f32 %v4247, %v4989
    %v5252 = vmax.f32 %v4248, %v4991
    %v5253 = vmax.f32 %v4249, %v4993
    %v5254 = vmax.f32 %v4250, %v4992
    %v5255 = vmax.f32 %v4255, %v4996
    %v5256 = vmax.f32 %v4256, %v4998
    %v5257 = vmax.f32 %v4257, %v5000
    %v5258 = vmax.f32 %v4258, %v4999
    %v5259 = vmax.f32 %v4263, %v5003
    %v5260 = vmax.f32 %v4264, %v5005
    %v5261 = vmax.f32 %v4265, %v5007
    %v5262 = vmax.f32 %v4266, %v5006
    %v5263 = vmax.f32 %v4271, %v5010
    %v5264 = vmax.f32 %v4272, %v5012
    %v5265 = vmax.f32 %v4273, %v5014
    %v5266 = vmax.f32 %v4274, %v5013
    %v5267 = vmax.f32 %v4279, %v5017
    %v5268 = vmax.f32 %v4280, %v5019
    %v5269 = vmax.f32 %v4281, %v5021
    %v5270 = vmax.f32 %v4282, %v5020
    %v5271 = vmax.f32 %v4287, %v5024
    %v5272 = vmax.f32 %v4288, %v5026
    %v5273 = vmax.f32 %v4289, %v5028
    %v5274 = vmax.f32 %v4290, %v5027
    %v5275 = vmax.f32 %v4295, %v5031
    %v5276 = vmax.f32 %v4296, %v5033
    %v5277 = vmax.f32 %v4297, %v5035
    %v5278 = vmax.f32 %v4298, %v5034
    %v5279 = vmax.f32 %v4303, %v5038
    %v5280 = vmax.f32 %v4304, %v5040
    %v5281 = vmax.f32 %v4305, %v5042
    %v5282 = vmax.f32 %v4306, %v5041
    %v5283 = vmax.f32 %v4311, %v5045
    %v5284 = vmax.f32 %v4312, %v5047
    %v5285 = vmax.f32 %v4313, %v5049
    %v5286 = vmax.f32 %v4314, %v5048
    %v5287 = vmax.f32 %v4319, %v5052
    %v5288 = vmax.f32 %v4320, %v5054
    %v5289 = vmax.f32 %v4321, %v5056
    %v5290 = vmax.f32 %v4322, %v5055
    %v5291 = vmax.f32 %v4327, %v5059
    %v5292 = vmax.f32 %v4328, %v5061
    %v5293 = vmax.f32 %v4329, %v5063
    %v5294 = vmax.f32 %v4330, %v5062
    %v5295 = vmax.f32 %v4335, %v5066
    %v5296 = vmax.f32 %v4336, %v5068
    %v5297 = vmax.f32 %v4337, %v5070
    %v5298 = vmax.f32 %v4338, %v5069
    %v5299 = vmax.f32 %v4343, %v5073
    %v5300 = vmax.f32 %v4344, %v5075
    %v5301 = vmax.f32 %v4345, %v5077
    %v5302 = vmax.f32 %v4346, %v5076
    %v5303 = vmax.f32 %v4351, %v5080
    %v5304 = vmax.f32 %v4352, %v5082
    %v5305 = vmax.f32 %v4353, %v5084
    %v5306 = vmax.f32 %v4354, %v5083
    %v5307 = vmax.f32 %v4359, %v5087
    %v5308 = vmax.f32 %v4360, %v5089
    %v5309 = vmax.f32 %v4361, %v5091
    %v5310 = vmax.f32 %v4362, %v5090
    %v5311 = vmax.f32 %v4367, %v5094
    %v5312 = vmax.f32 %v4368, %v5096
    %v5313 = vmax.f32 %v4369, %v5098
    %v5314 = vmax.f32 %v4370, %v5097
    %v5315 = vmax.f32 %v4375, %v5101
    %v5316 = vmax.f32 %v4376, %v5103
    %v5317 = vmax.f32 %v4377, %v5105
    %v5318 = vmax.f32 %v4378, %v5104
    %v5319 = vmax.f32 %v4383, %v5108
    %v5320 = vmax.f32 %v4384, %v5110
    %v5321 = vmax.f32 %v4385, %v5112
    %v5322 = vmax.f32 %v4386, %v5111
    %v5323 = vmax.f32 %v4391, %v5115
    %v5324 = vmax.f32 %v4392, %v5117
    %v5325 = vmax.f32 %v4393, %v5119
    %v5326 = vmax.f32 %v4394, %v5118
    %v5327 = vmax.f32 %v4399, %v5122
    %v5328 = vmax.f32 %v4400, %v5124
    %v5329 = vmax.f32 %v4401, %v5126
    %v5330 = vmax.f32 %v4402, %v5125
    %v5331 = vmax.f32 %v4407, %v5129
    %v5332 = vmax.f32 %v4408, %v5131
    %v5333 = vmax.f32 %v4409, %v5133
    %v5334 = vmax.f32 %v4410, %v5132
    %v5335 = vmax.f32 %v4415, %v5136
    %v5336 = vmax.f32 %v4416, %v5138
    %v5337 = vmax.f32 %v4417, %v5140
    %v5338 = vmax.f32 %v4418, %v5139
    %v5339 = vmax.f32 %v4423, %v5143
    %v5340 = vmax.f32 %v4424, %v5145
    %v5341 = vmax.f32 %v4425, %v5147
    %v5342 = vmax.f32 %v4426, %v5146
    %v5343 = vmax.f32 %v4431, %v5150
    %v5344 = vmax.f32 %v4432, %v5152
    %v5345 = vmax.f32 %v4433, %v5154
    %v5346 = vmax.f32 %v4434, %v5153
    %v5347 = vmax.f32 %v4795, %v5251
    %v5348 = vmax.f32 %v4796, %v5252
    %v5349 = vmax.f32 %v4797, %v5253
    %v5350 = vmax.f32 %v4798, %v5254
    %v5351 = vmax.f32 %v4799, %v5255
    %v5352 = vmax.f32 %v4800, %v5256
    %v5353 = vmax.f32 %v4801, %v5257
    %v5354 = vmax.f32 %v4802, %v5258
    %v5355 = vmax.f32 %v4803, %v5259
    %v5356 = vmax.f32 %v4804, %v5260
    %v5357 = vmax.f32 %v4805, %v5261
    %v5358 = vmax.f32 %v4806, %v5262
    %v5359 = vmax.f32 %v4807, %v5263
    %v5360 = vmax.f32 %v4808, %v5264
    %v5361 = vmax.f32 %v4809, %v5265
    %v5362 = vmax.f32 %v4810, %v5266
    %v5363 = vmax.f32 %v4811, %v5267
    %v5364 = vmax.f32 %v4812, %v5268
    %v5365 = vmax.f32 %v4813, %v5269
    %v5366 = vmax.f32 %v4814, %v5270
    %v5367 = vmax.f32 %v4815, %v5271
    %v5368 = vmax.f32 %v4816, %v5272
    %v5369 = vmax.f32 %v4817, %v5273
    %v5370 = vmax.f32 %v4818, %v5274
    %v5371 = vmax.f32 %v4819, %v5275
    %v5372 = vmax.f32 %v4820, %v5276
    %v5373 = vmax.f32 %v4821, %v5277
    %v5374 = vmax.f32 %v4822, %v5278
    %v5375 = vmax.f32 %v4823, %v5279
    %v5376 = vmax.f32 %v4824, %v5280
    %v5377 = vmax.f32 %v4825, %v5281
    %v5378 = vmax.f32 %v4826, %v5282
    %v5379 = vmax.f32 %v4827, %v5283
    %v5380 = vmax.f32 %v4828, %v5284
    %v5381 = vmax.f32 %v4829, %v5285
    %v5382 = vmax.f32 %v4830, %v5286
    %v5383 = vmax.f32 %v4831, %v5287
    %v5384 = vmax.f32 %v4832, %v5288
    %v5385 = vmax.f32 %v4833, %v5289
    %v5386 = vmax.f32 %v4834, %v5290
    %v5387 = vmax.f32 %v4835, %v5291
    %v5388 = vmax.f32 %v4836, %v5292
    %v5389 = vmax.f32 %v4837, %v5293
    %v5390 = vmax.f32 %v4838, %v5294
    %v5391 = vmax.f32 %v4839, %v5295
    %v5392 = vmax.f32 %v4840, %v5296
    %v5393 = vmax.f32 %v4841, %v5297
    %v5394 = vmax.f32 %v4842, %v5298
    %v5395 = vmax.f32 %v4843, %v5299
    %v5396 = vmax.f32 %v4844, %v5300
    %v5397 = vmax.f32 %v4845, %v5301
    %v5398 = vmax.f32 %v4846, %v5302
    %v5399 = vmax.f32 %v4847, %v5303
    %v5400 = vmax.f32 %v4848, %v5304
    %v5401 = vmax.f32 %v4849, %v5305
    %v5402 = vmax.f32 %v4850, %v5306
    %v5403 = vmax.f32 %v4851, %v5307
    %v5404 = vmax.f32 %v4852, %v5308
    %v5405 = vmax.f32 %v4853, %v5309
    %v5406 = vmax.f32 %v4854, %v5310
    %v5407 = vmax.f32 %v4855, %v5311
    %v5408 = vmax.f32 %v4856, %v5312
    %v5409 = vmax.f32 %v4857, %v5313
    %v5410 = vmax.f32 %v4858, %v5314
    %v5411 = vmax.f32 %v4859, %v5315
    %v5412 = vmax.f32 %v4860, %v5316
    %v5413 = vmax.f32 %v4861, %v5317
    %v5414 = vmax.f32 %v4862, %v5318
    %v5415 = vmax.f32 %v4863, %v5319
    %v5416 = vmax.f32 %v4864, %v5320
    %v5417 = vmax.f32 %v4865, %v5321
    %v5418 = vmax.f32 %v4866, %v5322
    %v5419 = vmax.f32 %v4867, %v5323
    %v5420 = vmax.f32 %v4868, %v5324
    %v5421 = vmax.f32 %v4869, %v5325
    %v5422 = vmax.f32 %v4870, %v5326
    %v5423 = vmax.f32 %v4871, %v5327
    %v5424 = vmax.f32 %v4872, %v5328
    %v5425 = vmax.f32 %v4873, %v5329
    %v5426 = vmax.f32 %v4874, %v5330
    %v5427 = vmax.f32 %v4875, %v5331
    %v5428 = vmax.f32 %v4876, %v5332
    %v5429 = vmax.f32 %v4877, %v5333
    %v5430 = vmax.f32 %v4878, %v5334
    %v5431 = vmax.f32 %v4879, %v5335
    %v5432 = vmax.f32 %v4880, %v5336
    %v5433 = vmax.f32 %v4881, %v5337
    %v5434 = vmax.f32 %v4882, %v5338
    %v5435 = vmax.f32 %v4883, %v5339
    %v5436 = vmax.f32 %v4884, %v5340
    %v5437 = vmax.f32 %v4885, %v5341
    %v5438 = vmax.f32 %v4886, %v5342
    %v5439 = vmax.f32 %v4887, %v5343
    %v5440 = vmax.f32 %v4888, %v5344
    %v5441 = vmax.f32 %v4889, %v5345
    %v5442 = vmax.f32 %v4890, %v5346
    %v5443 = vld [vmem:[%s3] sm:$0xff]
    %v5444 = vld [vmem:[%s3 + $0x8] sm:$0xff]
    %v5445 = vld [vmem:[%s3 + $0x10] sm:$0xf]
    %v5446 = vld [vmem:[%s4] sm:$0xff]
    %v5447 = vld [vmem:[%s4 + $0x8] sm:$0xff]
    %v5448 = vld [vmem:[%s4 + $0x10] sm:$0xff]
    %v5449 = vld [vmem:[%s4 + $0x18] sm:$0xff]
    %v5450 = vld [vmem:[%s4 + $0x20] sm:$0xff]
    %v5451 = vld [vmem:[%s4 + $0x28] sm:$0xff]
    %v5452 = vld [vmem:[%s4 + $0x30] sm:$0xff]
    %v5453 = vld [vmem:[%s4 + $0x38] sm:$0xff]
    %v5454 = vld [vmem:[%s4 + $0x40] sm:$0xff]
    %v5455 = vld [vmem:[%s4 + $0x48] sm:$0xff]
    %v5456 = vld [vmem:[%s4 + $0x50] sm:$0xff]
    %v5457 = vld [vmem:[%s4 + $0x58] sm:$0xff]
    %v5458 = vld [vmem:[%s4 + $0x60] sm:$0xff]
    %v5459 = vld [vmem:[%s4 + $0x68] sm:$0xff]
    %v5460 = vld [vmem:[%s4 + $0x70] sm:$0xff]
    %v5461 = vld [vmem:[%s4 + $0x78] sm:$0xff]
    %vm5462 = vcmask 211968
    %v5464 = vsel %vm5462, %v5443, 0
    %v5467 = vsel %vm5462, %v5444, 0
    %v5470 = vsel %vm5462, %v5445, 0
    %vm5472 = vcmask 1041408
    %v5474 = vsel %vm5472, %v5350, 0
    %5476 = vmatprep.subr.mxu0 0.0
    %5477 = vmatpush1.msra.mxu0 %v5347
    %5478 = vmatprep.subr.mxu0 0.0
    %5479 = vmatpush1.msra.mxu0 %v5348
    %5480 = vmatprep.subr.mxu0 0.0
    %5481 = vmatpush1.msra.mxu0 %v5349
    %5482 = vmatprep.subr.mxu0 0.0
    %5483 = vmatpush1.msra.mxu0 %v5474
    %5484 = vmatprep.subr.mxu0 0.0
    %5485 = vmatpush1.msra.mxu0 0.0
    %5486 = vmatprep.subr.mxu0 0.0
    %5487 = vmatpush1.msra.mxu0 0.0
    %5488 = vmatprep.subr.mxu0 0.0
    %5489 = vmatpush1.msra.mxu0 0.0
    %5490 = vmatprep.subr.mxu0 0.0
    %5491 = vmatpush1.msra.mxu0 0.0
    %5492 = vmatprep.subr.mxu0 0.0
    %5493 = vmatpush1.msra.mxu0 0.0
    %5494 = vmatprep.subr.mxu0 0.0
    %5495 = vmatpush1.msra.mxu0 0.0
    %5496 = vmatprep.subr.mxu0 0.0
    %5497 = vmatpush1.msra.mxu0 0.0
    %5498 = vmatprep.subr.mxu0 0.0
    %5499 = vmatpush1.msra.mxu0 0.0
    %5500 = vmatprep.subr.mxu0 0.0
    %5501 = vmatpush1.msra.mxu0 0.0
    %5502 = vmatprep.subr.mxu0 0.0
    %5503 = vmatpush1.msra.mxu0 0.0
    %5504 = vmatprep.subr.mxu0 0.0
    %5505 = vmatpush1.msra.mxu0 0.0
    %5506 = vmatprep.subr.mxu0 0.0
    %5507 = vmatpush1.msra.mxu0 0.0
    %5508 = vmatprep.subr.mxu0 0.0
    %5509 = vmatpush1.msra.mxu0 0.0
    %5510 = vmatprep.subr.mxu0 0.0
    %5511 = vmatpush1.msra.mxu0 0.0
    %5512 = vmatprep.subr.mxu0 0.0
    %5513 = vmatpush1.msra.mxu0 0.0
    %5514 = vmatprep.subr.mxu0 0.0
    %5515 = vmatpush1.msra.mxu0 0.0
    %5516 = vmatprep.subr.mxu0 0.0
    %5517 = vmatpush1.msra.mxu0 0.0
    %5518 = vmatprep.subr.mxu0 0.0
    %5519 = vmatpush1.msra.mxu0 0.0
    %5520 = vmatprep.subr.mxu0 0.0
    %5521 = vmatpush1.msra.mxu0 0.0
    %5522 = vmatprep.subr.mxu0 0.0
    %5523 = vmatpush1.msra.mxu0 0.0
    %5524 = vmatprep.subr.mxu0 0.0
    %5525 = vmatpush1.msra.mxu0 0.0
    %5526 = vmatprep.subr.mxu0 0.0
    %5527 = vmatpush1.msra.mxu0 0.0
    %5528 = vmatprep.subr.mxu0 0.0
    %5529 = vmatpush1.msra.mxu0 0.0
    %5530 = vmatprep.subr.mxu0 0.0
    %5531 = vmatpush1.msra.mxu0 0.0
    %5532 = vmatprep.subr.mxu0 0.0
    %5533 = vmatpush1.msra.mxu0 0.0
    %5534 = vmatprep.subr.mxu0 0.0
    %5535 = vmatpush1.msra.mxu0 0.0
    %5536 = vmatprep.subr.mxu0 0.0
    %5537 = vmatpush1.msra.mxu0 0.0
    %5538 = vmatprep.subr.mxu0 0.0
    %5539 = vmatpush1.msra.mxu0 0.0
    %5540 = vmatprep.mubr.f32.mxu0 0.0
    %5541 = vmatmul.mubr.f32.gmra.mrb[0].mxu0 %v5464
    %v5542 = vpop.f32.mrb[0].mxu0
    %v5543 = vadd.f32 0.0, %v5542
    %v5544 = vpop.f32.mrb[0].mxu0
    %5545 = vmatprep.mubr.f32.mxu0 0.0
    %5546 = vmatmul.mubr.f32.gmra.mrb[0].mxu0 %v5467
    %v5547 = vpop.f32.mrb[0].mxu0
    %v5548 = vadd.f32 0.0, %v5547
    %v5549 = vpop.f32.mrb[0].mxu0
    %5550 = vmatprep.mubr.f32.mxu0 0.0
    %5551 = vmatmul.mubr.f32.gmra.mrb[0].mxu0 %v5470
    %v5552 = vpop.f32.mrb[0].mxu0
    %v5553 = vadd.f32 0.0, %v5552
    %v5554 = vpop.f32.mrb[0].mxu0
    %5555 = vdwg.mxu0
    %v5557 = vsel %vm5472, %v5358, 0
    %5559 = vmatprep.subr.mxu0 0.0
    %5560 = vmatpush1.msra.mxu0 %v5355
    %5561 = vmatprep.subr.mxu0 0.0
    %5562 = vmatpush1.msra.mxu0 %v5356
    %5563 = vmatprep.subr.mxu0 0.0
    %5564 = vmatpush1.msra.mxu0 %v5357
    %5565 = vmatprep.subr.mxu0 0.0
    %5566 = vmatpush1.msra.mxu0 %v5557
    %5567 = vmatprep.subr.mxu0 0.0
    %5568 = vmatpush1.msra.mxu0 0.0
    %5569 = vmatprep.subr.mxu0 0.0
    %5570 = vmatpush1.msra.mxu0 0.0
    %5571 = vmatprep.subr.mxu0 0.0
    %5572 = vmatpush1.msra.mxu0 0.0
    %5573 = vmatprep.subr.mxu0 0.0
    %5574 = vmatpush1.msra.mxu0 0.0
    %5575 = vmatprep.subr.mxu0 0.0
    %5576 = vmatpush1.msra.mxu0 0.0
    %5577 = vmatprep.subr.mxu0 0.0
    %5578 = vmatpush1.msra.mxu0 0.0
    %5579 = vmatprep.subr.mxu0 0.0
    %5580 = vmatpush1.msra.mxu0 0.0
    %5581 = vmatprep.subr.mxu0 0.0
    %5582 = vmatpush1.msra.mxu0 0.0
    %5583 = vmatprep.subr.mxu0 0.0
    %5584 = vmatpush1.msra.mxu0 0.0
    %5585 = vmatprep.subr.mxu0 0.0
    %5586 = vmatpush1.msra.mxu0 0.0
    %5587 = vmatprep.subr.mxu0 0.0
    %5588 = vmatpush1.msra.mxu0 0.0
    %5589 = vmatprep.subr.mxu0 0.0
    %5590 = vmatpush1.msra.mxu0 0.0
    %5591 = vmatprep.subr.mxu0 0.0
    %5592 = vmatpush1.msra.mxu0 0.0
    %5593 = vmatprep.subr.mxu0 0.0
    %5594 = vmatpush1.msra.mxu0 0.0
    %5595 = vmatprep.subr.mxu0 0.0
    %5596 = vmatpush1.msra.mxu0 0.0
    %5597 = vmatprep.subr.mxu0 0.0
    %5598 = vmatpush1.msra.mxu0 0.0
    %5599 = vmatprep.subr.mxu0 0.0
    %5600 = vmatpush1.msra.mxu0 0.0
    %5601 = vmatprep.subr.mxu0 0.0
    %5602 = vmatpush1.msra.mxu0 0.0
    %5603 = vmatprep.subr.mxu0 0.0
    %5604 = vmatpush1.msra.mxu0 0.0
    %5605 = vmatprep.subr.mxu0 0.0
    %5606 = vmatpush1.msra.mxu0 0.0
    %5607 = vmatprep.subr.mxu0 0.0
    %5608 = vmatpush1.msra.mxu0 0.0
    %5609 = vmatprep.subr.mxu0 0.0
    %5610 = vmatpush1.msra.mxu0 0.0
    %5611 = vmatprep.subr.mxu0 0.0
    %5612 = vmatpush1.msra.mxu0 0.0
    %5613 = vmatprep.subr.mxu0 0.0
    %5614 = vmatpush1.msra.mxu0 0.0
    %5615 = vmatprep.subr.mxu0 0.0
    %5616 = vmatpush1.msra.mxu0 0.0
    %5617 = vmatprep.subr.mxu0 0.0
    %5618 = vmatpush1.msra.mxu0 0.0
    %5619 = vmatprep.subr.mxu0 0.0
    %5620 = vmatpush1.msra.mxu0 0.0
    %5621 = vmatprep.subr.mxu0 0.0
    %5622 = vmatpush1.msra.mxu0 0.0
    %5623 = vmatprep.mubr.f32.mxu0 0.0
    %5624 = vmatmul.mubr.f32.gmra.mrb[0].mxu0 %v5464
    %v5625 = vpop.f32.mrb[0].mxu0
    %v5626 = vadd.f32 0.0, %v5625
    %v5627 = vpop.f32.mrb[0].mxu0
    %5628 = vmatprep.mubr.f32.mxu0 0.0
    %5629 = vmatmul.mubr.f32.gmra.mrb[0].mxu0 %v5467
    %v5630 = vpop.f32.mrb[0].mxu0
    %v5631 = vadd.f32 0.0, %v5630
    %v5632 = vpop.f32.mrb[0].mxu0
    %5633 = vmatprep.mubr.f32.mxu0 0.0
    %5634 = vmatmul.mubr.f32.gmra.mrb[0].mxu0 %v5470
    %v5635 = vpop.f32.mrb[0].mxu0
    %v5636 = vadd.f32 0.0, %v5635
    %v5637 = vpop.f32.mrb[0].mxu0
    %5638 = vdwg.mxu0
    %v5640 = vsel %vm5472, %v5366, 0
    %5642 = vmatprep.subr.mxu0 0.0
    %5643 = vmatpush1.msra.mxu0 %v5363
    %5644 = vmatprep.subr.mxu0 0.0
    %5645 = vmatpush1.msra.mxu0 %v5364
    %5646 = vmatprep.subr.mxu0 0.0
    %5647 = vmatpush1.msra.mxu0 %v5365
    %5648 = vmatprep.subr.mxu0 0.0
    %5649 = vmatpush1.msra.mxu0 %v5640
    %5650 = vmatprep.subr.mxu0 0.0
    %5651 = vmatpush1.msra.mxu0 0.0
    %5652 = vmatprep.subr.mxu0 0.0
    %5653 = vmatpush1.msra.mxu0 0.0
    %5654 = vmatprep.subr.mxu0 0.0
    %5655 = vmatpush1.msra.mxu0 0.0
    %5656 = vmatprep.subr.mxu0 0.0
    %5657 = vmatpush1.msra.mxu0 0.0
    %5658 = vmatprep.subr.mxu0 0.0
    %5659 = vmatpush1.msra.mxu0 0.0
    %5660 = vmatprep.subr.mxu0 0.0
    %5661 = vmatpush1.msra.mxu0 0.0
    %5662 = vmatprep.subr.mxu0 0.0
    %5663 = vmatpush1.msra.mxu0 0.0
    %5664 = vmatprep.subr.mxu0 0.0
    %5665 = vmatpush1.msra.mxu0 0.0
    %5666 = vmatprep.subr.mxu0 0.0
    %5667 = vmatpush1.msra.mxu0 0.0
    %5668 = vmatprep.subr.mxu0 0.0
    %5669 = vmatpush1.msra.mxu0 0.0
    %5670 = vmatprep.subr.mxu0 0.0
    %5671 = vmatpush1.msra.mxu0 0.0
    %5672 = vmatprep.subr.mxu0 0.0
    %5673 = vmatpush1.msra.mxu0 0.0
    %5674 = vmatprep.subr.mxu0 0.0
    %5675 = vmatpush1.msra.mxu0 0.0
    %5676 = vmatprep.subr.mxu0 0.0
    %5677 = vmatpush1.msra.mxu0 0.0
    %5678 = vmatprep.subr.mxu0 0.0
    %5679 = vmatpush1.msra.mxu0 0.0
    %5680 = vmatprep.subr.mxu0 0.0
    %5681 = vmatpush1.msra.mxu0 0.0
    %5682 = vmatprep.subr.mxu0 0.0
    %5683 = vmatpush1.msra.mxu0 0.0
    %5684 = vmatprep.subr.mxu0 0.0
    %5685 = vmatpush1.msra.mxu0 0.0
    %5686 = vmatprep.subr.mxu0 0.0
    %5687 = vmatpush1.msra.mxu0 0.0
    %5688 = vmatprep.subr.mxu0 0.0
    %5689 = vmatpush1.msra.mxu0 0.0
    %5690 = vmatprep.subr.mxu0 0.0
    %5691 = vmatpush1.msra.mxu0 0.0
    %5692 = vmatprep.subr.mxu0 0.0
    %5693 = vmatpush1.msra.mxu0 0.0
    %5694 = vmatprep.subr.mxu0 0.0
    %5695 = vmatpush1.msra.mxu0 0.0
    %5696 = vmatprep.subr.mxu0 0.0
    %5697 = vmatpush1.msra.mxu0 0.0
    %5698 = vmatprep.subr.mxu0 0.0
    %5699 = vmatpush1.msra.mxu0 0.0
    %5700 = vmatprep.subr.mxu0 0.0
    %5701 = vmatpush1.msra.mxu0 0.0
    %5702 = vmatprep.subr.mxu0 0.0
    %5703 = vmatpush1.msra.mxu0 0.0
    %5704 = vmatprep.subr.mxu0 0.0
    %5705 = vmatpush1.msra.mxu0 0.0
    %5706 = vmatprep.mubr.f32.mxu0 0.0
    %5707 = vmatmul.mubr.f32.gmra.mrb[0].mxu0 %v5464
    %v5708 = vpop.f32.mrb[0].mxu0
    %v5709 = vadd.f32 0.0, %v5708
    %v5710 = vpop.f32.mrb[0].mxu0
    %5711 = vmatprep.mubr.f32.mxu0 0.0
    %5712 = vmatmul.mubr.f32.gmra.mrb[0].mxu0 %v5467
    %v5713 = vpop.f32.mrb[0].mxu0
    %v5714 = vadd.f32 0.0, %v5713
    %v5715 = vpop.f32.mrb[0].mxu0
    %5716 = vmatprep.mubr.f32.mxu0 0.0
    %5717 = vmatmul.mubr.f32.gmra.mrb[0].mxu0 %v5470
    %v5718 = vpop.f32.mrb[0].mxu0
    %v5719 = vadd.f32 0.0, %v5718
    %v5720 = vpop.f32.mrb[0].mxu0
    %5721 = vdwg.mxu0
    %v5723 = vsel %vm5472, %v5374, 0
    %5725 = vmatprep.subr.mxu0 0.0
    %5726 = vmatpush1.msra.mxu0 %v5371
    %5727 = vmatprep.subr.mxu0 0.0
    %5728 = vmatpush1.msra.mxu0 %v5372
    %5729 = vmatprep.subr.mxu0 0.0
    %5730 = vmatpush1.msra.mxu0 %v5373
    %5731 = vmatprep.subr.mxu0 0.0
    %5732 = vmatpush1.msra.mxu0 %v5723
    %5733 = vmatprep.subr.mxu0 0.0
    %5734 = vmatpush1.msra.mxu0 0.0
    %5735 = vmatprep.subr.mxu0 0.0
    %5736 = vmatpush1.msra.mxu0 0.0
    %5737 = vmatprep.subr.mxu0 0.0
    %5738 = vmatpush1.msra.mxu0 0.0
    %5739 = vmatprep.subr.mxu0 0.0
    %5740 = vmatpush1.msra.mxu0 0.0
    %5741 = vmatprep.subr.mxu0 0.0
    %5742 = vmatpush1.msra.mxu0 0.0
    %5743 = vmatprep.subr.mxu0 0.0
    %5744 = vmatpush1.msra.mxu0 0.0
    %5745 = vmatprep.subr.mxu0 0.0
    %5746 = vmatpush1.msra.mxu0 0.0
    %5747 = vmatprep.subr.mxu0 0.0
    %5748 = vmatpush1.msra.mxu0 0.0
    %5749 = vmatprep.subr.mxu0 0.0
    %5750 = vmatpush1.msra.mxu0 0.0
    %5751 = vmatprep.subr.mxu0 0.0
    %5752 = vmatpush1.msra.mxu0 0.0
    %5753 = vmatprep.subr.mxu0 0.0
    %5754 = vmatpush1.msra.mxu0 0.0
    %5755 = vmatprep.subr.mxu0 0.0
    %5756 = vmatpush1.msra.mxu0 0.0
    %5757 = vmatprep.subr.mxu0 0.0
    %5758 = vmatpush1.msra.mxu0 0.0
    %5759 = vmatprep.subr.mxu0 0.0
    %5760 = vmatpush1.msra.mxu0 0.0
    %5761 = vmatprep.subr.mxu0 0.0
    %5762 = vmatpush1.msra.mxu0 0.0
    %5763 = vmatprep.subr.mxu0 0.0
    %5764 = vmatpush1.msra.mxu0 0.0
    %5765 = vmatprep.subr.mxu0 0.0
    %5766 = vmatpush1.msra.mxu0 0.0
    %5767 = vmatprep.subr.mxu0 0.0
    %5768 = vmatpush1.msra.mxu0 0.0
    %5769 = vmatprep.subr.mxu0 0.0
    %5770 = vmatpush1.msra.mxu0 0.0
    %5771 = vmatprep.subr.mxu0 0.0
    %5772 = vmatpush1.msra.mxu0 0.0
    %5773 = vmatprep.subr.mxu0 0.0
    %5774 = vmatpush1.msra.mxu0 0.0
    %5775 = vmatprep.subr.mxu0 0.0
    %5776 = vmatpush1.msra.mxu0 0.0
    %5777 = vmatprep.subr.mxu0 0.0
    %5778 = vmatpush1.msra.mxu0 0.0
    %5779 = vmatprep.subr.mxu0 0.0
    %5780 = vmatpush1.msra.mxu0 0.0
    %5781 = vmatprep.subr.mxu0 0.0
    %5782 = vmatpush1.msra.mxu0 0.0
    %5783 = vmatprep.subr.mxu0 0.0
    %5784 = vmatpush1.msra.mxu0 0.0
    %5785 = vmatprep.subr.mxu0 0.0
    %5786 = vmatpush1.msra.mxu0 0.0
    %5787 = vmatprep.subr.mxu0 0.0
    %5788 = vmatpush1.msra.mxu0 0.0
    %5789 = vmatprep.mubr.f32.mxu0 0.0
    %5790 = vmatmul.mubr.f32.gmra.mrb[0].mxu0 %v5464
    %v5791 = vpop.f32.mrb[0].mxu0
    %v5792 = vadd.f32 0.0, %v5791
    %v5793 = vpop.f32.mrb[0].mxu0
    %5794 = vmatprep.mubr.f32.mxu0 0.0
    %5795 = vmatmul.mubr.f32.gmra.mrb[0].mxu0 %v5467
    %v5796 = vpop.f32.mrb[0].mxu0
    %v5797 = vadd.f32 0.0, %v5796
    %v5798 = vpop.f32.mrb[0].mxu0
    %5799 = vmatprep.mubr.f32.mxu0 0.0
    %5800 = vmatmul.mubr.f32.gmra.mrb[0].mxu0 %v5470
    %v5801 = vpop.f32.mrb[0].mxu0
    %v5802 = vadd.f32 0.0, %v5801
    %v5803 = vpop.f32.mrb[0].mxu0
    %5804 = vdwg.mxu0
    %v5806 = vsel %vm5472, %v5382, 0
    %5808 = vmatprep.subr.mxu0 0.0
    %5809 = vmatpush1.msra.mxu0 %v5379
    %5810 = vmatprep.subr.mxu0 0.0
    %5811 = vmatpush1.msra.mxu0 %v5380
    %5812 = vmatprep.subr.mxu0 0.0
    %5813 = vmatpush1.msra.mxu0 %v5381
    %5814 = vmatprep.subr.mxu0 0.0
    %5815 = vmatpush1.msra.mxu0 %v5806
    %5816 = vmatprep.subr.mxu0 0.0
    %5817 = vmatpush1.msra.mxu0 0.0
    %5818 = vmatprep.subr.mxu0 0.0
    %5819 = vmatpush1.msra.mxu0 0.0
    %5820 = vmatprep.subr.mxu0 0.0
    %5821 = vmatpush1.msra.mxu0 0.0
    %5822 = vmatprep.subr.mxu0 0.0
    %5823 = vmatpush1.msra.mxu0 0.0
    %5824 = vmatprep.subr.mxu0 0.0
    %5825 = vmatpush1.msra.mxu0 0.0
    %5826 = vmatprep.subr.mxu0 0.0
    %5827 = vmatpush1.msra.mxu0 0.0
    %5828 = vmatprep.subr.mxu0 0.0
    %5829 = vmatpush1.msra.mxu0 0.0
    %5830 = vmatprep.subr.mxu0 0.0
    %5831 = vmatpush1.msra.mxu0 0.0
    %5832 = vmatprep.subr.mxu0 0.0
    %5833 = vmatpush1.msra.mxu0 0.0
    %5834 = vmatprep.subr.mxu0 0.0
    %5835 = vmatpush1.msra.mxu0 0.0
    %5836 = vmatprep.subr.mxu0 0.0
    %5837 = vmatpush1.msra.mxu0 0.0
    %5838 = vmatprep.subr.mxu0 0.0
    %5839 = vmatpush1.msra.mxu0 0.0
    %5840 = vmatprep.subr.mxu0 0.0
    %5841 = vmatpush1.msra.mxu0 0.0
    %5842 = vmatprep.subr.mxu0 0.0
    %5843 = vmatpush1.msra.mxu0 0.0
    %5844 = vmatprep.subr.mxu0 0.0
    %5845 = vmatpush1.msra.mxu0 0.0
    %5846 = vmatprep.subr.mxu0 0.0
    %5847 = vmatpush1.msra.mxu0 0.0
    %5848 = vmatprep.subr.mxu0 0.0
    %5849 = vmatpush1.msra.mxu0 0.0
    %5850 = vmatprep.subr.mxu0 0.0
    %5851 = vmatpush1.msra.mxu0 0.0
    %5852 = vmatprep.subr.mxu0 0.0
    %5853 = vmatpush1.msra.mxu0 0.0
    %5854 = vmatprep.subr.mxu0 0.0
    %5855 = vmatpush1.msra.mxu0 0.0
    %5856 = vmatprep.subr.mxu0 0.0
    %5857 = vmatpush1.msra.mxu0 0.0
    %5858 = vmatprep.subr.mxu0 0.0
    %5859 = vmatpush1.msra.mxu0 0.0
    %5860 = vmatprep.subr.mxu0 0.0
    %5861 = vmatpush1.msra.mxu0 0.0
    %5862 = vmatprep.subr.mxu0 0.0
    %5863 = vmatpush1.msra.mxu0 0.0
    %5864 = vmatprep.subr.mxu0 0.0
    %5865 = vmatpush1.msra.mxu0 0.0
    %5866 = vmatprep.subr.mxu0 0.0
    %5867 = vmatpush1.msra.mxu0 0.0
    %5868 = vmatprep.subr.mxu0 0.0
    %5869 = vmatpush1.msra.mxu0 0.0
    %5870 = vmatprep.subr.mxu0 0.0
    %5871 = vmatpush1.msra.mxu0 0.0
    %5872 = vmatprep.mubr.f32.mxu0 0.0
    %5873 = vmatmul.mubr.f32.gmra.mrb[0].mxu0 %v5464
    %v5874 = vpop.f32.mrb[0].mxu0
    %v5875 = vadd.f32 0.0, %v5874
    %v5876 = vpop.f32.mrb[0].mxu0
    %5877 = vmatprep.mubr.f32.mxu0 0.0
    %5878 = vmatmul.mubr.f32.gmra.mrb[0].mxu0 %v5467
    %v5879 = vpop.f32.mrb[0].mxu0
    %v5880 = vadd.f32 0.0, %v5879
    %v5881 = vpop.f32.mrb[0].mxu0
    %5882 = vmatprep.mubr.f32.mxu0 0.0
    %5883 = vmatmul.mubr.f32.gmra.mrb[0].mxu0 %v5470
    %v5884 = vpop.f32.mrb[0].mxu0
    %v5885 = vadd.f32 0.0, %v5884
    %v5886 = vpop.f32.mrb[0].mxu0
    %5887 = vdwg.mxu0
    %v5889 = vsel %vm5472, %v5398, 0
    %5891 = vmatprep.subr.mxu0 0.0
    %5892 = vmatpush1.msra.mxu0 %v5395
    %5893 = vmatprep.subr.mxu0 0.0
    %5894 = vmatpush1.msra.mxu0 %v5396
    %5895 = vmatprep.subr.mxu0 0.0
    %5896 = vmatpush1.msra.mxu0 %v5397
    %5897 = vmatprep.subr.mxu0 0.0
    %5898 = vmatpush1.msra.mxu0 %v5889
    %5899 = vmatprep.subr.mxu0 0.0
    %5900 = vmatpush1.msra.mxu0 0.0
    %5901 = vmatprep.subr.mxu0 0.0
    %5902 = vmatpush1.msra.mxu0 0.0
    %5903 = vmatprep.subr.mxu0 0.0
    %5904 = vmatpush1.msra.mxu0 0.0
    %5905 = vmatprep.subr.mxu0 0.0
    %5906 = vmatpush1.msra.mxu0 0.0
    %5907 = vmatprep.subr.mxu0 0.0
    %5908 = vmatpush1.msra.mxu0 0.0
    %5909 = vmatprep.subr.mxu0 0.0
    %5910 = vmatpush1.msra.mxu0 0.0
    %5911 = vmatprep.subr.mxu0 0.0
    %5912 = vmatpush1.msra.mxu0 0.0
    %5913 = vmatprep.subr.mxu0 0.0
    %5914 = vmatpush1.msra.mxu0 0.0
    %5915 = vmatprep.subr.mxu0 0.0
    %5916 = vmatpush1.msra.mxu0 0.0
    %5917 = vmatprep.subr.mxu0 0.0
    %5918 = vmatpush1.msra.mxu0 0.0
    %5919 = vmatprep.subr.mxu0 0.0
    %5920 = vmatpush1.msra.mxu0 0.0
    %5921 = vmatprep.subr.mxu0 0.0
    %5922 = vmatpush1.msra.mxu0 0.0
    %5923 = vmatprep.subr.mxu0 0.0
    %5924 = vmatpush1.msra.mxu0 0.0
    %5925 = vmatprep.subr.mxu0 0.0
    %5926 = vmatpush1.msra.mxu0 0.0
    %5927 = vmatprep.subr.mxu0 0.0
    %5928 = vmatpush1.msra.mxu0 0.0
    %5929 = vmatprep.subr.mxu0 0.0
    %5930 = vmatpush1.msra.mxu0 0.0
    %5931 = vmatprep.subr.mxu0 0.0
    %5932 = vmatpush1.msra.mxu0 0.0
    %5933 = vmatprep.subr.mxu0 0.0
    %5934 = vmatpush1.msra.mxu0 0.0
    %5935 = vmatprep.subr.mxu0 0.0
    %5936 = vmatpush1.msra.mxu0 0.0
    %5937 = vmatprep.subr.mxu0 0.0
    %5938 = vmatpush1.msra.mxu0 0.0
    %5939 = vmatprep.subr.mxu0 0.0
    %5940 = vmatpush1.msra.mxu0 0.0
    %5941 = vmatprep.subr.mxu0 0.0
    %5942 = vmatpush1.msra.mxu0 0.0
    %5943 = vmatprep.subr.mxu0 0.0
    %5944 = vmatpush1.msra.mxu0 0.0
    %5945 = vmatprep.subr.mxu0 0.0
    %5946 = vmatpush1.msra.mxu0 0.0
    %5947 = vmatprep.subr.mxu0 0.0
    %5948 = vmatpush1.msra.mxu0 0.0
    %5949 = vmatprep.subr.mxu0 0.0
    %5950 = vmatpush1.msra.mxu0 0.0
    %5951 = vmatprep.subr.mxu0 0.0
    %5952 = vmatpush1.msra.mxu0 0.0
    %5953 = vmatprep.subr.mxu0 0.0
    %5954 = vmatpush1.msra.mxu0 0.0
    %5955 = vmatprep.mubr.f32.mxu0 0.0
    %5956 = vmatmul.mubr.f32.gmra.mrb[0].mxu0 %v5464
    %v5957 = vpop.f32.mrb[0].mxu0
    %v5958 = vadd.f32 0.0, %v5957
    %v5959 = vpop.f32.mrb[0].mxu0
    %5960 = vmatprep.mubr.f32.mxu0 0.0
    %5961 = vmatmul.mubr.f32.gmra.mrb[0].mxu0 %v5467
    %v5962 = vpop.f32.mrb[0].mxu0
    %v5963 = vadd.f32 0.0, %v5962
    %v5964 = vpop.f32.mrb[0].mxu0
    %5965 = vmatprep.mubr.f32.mxu0 0.0
    %5966 = vmatmul.mubr.f32.gmra.mrb[0].mxu0 %v5470
    %v5967 = vpop.f32.mrb[0].mxu0
    %v5968 = vadd.f32 0.0, %v5967
    %v5969 = vpop.f32.mrb[0].mxu0
    %5970 = vdwg.mxu0
    %v5972 = vsel %vm5472, %v5406, 0
    %5974 = vmatprep.subr.mxu0 0.0
    %5975 = vmatpush1.msra.mxu0 %v5403
    %5976 = vmatprep.subr.mxu0 0.0
    %5977 = vmatpush1.msra.mxu0 %v5404
    %5978 = vmatprep.subr.mxu0 0.0
    %5979 = vmatpush1.msra.mxu0 %v5405
    %5980 = vmatprep.subr.mxu0 0.0
    %5981 = vmatpush1.msra.mxu0 %v5972
    %5982 = vmatprep.subr.mxu0 0.0
    %5983 = vmatpush1.msra.mxu0 0.0
    %5984 = vmatprep.subr.mxu0 0.0
    %5985 = vmatpush1.msra.mxu0 0.0
    %5986 = vmatprep.subr.mxu0 0.0
    %5987 = vmatpush1.msra.mxu0 0.0
    %5988 = vmatprep.subr.mxu0 0.0
    %5989 = vmatpush1.msra.mxu0 0.0
    %5990 = vmatprep.subr.mxu0 0.0
    %5991 = vmatpush1.msra.mxu0 0.0
    %5992 = vmatprep.subr.mxu0 0.0
    %5993 = vmatpush1.msra.mxu0 0.0
    %5994 = vmatprep.subr.mxu0 0.0
    %5995 = vmatpush1.msra.mxu0 0.0
    %5996 = vmatprep.subr.mxu0 0.0
    %5997 = vmatpush1.msra.mxu0 0.0
    %5998 = vmatprep.subr.mxu0 0.0
    %5999 = vmatpush1.msra.mxu0 0.0
    %6000 = vmatprep.subr.mxu0 0.0
    %6001 = vmatpush1.msra.mxu0 0.0
    %6002 = vmatprep.subr.mxu0 0.0
    %6003 = vmatpush1.msra.mxu0 0.0
    %6004 = vmatprep.subr.mxu0 0.0
    %6005 = vmatpush1.msra.mxu0 0.0
    %6006 = vmatprep.subr.mxu0 0.0
    %6007 = vmatpush1.msra.mxu0 0.0
    %6008 = vmatprep.subr.mxu0 0.0
    %6009 = vmatpush1.msra.mxu0 0.0
    %6010 = vmatprep.subr.mxu0 0.0
    %6011 = vmatpush1.msra.mxu0 0.0
    %6012 = vmatprep.subr.mxu0 0.0
    %6013 = vmatpush1.msra.mxu0 0.0
    %6014 = vmatprep.subr.mxu0 0.0
    %6015 = vmatpush1.msra.mxu0 0.0
    %6016 = vmatprep.subr.mxu0 0.0
    %6017 = vmatpush1.msra.mxu0 0.0
    %6018 = vmatprep.subr.mxu0 0.0
    %6019 = vmatpush1.msra.mxu0 0.0
    %6020 = vmatprep.subr.mxu0 0.0
    %6021 = vmatpush1.msra.mxu0 0.0
    %6022 = vmatprep.subr.mxu0 0.0
    %6023 = vmatpush1.msra.mxu0 0.0
    %6024 = vmatprep.subr.mxu0 0.0
    %6025 = vmatpush1.msra.mxu0 0.0
    %6026 = vmatprep.subr.mxu0 0.0
    %6027 = vmatpush1.msra.mxu0 0.0
    %6028 = vmatprep.subr.mxu0 0.0
    %6029 = vmatpush1.msra.mxu0 0.0
    %6030 = vmatprep.subr.mxu0 0.0
    %6031 = vmatpush1.msra.mxu0 0.0
    %6032 = vmatprep.subr.mxu0 0.0
    %6033 = vmatpush1.msra.mxu0 0.0
    %6034 = vmatprep.subr.mxu0 0.0
    %6035 = vmatpush1.msra.mxu0 0.0
    %6036 = vmatprep.subr.mxu0 0.0
    %6037 = vmatpush1.msra.mxu0 0.0
    %6038 = vmatprep.mubr.f32.mxu0 0.0
    %6039 = vmatmul.mubr.f32.gmra.mrb[0].mxu0 %v5464
    %v6040 = vpop.f32.mrb[0].mxu0
    %v6041 = vadd.f32 0.0, %v6040
    %v6042 = vpop.f32.mrb[0].mxu0
    %6043 = vmatprep.mubr.f32.mxu0 0.0
    %6044 = vmatmul.mubr.f32.gmra.mrb[0].mxu0 %v5467
    %v6045 = vpop.f32.mrb[0].mxu0
    %v6046 = vadd.f32 0.0, %v6045
    %v6047 = vpop.f32.mrb[0].mxu0
    %6048 = vmatprep.mubr.f32.mxu0 0.0
    %6049 = vmatmul.mubr.f32.gmra.mrb[0].mxu0 %v5470
    %v6050 = vpop.f32.mrb[0].mxu0
    %v6051 = vadd.f32 0.0, %v6050
    %v6052 = vpop.f32.mrb[0].mxu0
    %6053 = vdwg.mxu0
    %v6055 = vsel %vm5472, %v5414, 0
    %6057 = vmatprep.subr.mxu0 0.0
    %6058 = vmatpush1.msra.mxu0 %v5411
    %6059 = vmatprep.subr.mxu0 0.0
    %6060 = vmatpush1.msra.mxu0 %v5412
    %6061 = vmatprep.subr.mxu0 0.0
    %6062 = vmatpush1.msra.mxu0 %v5413
    %6063 = vmatprep.subr.mxu0 0.0
    %6064 = vmatpush1.msra.mxu0 %v6055
    %6065 = vmatprep.subr.mxu0 0.0
    %6066 = vmatpush1.msra.mxu0 0.0
    %6067 = vmatprep.subr.mxu0 0.0
    %6068 = vmatpush1.msra.mxu0 0.0
    %6069 = vmatprep.subr.mxu0 0.0
    %6070 = vmatpush1.msra.mxu0 0.0
    %6071 = vmatprep.subr.mxu0 0.0
    %6072 = vmatpush1.msra.mxu0 0.0
    %6073 = vmatprep.subr.mxu0 0.0
    %6074 = vmatpush1.msra.mxu0 0.0
    %6075 = vmatprep.subr.mxu0 0.0
    %6076 = vmatpush1.msra.mxu0 0.0
    %6077 = vmatprep.subr.mxu0 0.0
    %6078 = vmatpush1.msra.mxu0 0.0
    %6079 = vmatprep.subr.mxu0 0.0
    %6080 = vmatpush1.msra.mxu0 0.0
    %6081 = vmatprep.subr.mxu0 0.0
    %6082 = vmatpush1.msra.mxu0 0.0
    %6083 = vmatprep.subr.mxu0 0.0
    %6084 = vmatpush1.msra.mxu0 0.0
    %6085 = vmatprep.subr.mxu0 0.0
    %6086 = vmatpush1.msra.mxu0 0.0
    %6087 = vmatprep.subr.mxu0 0.0
    %6088 = vmatpush1.msra.mxu0 0.0
    %6089 = vmatprep.subr.mxu0 0.0
    %6090 = vmatpush1.msra.mxu0 0.0
    %6091 = vmatprep.subr.mxu0 0.0
    %6092 = vmatpush1.msra.mxu0 0.0
    %6093 = vmatprep.subr.mxu0 0.0
    %6094 = vmatpush1.msra.mxu0 0.0
    %6095 = vmatprep.subr.mxu0 0.0
    %6096 = vmatpush1.msra.mxu0 0.0
    %6097 = vmatprep.subr.mxu0 0.0
    %6098 = vmatpush1.msra.mxu0 0.0
    %6099 = vmatprep.subr.mxu0 0.0
    %6100 = vmatpush1.msra.mxu0 0.0
    %6101 = vmatprep.subr.mxu0 0.0
    %6102 = vmatpush1.msra.mxu0 0.0
    %6103 = vmatprep.subr.mxu0 0.0
    %6104 = vmatpush1.msra.mxu0 0.0
    %6105 = vmatprep.subr.mxu0 0.0
    %6106 = vmatpush1.msra.mxu0 0.0
    %6107 = vmatprep.subr.mxu0 0.0
    %6108 = vmatpush1.msra.mxu0 0.0
    %6109 = vmatprep.subr.mxu0 0.0
    %6110 = vmatpush1.msra.mxu0 0.0
    %6111 = vmatprep.subr.mxu0 0.0
    %6112 = vmatpush1.msra.mxu0 0.0
    %6113 = vmatprep.subr.mxu0 0.0
    %6114 = vmatpush1.msra.mxu0 0.0
    %6115 = vmatprep.subr.mxu0 0.0
    %6116 = vmatpush1.msra.mxu0 0.0
    %6117 = vmatprep.subr.mxu0 0.0
    %6118 = vmatpush1.msra.mxu0 0.0
    %6119 = vmatprep.subr.mxu0 0.0
    %6120 = vmatpush1.msra.mxu0 0.0
    %6121 = vmatprep.mubr.f32.mxu0 0.0
    %6122 = vmatmul.mubr.f32.gmra.mrb[0].mxu0 %v5464
    %v6123 = vpop.f32.mrb[0].mxu0
    %v6124 = vadd.f32 0.0, %v6123
    %v6125 = vpop.f32.mrb[0].mxu0
    %6126 = vmatprep.mubr.f32.mxu0 0.0
    %6127 = vmatmul.mubr.f32.gmra.mrb[0].mxu0 %v5467
    %v6128 = vpop.f32.mrb[0].mxu0
    %v6129 = vadd.f32 0.0, %v6128
    %v6130 = vpop.f32.mrb[0].mxu0
    %6131 = vmatprep.mubr.f32.mxu0 0.0
    %6132 = vmatmul.mubr.f32.gmra.mrb[0].mxu0 %v5470
    %v6133 = vpop.f32.mrb[0].mxu0
    %v6134 = vadd.f32 0.0, %v6133
    %v6135 = vpop.f32.mrb[0].mxu0
    %6136 = vdwg.mxu0
    %v6138 = vsel %vm5472, %v5422, 0
    %6140 = vmatprep.subr.mxu0 0.0
    %6141 = vmatpush1.msra.mxu0 %v5419
    %6142 = vmatprep.subr.mxu0 0.0
    %6143 = vmatpush1.msra.mxu0 %v5420
    %6144 = vmatprep.subr.mxu0 0.0
    %6145 = vmatpush1.msra.mxu0 %v5421
    %6146 = vmatprep.subr.mxu0 0.0
    %6147 = vmatpush1.msra.mxu0 %v6138
    %6148 = vmatprep.subr.mxu0 0.0
    %6149 = vmatpush1.msra.mxu0 0.0
    %6150 = vmatprep.subr.mxu0 0.0
    %6151 = vmatpush1.msra.mxu0 0.0
    %6152 = vmatprep.subr.mxu0 0.0
    %6153 = vmatpush1.msra.mxu0 0.0
    %6154 = vmatprep.subr.mxu0 0.0
    %6155 = vmatpush1.msra.mxu0 0.0
    %6156 = vmatprep.subr.mxu0 0.0
    %6157 = vmatpush1.msra.mxu0 0.0
    %6158 = vmatprep.subr.mxu0 0.0
    %6159 = vmatpush1.msra.mxu0 0.0
    %6160 = vmatprep.subr.mxu0 0.0
    %6161 = vmatpush1.msra.mxu0 0.0
    %6162 = vmatprep.subr.mxu0 0.0
    %6163 = vmatpush1.msra.mxu0 0.0
    %6164 = vmatprep.subr.mxu0 0.0
    %6165 = vmatpush1.msra.mxu0 0.0
    %6166 = vmatprep.subr.mxu0 0.0
    %6167 = vmatpush1.msra.mxu0 0.0
    %6168 = vmatprep.subr.mxu0 0.0
    %6169 = vmatpush1.msra.mxu0 0.0
    %6170 = vmatprep.subr.mxu0 0.0
    %6171 = vmatpush1.msra.mxu0 0.0
    %6172 = vmatprep.subr.mxu0 0.0
    %6173 = vmatpush1.msra.mxu0 0.0
    %6174 = vmatprep.subr.mxu0 0.0
    %6175 = vmatpush1.msra.mxu0 0.0
    %6176 = vmatprep.subr.mxu0 0.0
    %6177 = vmatpush1.msra.mxu0 0.0
    %6178 = vmatprep.subr.mxu0 0.0
    %6179 = vmatpush1.msra.mxu0 0.0
    %6180 = vmatprep.subr.mxu0 0.0
    %6181 = vmatpush1.msra.mxu0 0.0
    %6182 = vmatprep.subr.mxu0 0.0
    %6183 = vmatpush1.msra.mxu0 0.0
    %6184 = vmatprep.subr.mxu0 0.0
    %6185 = vmatpush1.msra.mxu0 0.0
    %6186 = vmatprep.subr.mxu0 0.0
    %6187 = vmatpush1.msra.mxu0 0.0
    %6188 = vmatprep.subr.mxu0 0.0
    %6189 = vmatpush1.msra.mxu0 0.0
    %6190 = vmatprep.subr.mxu0 0.0
    %6191 = vmatpush1.msra.mxu0 0.0
    %6192 = vmatprep.subr.mxu0 0.0
    %6193 = vmatpush1.msra.mxu0 0.0
    %6194 = vmatprep.subr.mxu0 0.0
    %6195 = vmatpush1.msra.mxu0 0.0
    %6196 = vmatprep.subr.mxu0 0.0
    %6197 = vmatpush1.msra.mxu0 0.0
    %6198 = vmatprep.subr.mxu0 0.0
    %6199 = vmatpush1.msra.mxu0 0.0
    %6200 = vmatprep.subr.mxu0 0.0
    %6201 = vmatpush1.msra.mxu0 0.0
    %6202 = vmatprep.subr.mxu0 0.0
    %6203 = vmatpush1.msra.mxu0 0.0
    %6204 = vmatprep.mubr.f32.mxu0 0.0
    %6205 = vmatmul.mubr.f32.gmra.mrb[0].mxu0 %v5464
    %v6206 = vpop.f32.mrb[0].mxu0
    %v6207 = vadd.f32 0.0, %v6206
    %v6208 = vpop.f32.mrb[0].mxu0
    %6209 = vmatprep.mubr.f32.mxu0 0.0
    %6210 = vmatmul.mubr.f32.gmra.mrb[0].mxu0 %v5467
    %v6211 = vpop.f32.mrb[0].mxu0
    %v6212 = vadd.f32 0.0, %v6211
    %v6213 = vpop.f32.mrb[0].mxu0
    %6214 = vmatprep.mubr.f32.mxu0 0.0
    %6215 = vmatmul.mubr.f32.gmra.mrb[0].mxu0 %v5470
    %v6216 = vpop.f32.mrb[0].mxu0
    %v6217 = vadd.f32 0.0, %v6216
    %v6218 = vpop.f32.mrb[0].mxu0
    %6219 = vdwg.mxu0
    %v6221 = vsel %vm5472, %v5430, 0
    %6223 = vmatprep.subr.mxu0 0.0
    %6224 = vmatpush1.msra.mxu0 %v5427
    %6225 = vmatprep.subr.mxu0 0.0
    %6226 = vmatpush1.msra.mxu0 %v5428
    %6227 = vmatprep.subr.mxu0 0.0
    %6228 = vmatpush1.msra.mxu0 %v5429
    %6229 = vmatprep.subr.mxu0 0.0
    %6230 = vmatpush1.msra.mxu0 %v6221
    %6231 = vmatprep.subr.mxu0 0.0
    %6232 = vmatpush1.msra.mxu0 0.0
    %6233 = vmatprep.subr.mxu0 0.0
    %6234 = vmatpush1.msra.mxu0 0.0
    %6235 = vmatprep.subr.mxu0 0.0
    %6236 = vmatpush1.msra.mxu0 0.0
    %6237 = vmatprep.subr.mxu0 0.0
    %6238 = vmatpush1.msra.mxu0 0.0
    %6239 = vmatprep.subr.mxu0 0.0
    %6240 = vmatpush1.msra.mxu0 0.0
    %6241 = vmatprep.subr.mxu0 0.0
    %6242 = vmatpush1.msra.mxu0 0.0
    %6243 = vmatprep.subr.mxu0 0.0
    %6244 = vmatpush1.msra.mxu0 0.0
    %6245 = vmatprep.subr.mxu0 0.0
    %6246 = vmatpush1.msra.mxu0 0.0
    %6247 = vmatprep.subr.mxu0 0.0
    %6248 = vmatpush1.msra.mxu0 0.0
    %6249 = vmatprep.subr.mxu0 0.0
    %6250 = vmatpush1.msra.mxu0 0.0
    %6251 = vmatprep.subr.mxu0 0.0
    %6252 = vmatpush1.msra.mxu0 0.0
    %6253 = vmatprep.subr.mxu0 0.0
    %6254 = vmatpush1.msra.mxu0 0.0
    %6255 = vmatprep.subr.mxu0 0.0
    %6256 = vmatpush1.msra.mxu0 0.0
    %6257 = vmatprep.subr.mxu0 0.0
    %6258 = vmatpush1.msra.mxu0 0.0
    %6259 = vmatprep.subr.mxu0 0.0
    %6260 = vmatpush1.msra.mxu0 0.0
    %6261 = vmatprep.subr.mxu0 0.0
    %6262 = vmatpush1.msra.mxu0 0.0
    %6263 = vmatprep.subr.mxu0 0.0
    %6264 = vmatpush1.msra.mxu0 0.0
    %6265 = vmatprep.subr.mxu0 0.0
    %6266 = vmatpush1.msra.mxu0 0.0
    %6267 = vmatprep.subr.mxu0 0.0
    %6268 = vmatpush1.msra.mxu0 0.0
    %6269 = vmatprep.subr.mxu0 0.0
    %6270 = vmatpush1.msra.mxu0 0.0
    %6271 = vmatprep.subr.mxu0 0.0
    %6272 = vmatpush1.msra.mxu0 0.0
    %6273 = vmatprep.subr.mxu0 0.0
    %6274 = vmatpush1.msra.mxu0 0.0
    %6275 = vmatprep.subr.mxu0 0.0
    %6276 = vmatpush1.msra.mxu0 0.0
    %6277 = vmatprep.subr.mxu0 0.0
    %6278 = vmatpush1.msra.mxu0 0.0
    %6279 = vmatprep.subr.mxu0 0.0
    %6280 = vmatpush1.msra.mxu0 0.0
    %6281 = vmatprep.subr.mxu0 0.0
    %6282 = vmatpush1.msra.mxu0 0.0
    %6283 = vmatprep.subr.mxu0 0.0
    %6284 = vmatpush1.msra.mxu0 0.0
    %6285 = vmatprep.subr.mxu0 0.0
    %6286 = vmatpush1.msra.mxu0 0.0
    %6287 = vmatprep.mubr.f32.mxu0 0.0
    %6288 = vmatmul.mubr.f32.gmra.mrb[0].mxu0 %v5464
    %v6289 = vpop.f32.mrb[0].mxu0
    %v6290 = vadd.f32 0.0, %v6289
    %v6291 = vpop.f32.mrb[0].mxu0
    %6292 = vmatprep.mubr.f32.mxu0 0.0
    %6293 = vmatmul.mubr.f32.gmra.mrb[0].mxu0 %v5467
    %v6294 = vpop.f32.mrb[0].mxu0
    %v6295 = vadd.f32 0.0, %v6294
    %v6296 = vpop.f32.mrb[0].mxu0
    %6297 = vmatprep.mubr.f32.mxu0 0.0
    %6298 = vmatmul.mubr.f32.gmra.mrb[0].mxu0 %v5470
    %v6299 = vpop.f32.mrb[0].mxu0
    %v6300 = vadd.f32 0.0, %v6299
    %v6301 = vpop.f32.mrb[0].mxu0
    %6302 = vdwg.mxu0
    %vm6323 = vcmask 1042432
    %v6324 = vrot.slane %v5543, 5
    %v6325 = vrot.slane %v5548, 5
    %v6326 = vsel %vm6323, %v6324, %v6325
    %v6327 = vrot.slane %v5626, 5
    %v6328 = vrot.slane %v5631, 5
    %v6329 = vsel %vm6323, %v6327, %v6328
    %v6330 = vrot.slane %v5709, 5
    %v6331 = vrot.slane %v5714, 5
    %v6332 = vsel %vm6323, %v6330, %v6331
    %v6333 = vrot.slane %v5792, 5
    %v6334 = vrot.slane %v5797, 5
    %v6335 = vsel %vm6323, %v6333, %v6334
    %v6336 = vrot.slane %v5875, 5
    %v6337 = vrot.slane %v5880, 5
    %v6338 = vsel %vm6323, %v6336, %v6337
    %v6339 = vrot.slane %v5958, 5
    %v6340 = vrot.slane %v5963, 5
    %v6341 = vsel %vm6323, %v6339, %v6340
    %v6342 = vrot.slane %v6041, 5
    %v6343 = vrot.slane %v6046, 5
    %v6344 = vsel %vm6323, %v6342, %v6343
    %v6345 = vrot.slane %v6124, 5
    %v6346 = vrot.slane %v6129, 5
    %v6347 = vsel %vm6323, %v6345, %v6346
    %v6348 = vrot.slane %v6207, 5
    %v6349 = vrot.slane %v6212, 5
    %v6350 = vsel %vm6323, %v6348, %v6349
    %v6351 = vrot.slane %v6290, 5
    %v6352 = vrot.slane %v6295, 5
    %v6353 = vsel %vm6323, %v6351, %v6352
    %6354 = vrot.lane.b32.xlu0 %v6326, 8
    %v6355 = vpop.permute.xlu0 %6354
    %6356 = vrot.lane.b32.xlu0 %v6329, 8
    %v6357 = vpop.permute.xlu0 %6356
    %6358 = vrot.lane.b32.xlu0 %v6332, 8
    %v6359 = vpop.permute.xlu0 %6358
    %6360 = vrot.lane.b32.xlu0 %v6335, 8
    %v6361 = vpop.permute.xlu0 %6360
    %6362 = vrot.lane.b32.xlu0 %v6338, 8
    %v6363 = vpop.permute.xlu0 %6362
    %6364 = vrot.lane.b32.xlu0 %v6341, 8
    %v6365 = vpop.permute.xlu0 %6364
    %6366 = vrot.lane.b32.xlu0 %v6344, 8
    %v6367 = vpop.permute.xlu0 %6366
    %6368 = vrot.lane.b32.xlu0 %v6347, 8
    %v6369 = vpop.permute.xlu0 %6368
    %6370 = vrot.lane.b32.xlu0 %v6350, 8
    %v6371 = vpop.permute.xlu0 %6370
    %6372 = vrot.lane.b32.xlu0 %v6353, 8
    %v6373 = vpop.permute.xlu0 %6372
    %v6384 = vrot.slane %v5548, 2
    %v6385 = vrot.slane %v5631, 2
    %v6386 = vrot.slane %v5714, 2
    %v6387 = vrot.slane %v5797, 2
    %v6388 = vrot.slane %v5880, 2
    %v6389 = vrot.slane %v5963, 2
    %v6390 = vrot.slane %v6046, 2
    %v6391 = vrot.slane %v6129, 2
    %v6392 = vrot.slane %v6212, 2
    %v6393 = vrot.slane %v6295, 2
    %6394 = vrot.lane.b32.xlu0 %v6384, 16
    %v6395 = vpop.permute.xlu0 %6394
    %6396 = vrot.lane.b32.xlu0 %v6385, 16
    %v6397 = vpop.permute.xlu0 %6396
    %6398 = vrot.lane.b32.xlu0 %v6386, 16
    %v6399 = vpop.permute.xlu0 %6398
    %6400 = vrot.lane.b32.xlu0 %v6387, 16
    %v6401 = vpop.permute.xlu0 %6400
    %6402 = vrot.lane.b32.xlu0 %v6388, 16
    %v6403 = vpop.permute.xlu0 %6402
    %6404 = vrot.lane.b32.xlu0 %v6389, 16
    %v6405 = vpop.permute.xlu0 %6404
    %6406 = vrot.lane.b32.xlu0 %v6390, 16
    %v6407 = vpop.permute.xlu0 %6406
    %6408 = vrot.lane.b32.xlu0 %v6391, 16
    %v6409 = vpop.permute.xlu0 %6408
    %6410 = vrot.lane.b32.xlu0 %v6392, 16
    %v6411 = vpop.permute.xlu0 %6410
    %6412 = vrot.lane.b32.xlu0 %v6393, 16
    %v6413 = vpop.permute.xlu0 %6412
    %vm6434 = vcmask 1040384
    %v6435 = vrot.slane %v5548, 7
    %v6436 = vrot.slane %v5553, 7
    %v6437 = vsel %vm6434, %v6435, %v6436
    %v6438 = vrot.slane %v5631, 7
    %v6439 = vrot.slane %v5636, 7
    %v6440 = vsel %vm6434, %v6438, %v6439
    %v6441 = vrot.slane %v5714, 7
    %v6442 = vrot.slane %v5719, 7
    %v6443 = vsel %vm6434, %v6441, %v6442
    %v6444 = vrot.slane %v5797, 7
    %v6445 = vrot.slane %v5802, 7
    %v6446 = vsel %vm6434, %v6444, %v6445
    %v6447 = vrot.slane %v5880, 7
    %v6448 = vrot.slane %v5885, 7
    %v6449 = vsel %vm6434, %v6447, %v6448
    %v6450 = vrot.slane %v5963, 7
    %v6451 = vrot.slane %v5968, 7
    %v6452 = vsel %vm6434, %v6450, %v6451
    %v6453 = vrot.slane %v6046, 7
    %v6454 = vrot.slane %v6051, 7
    %v6455 = vsel %vm6434, %v6453, %v6454
    %v6456 = vrot.slane %v6129, 7
    %v6457 = vrot.slane %v6134, 7
    %v6458 = vsel %vm6434, %v6456, %v6457
    %v6459 = vrot.slane %v6212, 7
    %v6460 = vrot.slane %v6217, 7
    %v6461 = vsel %vm6434, %v6459, %v6460
    %v6462 = vrot.slane %v6295, 7
    %v6463 = vrot.slane %v6300, 7
    %v6464 = vsel %vm6434, %v6462, %v6463
    %6465 = vrot.lane.b32.xlu0 %v6437, 24
    %v6466 = vpop.permute.xlu0 %6465
    %6467 = vrot.lane.b32.xlu0 %v6440, 24
    %v6468 = vpop.permute.xlu0 %6467
    %6469 = vrot.lane.b32.xlu0 %v6443, 24
    %v6470 = vpop.permute.xlu0 %6469
    %6471 = vrot.lane.b32.xlu0 %v6446, 24
    %v6472 = vpop.permute.xlu0 %6471
    %6473 = vrot.lane.b32.xlu0 %v6449, 24
    %v6474 = vpop.permute.xlu0 %6473
    %6475 = vrot.lane.b32.xlu0 %v6452, 24
    %v6476 = vpop.permute.xlu0 %6475
    %6477 = vrot.lane.b32.xlu0 %v6455, 24
    %v6478 = vpop.permute.xlu0 %6477
    %6479 = vrot.lane.b32.xlu0 %v6458, 24
    %v6480 = vpop.permute.xlu0 %6479
    %6481 = vrot.lane.b32.xlu0 %v6461, 24
    %v6482 = vpop.permute.xlu0 %6481
    %6483 = vrot.lane.b32.xlu0 %v6464, 24
    %v6484 = vpop.permute.xlu0 %6483
    %vm6495 = vcmask 64512
    %v6496 = vsel %vm6495, %v5543, %v6355
    %v6497 = vsel %vm6495, %v5626, %v6357
    %v6498 = vsel %vm6495, %v5709, %v6359
    %v6499 = vsel %vm6495, %v5792, %v6361
    %v6500 = vsel %vm6495, %v5875, %v6363
    %v6501 = vsel %vm6495, %v5958, %v6365
    %v6502 = vsel %vm6495, %v6041, %v6367
    %v6503 = vsel %vm6495, %v6124, %v6369
    %v6504 = vsel %vm6495, %v6207, %v6371
    %v6505 = vsel %vm6495, %v6290, %v6373
    %vm6506 = vcmask 130048
    %v6507 = vsel %vm6506, %v6496, %v6395
    %v6508 = vsel %vm6506, %v6497, %v6397
    %v6509 = vsel %vm6506, %v6498, %v6399
    %v6510 = vsel %vm6506, %v6499, %v6401
    %v6511 = vsel %vm6506, %v6500, %v6403
    %v6512 = vsel %vm6506, %v6501, %v6405
    %v6513 = vsel %vm6506, %v6502, %v6407
    %v6514 = vsel %vm6506, %v6503, %v6409
    %v6515 = vsel %vm6506, %v6504, %v6411
    %v6516 = vsel %vm6506, %v6505, %v6413
    %vm6517 = vcmask 195584
    %v6518 = vsel %vm6517, %v6507, %v6466
    %v6519 = vsel %vm6517, %v6508, %v6468
    %v6520 = vsel %vm6517, %v6509, %v6470
    %v6521 = vsel %vm6517, %v6510, %v6472
    %v6522 = vsel %vm6517, %v6511, %v6474
    %v6523 = vsel %vm6517, %v6512, %v6476
    %v6524 = vsel %vm6517, %v6513, %v6478
    %v6525 = vsel %vm6517, %v6514, %v6480
    %v6526 = vsel %vm6517, %v6515, %v6482
    %v6527 = vsel %vm6517, %v6516, %v6484
    %v6529 = vsel %vm5472, %v5354, 0
    %6531 = vmatprep.subr.mxu0 0.0
    %6532 = vmatpush1.msra.mxu0 %v5351
    %6533 = vmatprep.subr.mxu0 0.0
    %6534 = vmatpush1.msra.mxu0 %v5352
    %6535 = vmatprep.subr.mxu0 0.0
    %6536 = vmatpush1.msra.mxu0 %v5353
    %6537 = vmatprep.subr.mxu0 0.0
    %6538 = vmatpush1.msra.mxu0 %v6529
    %6539 = vmatprep.subr.mxu0 0.0
    %6540 = vmatpush1.msra.mxu0 0.0
    %6541 = vmatprep.subr.mxu0 0.0
    %6542 = vmatpush1.msra.mxu0 0.0
    %6543 = vmatprep.subr.mxu0 0.0
    %6544 = vmatpush1.msra.mxu0 0.0
    %6545 = vmatprep.subr.mxu0 0.0
    %6546 = vmatpush1.msra.mxu0 0.0
    %6547 = vmatprep.subr.mxu0 0.0
    %6548 = vmatpush1.msra.mxu0 0.0
    %6549 = vmatprep.subr.mxu0 0.0
    %6550 = vmatpush1.msra.mxu0 0.0
    %6551 = vmatprep.subr.mxu0 0.0
    %6552 = vmatpush1.msra.mxu0 0.0
    %6553 = vmatprep.subr.mxu0 0.0
    %6554 = vmatpush1.msra.mxu0 0.0
    %6555 = vmatprep.subr.mxu0 0.0
    %6556 = vmatpush1.msra.mxu0 0.0
    %6557 = vmatprep.subr.mxu0 0.0
    %6558 = vmatpush1.msra.mxu0 0.0
    %6559 = vmatprep.subr.mxu0 0.0
    %6560 = vmatpush1.msra.mxu0 0.0
    %6561 = vmatprep.subr.mxu0 0.0
    %6562 = vmatpush1.msra.mxu0 0.0
    %6563 = vmatprep.subr.mxu0 0.0
    %6564 = vmatpush1.msra.mxu0 0.0
    %6565 = vmatprep.subr.mxu0 0.0
    %6566 = vmatpush1.msra.mxu0 0.0
    %6567 = vmatprep.subr.mxu0 0.0
    %6568 = vmatpush1.msra.mxu0 0.0
    %6569 = vmatprep.subr.mxu0 0.0
    %6570 = vmatpush1.msra.mxu0 0.0
    %6571 = vmatprep.subr.mxu0 0.0
    %6572 = vmatpush1.msra.mxu0 0.0
    %6573 = vmatprep.subr.mxu0 0.0
    %6574 = vmatpush1.msra.mxu0 0.0
    %6575 = vmatprep.subr.mxu0 0.0
    %6576 = vmatpush1.msra.mxu0 0.0
    %6577 = vmatprep.subr.mxu0 0.0
    %6578 = vmatpush1.msra.mxu0 0.0
    %6579 = vmatprep.subr.mxu0 0.0
    %6580 = vmatpush1.msra.mxu0 0.0
    %6581 = vmatprep.subr.mxu0 0.0
    %6582 = vmatpush1.msra.mxu0 0.0
    %6583 = vmatprep.subr.mxu0 0.0
    %6584 = vmatpush1.msra.mxu0 0.0
    %6585 = vmatprep.subr.mxu0 0.0
    %6586 = vmatpush1.msra.mxu0 0.0
    %6587 = vmatprep.subr.mxu0 0.0
    %6588 = vmatpush1.msra.mxu0 0.0
    %6589 = vmatprep.subr.mxu0 0.0
    %6590 = vmatpush1.msra.mxu0 0.0
    %6591 = vmatprep.subr.mxu0 0.0
    %6592 = vmatpush1.msra.mxu0 0.0
    %6593 = vmatprep.subr.mxu0 0.0
    %6594 = vmatpush1.msra.mxu0 0.0
    %6595 = vmatprep.mubr.f32.mxu0 0.0
    %6596 = vmatmul.mubr.f32.gmra.mrb[0].mxu0 %v5464
    %v6597 = vpop.f32.mrb[0].mxu0
    %v6598 = vadd.f32 0.0, %v6597
    %v6599 = vpop.f32.mrb[0].mxu0
    %6600 = vmatprep.mubr.f32.mxu0 0.0
    %6601 = vmatmul.mubr.f32.gmra.mrb[0].mxu0 %v5467
    %v6602 = vpop.f32.mrb[0].mxu0
    %v6603 = vadd.f32 0.0, %v6602
    %v6604 = vpop.f32.mrb[0].mxu0
    %6605 = vmatprep.mubr.f32.mxu0 0.0
    %6606 = vmatmul.mubr.f32.gmra.mrb[0].mxu0 %v5470
    %v6607 = vpop.f32.mrb[0].mxu0
    %v6608 = vadd.f32 0.0, %v6607
    %v6609 = vpop.f32.mrb[0].mxu0
    %6610 = vdwg.mxu0
    %v6612 = vsel %vm5472, %v5362, 0
    %6614 = vmatprep.subr.mxu0 0.0
    %6615 = vmatpush1.msra.mxu0 %v5359
    %6616 = vmatprep.subr.mxu0 0.0
    %6617 = vmatpush1.msra.mxu0 %v5360
    %6618 = vmatprep.subr.mxu0 0.0
    %6619 = vmatpush1.msra.mxu0 %v5361
    %6620 = vmatprep.subr.mxu0 0.0
    %6621 = vmatpush1.msra.mxu0 %v6612
    %6622 = vmatprep.subr.mxu0 0.0
    %6623 = vmatpush1.msra.mxu0 0.0
    %6624 = vmatprep.subr.mxu0 0.0
    %6625 = vmatpush1.msra.mxu0 0.0
    %6626 = vmatprep.subr.mxu0 0.0
    %6627 = vmatpush1.msra.mxu0 0.0
    %6628 = vmatprep.subr.mxu0 0.0
    %6629 = vmatpush1.msra.mxu0 0.0
    %6630 = vmatprep.subr.mxu0 0.0
    %6631 = vmatpush1.msra.mxu0 0.0
    %6632 = vmatprep.subr.mxu0 0.0
    %6633 = vmatpush1.msra.mxu0 0.0
    %6634 = vmatprep.subr.mxu0 0.0
    %6635 = vmatpush1.msra.mxu0 0.0
    %6636 = vmatprep.subr.mxu0 0.0
    %6637 = vmatpush1.msra.mxu0 0.0
    %6638 = vmatprep.subr.mxu0 0.0
    %6639 = vmatpush1.msra.mxu0 0.0
    %6640 = vmatprep.subr.mxu0 0.0
    %6641 = vmatpush1.msra.mxu0 0.0
    %6642 = vmatprep.subr.mxu0 0.0
    %6643 = vmatpush1.msra.mxu0 0.0
    %6644 = vmatprep.subr.mxu0 0.0
    %6645 = vmatpush1.msra.mxu0 0.0
    %6646 = vmatprep.subr.mxu0 0.0
    %6647 = vmatpush1.msra.mxu0 0.0
    %6648 = vmatprep.subr.mxu0 0.0
    %6649 = vmatpush1.msra.mxu0 0.0
    %6650 = vmatprep.subr.mxu0 0.0
    %6651 = vmatpush1.msra.mxu0 0.0
    %6652 = vmatprep.subr.mxu0 0.0
    %6653 = vmatpush1.msra.mxu0 0.0
    %6654 = vmatprep.subr.mxu0 0.0
    %6655 = vmatpush1.msra.mxu0 0.0
    %6656 = vmatprep.subr.mxu0 0.0
    %6657 = vmatpush1.msra.mxu0 0.0
    %6658 = vmatprep.subr.mxu0 0.0
    %6659 = vmatpush1.msra.mxu0 0.0
    %6660 = vmatprep.subr.mxu0 0.0
    %6661 = vmatpush1.msra.mxu0 0.0
    %6662 = vmatprep.subr.mxu0 0.0
    %6663 = vmatpush1.msra.mxu0 0.0
    %6664 = vmatprep.subr.mxu0 0.0
    %6665 = vmatpush1.msra.mxu0 0.0
    %6666 = vmatprep.subr.mxu0 0.0
    %6667 = vmatpush1.msra.mxu0 0.0
    %6668 = vmatprep.subr.mxu0 0.0
    %6669 = vmatpush1.msra.mxu0 0.0
    %6670 = vmatprep.subr.mxu0 0.0
    %6671 = vmatpush1.msra.mxu0 0.0
    %6672 = vmatprep.subr.mxu0 0.0
    %6673 = vmatpush1.msra.mxu0 0.0
    %6674 = vmatprep.subr.mxu0 0.0
    %6675 = vmatpush1.msra.mxu0 0.0
    %6676 = vmatprep.subr.mxu0 0.0
    %6677 = vmatpush1.msra.mxu0 0.0
    %6678 = vmatprep.mubr.f32.mxu0 0.0
    %6679 = vmatmul.mubr.f32.gmra.mrb[0].mxu0 %v5464
    %v6680 = vpop.f32.mrb[0].mxu0
    %v6681 = vadd.f32 0.0, %v6680
    %v6682 = vpop.f32.mrb[0].mxu0
    %6683 = vmatprep.mubr.f32.mxu0 0.0
    %6684 = vmatmul.mubr.f32.gmra.mrb[0].mxu0 %v5467
    %v6685 = vpop.f32.mrb[0].mxu0
    %v6686 = vadd.f32 0.0, %v6685
    %v6687 = vpop.f32.mrb[0].mxu0
    %6688 = vmatprep.mubr.f32.mxu0 0.0
    %6689 = vmatmul.mubr.f32.gmra.mrb[0].mxu0 %v5470
    %v6690 = vpop.f32.mrb[0].mxu0
    %v6691 = vadd.f32 0.0, %v6690
    %v6692 = vpop.f32.mrb[0].mxu0
    %6693 = vdwg.mxu0
    %v6695 = vsel %vm5472, %v5370, 0
    %6697 = vmatprep.subr.mxu0 0.0
    %6698 = vmatpush1.msra.mxu0 %v5367
    %6699 = vmatprep.subr.mxu0 0.0
    %6700 = vmatpush1.msra.mxu0 %v5368
    %6701 = vmatprep.subr.mxu0 0.0
    %6702 = vmatpush1.msra.mxu0 %v5369
    %6703 = vmatprep.subr.mxu0 0.0
    %6704 = vmatpush1.msra.mxu0 %v6695
    %6705 = vmatprep.subr.mxu0 0.0
    %6706 = vmatpush1.msra.mxu0 0.0
    %6707 = vmatprep.subr.mxu0 0.0
    %6708 = vmatpush1.msra.mxu0 0.0
    %6709 = vmatprep.subr.mxu0 0.0
    %6710 = vmatpush1.msra.mxu0 0.0
    %6711 = vmatprep.subr.mxu0 0.0
    %6712 = vmatpush1.msra.mxu0 0.0
    %6713 = vmatprep.subr.mxu0 0.0
    %6714 = vmatpush1.msra.mxu0 0.0
    %6715 = vmatprep.subr.mxu0 0.0
    %6716 = vmatpush1.msra.mxu0 0.0
    %6717 = vmatprep.subr.mxu0 0.0
    %6718 = vmatpush1.msra.mxu0 0.0
    %6719 = vmatprep.subr.mxu0 0.0
    %6720 = vmatpush1.msra.mxu0 0.0
    %6721 = vmatprep.subr.mxu0 0.0
    %6722 = vmatpush1.msra.mxu0 0.0
    %6723 = vmatprep.subr.mxu0 0.0
    %6724 = vmatpush1.msra.mxu0 0.0
    %6725 = vmatprep.subr.mxu0 0.0
    %6726 = vmatpush1.msra.mxu0 0.0
    %6727 = vmatprep.subr.mxu0 0.0
    %6728 = vmatpush1.msra.mxu0 0.0
    %6729 = vmatprep.subr.mxu0 0.0
    %6730 = vmatpush1.msra.mxu0 0.0
    %6731 = vmatprep.subr.mxu0 0.0
    %6732 = vmatpush1.msra.mxu0 0.0
    %6733 = vmatprep.subr.mxu0 0.0
    %6734 = vmatpush1.msra.mxu0 0.0
    %6735 = vmatprep.subr.mxu0 0.0
    %6736 = vmatpush1.msra.mxu0 0.0
    %6737 = vmatprep.subr.mxu0 0.0
    %6738 = vmatpush1.msra.mxu0 0.0
    %6739 = vmatprep.subr.mxu0 0.0
    %6740 = vmatpush1.msra.mxu0 0.0
    %6741 = vmatprep.subr.mxu0 0.0
    %6742 = vmatpush1.msra.mxu0 0.0
    %6743 = vmatprep.subr.mxu0 0.0
    %6744 = vmatpush1.msra.mxu0 0.0
    %6745 = vmatprep.subr.mxu0 0.0
    %6746 = vmatpush1.msra.mxu0 0.0
    %6747 = vmatprep.subr.mxu0 0.0
    %6748 = vmatpush1.msra.mxu0 0.0
    %6749 = vmatprep.subr.mxu0 0.0
    %6750 = vmatpush1.msra.mxu0 0.0
    %6751 = vmatprep.subr.mxu0 0.0
    %6752 = vmatpush1.msra.mxu0 0.0
    %6753 = vmatprep.subr.mxu0 0.0
    %6754 = vmatpush1.msra.mxu0 0.0
    %6755 = vmatprep.subr.mxu0 0.0
    %6756 = vmatpush1.msra.mxu0 0.0
    %6757 = vmatprep.subr.mxu0 0.0
    %6758 = vmatpush1.msra.mxu0 0.0
    %6759 = vmatprep.subr.mxu0 0.0
    %6760 = vmatpush1.msra.mxu0 0.0
    %6761 = vmatprep.mubr.f32.mxu0 0.0
    %6762 = vmatmul.mubr.f32.gmra.mrb[0].mxu0 %v5464
    %v6763 = vpop.f32.mrb[0].mxu0
    %v6764 = vadd.f32 0.0, %v6763
    %v6765 = vpop.f32.mrb[0].mxu0
    %6766 = vmatprep.mubr.f32.mxu0 0.0
    %6767 = vmatmul.mubr.f32.gmra.mrb[0].mxu0 %v5467
    %v6768 = vpop.f32.mrb[0].mxu0
    %v6769 = vadd.f32 0.0, %v6768
    %v6770 = vpop.f32.mrb[0].mxu0
    %6771 = vmatprep.mubr.f32.mxu0 0.0
    %6772 = vmatmul.mubr.f32.gmra.mrb[0].mxu0 %v5470
    %v6773 = vpop.f32.mrb[0].mxu0
    %v6774 = vadd.f32 0.0, %v6773
    %v6775 = vpop.f32.mrb[0].mxu0
    %6776 = vdwg.mxu0
    %v6778 = vsel %vm5472, %v5378, 0
    %6780 = vmatprep.subr.mxu0 0.0
    %6781 = vmatpush1.msra.mxu0 %v5375
    %6782 = vmatprep.subr.mxu0 0.0
    %6783 = vmatpush1.msra.mxu0 %v5376
    %6784 = vmatprep.subr.mxu0 0.0
    %6785 = vmatpush1.msra.mxu0 %v5377
    %6786 = vmatprep.subr.mxu0 0.0
    %6787 = vmatpush1.msra.mxu0 %v6778
    %6788 = vmatprep.subr.mxu0 0.0
    %6789 = vmatpush1.msra.mxu0 0.0
    %6790 = vmatprep.subr.mxu0 0.0
    %6791 = vmatpush1.msra.mxu0 0.0
    %6792 = vmatprep.subr.mxu0 0.0
    %6793 = vmatpush1.msra.mxu0 0.0
    %6794 = vmatprep.subr.mxu0 0.0
    %6795 = vmatpush1.msra.mxu0 0.0
    %6796 = vmatprep.subr.mxu0 0.0
    %6797 = vmatpush1.msra.mxu0 0.0
    %6798 = vmatprep.subr.mxu0 0.0
    %6799 = vmatpush1.msra.mxu0 0.0
    %6800 = vmatprep.subr.mxu0 0.0
    %6801 = vmatpush1.msra.mxu0 0.0
    %6802 = vmatprep.subr.mxu0 0.0
    %6803 = vmatpush1.msra.mxu0 0.0
    %6804 = vmatprep.subr.mxu0 0.0
    %6805 = vmatpush1.msra.mxu0 0.0
    %6806 = vmatprep.subr.mxu0 0.0
    %6807 = vmatpush1.msra.mxu0 0.0
    %6808 = vmatprep.subr.mxu0 0.0
    %6809 = vmatpush1.msra.mxu0 0.0
    %6810 = vmatprep.subr.mxu0 0.0
    %6811 = vmatpush1.msra.mxu0 0.0
    %6812 = vmatprep.subr.mxu0 0.0
    %6813 = vmatpush1.msra.mxu0 0.0
    %6814 = vmatprep.subr.mxu0 0.0
    %6815 = vmatpush1.msra.mxu0 0.0
    %6816 = vmatprep.subr.mxu0 0.0
    %6817 = vmatpush1.msra.mxu0 0.0
    %6818 = vmatprep.subr.mxu0 0.0
    %6819 = vmatpush1.msra.mxu0 0.0
    %6820 = vmatprep.subr.mxu0 0.0
    %6821 = vmatpush1.msra.mxu0 0.0
    %6822 = vmatprep.subr.mxu0 0.0
    %6823 = vmatpush1.msra.mxu0 0.0
    %6824 = vmatprep.subr.mxu0 0.0
    %6825 = vmatpush1.msra.mxu0 0.0
    %6826 = vmatprep.subr.mxu0 0.0
    %6827 = vmatpush1.msra.mxu0 0.0
    %6828 = vmatprep.subr.mxu0 0.0
    %6829 = vmatpush1.msra.mxu0 0.0
    %6830 = vmatprep.subr.mxu0 0.0
    %6831 = vmatpush1.msra.mxu0 0.0
    %6832 = vmatprep.subr.mxu0 0.0
    %6833 = vmatpush1.msra.mxu0 0.0
    %6834 = vmatprep.subr.mxu0 0.0
    %6835 = vmatpush1.msra.mxu0 0.0
    %6836 = vmatprep.subr.mxu0 0.0
    %6837 = vmatpush1.msra.mxu0 0.0
    %6838 = vmatprep.subr.mxu0 0.0
    %6839 = vmatpush1.msra.mxu0 0.0
    %6840 = vmatprep.subr.mxu0 0.0
    %6841 = vmatpush1.msra.mxu0 0.0
    %6842 = vmatprep.subr.mxu0 0.0
    %6843 = vmatpush1.msra.mxu0 0.0
    %6844 = vmatprep.mubr.f32.mxu0 0.0
    %6845 = vmatmul.mubr.f32.gmra.mrb[0].mxu0 %v5464
    %v6846 = vpop.f32.mrb[0].mxu0
    %v6847 = vadd.f32 0.0, %v6846
    %v6848 = vpop.f32.mrb[0].mxu0
    %6849 = vmatprep.mubr.f32.mxu0 0.0
    %6850 = vmatmul.mubr.f32.gmra.mrb[0].mxu0 %v5467
    %v6851 = vpop.f32.mrb[0].mxu0
    %v6852 = vadd.f32 0.0, %v6851
    %v6853 = vpop.f32.mrb[0].mxu0
    %6854 = vmatprep.mubr.f32.mxu0 0.0
    %6855 = vmatmul.mubr.f32.gmra.mrb[0].mxu0 %v5470
    %v6856 = vpop.f32.mrb[0].mxu0
    %v6857 = vadd.f32 0.0, %v6856
    %v6858 = vpop.f32.mrb[0].mxu0
    %6859 = vdwg.mxu0
    %v6861 = vsel %vm5472, %v5386, 0
    %6863 = vmatprep.subr.mxu0 0.0
    %6864 = vmatpush1.msra.mxu0 %v5383
    %6865 = vmatprep.subr.mxu0 0.0
    %6866 = vmatpush1.msra.mxu0 %v5384
    %6867 = vmatprep.subr.mxu0 0.0
    %6868 = vmatpush1.msra.mxu0 %v5385
    %6869 = vmatprep.subr.mxu0 0.0
    %6870 = vmatpush1.msra.mxu0 %v6861
    %6871 = vmatprep.subr.mxu0 0.0
    %6872 = vmatpush1.msra.mxu0 0.0
    %6873 = vmatprep.subr.mxu0 0.0
    %6874 = vmatpush1.msra.mxu0 0.0
    %6875 = vmatprep.subr.mxu0 0.0
    %6876 = vmatpush1.msra.mxu0 0.0
    %6877 = vmatprep.subr.mxu0 0.0
    %6878 = vmatpush1.msra.mxu0 0.0
    %6879 = vmatprep.subr.mxu0 0.0
    %6880 = vmatpush1.msra.mxu0 0.0
    %6881 = vmatprep.subr.mxu0 0.0
    %6882 = vmatpush1.msra.mxu0 0.0
    %6883 = vmatprep.subr.mxu0 0.0
    %6884 = vmatpush1.msra.mxu0 0.0
    %6885 = vmatprep.subr.mxu0 0.0
    %6886 = vmatpush1.msra.mxu0 0.0
    %6887 = vmatprep.subr.mxu0 0.0
    %6888 = vmatpush1.msra.mxu0 0.0
    %6889 = vmatprep.subr.mxu0 0.0
    %6890 = vmatpush1.msra.mxu0 0.0
    %6891 = vmatprep.subr.mxu0 0.0
    %6892 = vmatpush1.msra.mxu0 0.0
    %6893 = vmatprep.subr.mxu0 0.0
    %6894 = vmatpush1.msra.mxu0 0.0
    %6895 = vmatprep.subr.mxu0 0.0
    %6896 = vmatpush1.msra.mxu0 0.0
    %6897 = vmatprep.subr.mxu0 0.0
    %6898 = vmatpush1.msra.mxu0 0.0
    %6899 = vmatprep.subr.mxu0 0.0
    %6900 = vmatpush1.msra.mxu0 0.0
    %6901 = vmatprep.subr.mxu0 0.0
    %6902 = vmatpush1.msra.mxu0 0.0
    %6903 = vmatprep.subr.mxu0 0.0
    %6904 = vmatpush1.msra.mxu0 0.0
    %6905 = vmatprep.subr.mxu0 0.0
    %6906 = vmatpush1.msra.mxu0 0.0
    %6907 = vmatprep.subr.mxu0 0.0
    %6908 = vmatpush1.msra.mxu0 0.0
    %6909 = vmatprep.subr.mxu0 0.0
    %6910 = vmatpush1.msra.mxu0 0.0
    %6911 = vmatprep.subr.mxu0 0.0
    %6912 = vmatpush1.msra.mxu0 0.0
    %6913 = vmatprep.subr.mxu0 0.0
    %6914 = vmatpush1.msra.mxu0 0.0
    %6915 = vmatprep.subr.mxu0 0.0
    %6916 = vmatpush1.msra.mxu0 0.0
    %6917 = vmatprep.subr.mxu0 0.0
    %6918 = vmatpush1.msra.mxu0 0.0
    %6919 = vmatprep.subr.mxu0 0.0
    %6920 = vmatpush1.msra.mxu0 0.0
    %6921 = vmatprep.subr.mxu0 0.0
    %6922 = vmatpush1.msra.mxu0 0.0
    %6923 = vmatprep.subr.mxu0 0.0
    %6924 = vmatpush1.msra.mxu0 0.0
    %6925 = vmatprep.subr.mxu0 0.0
    %6926 = vmatpush1.msra.mxu0 0.0
    %6927 = vmatprep.mubr.f32.mxu0 0.0
    %6928 = vmatmul.mubr.f32.gmra.mrb[0].mxu0 %v5464
    %v6929 = vpop.f32.mrb[0].mxu0
    %v6930 = vadd.f32 0.0, %v6929
    %v6931 = vpop.f32.mrb[0].mxu0
    %6932 = vmatprep.mubr.f32.mxu0 0.0
    %6933 = vmatmul.mubr.f32.gmra.mrb[0].mxu0 %v5467
    %v6934 = vpop.f32.mrb[0].mxu0
    %v6935 = vadd.f32 0.0, %v6934
    %v6936 = vpop.f32.mrb[0].mxu0
    %6937 = vmatprep.mubr.f32.mxu0 0.0
    %6938 = vmatmul.mubr.f32.gmra.mrb[0].mxu0 %v5470
    %v6939 = vpop.f32.mrb[0].mxu0
    %v6940 = vadd.f32 0.0, %v6939
    %v6941 = vpop.f32.mrb[0].mxu0
    %6942 = vdwg.mxu0
    %v6944 = vsel %vm5472, %v5402, 0
    %6946 = vmatprep.subr.mxu0 0.0
    %6947 = vmatpush1.msra.mxu0 %v5399
    %6948 = vmatprep.subr.mxu0 0.0
    %6949 = vmatpush1.msra.mxu0 %v5400
    %6950 = vmatprep.subr.mxu0 0.0
    %6951 = vmatpush1.msra.mxu0 %v5401
    %6952 = vmatprep.subr.mxu0 0.0
    %6953 = vmatpush1.msra.mxu0 %v6944
    %6954 = vmatprep.subr.mxu0 0.0
    %6955 = vmatpush1.msra.mxu0 0.0
    %6956 = vmatprep.subr.mxu0 0.0
    %6957 = vmatpush1.msra.mxu0 0.0
    %6958 = vmatprep.subr.mxu0 0.0
    %6959 = vmatpush1.msra.mxu0 0.0
    %6960 = vmatprep.subr.mxu0 0.0
    %6961 = vmatpush1.msra.mxu0 0.0
    %6962 = vmatprep.subr.mxu0 0.0
    %6963 = vmatpush1.msra.mxu0 0.0
    %6964 = vmatprep.subr.mxu0 0.0
    %6965 = vmatpush1.msra.mxu0 0.0
    %6966 = vmatprep.subr.mxu0 0.0
    %6967 = vmatpush1.msra.mxu0 0.0
    %6968 = vmatprep.subr.mxu0 0.0
    %6969 = vmatpush1.msra.mxu0 0.0
    %6970 = vmatprep.subr.mxu0 0.0
    %6971 = vmatpush1.msra.mxu0 0.0
    %6972 = vmatprep.subr.mxu0 0.0
    %6973 = vmatpush1.msra.mxu0 0.0
    %6974 = vmatprep.subr.mxu0 0.0
    %6975 = vmatpush1.msra.mxu0 0.0
    %6976 = vmatprep.subr.mxu0 0.0
    %6977 = vmatpush1.msra.mxu0 0.0
    %6978 = vmatprep.subr.mxu0 0.0
    %6979 = vmatpush1.msra.mxu0 0.0
    %6980 = vmatprep.subr.mxu0 0.0
    %6981 = vmatpush1.msra.mxu0 0.0
    %6982 = vmatprep.subr.mxu0 0.0
    %6983 = vmatpush1.msra.mxu0 0.0
    %6984 = vmatprep.subr.mxu0 0.0
    %6985 = vmatpush1.msra.mxu0 0.0
    %6986 = vmatprep.subr.mxu0 0.0
    %6987 = vmatpush1.msra.mxu0 0.0
    %6988 = vmatprep.subr.mxu0 0.0
    %6989 = vmatpush1.msra.mxu0 0.0
    %6990 = vmatprep.subr.mxu0 0.0
    %6991 = vmatpush1.msra.mxu0 0.0
    %6992 = vmatprep.subr.mxu0 0.0
    %6993 = vmatpush1.msra.mxu0 0.0
    %6994 = vmatprep.subr.mxu0 0.0
    %6995 = vmatpush1.msra.mxu0 0.0
    %6996 = vmatprep.subr.mxu0 0.0
    %6997 = vmatpush1.msra.mxu0 0.0
    %6998 = vmatprep.subr.mxu0 0.0
    %6999 = vmatpush1.msra.mxu0 0.0
    %7000 = vmatprep.subr.mxu0 0.0
    %7001 = vmatpush1.msra.mxu0 0.0
    %7002 = vmatprep.subr.mxu0 0.0
    %7003 = vmatpush1.msra.mxu0 0.0
    %7004 = vmatprep.subr.mxu0 0.0
    %7005 = vmatpush1.msra.mxu0 0.0
    %7006 = vmatprep.subr.mxu0 0.0
    %7007 = vmatpush1.msra.mxu0 0.0
    %7008 = vmatprep.subr.mxu0 0.0
    %7009 = vmatpush1.msra.mxu0 0.0
    %7010 = vmatprep.mubr.f32.mxu0 0.0
    %7011 = vmatmul.mubr.f32.gmra.mrb[0].mxu0 %v5464
    %v7012 = vpop.f32.mrb[0].mxu0
    %v7013 = vadd.f32 0.0, %v7012
    %v7014 = vpop.f32.mrb[0].mxu0
    %7015 = vmatprep.mubr.f32.mxu0 0.0
    %7016 = vmatmul.mubr.f32.gmra.mrb[0].mxu0 %v5467
    %v7017 = vpop.f32.mrb[0].mxu0
    %v7018 = vadd.f32 0.0, %v7017
    %v7019 = vpop.f32.mrb[0].mxu0
    %7020 = vmatprep.mubr.f32.mxu0 0.0
    %7021 = vmatmul.mubr.f32.gmra.mrb[0].mxu0 %v5470
    %v7022 = vpop.f32.mrb[0].mxu0
    %v7023 = vadd.f32 0.0, %v7022
    %v7024 = vpop.f32.mrb[0].mxu0
    %7025 = vdwg.mxu0
    %v7027 = vsel %vm5472, %v5410, 0
    %7029 = vmatprep.subr.mxu0 0.0
    %7030 = vmatpush1.msra.mxu0 %v5407
    %7031 = vmatprep.subr.mxu0 0.0
    %7032 = vmatpush1.msra.mxu0 %v5408
    %7033 = vmatprep.subr.mxu0 0.0
    %7034 = vmatpush1.msra.mxu0 %v5409
    %7035 = vmatprep.subr.mxu0 0.0
    %7036 = vmatpush1.msra.mxu0 %v7027
    %7037 = vmatprep.subr.mxu0 0.0
    %7038 = vmatpush1.msra.mxu0 0.0
    %7039 = vmatprep.subr.mxu0 0.0
    %7040 = vmatpush1.msra.mxu0 0.0
    %7041 = vmatprep.subr.mxu0 0.0
    %7042 = vmatpush1.msra.mxu0 0.0
    %7043 = vmatprep.subr.mxu0 0.0
    %7044 = vmatpush1.msra.mxu0 0.0
    %7045 = vmatprep.subr.mxu0 0.0
    %7046 = vmatpush1.msra.mxu0 0.0
    %7047 = vmatprep.subr.mxu0 0.0
    %7048 = vmatpush1.msra.mxu0 0.0
    %7049 = vmatprep.subr.mxu0 0.0
    %7050 = vmatpush1.msra.mxu0 0.0
    %7051 = vmatprep.subr.mxu0 0.0
    %7052 = vmatpush1.msra.mxu0 0.0
    %7053 = vmatprep.subr.mxu0 0.0
    %7054 = vmatpush1.msra.mxu0 0.0
    %7055 = vmatprep.subr.mxu0 0.0
    %7056 = vmatpush1.msra.mxu0 0.0
    %7057 = vmatprep.subr.mxu0 0.0
    %7058 = vmatpush1.msra.mxu0 0.0
    %7059 = vmatprep.subr.mxu0 0.0
    %7060 = vmatpush1.msra.mxu0 0.0
    %7061 = vmatprep.subr.mxu0 0.0
    %7062 = vmatpush1.msra.mxu0 0.0
    %7063 = vmatprep.subr.mxu0 0.0
    %7064 = vmatpush1.msra.mxu0 0.0
    %7065 = vmatprep.subr.mxu0 0.0
    %7066 = vmatpush1.msra.mxu0 0.0
    %7067 = vmatprep.subr.mxu0 0.0
    %7068 = vmatpush1.msra.mxu0 0.0
    %7069 = vmatprep.subr.mxu0 0.0
    %7070 = vmatpush1.msra.mxu0 0.0
    %7071 = vmatprep.subr.mxu0 0.0
    %7072 = vmatpush1.msra.mxu0 0.0
    %7073 = vmatprep.subr.mxu0 0.0
    %7074 = vmatpush1.msra.mxu0 0.0
    %7075 = vmatprep.subr.mxu0 0.0
    %7076 = vmatpush1.msra.mxu0 0.0
    %7077 = vmatprep.subr.mxu0 0.0
    %7078 = vmatpush1.msra.mxu0 0.0
    %7079 = vmatprep.subr.mxu0 0.0
    %7080 = vmatpush1.msra.mxu0 0.0
    %7081 = vmatprep.subr.mxu0 0.0
    %7082 = vmatpush1.msra.mxu0 0.0
    %7083 = vmatprep.subr.mxu0 0.0
    %7084 = vmatpush1.msra.mxu0 0.0
    %7085 = vmatprep.subr.mxu0 0.0
    %7086 = vmatpush1.msra.mxu0 0.0
    %7087 = vmatprep.subr.mxu0 0.0
    %7088 = vmatpush1.msra.mxu0 0.0
    %7089 = vmatprep.subr.mxu0 0.0
    %7090 = vmatpush1.msra.mxu0 0.0
    %7091 = vmatprep.subr.mxu0 0.0
    %7092 = vmatpush1.msra.mxu0 0.0
    %7093 = vmatprep.mubr.f32.mxu0 0.0
    %7094 = vmatmul.mubr.f32.gmra.mrb[0].mxu0 %v5464
    %v7095 = vpop.f32.mrb[0].mxu0
    %v7096 = vadd.f32 0.0, %v7095
    %v7097 = vpop.f32.mrb[0].mxu0
    %7098 = vmatprep.mubr.f32.mxu0 0.0
    %7099 = vmatmul.mubr.f32.gmra.mrb[0].mxu0 %v5467
    %v7100 = vpop.f32.mrb[0].mxu0
    %v7101 = vadd.f32 0.0, %v7100
    %v7102 = vpop.f32.mrb[0].mxu0
    %7103 = vmatprep.mubr.f32.mxu0 0.0
    %7104 = vmatmul.mubr.f32.gmra.mrb[0].mxu0 %v5470
    %v7105 = vpop.f32.mrb[0].mxu0
    %v7106 = vadd.f32 0.0, %v7105
    %v7107 = vpop.f32.mrb[0].mxu0
    %7108 = vdwg.mxu0
    %v7110 = vsel %vm5472, %v5418, 0
    %7112 = vmatprep.subr.mxu0 0.0
    %7113 = vmatpush1.msra.mxu0 %v5415
    %7114 = vmatprep.subr.mxu0 0.0
    %7115 = vmatpush1.msra.mxu0 %v5416
    %7116 = vmatprep.subr.mxu0 0.0
    %7117 = vmatpush1.msra.mxu0 %v5417
    %7118 = vmatprep.subr.mxu0 0.0
    %7119 = vmatpush1.msra.mxu0 %v7110
    %7120 = vmatprep.subr.mxu0 0.0
    %7121 = vmatpush1.msra.mxu0 0.0
    %7122 = vmatprep.subr.mxu0 0.0
    %7123 = vmatpush1.msra.mxu0 0.0
    %7124 = vmatprep.subr.mxu0 0.0
    %7125 = vmatpush1.msra.mxu0 0.0
    %7126 = vmatprep.subr.mxu0 0.0
    %7127 = vmatpush1.msra.mxu0 0.0
    %7128 = vmatprep.subr.mxu0 0.0
    %7129 = vmatpush1.msra.mxu0 0.0
    %7130 = vmatprep.subr.mxu0 0.0
    %7131 = vmatpush1.msra.mxu0 0.0
    %7132 = vmatprep.subr.mxu0 0.0
    %7133 = vmatpush1.msra.mxu0 0.0
    %7134 = vmatprep.subr.mxu0 0.0
    %7135 = vmatpush1.msra.mxu0 0.0
    %7136 = vmatprep.subr.mxu0 0.0
    %7137 = vmatpush1.msra.mxu0 0.0
    %7138 = vmatprep.subr.mxu0 0.0
    %7139 = vmatpush1.msra.mxu0 0.0
    %7140 = vmatprep.subr.mxu0 0.0
    %7141 = vmatpush1.msra.mxu0 0.0
    %7142 = vmatprep.subr.mxu0 0.0
    %7143 = vmatpush1.msra.mxu0 0.0
    %7144 = vmatprep.subr.mxu0 0.0
    %7145 = vmatpush1.msra.mxu0 0.0
    %7146 = vmatprep.subr.mxu0 0.0
    %7147 = vmatpush1.msra.mxu0 0.0
    %7148 = vmatprep.subr.mxu0 0.0
    %7149 = vmatpush1.msra.mxu0 0.0
    %7150 = vmatprep.subr.mxu0 0.0
    %7151 = vmatpush1.msra.mxu0 0.0
    %7152 = vmatprep.subr.mxu0 0.0
    %7153 = vmatpush1.msra.mxu0 0.0
    %7154 = vmatprep.subr.mxu0 0.0
    %7155 = vmatpush1.msra.mxu0 0.0
    %7156 = vmatprep.subr.mxu0 0.0
    %7157 = vmatpush1.msra.mxu0 0.0
    %7158 = vmatprep.subr.mxu0 0.0
    %7159 = vmatpush1.msra.mxu0 0.0
    %7160 = vmatprep.subr.mxu0 0.0
    %7161 = vmatpush1.msra.mxu0 0.0
    %7162 = vmatprep.subr.mxu0 0.0
    %7163 = vmatpush1.msra.mxu0 0.0
    %7164 = vmatprep.subr.mxu0 0.0
    %7165 = vmatpush1.msra.mxu0 0.0
    %7166 = vmatprep.subr.mxu0 0.0
    %7167 = vmatpush1.msra.mxu0 0.0
    %7168 = vmatprep.subr.mxu0 0.0
    %7169 = vmatpush1.msra.mxu0 0.0
    %7170 = vmatprep.subr.mxu0 0.0
    %7171 = vmatpush1.msra.mxu0 0.0
    %7172 = vmatprep.subr.mxu0 0.0
    %7173 = vmatpush1.msra.mxu0 0.0
    %7174 = vmatprep.subr.mxu0 0.0
    %7175 = vmatpush1.msra.mxu0 0.0
    %7176 = vmatprep.mubr.f32.mxu0 0.0
    %7177 = vmatmul.mubr.f32.gmra.mrb[0].mxu0 %v5464
    %v7178 = vpop.f32.mrb[0].mxu0
    %v7179 = vadd.f32 0.0, %v7178
    %v7180 = vpop.f32.mrb[0].mxu0
    %7181 = vmatprep.mubr.f32.mxu0 0.0
    %7182 = vmatmul.mubr.f32.gmra.mrb[0].mxu0 %v5467
    %v7183 = vpop.f32.mrb[0].mxu0
    %v7184 = vadd.f32 0.0, %v7183
    %v7185 = vpop.f32.mrb[0].mxu0
    %7186 = vmatprep.mubr.f32.mxu0 0.0
    %7187 = vmatmul.mubr.f32.gmra.mrb[0].mxu0 %v5470
    %v7188 = vpop.f32.mrb[0].mxu0
    %v7189 = vadd.f32 0.0, %v7188
    %v7190 = vpop.f32.mrb[0].mxu0
    %7191 = vdwg.mxu0
    %v7193 = vsel %vm5472, %v5426, 0
    %7195 = vmatprep.subr.mxu0 0.0
    %7196 = vmatpush1.msra.mxu0 %v5423
    %7197 = vmatprep.subr.mxu0 0.0
    %7198 = vmatpush1.msra.mxu0 %v5424
    %7199 = vmatprep.subr.mxu0 0.0
    %7200 = vmatpush1.msra.mxu0 %v5425
    %7201 = vmatprep.subr.mxu0 0.0
    %7202 = vmatpush1.msra.mxu0 %v7193
    %7203 = vmatprep.subr.mxu0 0.0
    %7204 = vmatpush1.msra.mxu0 0.0
    %7205 = vmatprep.subr.mxu0 0.0
    %7206 = vmatpush1.msra.mxu0 0.0
    %7207 = vmatprep.subr.mxu0 0.0
    %7208 = vmatpush1.msra.mxu0 0.0
    %7209 = vmatprep.subr.mxu0 0.0
    %7210 = vmatpush1.msra.mxu0 0.0
    %7211 = vmatprep.subr.mxu0 0.0
    %7212 = vmatpush1.msra.mxu0 0.0
    %7213 = vmatprep.subr.mxu0 0.0
    %7214 = vmatpush1.msra.mxu0 0.0
    %7215 = vmatprep.subr.mxu0 0.0
    %7216 = vmatpush1.msra.mxu0 0.0
    %7217 = vmatprep.subr.mxu0 0.0
    %7218 = vmatpush1.msra.mxu0 0.0
    %7219 = vmatprep.subr.mxu0 0.0
    %7220 = vmatpush1.msra.mxu0 0.0
    %7221 = vmatprep.subr.mxu0 0.0
    %7222 = vmatpush1.msra.mxu0 0.0
    %7223 = vmatprep.subr.mxu0 0.0
    %7224 = vmatpush1.msra.mxu0 0.0
    %7225 = vmatprep.subr.mxu0 0.0
    %7226 = vmatpush1.msra.mxu0 0.0
    %7227 = vmatprep.subr.mxu0 0.0
    %7228 = vmatpush1.msra.mxu0 0.0
    %7229 = vmatprep.subr.mxu0 0.0
    %7230 = vmatpush1.msra.mxu0 0.0
    %7231 = vmatprep.subr.mxu0 0.0
    %7232 = vmatpush1.msra.mxu0 0.0
    %7233 = vmatprep.subr.mxu0 0.0
    %7234 = vmatpush1.msra.mxu0 0.0
    %7235 = vmatprep.subr.mxu0 0.0
    %7236 = vmatpush1.msra.mxu0 0.0
    %7237 = vmatprep.subr.mxu0 0.0
    %7238 = vmatpush1.msra.mxu0 0.0
    %7239 = vmatprep.subr.mxu0 0.0
    %7240 = vmatpush1.msra.mxu0 0.0
    %7241 = vmatprep.subr.mxu0 0.0
    %7242 = vmatpush1.msra.mxu0 0.0
    %7243 = vmatprep.subr.mxu0 0.0
    %7244 = vmatpush1.msra.mxu0 0.0
    %7245 = vmatprep.subr.mxu0 0.0
    %7246 = vmatpush1.msra.mxu0 0.0
    %7247 = vmatprep.subr.mxu0 0.0
    %7248 = vmatpush1.msra.mxu0 0.0
    %7249 = vmatprep.subr.mxu0 0.0
    %7250 = vmatpush1.msra.mxu0 0.0
    %7251 = vmatprep.subr.mxu0 0.0
    %7252 = vmatpush1.msra.mxu0 0.0
    %7253 = vmatprep.subr.mxu0 0.0
    %7254 = vmatpush1.msra.mxu0 0.0
    %7255 = vmatprep.subr.mxu0 0.0
    %7256 = vmatpush1.msra.mxu0 0.0
    %7257 = vmatprep.subr.mxu0 0.0
    %7258 = vmatpush1.msra.mxu0 0.0
    %7259 = vmatprep.mubr.f32.mxu0 0.0
    %7260 = vmatmul.mubr.f32.gmra.mrb[0].mxu0 %v5464
    %v7261 = vpop.f32.mrb[0].mxu0
    %v7262 = vadd.f32 0.0, %v7261
    %v7263 = vpop.f32.mrb[0].mxu0
    %7264 = vmatprep.mubr.f32.mxu0 0.0
    %7265 = vmatmul.mubr.f32.gmra.mrb[0].mxu0 %v5467
    %v7266 = vpop.f32.mrb[0].mxu0
    %v7267 = vadd.f32 0.0, %v7266
    %v7268 = vpop.f32.mrb[0].mxu0
    %7269 = vmatprep.mubr.f32.mxu0 0.0
    %7270 = vmatmul.mubr.f32.gmra.mrb[0].mxu0 %v5470
    %v7271 = vpop.f32.mrb[0].mxu0
    %v7272 = vadd.f32 0.0, %v7271
    %v7273 = vpop.f32.mrb[0].mxu0
    %7274 = vdwg.mxu0
    %v7276 = vsel %vm5472, %v5434, 0
    %7278 = vmatprep.subr.mxu0 0.0
    %7279 = vmatpush1.msra.mxu0 %v5431
    %7280 = vmatprep.subr.mxu0 0.0
    %7281 = vmatpush1.msra.mxu0 %v5432
    %7282 = vmatprep.subr.mxu0 0.0
    %7283 = vmatpush1.msra.mxu0 %v5433
    %7284 = vmatprep.subr.mxu0 0.0
    %7285 = vmatpush1.msra.mxu0 %v7276
    %7286 = vmatprep.subr.mxu0 0.0
    %7287 = vmatpush1.msra.mxu0 0.0
    %7288 = vmatprep.subr.mxu0 0.0
    %7289 = vmatpush1.msra.mxu0 0.0
    %7290 = vmatprep.subr.mxu0 0.0
    %7291 = vmatpush1.msra.mxu0 0.0
    %7292 = vmatprep.subr.mxu0 0.0
    %7293 = vmatpush1.msra.mxu0 0.0
    %7294 = vmatprep.subr.mxu0 0.0
    %7295 = vmatpush1.msra.mxu0 0.0
    %7296 = vmatprep.subr.mxu0 0.0
    %7297 = vmatpush1.msra.mxu0 0.0
    %7298 = vmatprep.subr.mxu0 0.0
    %7299 = vmatpush1.msra.mxu0 0.0
    %7300 = vmatprep.subr.mxu0 0.0
    %7301 = vmatpush1.msra.mxu0 0.0
    %7302 = vmatprep.subr.mxu0 0.0
    %7303 = vmatpush1.msra.mxu0 0.0
    %7304 = vmatprep.subr.mxu0 0.0
    %7305 = vmatpush1.msra.mxu0 0.0
    %7306 = vmatprep.subr.mxu0 0.0
    %7307 = vmatpush1.msra.mxu0 0.0
    %7308 = vmatprep.subr.mxu0 0.0
    %7309 = vmatpush1.msra.mxu0 0.0
    %7310 = vmatprep.subr.mxu0 0.0
    %7311 = vmatpush1.msra.mxu0 0.0
    %7312 = vmatprep.subr.mxu0 0.0
    %7313 = vmatpush1.msra.mxu0 0.0
    %7314 = vmatprep.subr.mxu0 0.0
    %7315 = vmatpush1.msra.mxu0 0.0
    %7316 = vmatprep.subr.mxu0 0.0
    %7317 = vmatpush1.msra.mxu0 0.0
    %7318 = vmatprep.subr.mxu0 0.0
    %7319 = vmatpush1.msra.mxu0 0.0
    %7320 = vmatprep.subr.mxu0 0.0
    %7321 = vmatpush1.msra.mxu0 0.0
    %7322 = vmatprep.subr.mxu0 0.0
    %7323 = vmatpush1.msra.mxu0 0.0
    %7324 = vmatprep.subr.mxu0 0.0
    %7325 = vmatpush1.msra.mxu0 0.0
    %7326 = vmatprep.subr.mxu0 0.0
    %7327 = vmatpush1.msra.mxu0 0.0
    %7328 = vmatprep.subr.mxu0 0.0
    %7329 = vmatpush1.msra.mxu0 0.0
    %7330 = vmatprep.subr.mxu0 0.0
    %7331 = vmatpush1.msra.mxu0 0.0
    %7332 = vmatprep.subr.mxu0 0.0
    %7333 = vmatpush1.msra.mxu0 0.0
    %7334 = vmatprep.subr.mxu0 0.0
    %7335 = vmatpush1.msra.mxu0 0.0
    %7336 = vmatprep.subr.mxu0 0.0
    %7337 = vmatpush1.msra.mxu0 0.0
    %7338 = vmatprep.subr.mxu0 0.0
    %7339 = vmatpush1.msra.mxu0 0.0
    %7340 = vmatprep.subr.mxu0 0.0
    %7341 = vmatpush1.msra.mxu0 0.0
    %7342 = vmatprep.mubr.f32.mxu0 0.0
    %7343 = vmatmul.mubr.f32.gmra.mrb[0].mxu0 %v5464
    %v7344 = vpop.f32.mrb[0].mxu0
    %v7345 = vadd.f32 0.0, %v7344
    %v7346 = vpop.f32.mrb[0].mxu0
    %7347 = vmatprep.mubr.f32.mxu0 0.0
    %7348 = vmatmul.mubr.f32.gmra.mrb[0].mxu0 %v5467
    %v7349 = vpop.f32.mrb[0].mxu0
    %v7350 = vadd.f32 0.0, %v7349
    %v7351 = vpop.f32.mrb[0].mxu0
    %7352 = vmatprep.mubr.f32.mxu0 0.0
    %7353 = vmatmul.mubr.f32.gmra.mrb[0].mxu0 %v5470
    %v7354 = vpop.f32.mrb[0].mxu0
    %v7355 = vadd.f32 0.0, %v7354
    %v7356 = vpop.f32.mrb[0].mxu0
    %7357 = vdwg.mxu0
    %v7378 = vrot.slane %v6598, 5
    %v7379 = vrot.slane %v6603, 5
    %v7380 = vsel %vm6323, %v7378, %v7379
    %v7381 = vrot.slane %v6681, 5
    %v7382 = vrot.slane %v6686, 5
    %v7383 = vsel %vm6323, %v7381, %v7382
    %v7384 = vrot.slane %v6764, 5
    %v7385 = vrot.slane %v6769, 5
    %v7386 = vsel %vm6323, %v7384, %v7385
    %v7387 = vrot.slane %v6847, 5
    %v7388 = vrot.slane %v6852, 5
    %v7389 = vsel %vm6323, %v7387, %v7388
    %v7390 = vrot.slane %v6930, 5
    %v7391 = vrot.slane %v6935, 5
    %v7392 = vsel %vm6323, %v7390, %v7391
    %v7393 = vrot.slane %v7013, 5
    %v7394 = vrot.slane %v7018, 5
    %v7395 = vsel %vm6323, %v7393, %v7394
    %v7396 = vrot.slane %v7096, 5
    %v7397 = vrot.slane %v7101, 5
    %v7398 = vsel %vm6323, %v7396, %v7397
    %v7399 = vrot.slane %v7179, 5
    %v7400 = vrot.slane %v7184, 5
    %v7401 = vsel %vm6323, %v7399, %v7400
    %v7402 = vrot.slane %v7262, 5
    %v7403 = vrot.slane %v7267, 5
    %v7404 = vsel %vm6323, %v7402, %v7403
    %v7405 = vrot.slane %v7345, 5
    %v7406 = vrot.slane %v7350, 5
    %v7407 = vsel %vm6323, %v7405, %v7406
    %7408 = vrot.lane.b32.xlu0 %v7380, 8
    %v7409 = vpop.permute.xlu0 %7408
    %7410 = vrot.lane.b32.xlu0 %v7383, 8
    %v7411 = vpop.permute.xlu0 %7410
    %7412 = vrot.lane.b32.xlu0 %v7386, 8
    %v7413 = vpop.permute.xlu0 %7412
    %7414 = vrot.lane.b32.xlu0 %v7389, 8
    %v7415 = vpop.permute.xlu0 %7414
    %7416 = vrot.lane.b32.xlu0 %v7392, 8
    %v7417 = vpop.permute.xlu0 %7416
    %7418 = vrot.lane.b32.xlu0 %v7395, 8
    %v7419 = vpop.permute.xlu0 %7418
    %7420 = vrot.lane.b32.xlu0 %v7398, 8
    %v7421 = vpop.permute.xlu0 %7420
    %7422 = vrot.lane.b32.xlu0 %v7401, 8
    %v7423 = vpop.permute.xlu0 %7422
    %7424 = vrot.lane.b32.xlu0 %v7404, 8
    %v7425 = vpop.permute.xlu0 %7424
    %7426 = vrot.lane.b32.xlu0 %v7407, 8
    %v7427 = vpop.permute.xlu0 %7426
    %v7438 = vrot.slane %v6603, 2
    %v7439 = vrot.slane %v6686, 2
    %v7440 = vrot.slane %v6769, 2
    %v7441 = vrot.slane %v6852, 2
    %v7442 = vrot.slane %v6935, 2
    %v7443 = vrot.slane %v7018, 2
    %v7444 = vrot.slane %v7101, 2
    %v7445 = vrot.slane %v7184, 2
    %v7446 = vrot.slane %v7267, 2
    %v7447 = vrot.slane %v7350, 2
    %7448 = vrot.lane.b32.xlu0 %v7438, 16
    %v7449 = vpop.permute.xlu0 %7448
    %7450 = vrot.lane.b32.xlu0 %v7439, 16
    %v7451 = vpop.permute.xlu0 %7450
    %7452 = vrot.lane.b32.xlu0 %v7440, 16
    %v7453 = vpop.permute.xlu0 %7452
    %7454 = vrot.lane.b32.xlu0 %v7441, 16
    %v7455 = vpop.permute.xlu0 %7454
    %7456 = vrot.lane.b32.xlu0 %v7442, 16
    %v7457 = vpop.permute.xlu0 %7456
    %7458 = vrot.lane.b32.xlu0 %v7443, 16
    %v7459 = vpop.permute.xlu0 %7458
    %7460 = vrot.lane.b32.xlu0 %v7444, 16
    %v7461 = vpop.permute.xlu0 %7460
    %7462 = vrot.lane.b32.xlu0 %v7445, 16
    %v7463 = vpop.permute.xlu0 %7462
    %7464 = vrot.lane.b32.xlu0 %v7446, 16
    %v7465 = vpop.permute.xlu0 %7464
    %7466 = vrot.lane.b32.xlu0 %v7447, 16
    %v7467 = vpop.permute.xlu0 %7466
    %v7488 = vrot.slane %v6603, 7
    %v7489 = vrot.slane %v6608, 7
    %v7490 = vsel %vm6434, %v7488, %v7489
    %v7491 = vrot.slane %v6686, 7
    %v7492 = vrot.slane %v6691, 7
    %v7493 = vsel %vm6434, %v7491, %v7492
    %v7494 = vrot.slane %v6769, 7
    %v7495 = vrot.slane %v6774, 7
    %v7496 = vsel %vm6434, %v7494, %v7495
    %v7497 = vrot.slane %v6852, 7
    %v7498 = vrot.slane %v6857, 7
    %v7499 = vsel %vm6434, %v7497, %v7498
    %v7500 = vrot.slane %v6935, 7
    %v7501 = vrot.slane %v6940, 7
    %v7502 = vsel %vm6434, %v7500, %v7501
    %v7503 = vrot.slane %v7018, 7
    %v7504 = vrot.slane %v7023, 7
    %v7505 = vsel %vm6434, %v7503, %v7504
    %v7506 = vrot.slane %v7101, 7
    %v7507 = vrot.slane %v7106, 7
    %v7508 = vsel %vm6434, %v7506, %v7507
    %v7509 = vrot.slane %v7184, 7
    %v7510 = vrot.slane %v7189, 7
    %v7511 = vsel %vm6434, %v7509, %v7510
    %v7512 = vrot.slane %v7267, 7
    %v7513 = vrot.slane %v7272, 7
    %v7514 = vsel %vm6434, %v7512, %v7513
    %v7515 = vrot.slane %v7350, 7
    %v7516 = vrot.slane %v7355, 7
    %v7517 = vsel %vm6434, %v7515, %v7516
    %7518 = vrot.lane.b32.xlu0 %v7490, 24
    %v7519 = vpop.permute.xlu0 %7518
    %7520 = vrot.lane.b32.xlu0 %v7493, 24
    %v7521 = vpop.permute.xlu0 %7520
    %7522 = vrot.lane.b32.xlu0 %v7496, 24
    %v7523 = vpop.permute.xlu0 %7522
    %7524 = vrot.lane.b32.xlu0 %v7499, 24
    %v7525 = vpop.permute.xlu0 %7524
    %7526 = vrot.lane.b32.xlu0 %v7502, 24
    %v7527 = vpop.permute.xlu0 %7526
    %7528 = vrot.lane.b32.xlu0 %v7505, 24
    %v7529 = vpop.permute.xlu0 %7528
    %7530 = vrot.lane.b32.xlu0 %v7508, 24
    %v7531 = vpop.permute.xlu0 %7530
    %7532 = vrot.lane.b32.xlu0 %v7511, 24
    %v7533 = vpop.permute.xlu0 %7532
    %7534 = vrot.lane.b32.xlu0 %v7514, 24
    %v7535 = vpop.permute.xlu0 %7534
    %7536 = vrot.lane.b32.xlu0 %v7517, 24
    %v7537 = vpop.permute.xlu0 %7536
    %v7548 = vsel %vm6495, %v6598, %v7409
    %v7549 = vsel %vm6495, %v6681, %v7411
    %v7550 = vsel %vm6495, %v6764, %v7413
    %v7551 = vsel %vm6495, %v6847, %v7415
    %v7552 = vsel %vm6495, %v6930, %v7417
    %v7553 = vsel %vm6495, %v7013, %v7419
    %v7554 = vsel %vm6495, %v7096, %v7421
    %v7555 = vsel %vm6495, %v7179, %v7423
    %v7556 = vsel %vm6495, %v7262, %v7425
    %v7557 = vsel %vm6495, %v7345, %v7427
    %v7558 = vsel %vm6506, %v7548, %v7449
    %v7559 = vsel %vm6506, %v7549, %v7451
    %v7560 = vsel %vm6506, %v7550, %v7453
    %v7561 = vsel %vm6506, %v7551, %v7455
    %v7562 = vsel %vm6506, %v7552, %v7457
    %v7563 = vsel %vm6506, %v7553, %v7459
    %v7564 = vsel %vm6506, %v7554, %v7461
    %v7565 = vsel %vm6506, %v7555, %v7463
    %v7566 = vsel %vm6506, %v7556, %v7465
    %v7567 = vsel %vm6506, %v7557, %v7467
    %v7568 = vsel %vm6517, %v7558, %v7519
    %v7569 = vsel %vm6517, %v7559, %v7521
    %v7570 = vsel %vm6517, %v7560, %v7523
    %v7571 = vsel %vm6517, %v7561, %v7525
    %v7572 = vsel %vm6517, %v7562, %v7527
    %v7573 = vsel %vm6517, %v7563, %v7529
    %v7574 = vsel %vm6517, %v7564, %v7531
    %v7575 = vsel %vm6517, %v7565, %v7533
    %v7576 = vsel %vm6517, %v7566, %v7535
    %v7577 = vsel %vm6517, %v7567, %v7537
    %vm7578 = vcmask 261120
    %v7580 = vsel %vm7578, %v7568, 0
    %7582 = vmatprep.subr.mxu0 0.0
    %7583 = vmatpush1.msra.mxu0 %v5450
    %7584 = vmatprep.subr.mxu0 0.0
    %7585 = vmatpush1.msra.mxu0 %v5451
    %7586 = vmatprep.subr.mxu0 0.0
    %7587 = vmatpush1.msra.mxu0 %v5452
    %7588 = vmatprep.subr.mxu0 0.0
    %7589 = vmatpush1.msra.mxu0 %v5453
    %7590 = vmatprep.subr.mxu0 0.0
    %7591 = vmatpush1.msra.mxu0 0.0
    %7592 = vmatprep.subr.mxu0 0.0
    %7593 = vmatpush1.msra.mxu0 0.0
    %7594 = vmatprep.subr.mxu0 0.0
    %7595 = vmatpush1.msra.mxu0 0.0
    %7596 = vmatprep.subr.mxu0 0.0
    %7597 = vmatpush1.msra.mxu0 0.0
    %7598 = vmatprep.subr.mxu0 0.0
    %7599 = vmatpush1.msra.mxu0 0.0
    %7600 = vmatprep.subr.mxu0 0.0
    %7601 = vmatpush1.msra.mxu0 0.0
    %7602 = vmatprep.subr.mxu0 0.0
    %7603 = vmatpush1.msra.mxu0 0.0
    %7604 = vmatprep.subr.mxu0 0.0
    %7605 = vmatpush1.msra.mxu0 0.0
    %7606 = vmatprep.subr.mxu0 0.0
    %7607 = vmatpush1.msra.mxu0 0.0
    %7608 = vmatprep.subr.mxu0 0.0
    %7609 = vmatpush1.msra.mxu0 0.0
    %7610 = vmatprep.subr.mxu0 0.0
    %7611 = vmatpush1.msra.mxu0 0.0
    %7612 = vmatprep.subr.mxu0 0.0
    %7613 = vmatpush1.msra.mxu0 0.0
    %7614 = vmatprep.subr.mxu0 0.0
    %7615 = vmatpush1.msra.mxu0 0.0
    %7616 = vmatprep.subr.mxu0 0.0
    %7617 = vmatpush1.msra.mxu0 0.0
    %7618 = vmatprep.subr.mxu0 0.0
    %7619 = vmatpush1.msra.mxu0 0.0
    %7620 = vmatprep.subr.mxu0 0.0
    %7621 = vmatpush1.msra.mxu0 0.0
    %7622 = vmatprep.subr.mxu0 0.0
    %7623 = vmatpush1.msra.mxu0 0.0
    %7624 = vmatprep.subr.mxu0 0.0
    %7625 = vmatpush1.msra.mxu0 0.0
    %7626 = vmatprep.subr.mxu0 0.0
    %7627 = vmatpush1.msra.mxu0 0.0
    %7628 = vmatprep.subr.mxu0 0.0
    %7629 = vmatpush1.msra.mxu0 0.0
    %7630 = vmatprep.subr.mxu0 0.0
    %7631 = vmatpush1.msra.mxu0 0.0
    %7632 = vmatprep.subr.mxu0 0.0
    %7633 = vmatpush1.msra.mxu0 0.0
    %7634 = vmatprep.subr.mxu0 0.0
    %7635 = vmatpush1.msra.mxu0 0.0
    %7636 = vmatprep.subr.mxu0 0.0
    %7637 = vmatpush1.msra.mxu0 0.0
    %7638 = vmatprep.subr.mxu0 0.0
    %7639 = vmatpush1.msra.mxu0 0.0
    %7640 = vmatprep.subr.mxu0 0.0
    %7641 = vmatpush1.msra.mxu0 0.0
    %7642 = vmatprep.subr.mxu0 0.0
    %7643 = vmatpush1.msra.mxu0 0.0
    %7644 = vmatprep.subr.mxu0 0.0
    %7645 = vmatpush1.msra.mxu0 0.0
    %7646 = vmatprep.mubr.f32.mxu0 0.0
    %7647 = vmatmul.mubr.f32.gmra.mrb[0].mxu0 %v7580
    %v7648 = vpop.f32.mrb[0].mxu0
    %v7649 = vadd.f32 0.0, %v7648
    %v7650 = vpop.f32.mrb[0].mxu0
    %7651 = vdwg.mxu0
    %v7653 = vsel %vm7578, %v7569, 0
    %7655 = vmatprep.subr.mxu0 0.0
    %7656 = vmatpush1.msra.mxu0 %v5450
    %7657 = vmatprep.subr.mxu0 0.0
    %7658 = vmatpush1.msra.mxu0 %v5451
    %7659 = vmatprep.subr.mxu0 0.0
    %7660 = vmatpush1.msra.mxu0 %v5452
    %7661 = vmatprep.subr.mxu0 0.0
    %7662 = vmatpush1.msra.mxu0 %v5453
    %7663 = vmatprep.subr.mxu0 0.0
    %7664 = vmatpush1.msra.mxu0 0.0
    %7665 = vmatprep.subr.mxu0 0.0
    %7666 = vmatpush1.msra.mxu0 0.0
    %7667 = vmatprep.subr.mxu0 0.0
    %7668 = vmatpush1.msra.mxu0 0.0
    %7669 = vmatprep.subr.mxu0 0.0
    %7670 = vmatpush1.msra.mxu0 0.0
    %7671 = vmatprep.subr.mxu0 0.0
    %7672 = vmatpush1.msra.mxu0 0.0
    %7673 = vmatprep.subr.mxu0 0.0
    %7674 = vmatpush1.msra.mxu0 0.0
    %7675 = vmatprep.subr.mxu0 0.0
    %7676 = vmatpush1.msra.mxu0 0.0
    %7677 = vmatprep.subr.mxu0 0.0
    %7678 = vmatpush1.msra.mxu0 0.0
    %7679 = vmatprep.subr.mxu0 0.0
    %7680 = vmatpush1.msra.mxu0 0.0
    %7681 = vmatprep.subr.mxu0 0.0
    %7682 = vmatpush1.msra.mxu0 0.0
    %7683 = vmatprep.subr.mxu0 0.0
    %7684 = vmatpush1.msra.mxu0 0.0
    %7685 = vmatprep.subr.mxu0 0.0
    %7686 = vmatpush1.msra.mxu0 0.0
    %7687 = vmatprep.subr.mxu0 0.0
    %7688 = vmatpush1.msra.mxu0 0.0
    %7689 = vmatprep.subr.mxu0 0.0
    %7690 = vmatpush1.msra.mxu0 0.0
    %7691 = vmatprep.subr.mxu0 0.0
    %7692 = vmatpush1.msra.mxu0 0.0
    %7693 = vmatprep.subr.mxu0 0.0
    %7694 = vmatpush1.msra.mxu0 0.0
    %7695 = vmatprep.subr.mxu0 0.0
    %7696 = vmatpush1.msra.mxu0 0.0
    %7697 = vmatprep.subr.mxu0 0.0
    %7698 = vmatpush1.msra.mxu0 0.0
    %7699 = vmatprep.subr.mxu0 0.0
    %7700 = vmatpush1.msra.mxu0 0.0
    %7701 = vmatprep.subr.mxu0 0.0
    %7702 = vmatpush1.msra.mxu0 0.0
    %7703 = vmatprep.subr.mxu0 0.0
    %7704 = vmatpush1.msra.mxu0 0.0
    %7705 = vmatprep.subr.mxu0 0.0
    %7706 = vmatpush1.msra.mxu0 0.0
    %7707 = vmatprep.subr.mxu0 0.0
    %7708 = vmatpush1.msra.mxu0 0.0
    %7709 = vmatprep.subr.mxu0 0.0
    %7710 = vmatpush1.msra.mxu0 0.0
    %7711 = vmatprep.subr.mxu0 0.0
    %7712 = vmatpush1.msra.mxu0 0.0
    %7713 = vmatprep.subr.mxu0 0.0
    %7714 = vmatpush1.msra.mxu0 0.0
    %7715 = vmatprep.subr.mxu0 0.0
    %7716 = vmatpush1.msra.mxu0 0.0
    %7717 = vmatprep.subr.mxu0 0.0
    %7718 = vmatpush1.msra.mxu0 0.0
    %7719 = vmatprep.mubr.f32.mxu0 0.0
    %7720 = vmatmul.mubr.f32.gmra.mrb[0].mxu0 %v7653
    %v7721 = vpop.f32.mrb[0].mxu0
    %v7722 = vadd.f32 0.0, %v7721
    %v7723 = vpop.f32.mrb[0].mxu0
    %7724 = vdwg.mxu0
    %v7726 = vsel %vm7578, %v7570, 0
    %7728 = vmatprep.subr.mxu0 0.0
    %7729 = vmatpush1.msra.mxu0 %v5450
    %7730 = vmatprep.subr.mxu0 0.0
    %7731 = vmatpush1.msra.mxu0 %v5451
    %7732 = vmatprep.subr.mxu0 0.0
    %7733 = vmatpush1.msra.mxu0 %v5452
    %7734 = vmatprep.subr.mxu0 0.0
    %7735 = vmatpush1.msra.mxu0 %v5453
    %7736 = vmatprep.subr.mxu0 0.0
    %7737 = vmatpush1.msra.mxu0 0.0
    %7738 = vmatprep.subr.mxu0 0.0
    %7739 = vmatpush1.msra.mxu0 0.0
    %7740 = vmatprep.subr.mxu0 0.0
    %7741 = vmatpush1.msra.mxu0 0.0
    %7742 = vmatprep.subr.mxu0 0.0
    %7743 = vmatpush1.msra.mxu0 0.0
    %7744 = vmatprep.subr.mxu0 0.0
    %7745 = vmatpush1.msra.mxu0 0.0
    %7746 = vmatprep.subr.mxu0 0.0
    %7747 = vmatpush1.msra.mxu0 0.0
    %7748 = vmatprep.subr.mxu0 0.0
    %7749 = vmatpush1.msra.mxu0 0.0
    %7750 = vmatprep.subr.mxu0 0.0
    %7751 = vmatpush1.msra.mxu0 0.0
    %7752 = vmatprep.subr.mxu0 0.0
    %7753 = vmatpush1.msra.mxu0 0.0
    %7754 = vmatprep.subr.mxu0 0.0
    %7755 = vmatpush1.msra.mxu0 0.0
    %7756 = vmatprep.subr.mxu0 0.0
    %7757 = vmatpush1.msra.mxu0 0.0
    %7758 = vmatprep.subr.mxu0 0.0
    %7759 = vmatpush1.msra.mxu0 0.0
    %7760 = vmatprep.subr.mxu0 0.0
    %7761 = vmatpush1.msra.mxu0 0.0
    %7762 = vmatprep.subr.mxu0 0.0
    %7763 = vmatpush1.msra.mxu0 0.0
    %7764 = vmatprep.subr.mxu0 0.0
    %7765 = vmatpush1.msra.mxu0 0.0
    %7766 = vmatprep.subr.mxu0 0.0
    %7767 = vmatpush1.msra.mxu0 0.0
    %7768 = vmatprep.subr.mxu0 0.0
    %7769 = vmatpush1.msra.mxu0 0.0
    %7770 = vmatprep.subr.mxu0 0.0
    %7771 = vmatpush1.msra.mxu0 0.0
    %7772 = vmatprep.subr.mxu0 0.0
    %7773 = vmatpush1.msra.mxu0 0.0
    %7774 = vmatprep.subr.mxu0 0.0
    %7775 = vmatpush1.msra.mxu0 0.0
    %7776 = vmatprep.subr.mxu0 0.0
    %7777 = vmatpush1.msra.mxu0 0.0
    %7778 = vmatprep.subr.mxu0 0.0
    %7779 = vmatpush1.msra.mxu0 0.0
    %7780 = vmatprep.subr.mxu0 0.0
    %7781 = vmatpush1.msra.mxu0 0.0
    %7782 = vmatprep.subr.mxu0 0.0
    %7783 = vmatpush1.msra.mxu0 0.0
    %7784 = vmatprep.subr.mxu0 0.0
    %7785 = vmatpush1.msra.mxu0 0.0
    %7786 = vmatprep.subr.mxu0 0.0
    %7787 = vmatpush1.msra.mxu0 0.0
    %7788 = vmatprep.subr.mxu0 0.0
    %7789 = vmatpush1.msra.mxu0 0.0
    %7790 = vmatprep.subr.mxu0 0.0
    %7791 = vmatpush1.msra.mxu0 0.0
    %7792 = vmatprep.mubr.f32.mxu0 0.0
    %7793 = vmatmul.mubr.f32.gmra.mrb[0].mxu0 %v7726
    %v7794 = vpop.f32.mrb[0].mxu0
    %v7795 = vadd.f32 0.0, %v7794
    %v7796 = vpop.f32.mrb[0].mxu0
    %7797 = vdwg.mxu0
    %v7799 = vsel %vm7578, %v7571, 0
    %7801 = vmatprep.subr.mxu0 0.0
    %7802 = vmatpush1.msra.mxu0 %v5450
    %7803 = vmatprep.subr.mxu0 0.0
    %7804 = vmatpush1.msra.mxu0 %v5451
    %7805 = vmatprep.subr.mxu0 0.0
    %7806 = vmatpush1.msra.mxu0 %v5452
    %7807 = vmatprep.subr.mxu0 0.0
    %7808 = vmatpush1.msra.mxu0 %v5453
    %7809 = vmatprep.subr.mxu0 0.0
    %7810 = vmatpush1.msra.mxu0 0.0
    %7811 = vmatprep.subr.mxu0 0.0
    %7812 = vmatpush1.msra.mxu0 0.0
    %7813 = vmatprep.subr.mxu0 0.0
    %7814 = vmatpush1.msra.mxu0 0.0
    %7815 = vmatprep.subr.mxu0 0.0
    %7816 = vmatpush1.msra.mxu0 0.0
    %7817 = vmatprep.subr.mxu0 0.0
    %7818 = vmatpush1.msra.mxu0 0.0
    %7819 = vmatprep.subr.mxu0 0.0
    %7820 = vmatpush1.msra.mxu0 0.0
    %7821 = vmatprep.subr.mxu0 0.0
    %7822 = vmatpush1.msra.mxu0 0.0
    %7823 = vmatprep.subr.mxu0 0.0
    %7824 = vmatpush1.msra.mxu0 0.0
    %7825 = vmatprep.subr.mxu0 0.0
    %7826 = vmatpush1.msra.mxu0 0.0
    %7827 = vmatprep.subr.mxu0 0.0
    %7828 = vmatpush1.msra.mxu0 0.0
    %7829 = vmatprep.subr.mxu0 0.0
    %7830 = vmatpush1.msra.mxu0 0.0
    %7831 = vmatprep.subr.mxu0 0.0
    %7832 = vmatpush1.msra.mxu0 0.0
    %7833 = vmatprep.subr.mxu0 0.0
    %7834 = vmatpush1.msra.mxu0 0.0
    %7835 = vmatprep.subr.mxu0 0.0
    %7836 = vmatpush1.msra.mxu0 0.0
    %7837 = vmatprep.subr.mxu0 0.0
    %7838 = vmatpush1.msra.mxu0 0.0
    %7839 = vmatprep.subr.mxu0 0.0
    %7840 = vmatpush1.msra.mxu0 0.0
    %7841 = vmatprep.subr.mxu0 0.0
    %7842 = vmatpush1.msra.mxu0 0.0
    %7843 = vmatprep.subr.mxu0 0.0
    %7844 = vmatpush1.msra.mxu0 0.0
    %7845 = vmatprep.subr.mxu0 0.0
    %7846 = vmatpush1.msra.mxu0 0.0
    %7847 = vmatprep.subr.mxu0 0.0
    %7848 = vmatpush1.msra.mxu0 0.0
    %7849 = vmatprep.subr.mxu0 0.0
    %7850 = vmatpush1.msra.mxu0 0.0
    %7851 = vmatprep.subr.mxu0 0.0
    %7852 = vmatpush1.msra.mxu0 0.0
    %7853 = vmatprep.subr.mxu0 0.0
    %7854 = vmatpush1.msra.mxu0 0.0
    %7855 = vmatprep.subr.mxu0 0.0
    %7856 = vmatpush1.msra.mxu0 0.0
    %7857 = vmatprep.subr.mxu0 0.0
    %7858 = vmatpush1.msra.mxu0 0.0
    %7859 = vmatprep.subr.mxu0 0.0
    %7860 = vmatpush1.msra.mxu0 0.0
    %7861 = vmatprep.subr.mxu0 0.0
    %7862 = vmatpush1.msra.mxu0 0.0
    %7863 = vmatprep.subr.mxu0 0.0
    %7864 = vmatpush1.msra.mxu0 0.0
    %7865 = vmatprep.mubr.f32.mxu0 0.0
    %7866 = vmatmul.mubr.f32.gmra.mrb[0].mxu0 %v7799
    %v7867 = vpop.f32.mrb[0].mxu0
    %v7868 = vadd.f32 0.0, %v7867
    %v7869 = vpop.f32.mrb[0].mxu0
    %7870 = vdwg.mxu0
    %v7872 = vsel %vm7578, %v7572, 0
    %7874 = vmatprep.subr.mxu0 0.0
    %7875 = vmatpush1.msra.mxu0 %v5450
    %7876 = vmatprep.subr.mxu0 0.0
    %7877 = vmatpush1.msra.mxu0 %v5451
    %7878 = vmatprep.subr.mxu0 0.0
    %7879 = vmatpush1.msra.mxu0 %v5452
    %7880 = vmatprep.subr.mxu0 0.0
    %7881 = vmatpush1.msra.mxu0 %v5453
    %7882 = vmatprep.subr.mxu0 0.0
    %7883 = vmatpush1.msra.mxu0 0.0
    %7884 = vmatprep.subr.mxu0 0.0
    %7885 = vmatpush1.msra.mxu0 0.0
    %7886 = vmatprep.subr.mxu0 0.0
    %7887 = vmatpush1.msra.mxu0 0.0
    %7888 = vmatprep.subr.mxu0 0.0
    %7889 = vmatpush1.msra.mxu0 0.0
    %7890 = vmatprep.subr.mxu0 0.0
    %7891 = vmatpush1.msra.mxu0 0.0
    %7892 = vmatprep.subr.mxu0 0.0
    %7893 = vmatpush1.msra.mxu0 0.0
    %7894 = vmatprep.subr.mxu0 0.0
    %7895 = vmatpush1.msra.mxu0 0.0
    %7896 = vmatprep.subr.mxu0 0.0
    %7897 = vmatpush1.msra.mxu0 0.0
    %7898 = vmatprep.subr.mxu0 0.0
    %7899 = vmatpush1.msra.mxu0 0.0
    %7900 = vmatprep.subr.mxu0 0.0
    %7901 = vmatpush1.msra.mxu0 0.0
    %7902 = vmatprep.subr.mxu0 0.0
    %7903 = vmatpush1.msra.mxu0 0.0
    %7904 = vmatprep.subr.mxu0 0.0
    %7905 = vmatpush1.msra.mxu0 0.0
    %7906 = vmatprep.subr.mxu0 0.0
    %7907 = vmatpush1.msra.mxu0 0.0
    %7908 = vmatprep.subr.mxu0 0.0
    %7909 = vmatpush1.msra.mxu0 0.0
    %7910 = vmatprep.subr.mxu0 0.0
    %7911 = vmatpush1.msra.mxu0 0.0
    %7912 = vmatprep.subr.mxu0 0.0
    %7913 = vmatpush1.msra.mxu0 0.0
    %7914 = vmatprep.subr.mxu0 0.0
    %7915 = vmatpush1.msra.mxu0 0.0
    %7916 = vmatprep.subr.mxu0 0.0
    %7917 = vmatpush1.msra.mxu0 0.0
    %7918 = vmatprep.subr.mxu0 0.0
    %7919 = vmatpush1.msra.mxu0 0.0
    %7920 = vmatprep.subr.mxu0 0.0
    %7921 = vmatpush1.msra.mxu0 0.0
    %7922 = vmatprep.subr.mxu0 0.0
    %7923 = vmatpush1.msra.mxu0 0.0
    %7924 = vmatprep.subr.mxu0 0.0
    %7925 = vmatpush1.msra.mxu0 0.0
    %7926 = vmatprep.subr.mxu0 0.0
    %7927 = vmatpush1.msra.mxu0 0.0
    %7928 = vmatprep.subr.mxu0 0.0
    %7929 = vmatpush1.msra.mxu0 0.0
    %7930 = vmatprep.subr.mxu0 0.0
    %7931 = vmatpush1.msra.mxu0 0.0
    %7932 = vmatprep.subr.mxu0 0.0
    %7933 = vmatpush1.msra.mxu0 0.0
    %7934 = vmatprep.subr.mxu0 0.0
    %7935 = vmatpush1.msra.mxu0 0.0
    %7936 = vmatprep.subr.mxu0 0.0
    %7937 = vmatpush1.msra.mxu0 0.0
    %7938 = vmatprep.mubr.f32.mxu0 0.0
    %7939 = vmatmul.mubr.f32.gmra.mrb[0].mxu0 %v7872
    %v7940 = vpop.f32.mrb[0].mxu0
    %v7941 = vadd.f32 0.0, %v7940
    %v7942 = vpop.f32.mrb[0].mxu0
    %7943 = vdwg.mxu0
    %v7945 = vsel %vm7578, %v7573, 0
    %7947 = vmatprep.subr.mxu0 0.0
    %7948 = vmatpush1.msra.mxu0 %v5450
    %7949 = vmatprep.subr.mxu0 0.0
    %7950 = vmatpush1.msra.mxu0 %v5451
    %7951 = vmatprep.subr.mxu0 0.0
    %7952 = vmatpush1.msra.mxu0 %v5452
    %7953 = vmatprep.subr.mxu0 0.0
    %7954 = vmatpush1.msra.mxu0 %v5453
    %7955 = vmatprep.subr.mxu0 0.0
    %7956 = vmatpush1.msra.mxu0 0.0
    %7957 = vmatprep.subr.mxu0 0.0
    %7958 = vmatpush1.msra.mxu0 0.0
    %7959 = vmatprep.subr.mxu0 0.0
    %7960 = vmatpush1.msra.mxu0 0.0
    %7961 = vmatprep.subr.mxu0 0.0
    %7962 = vmatpush1.msra.mxu0 0.0
    %7963 = vmatprep.subr.mxu0 0.0
    %7964 = vmatpush1.msra.mxu0 0.0
    %7965 = vmatprep.subr.mxu0 0.0
    %7966 = vmatpush1.msra.mxu0 0.0
    %7967 = vmatprep.subr.mxu0 0.0
    %7968 = vmatpush1.msra.mxu0 0.0
    %7969 = vmatprep.subr.mxu0 0.0
    %7970 = vmatpush1.msra.mxu0 0.0
    %7971 = vmatprep.subr.mxu0 0.0
    %7972 = vmatpush1.msra.mxu0 0.0
    %7973 = vmatprep.subr.mxu0 0.0
    %7974 = vmatpush1.msra.mxu0 0.0
    %7975 = vmatprep.subr.mxu0 0.0
    %7976 = vmatpush1.msra.mxu0 0.0
    %7977 = vmatprep.subr.mxu0 0.0
    %7978 = vmatpush1.msra.mxu0 0.0
    %7979 = vmatprep.subr.mxu0 0.0
    %7980 = vmatpush1.msra.mxu0 0.0
    %7981 = vmatprep.subr.mxu0 0.0
    %7982 = vmatpush1.msra.mxu0 0.0
    %7983 = vmatprep.subr.mxu0 0.0
    %7984 = vmatpush1.msra.mxu0 0.0
    %7985 = vmatprep.subr.mxu0 0.0
    %7986 = vmatpush1.msra.mxu0 0.0
    %7987 = vmatprep.subr.mxu0 0.0
    %7988 = vmatpush1.msra.mxu0 0.0
    %7989 = vmatprep.subr.mxu0 0.0
    %7990 = vmatpush1.msra.mxu0 0.0
    %7991 = vmatprep.subr.mxu0 0.0
    %7992 = vmatpush1.msra.mxu0 0.0
    %7993 = vmatprep.subr.mxu0 0.0
    %7994 = vmatpush1.msra.mxu0 0.0
    %7995 = vmatprep.subr.mxu0 0.0
    %7996 = vmatpush1.msra.mxu0 0.0
    %7997 = vmatprep.subr.mxu0 0.0
    %7998 = vmatpush1.msra.mxu0 0.0
    %7999 = vmatprep.subr.mxu0 0.0
    %8000 = vmatpush1.msra.mxu0 0.0
    %8001 = vmatprep.subr.mxu0 0.0
    %8002 = vmatpush1.msra.mxu0 0.0
    %8003 = vmatprep.subr.mxu0 0.0
    %8004 = vmatpush1.msra.mxu0 0.0
    %8005 = vmatprep.subr.mxu0 0.0
    %8006 = vmatpush1.msra.mxu0 0.0
    %8007 = vmatprep.subr.mxu0 0.0
    %8008 = vmatpush1.msra.mxu0 0.0
    %8009 = vmatprep.subr.mxu0 0.0
    %8010 = vmatpush1.msra.mxu0 0.0
    %8011 = vmatprep.mubr.f32.mxu0 0.0
    %8012 = vmatmul.mubr.f32.gmra.mrb[0].mxu0 %v7945
    %v8013 = vpop.f32.mrb[0].mxu0
    %v8014 = vadd.f32 0.0, %v8013
    %v8015 = vpop.f32.mrb[0].mxu0
    %8016 = vdwg.mxu0
    %v8018 = vsel %vm7578, %v7574, 0
    %8020 = vmatprep.subr.mxu0 0.0
    %8021 = vmatpush1.msra.mxu0 %v5450
    %8022 = vmatprep.subr.mxu0 0.0
    %8023 = vmatpush1.msra.mxu0 %v5451
    %8024 = vmatprep.subr.mxu0 0.0
    %8025 = vmatpush1.msra.mxu0 %v5452
    %8026 = vmatprep.subr.mxu0 0.0
    %8027 = vmatpush1.msra.mxu0 %v5453
    %8028 = vmatprep.subr.mxu0 0.0
    %8029 = vmatpush1.msra.mxu0 0.0
    %8030 = vmatprep.subr.mxu0 0.0
    %8031 = vmatpush1.msra.mxu0 0.0
    %8032 = vmatprep.subr.mxu0 0.0
    %8033 = vmatpush1.msra.mxu0 0.0
    %8034 = vmatprep.subr.mxu0 0.0
    %8035 = vmatpush1.msra.mxu0 0.0
    %8036 = vmatprep.subr.mxu0 0.0
    %8037 = vmatpush1.msra.mxu0 0.0
    %8038 = vmatprep.subr.mxu0 0.0
    %8039 = vmatpush1.msra.mxu0 0.0
    %8040 = vmatprep.subr.mxu0 0.0
    %8041 = vmatpush1.msra.mxu0 0.0
    %8042 = vmatprep.subr.mxu0 0.0
    %8043 = vmatpush1.msra.mxu0 0.0
    %8044 = vmatprep.subr.mxu0 0.0
    %8045 = vmatpush1.msra.mxu0 0.0
    %8046 = vmatprep.subr.mxu0 0.0
    %8047 = vmatpush1.msra.mxu0 0.0
    %8048 = vmatprep.subr.mxu0 0.0
    %8049 = vmatpush1.msra.mxu0 0.0
    %8050 = vmatprep.subr.mxu0 0.0
    %8051 = vmatpush1.msra.mxu0 0.0
    %8052 = vmatprep.subr.mxu0 0.0
    %8053 = vmatpush1.msra.mxu0 0.0
    %8054 = vmatprep.subr.mxu0 0.0
    %8055 = vmatpush1.msra.mxu0 0.0
    %8056 = vmatprep.subr.mxu0 0.0
    %8057 = vmatpush1.msra.mxu0 0.0
    %8058 = vmatprep.subr.mxu0 0.0
    %8059 = vmatpush1.msra.mxu0 0.0
    %8060 = vmatprep.subr.mxu0 0.0
    %8061 = vmatpush1.msra.mxu0 0.0
    %8062 = vmatprep.subr.mxu0 0.0
    %8063 = vmatpush1.msra.mxu0 0.0
    %8064 = vmatprep.subr.mxu0 0.0
    %8065 = vmatpush1.msra.mxu0 0.0
    %8066 = vmatprep.subr.mxu0 0.0
    %8067 = vmatpush1.msra.mxu0 0.0
    %8068 = vmatprep.subr.mxu0 0.0
    %8069 = vmatpush1.msra.mxu0 0.0
    %8070 = vmatprep.subr.mxu0 0.0
    %8071 = vmatpush1.msra.mxu0 0.0
    %8072 = vmatprep.subr.mxu0 0.0
    %8073 = vmatpush1.msra.mxu0 0.0
    %8074 = vmatprep.subr.mxu0 0.0
    %8075 = vmatpush1.msra.mxu0 0.0
    %8076 = vmatprep.subr.mxu0 0.0
    %8077 = vmatpush1.msra.mxu0 0.0
    %8078 = vmatprep.subr.mxu0 0.0
    %8079 = vmatpush1.msra.mxu0 0.0
    %8080 = vmatprep.subr.mxu0 0.0
    %8081 = vmatpush1.msra.mxu0 0.0
    %8082 = vmatprep.subr.mxu0 0.0
    %8083 = vmatpush1.msra.mxu0 0.0
    %8084 = vmatprep.mubr.f32.mxu0 0.0
    %8085 = vmatmul.mubr.f32.gmra.mrb[0].mxu0 %v8018
    %v8086 = vpop.f32.mrb[0].mxu0
    %v8087 = vadd.f32 0.0, %v8086
    %v8088 = vpop.f32.mrb[0].mxu0
    %8089 = vdwg.mxu0
    %v8091 = vsel %vm7578, %v7575, 0
    %8093 = vmatprep.subr.mxu0 0.0
    %8094 = vmatpush1.msra.mxu0 %v5450
    %8095 = vmatprep.subr.mxu0 0.0
    %8096 = vmatpush1.msra.mxu0 %v5451
    %8097 = vmatprep.subr.mxu0 0.0
    %8098 = vmatpush1.msra.mxu0 %v5452
    %8099 = vmatprep.subr.mxu0 0.0
    %8100 = vmatpush1.msra.mxu0 %v5453
    %8101 = vmatprep.subr.mxu0 0.0
    %8102 = vmatpush1.msra.mxu0 0.0
    %8103 = vmatprep.subr.mxu0 0.0
    %8104 = vmatpush1.msra.mxu0 0.0
    %8105 = vmatprep.subr.mxu0 0.0
    %8106 = vmatpush1.msra.mxu0 0.0
    %8107 = vmatprep.subr.mxu0 0.0
    %8108 = vmatpush1.msra.mxu0 0.0
    %8109 = vmatprep.subr.mxu0 0.0
    %8110 = vmatpush1.msra.mxu0 0.0
    %8111 = vmatprep.subr.mxu0 0.0
    %8112 = vmatpush1.msra.mxu0 0.0
    %8113 = vmatprep.subr.mxu0 0.0
    %8114 = vmatpush1.msra.mxu0 0.0
    %8115 = vmatprep.subr.mxu0 0.0
    %8116 = vmatpush1.msra.mxu0 0.0
    %8117 = vmatprep.subr.mxu0 0.0
    %8118 = vmatpush1.msra.mxu0 0.0
    %8119 = vmatprep.subr.mxu0 0.0
    %8120 = vmatpush1.msra.mxu0 0.0
    %8121 = vmatprep.subr.mxu0 0.0
    %8122 = vmatpush1.msra.mxu0 0.0
    %8123 = vmatprep.subr.mxu0 0.0
    %8124 = vmatpush1.msra.mxu0 0.0
    %8125 = vmatprep.subr.mxu0 0.0
    %8126 = vmatpush1.msra.mxu0 0.0
    %8127 = vmatprep.subr.mxu0 0.0
    %8128 = vmatpush1.msra.mxu0 0.0
    %8129 = vmatprep.subr.mxu0 0.0
    %8130 = vmatpush1.msra.mxu0 0.0
    %8131 = vmatprep.subr.mxu0 0.0
    %8132 = vmatpush1.msra.mxu0 0.0
    %8133 = vmatprep.subr.mxu0 0.0
    %8134 = vmatpush1.msra.mxu0 0.0
    %8135 = vmatprep.subr.mxu0 0.0
    %8136 = vmatpush1.msra.mxu0 0.0
    %8137 = vmatprep.subr.mxu0 0.0
    %8138 = vmatpush1.msra.mxu0 0.0
    %8139 = vmatprep.subr.mxu0 0.0
    %8140 = vmatpush1.msra.mxu0 0.0
    %8141 = vmatprep.subr.mxu0 0.0
    %8142 = vmatpush1.msra.mxu0 0.0
    %8143 = vmatprep.subr.mxu0 0.0
    %8144 = vmatpush1.msra.mxu0 0.0
    %8145 = vmatprep.subr.mxu0 0.0
    %8146 = vmatpush1.msra.mxu0 0.0
    %8147 = vmatprep.subr.mxu0 0.0
    %8148 = vmatpush1.msra.mxu0 0.0
    %8149 = vmatprep.subr.mxu0 0.0
    %8150 = vmatpush1.msra.mxu0 0.0
    %8151 = vmatprep.subr.mxu0 0.0
    %8152 = vmatpush1.msra.mxu0 0.0
    %8153 = vmatprep.subr.mxu0 0.0
    %8154 = vmatpush1.msra.mxu0 0.0
    %8155 = vmatprep.subr.mxu0 0.0
    %8156 = vmatpush1.msra.mxu0 0.0
    %8157 = vmatprep.mubr.f32.mxu0 0.0
    %8158 = vmatmul.mubr.f32.gmra.mrb[0].mxu0 %v8091
    %v8159 = vpop.f32.mrb[0].mxu0
    %v8160 = vadd.f32 0.0, %v8159
    %v8161 = vpop.f32.mrb[0].mxu0
    %8162 = vdwg.mxu0
    %v8164 = vsel %vm7578, %v7576, 0
    %8166 = vmatprep.subr.mxu0 0.0
    %8167 = vmatpush1.msra.mxu0 %v5450
    %8168 = vmatprep.subr.mxu0 0.0
    %8169 = vmatpush1.msra.mxu0 %v5451
    %8170 = vmatprep.subr.mxu0 0.0
    %8171 = vmatpush1.msra.mxu0 %v5452
    %8172 = vmatprep.subr.mxu0 0.0
    %8173 = vmatpush1.msra.mxu0 %v5453
    %8174 = vmatprep.subr.mxu0 0.0
    %8175 = vmatpush1.msra.mxu0 0.0
    %8176 = vmatprep.subr.mxu0 0.0
    %8177 = vmatpush1.msra.mxu0 0.0
    %8178 = vmatprep.subr.mxu0 0.0
    %8179 = vmatpush1.msra.mxu0 0.0
    %8180 = vmatprep.subr.mxu0 0.0
    %8181 = vmatpush1.msra.mxu0 0.0
    %8182 = vmatprep.subr.mxu0 0.0
    %8183 = vmatpush1.msra.mxu0 0.0
    %8184 = vmatprep.subr.mxu0 0.0
    %8185 = vmatpush1.msra.mxu0 0.0
    %8186 = vmatprep.subr.mxu0 0.0
    %8187 = vmatpush1.msra.mxu0 0.0
    %8188 = vmatprep.subr.mxu0 0.0
    %8189 = vmatpush1.msra.mxu0 0.0
    %8190 = vmatprep.subr.mxu0 0.0
    %8191 = vmatpush1.msra.mxu0 0.0
    %8192 = vmatprep.subr.mxu0 0.0
    %8193 = vmatpush1.msra.mxu0 0.0
    %8194 = vmatprep.subr.mxu0 0.0
    %8195 = vmatpush1.msra.mxu0 0.0
    %8196 = vmatprep.subr.mxu0 0.0
    %8197 = vmatpush1.msra.mxu0 0.0
    %8198 = vmatprep.subr.mxu0 0.0
    %8199 = vmatpush1.msra.mxu0 0.0
    %8200 = vmatprep.subr.mxu0 0.0
    %8201 = vmatpush1.msra.mxu0 0.0
    %8202 = vmatprep.subr.mxu0 0.0
    %8203 = vmatpush1.msra.mxu0 0.0
    %8204 = vmatprep.subr.mxu0 0.0
    %8205 = vmatpush1.msra.mxu0 0.0
    %8206 = vmatprep.subr.mxu0 0.0
    %8207 = vmatpush1.msra.mxu0 0.0
    %8208 = vmatprep.subr.mxu0 0.0
    %8209 = vmatpush1.msra.mxu0 0.0
    %8210 = vmatprep.subr.mxu0 0.0
    %8211 = vmatpush1.msra.mxu0 0.0
    %8212 = vmatprep.subr.mxu0 0.0
    %8213 = vmatpush1.msra.mxu0 0.0
    %8214 = vmatprep.subr.mxu0 0.0
    %8215 = vmatpush1.msra.mxu0 0.0
    %8216 = vmatprep.subr.mxu0 0.0
    %8217 = vmatpush1.msra.mxu0 0.0
    %8218 = vmatprep.subr.mxu0 0.0
    %8219 = vmatpush1.msra.mxu0 0.0
    %8220 = vmatprep.subr.mxu0 0.0
    %8221 = vmatpush1.msra.mxu0 0.0
    %8222 = vmatprep.subr.mxu0 0.0
    %8223 = vmatpush1.msra.mxu0 0.0
    %8224 = vmatprep.subr.mxu0 0.0
    %8225 = vmatpush1.msra.mxu0 0.0
    %8226 = vmatprep.subr.mxu0 0.0
    %8227 = vmatpush1.msra.mxu0 0.0
    %8228 = vmatprep.subr.mxu0 0.0
    %8229 = vmatpush1.msra.mxu0 0.0
    %8230 = vmatprep.mubr.f32.mxu0 0.0
    %8231 = vmatmul.mubr.f32.gmra.mrb[0].mxu0 %v8164
    %v8232 = vpop.f32.mrb[0].mxu0
    %v8233 = vadd.f32 0.0, %v8232
    %v8234 = vpop.f32.mrb[0].mxu0
    %8235 = vdwg.mxu0
    %v8237 = vsel %vm7578, %v7577, 0
    %8239 = vmatprep.subr.mxu0 0.0
    %8240 = vmatpush1.msra.mxu0 %v5450
    %8241 = vmatprep.subr.mxu0 0.0
    %8242 = vmatpush1.msra.mxu0 %v5451
    %8243 = vmatprep.subr.mxu0 0.0
    %8244 = vmatpush1.msra.mxu0 %v5452
    %8245 = vmatprep.subr.mxu0 0.0
    %8246 = vmatpush1.msra.mxu0 %v5453
    %8247 = vmatprep.subr.mxu0 0.0
    %8248 = vmatpush1.msra.mxu0 0.0
    %8249 = vmatprep.subr.mxu0 0.0
    %8250 = vmatpush1.msra.mxu0 0.0
    %8251 = vmatprep.subr.mxu0 0.0
    %8252 = vmatpush1.msra.mxu0 0.0
    %8253 = vmatprep.subr.mxu0 0.0
    %8254 = vmatpush1.msra.mxu0 0.0
    %8255 = vmatprep.subr.mxu0 0.0
    %8256 = vmatpush1.msra.mxu0 0.0
    %8257 = vmatprep.subr.mxu0 0.0
    %8258 = vmatpush1.msra.mxu0 0.0
    %8259 = vmatprep.subr.mxu0 0.0
    %8260 = vmatpush1.msra.mxu0 0.0
    %8261 = vmatprep.subr.mxu0 0.0
    %8262 = vmatpush1.msra.mxu0 0.0
    %8263 = vmatprep.subr.mxu0 0.0
    %8264 = vmatpush1.msra.mxu0 0.0
    %8265 = vmatprep.subr.mxu0 0.0
    %8266 = vmatpush1.msra.mxu0 0.0
    %8267 = vmatprep.subr.mxu0 0.0
    %8268 = vmatpush1.msra.mxu0 0.0
    %8269 = vmatprep.subr.mxu0 0.0
    %8270 = vmatpush1.msra.mxu0 0.0
    %8271 = vmatprep.subr.mxu0 0.0
    %8272 = vmatpush1.msra.mxu0 0.0
    %8273 = vmatprep.subr.mxu0 0.0
    %8274 = vmatpush1.msra.mxu0 0.0
    %8275 = vmatprep.subr.mxu0 0.0
    %8276 = vmatpush1.msra.mxu0 0.0
    %8277 = vmatprep.subr.mxu0 0.0
    %8278 = vmatpush1.msra.mxu0 0.0
    %8279 = vmatprep.subr.mxu0 0.0
    %8280 = vmatpush1.msra.mxu0 0.0
    %8281 = vmatprep.subr.mxu0 0.0
    %8282 = vmatpush1.msra.mxu0 0.0
    %8283 = vmatprep.subr.mxu0 0.0
    %8284 = vmatpush1.msra.mxu0 0.0
    %8285 = vmatprep.subr.mxu0 0.0
    %8286 = vmatpush1.msra.mxu0 0.0
    %8287 = vmatprep.subr.mxu0 0.0
    %8288 = vmatpush1.msra.mxu0 0.0
    %8289 = vmatprep.subr.mxu0 0.0
    %8290 = vmatpush1.msra.mxu0 0.0
    %8291 = vmatprep.subr.mxu0 0.0
    %8292 = vmatpush1.msra.mxu0 0.0
    %8293 = vmatprep.subr.mxu0 0.0
    %8294 = vmatpush1.msra.mxu0 0.0
    %8295 = vmatprep.subr.mxu0 0.0
    %8296 = vmatpush1.msra.mxu0 0.0
    %8297 = vmatprep.subr.mxu0 0.0
    %8298 = vmatpush1.msra.mxu0 0.0
    %8299 = vmatprep.subr.mxu0 0.0
    %8300 = vmatpush1.msra.mxu0 0.0
    %8301 = vmatprep.subr.mxu0 0.0
    %8302 = vmatpush1.msra.mxu0 0.0
    %8303 = vmatprep.mubr.f32.mxu0 0.0
    %8304 = vmatmul.mubr.f32.gmra.mrb[0].mxu0 %v8237
    %v8305 = vpop.f32.mrb[0].mxu0
    %v8306 = vadd.f32 0.0, %v8305
    %v8307 = vpop.f32.mrb[0].mxu0
    %8308 = vdwg.mxu0
    %v8310 = vsel %vm7578, %v6518, 0
    %8312 = vmatprep.subr.mxu0 0.0
    %8313 = vmatpush1.msra.mxu0 %v5446
    %8314 = vmatprep.subr.mxu0 0.0
    %8315 = vmatpush1.msra.mxu0 %v5447
    %8316 = vmatprep.subr.mxu0 0.0
    %8317 = vmatpush1.msra.mxu0 %v5448
    %8318 = vmatprep.subr.mxu0 0.0
    %8319 = vmatpush1.msra.mxu0 %v5449
    %8320 = vmatprep.subr.mxu0 0.0
    %8321 = vmatpush1.msra.mxu0 0.0
    %8322 = vmatprep.subr.mxu0 0.0
    %8323 = vmatpush1.msra.mxu0 0.0
    %8324 = vmatprep.subr.mxu0 0.0
    %8325 = vmatpush1.msra.mxu0 0.0
    %8326 = vmatprep.subr.mxu0 0.0
    %8327 = vmatpush1.msra.mxu0 0.0
    %8328 = vmatprep.subr.mxu0 0.0
    %8329 = vmatpush1.msra.mxu0 0.0
    %8330 = vmatprep.subr.mxu0 0.0
    %8331 = vmatpush1.msra.mxu0 0.0
    %8332 = vmatprep.subr.mxu0 0.0
    %8333 = vmatpush1.msra.mxu0 0.0
    %8334 = vmatprep.subr.mxu0 0.0
    %8335 = vmatpush1.msra.mxu0 0.0
    %8336 = vmatprep.subr.mxu0 0.0
    %8337 = vmatpush1.msra.mxu0 0.0
    %8338 = vmatprep.subr.mxu0 0.0
    %8339 = vmatpush1.msra.mxu0 0.0
    %8340 = vmatprep.subr.mxu0 0.0
    %8341 = vmatpush1.msra.mxu0 0.0
    %8342 = vmatprep.subr.mxu0 0.0
    %8343 = vmatpush1.msra.mxu0 0.0
    %8344 = vmatprep.subr.mxu0 0.0
    %8345 = vmatpush1.msra.mxu0 0.0
    %8346 = vmatprep.subr.mxu0 0.0
    %8347 = vmatpush1.msra.mxu0 0.0
    %8348 = vmatprep.subr.mxu0 0.0
    %8349 = vmatpush1.msra.mxu0 0.0
    %8350 = vmatprep.subr.mxu0 0.0
    %8351 = vmatpush1.msra.mxu0 0.0
    %8352 = vmatprep.subr.mxu0 0.0
    %8353 = vmatpush1.msra.mxu0 0.0
    %8354 = vmatprep.subr.mxu0 0.0
    %8355 = vmatpush1.msra.mxu0 0.0
    %8356 = vmatprep.subr.mxu0 0.0
    %8357 = vmatpush1.msra.mxu0 0.0
    %8358 = vmatprep.subr.mxu0 0.0
    %8359 = vmatpush1.msra.mxu0 0.0
    %8360 = vmatprep.subr.mxu0 0.0
    %8361 = vmatpush1.msra.mxu0 0.0
    %8362 = vmatprep.subr.mxu0 0.0
    %8363 = vmatpush1.msra.mxu0 0.0
    %8364 = vmatprep.subr.mxu0 0.0
    %8365 = vmatpush1.msra.mxu0 0.0
    %8366 = vmatprep.subr.mxu0 0.0
    %8367 = vmatpush1.msra.mxu0 0.0
    %8368 = vmatprep.subr.mxu0 0.0
    %8369 = vmatpush1.msra.mxu0 0.0
    %8370 = vmatprep.subr.mxu0 0.0
    %8371 = vmatpush1.msra.mxu0 0.0
    %8372 = vmatprep.subr.mxu0 0.0
    %8373 = vmatpush1.msra.mxu0 0.0
    %8374 = vmatprep.subr.mxu0 0.0
    %8375 = vmatpush1.msra.mxu0 0.0
    %8376 = vmatprep.mubr.f32.mxu0 0.0
    %8377 = vmatmul.mubr.f32.gmra.mrb[0].mxu0 %v8310
    %v8378 = vpop.f32.mrb[0].mxu0
    %v8379 = vadd.f32 %v7649, %v8378
    %v8380 = vpop.f32.mrb[0].mxu0
    %8381 = vdwg.mxu0
    %v8383 = vsel %vm7578, %v6519, 0
    %8385 = vmatprep.subr.mxu0 0.0
    %8386 = vmatpush1.msra.mxu0 %v5446
    %8387 = vmatprep.subr.mxu0 0.0
    %8388 = vmatpush1.msra.mxu0 %v5447
    %8389 = vmatprep.subr.mxu0 0.0
    %8390 = vmatpush1.msra.mxu0 %v5448
    %8391 = vmatprep.subr.mxu0 0.0
    %8392 = vmatpush1.msra.mxu0 %v5449
    %8393 = vmatprep.subr.mxu0 0.0
    %8394 = vmatpush1.msra.mxu0 0.0
    %8395 = vmatprep.subr.mxu0 0.0
    %8396 = vmatpush1.msra.mxu0 0.0
    %8397 = vmatprep.subr.mxu0 0.0
    %8398 = vmatpush1.msra.mxu0 0.0
    %8399 = vmatprep.subr.mxu0 0.0
    %8400 = vmatpush1.msra.mxu0 0.0
    %8401 = vmatprep.subr.mxu0 0.0
    %8402 = vmatpush1.msra.mxu0 0.0
    %8403 = vmatprep.subr.mxu0 0.0
    %8404 = vmatpush1.msra.mxu0 0.0
    %8405 = vmatprep.subr.mxu0 0.0
    %8406 = vmatpush1.msra.mxu0 0.0
    %8407 = vmatprep.subr.mxu0 0.0
    %8408 = vmatpush1.msra.mxu0 0.0
    %8409 = vmatprep.subr.mxu0 0.0
    %8410 = vmatpush1.msra.mxu0 0.0
    %8411 = vmatprep.subr.mxu0 0.0
    %8412 = vmatpush1.msra.mxu0 0.0
    %8413 = vmatprep.subr.mxu0 0.0
    %8414 = vmatpush1.msra.mxu0 0.0
    %8415 = vmatprep.subr.mxu0 0.0
    %8416 = vmatpush1.msra.mxu0 0.0
    %8417 = vmatprep.subr.mxu0 0.0
    %8418 = vmatpush1.msra.mxu0 0.0
    %8419 = vmatprep.subr.mxu0 0.0
    %8420 = vmatpush1.msra.mxu0 0.0
    %8421 = vmatprep.subr.mxu0 0.0
    %8422 = vmatpush1.msra.mxu0 0.0
    %8423 = vmatprep.subr.mxu0 0.0
    %8424 = vmatpush1.msra.mxu0 0.0
    %8425 = vmatprep.subr.mxu0 0.0
    %8426 = vmatpush1.msra.mxu0 0.0
    %8427 = vmatprep.subr.mxu0 0.0
    %8428 = vmatpush1.msra.mxu0 0.0
    %8429 = vmatprep.subr.mxu0 0.0
    %8430 = vmatpush1.msra.mxu0 0.0
    %8431 = vmatprep.subr.mxu0 0.0
    %8432 = vmatpush1.msra.mxu0 0.0
    %8433 = vmatprep.subr.mxu0 0.0
    %8434 = vmatpush1.msra.mxu0 0.0
    %8435 = vmatprep.subr.mxu0 0.0
    %8436 = vmatpush1.msra.mxu0 0.0
    %8437 = vmatprep.subr.mxu0 0.0
    %8438 = vmatpush1.msra.mxu0 0.0
    %8439 = vmatprep.subr.mxu0 0.0
    %8440 = vmatpush1.msra.mxu0 0.0
    %8441 = vmatprep.subr.mxu0 0.0
    %8442 = vmatpush1.msra.mxu0 0.0
    %8443 = vmatprep.subr.mxu0 0.0
    %8444 = vmatpush1.msra.mxu0 0.0
    %8445 = vmatprep.subr.mxu0 0.0
    %8446 = vmatpush1.msra.mxu0 0.0
    %8447 = vmatprep.subr.mxu0 0.0
    %8448 = vmatpush1.msra.mxu0 0.0
    %8449 = vmatprep.mubr.f32.mxu0 0.0
    %8450 = vmatmul.mubr.f32.gmra.mrb[0].mxu0 %v8383
    %v8451 = vpop.f32.mrb[0].mxu0
    %v8452 = vadd.f32 %v7722, %v8451
    %v8453 = vpop.f32.mrb[0].mxu0
    %8454 = vdwg.mxu0
    %v8456 = vsel %vm7578, %v6520, 0
    %8458 = vmatprep.subr.mxu0 0.0
    %8459 = vmatpush1.msra.mxu0 %v5446
    %8460 = vmatprep.subr.mxu0 0.0
    %8461 = vmatpush1.msra.mxu0 %v5447
    %8462 = vmatprep.subr.mxu0 0.0
    %8463 = vmatpush1.msra.mxu0 %v5448
    %8464 = vmatprep.subr.mxu0 0.0
    %8465 = vmatpush1.msra.mxu0 %v5449
    %8466 = vmatprep.subr.mxu0 0.0
    %8467 = vmatpush1.msra.mxu0 0.0
    %8468 = vmatprep.subr.mxu0 0.0
    %8469 = vmatpush1.msra.mxu0 0.0
    %8470 = vmatprep.subr.mxu0 0.0
    %8471 = vmatpush1.msra.mxu0 0.0
    %8472 = vmatprep.subr.mxu0 0.0
    %8473 = vmatpush1.msra.mxu0 0.0
    %8474 = vmatprep.subr.mxu0 0.0
    %8475 = vmatpush1.msra.mxu0 0.0
    %8476 = vmatprep.subr.mxu0 0.0
    %8477 = vmatpush1.msra.mxu0 0.0
    %8478 = vmatprep.subr.mxu0 0.0
    %8479 = vmatpush1.msra.mxu0 0.0
    %8480 = vmatprep.subr.mxu0 0.0
    %8481 = vmatpush1.msra.mxu0 0.0
    %8482 = vmatprep.subr.mxu0 0.0
    %8483 = vmatpush1.msra.mxu0 0.0
    %8484 = vmatprep.subr.mxu0 0.0
    %8485 = vmatpush1.msra.mxu0 0.0
    %8486 = vmatprep.subr.mxu0 0.0
    %8487 = vmatpush1.msra.mxu0 0.0
    %8488 = vmatprep.subr.mxu0 0.0
    %8489 = vmatpush1.msra.mxu0 0.0
    %8490 = vmatprep.subr.mxu0 0.0
    %8491 = vmatpush1.msra.mxu0 0.0
    %8492 = vmatprep.subr.mxu0 0.0
    %8493 = vmatpush1.msra.mxu0 0.0
    %8494 = vmatprep.subr.mxu0 0.0
    %8495 = vmatpush1.msra.mxu0 0.0
    %8496 = vmatprep.subr.mxu0 0.0
    %8497 = vmatpush1.msra.mxu0 0.0
    %8498 = vmatprep.subr.mxu0 0.0
    %8499 = vmatpush1.msra.mxu0 0.0
    %8500 = vmatprep.subr.mxu0 0.0
    %8501 = vmatpush1.msra.mxu0 0.0
    %8502 = vmatprep.subr.mxu0 0.0
    %8503 = vmatpush1.msra.mxu0 0.0
    %8504 = vmatprep.subr.mxu0 0.0
    %8505 = vmatpush1.msra.mxu0 0.0
    %8506 = vmatprep.subr.mxu0 0.0
    %8507 = vmatpush1.msra.mxu0 0.0
    %8508 = vmatprep.subr.mxu0 0.0
    %8509 = vmatpush1.msra.mxu0 0.0
    %8510 = vmatprep.subr.mxu0 0.0
    %8511 = vmatpush1.msra.mxu0 0.0
    %8512 = vmatprep.subr.mxu0 0.0
    %8513 = vmatpush1.msra.mxu0 0.0
    %8514 = vmatprep.subr.mxu0 0.0
    %8515 = vmatpush1.msra.mxu0 0.0
    %8516 = vmatprep.subr.mxu0 0.0
    %8517 = vmatpush1.msra.mxu0 0.0
    %8518 = vmatprep.subr.mxu0 0.0
    %8519 = vmatpush1.msra.mxu0 0.0
    %8520 = vmatprep.subr.mxu0 0.0
    %8521 = vmatpush1.msra.mxu0 0.0
    %8522 = vmatprep.mubr.f32.mxu0 0.0
    %8523 = vmatmul.mubr.f32.gmra.mrb[0].mxu0 %v8456
    %v8524 = vpop.f32.mrb[0].mxu0
    %v8525 = vadd.f32 %v7795, %v8524
    %v8526 = vpop.f32.mrb[0].mxu0
    %8527 = vdwg.mxu0
    %v8529 = vsel %vm7578, %v6521, 0
    %8531 = vmatprep.subr.mxu0 0.0
    %8532 = vmatpush1.msra.mxu0 %v5446
    %8533 = vmatprep.subr.mxu0 0.0
    %8534 = vmatpush1.msra.mxu0 %v5447
    %8535 = vmatprep.subr.mxu0 0.0
    %8536 = vmatpush1.msra.mxu0 %v5448
    %8537 = vmatprep.subr.mxu0 0.0
    %8538 = vmatpush1.msra.mxu0 %v5449
    %8539 = vmatprep.subr.mxu0 0.0
    %8540 = vmatpush1.msra.mxu0 0.0
    %8541 = vmatprep.subr.mxu0 0.0
    %8542 = vmatpush1.msra.mxu0 0.0
    %8543 = vmatprep.subr.mxu0 0.0
    %8544 = vmatpush1.msra.mxu0 0.0
    %8545 = vmatprep.subr.mxu0 0.0
    %8546 = vmatpush1.msra.mxu0 0.0
    %8547 = vmatprep.subr.mxu0 0.0
    %8548 = vmatpush1.msra.mxu0 0.0
    %8549 = vmatprep.subr.mxu0 0.0
    %8550 = vmatpush1.msra.mxu0 0.0
    %8551 = vmatprep.subr.mxu0 0.0
    %8552 = vmatpush1.msra.mxu0 0.0
    %8553 = vmatprep.subr.mxu0 0.0
    %8554 = vmatpush1.msra.mxu0 0.0
    %8555 = vmatprep.subr.mxu0 0.0
    %8556 = vmatpush1.msra.mxu0 0.0
    %8557 = vmatprep.subr.mxu0 0.0
    %8558 = vmatpush1.msra.mxu0 0.0
    %8559 = vmatprep.subr.mxu0 0.0
    %8560 = vmatpush1.msra.mxu0 0.0
    %8561 = vmatprep.subr.mxu0 0.0
    %8562 = vmatpush1.msra.mxu0 0.0
    %8563 = vmatprep.subr.mxu0 0.0
    %8564 = vmatpush1.msra.mxu0 0.0
    %8565 = vmatprep.subr.mxu0 0.0
    %8566 = vmatpush1.msra.mxu0 0.0
    %8567 = vmatprep.subr.mxu0 0.0
    %8568 = vmatpush1.msra.mxu0 0.0
    %8569 = vmatprep.subr.mxu0 0.0
    %8570 = vmatpush1.msra.mxu0 0.0
    %8571 = vmatprep.subr.mxu0 0.0
    %8572 = vmatpush1.msra.mxu0 0.0
    %8573 = vmatprep.subr.mxu0 0.0
    %8574 = vmatpush1.msra.mxu0 0.0
    %8575 = vmatprep.subr.mxu0 0.0
    %8576 = vmatpush1.msra.mxu0 0.0
    %8577 = vmatprep.subr.mxu0 0.0
    %8578 = vmatpush1.msra.mxu0 0.0
    %8579 = vmatprep.subr.mxu0 0.0
    %8580 = vmatpush1.msra.mxu0 0.0
    %8581 = vmatprep.subr.mxu0 0.0
    %8582 = vmatpush1.msra.mxu0 0.0
    %8583 = vmatprep.subr.mxu0 0.0
    %8584 = vmatpush1.msra.mxu0 0.0
    %8585 = vmatprep.subr.mxu0 0.0
    %8586 = vmatpush1.msra.mxu0 0.0
    %8587 = vmatprep.subr.mxu0 0.0
    %8588 = vmatpush1.msra.mxu0 0.0
    %8589 = vmatprep.subr.mxu0 0.0
    %8590 = vmatpush1.msra.mxu0 0.0
    %8591 = vmatprep.subr.mxu0 0.0
    %8592 = vmatpush1.msra.mxu0 0.0
    %8593 = vmatprep.subr.mxu0 0.0
    %8594 = vmatpush1.msra.mxu0 0.0
    %8595 = vmatprep.mubr.f32.mxu0 0.0
    %8596 = vmatmul.mubr.f32.gmra.mrb[0].mxu0 %v8529
    %v8597 = vpop.f32.mrb[0].mxu0
    %v8598 = vadd.f32 %v7868, %v8597
    %v8599 = vpop.f32.mrb[0].mxu0
    %8600 = vdwg.mxu0
    %v8602 = vsel %vm7578, %v6522, 0
    %8604 = vmatprep.subr.mxu0 0.0
    %8605 = vmatpush1.msra.mxu0 %v5446
    %8606 = vmatprep.subr.mxu0 0.0
    %8607 = vmatpush1.msra.mxu0 %v5447
    %8608 = vmatprep.subr.mxu0 0.0
    %8609 = vmatpush1.msra.mxu0 %v5448
    %8610 = vmatprep.subr.mxu0 0.0
    %8611 = vmatpush1.msra.mxu0 %v5449
    %8612 = vmatprep.subr.mxu0 0.0
    %8613 = vmatpush1.msra.mxu0 0.0
    %8614 = vmatprep.subr.mxu0 0.0
    %8615 = vmatpush1.msra.mxu0 0.0
    %8616 = vmatprep.subr.mxu0 0.0
    %8617 = vmatpush1.msra.mxu0 0.0
    %8618 = vmatprep.subr.mxu0 0.0
    %8619 = vmatpush1.msra.mxu0 0.0
    %8620 = vmatprep.subr.mxu0 0.0
    %8621 = vmatpush1.msra.mxu0 0.0
    %8622 = vmatprep.subr.mxu0 0.0
    %8623 = vmatpush1.msra.mxu0 0.0
    %8624 = vmatprep.subr.mxu0 0.0
    %8625 = vmatpush1.msra.mxu0 0.0
    %8626 = vmatprep.subr.mxu0 0.0
    %8627 = vmatpush1.msra.mxu0 0.0
    %8628 = vmatprep.subr.mxu0 0.0
    %8629 = vmatpush1.msra.mxu0 0.0
    %8630 = vmatprep.subr.mxu0 0.0
    %8631 = vmatpush1.msra.mxu0 0.0
    %8632 = vmatprep.subr.mxu0 0.0
    %8633 = vmatpush1.msra.mxu0 0.0
    %8634 = vmatprep.subr.mxu0 0.0
    %8635 = vmatpush1.msra.mxu0 0.0
    %8636 = vmatprep.subr.mxu0 0.0
    %8637 = vmatpush1.msra.mxu0 0.0
    %8638 = vmatprep.subr.mxu0 0.0
    %8639 = vmatpush1.msra.mxu0 0.0
    %8640 = vmatprep.subr.mxu0 0.0
    %8641 = vmatpush1.msra.mxu0 0.0
    %8642 = vmatprep.subr.mxu0 0.0
    %8643 = vmatpush1.msra.mxu0 0.0
    %8644 = vmatprep.subr.mxu0 0.0
    %8645 = vmatpush1.msra.mxu0 0.0
    %8646 = vmatprep.subr.mxu0 0.0
    %8647 = vmatpush1.msra.mxu0 0.0
    %8648 = vmatprep.subr.mxu0 0.0
    %8649 = vmatpush1.msra.mxu0 0.0
    %8650 = vmatprep.subr.mxu0 0.0
    %8651 = vmatpush1.msra.mxu0 0.0
    %8652 = vmatprep.subr.mxu0 0.0
    %8653 = vmatpush1.msra.mxu0 0.0
    %8654 = vmatprep.subr.mxu0 0.0
    %8655 = vmatpush1.msra.mxu0 0.0
    %8656 = vmatprep.subr.mxu0 0.0
    %8657 = vmatpush1.msra.mxu0 0.0
    %8658 = vmatprep.subr.mxu0 0.0
    %8659 = vmatpush1.msra.mxu0 0.0
    %8660 = vmatprep.subr.mxu0 0.0
    %8661 = vmatpush1.msra.mxu0 0.0
    %8662 = vmatprep.subr.mxu0 0.0
    %8663 = vmatpush1.msra.mxu0 0.0
    %8664 = vmatprep.subr.mxu0 0.0
    %8665 = vmatpush1.msra.mxu0 0.0
    %8666 = vmatprep.subr.mxu0 0.0
    %8667 = vmatpush1.msra.mxu0 0.0
    %8668 = vmatprep.mubr.f32.mxu0 0.0
    %8669 = vmatmul.mubr.f32.gmra.mrb[0].mxu0 %v8602
    %v8670 = vpop.f32.mrb[0].mxu0
    %v8671 = vadd.f32 %v7941, %v8670
    %v8672 = vpop.f32.mrb[0].mxu0
    %8673 = vdwg.mxu0
    %v8675 = vsel %vm7578, %v6523, 0
    %8677 = vmatprep.subr.mxu0 0.0
    %8678 = vmatpush1.msra.mxu0 %v5446
    %8679 = vmatprep.subr.mxu0 0.0
    %8680 = vmatpush1.msra.mxu0 %v5447
    %8681 = vmatprep.subr.mxu0 0.0
    %8682 = vmatpush1.msra.mxu0 %v5448
    %8683 = vmatprep.subr.mxu0 0.0
    %8684 = vmatpush1.msra.mxu0 %v5449
    %8685 = vmatprep.subr.mxu0 0.0
    %8686 = vmatpush1.msra.mxu0 0.0
    %8687 = vmatprep.subr.mxu0 0.0
    %8688 = vmatpush1.msra.mxu0 0.0
    %8689 = vmatprep.subr.mxu0 0.0
    %8690 = vmatpush1.msra.mxu0 0.0
    %8691 = vmatprep.subr.mxu0 0.0
    %8692 = vmatpush1.msra.mxu0 0.0
    %8693 = vmatprep.subr.mxu0 0.0
    %8694 = vmatpush1.msra.mxu0 0.0
    %8695 = vmatprep.subr.mxu0 0.0
    %8696 = vmatpush1.msra.mxu0 0.0
    %8697 = vmatprep.subr.mxu0 0.0
    %8698 = vmatpush1.msra.mxu0 0.0
    %8699 = vmatprep.subr.mxu0 0.0
    %8700 = vmatpush1.msra.mxu0 0.0
    %8701 = vmatprep.subr.mxu0 0.0
    %8702 = vmatpush1.msra.mxu0 0.0
    %8703 = vmatprep.subr.mxu0 0.0
    %8704 = vmatpush1.msra.mxu0 0.0
    %8705 = vmatprep.subr.mxu0 0.0
    %8706 = vmatpush1.msra.mxu0 0.0
    %8707 = vmatprep.subr.mxu0 0.0
    %8708 = vmatpush1.msra.mxu0 0.0
    %8709 = vmatprep.subr.mxu0 0.0
    %8710 = vmatpush1.msra.mxu0 0.0
    %8711 = vmatprep.subr.mxu0 0.0
    %8712 = vmatpush1.msra.mxu0 0.0
    %8713 = vmatprep.subr.mxu0 0.0
    %8714 = vmatpush1.msra.mxu0 0.0
    %8715 = vmatprep.subr.mxu0 0.0
    %8716 = vmatpush1.msra.mxu0 0.0
    %8717 = vmatprep.subr.mxu0 0.0
    %8718 = vmatpush1.msra.mxu0 0.0
    %8719 = vmatprep.subr.mxu0 0.0
    %8720 = vmatpush1.msra.mxu0 0.0
    %8721 = vmatprep.subr.mxu0 0.0
    %8722 = vmatpush1.msra.mxu0 0.0
    %8723 = vmatprep.subr.mxu0 0.0
    %8724 = vmatpush1.msra.mxu0 0.0
    %8725 = vmatprep.subr.mxu0 0.0
    %8726 = vmatpush1.msra.mxu0 0.0
    %8727 = vmatprep.subr.mxu0 0.0
    %8728 = vmatpush1.msra.mxu0 0.0
    %8729 = vmatprep.subr.mxu0 0.0
    %8730 = vmatpush1.msra.mxu0 0.0
    %8731 = vmatprep.subr.mxu0 0.0
    %8732 = vmatpush1.msra.mxu0 0.0
    %8733 = vmatprep.subr.mxu0 0.0
    %8734 = vmatpush1.msra.mxu0 0.0
    %8735 = vmatprep.subr.mxu0 0.0
    %8736 = vmatpush1.msra.mxu0 0.0
    %8737 = vmatprep.subr.mxu0 0.0
    %8738 = vmatpush1.msra.mxu0 0.0
    %8739 = vmatprep.subr.mxu0 0.0
    %8740 = vmatpush1.msra.mxu0 0.0
    %8741 = vmatprep.mubr.f32.mxu0 0.0
    %8742 = vmatmul.mubr.f32.gmra.mrb[0].mxu0 %v8675
    %v8743 = vpop.f32.mrb[0].mxu0
    %v8744 = vadd.f32 %v8014, %v8743
    %v8745 = vpop.f32.mrb[0].mxu0
    %8746 = vdwg.mxu0
    %v8748 = vsel %vm7578, %v6524, 0
    %8750 = vmatprep.subr.mxu0 0.0
    %8751 = vmatpush1.msra.mxu0 %v5446
    %8752 = vmatprep.subr.mxu0 0.0
    %8753 = vmatpush1.msra.mxu0 %v5447
    %8754 = vmatprep.subr.mxu0 0.0
    %8755 = vmatpush1.msra.mxu0 %v5448
    %8756 = vmatprep.subr.mxu0 0.0
    %8757 = vmatpush1.msra.mxu0 %v5449
    %8758 = vmatprep.subr.mxu0 0.0
    %8759 = vmatpush1.msra.mxu0 0.0
    %8760 = vmatprep.subr.mxu0 0.0
    %8761 = vmatpush1.msra.mxu0 0.0
    %8762 = vmatprep.subr.mxu0 0.0
    %8763 = vmatpush1.msra.mxu0 0.0
    %8764 = vmatprep.subr.mxu0 0.0
    %8765 = vmatpush1.msra.mxu0 0.0
    %8766 = vmatprep.subr.mxu0 0.0
    %8767 = vmatpush1.msra.mxu0 0.0
    %8768 = vmatprep.subr.mxu0 0.0
    %8769 = vmatpush1.msra.mxu0 0.0
    %8770 = vmatprep.subr.mxu0 0.0
    %8771 = vmatpush1.msra.mxu0 0.0
    %8772 = vmatprep.subr.mxu0 0.0
    %8773 = vmatpush1.msra.mxu0 0.0
    %8774 = vmatprep.subr.mxu0 0.0
    %8775 = vmatpush1.msra.mxu0 0.0
    %8776 = vmatprep.subr.mxu0 0.0
    %8777 = vmatpush1.msra.mxu0 0.0
    %8778 = vmatprep.subr.mxu0 0.0
    %8779 = vmatpush1.msra.mxu0 0.0
    %8780 = vmatprep.subr.mxu0 0.0
    %8781 = vmatpush1.msra.mxu0 0.0
    %8782 = vmatprep.subr.mxu0 0.0
    %8783 = vmatpush1.msra.mxu0 0.0
    %8784 = vmatprep.subr.mxu0 0.0
    %8785 = vmatpush1.msra.mxu0 0.0
    %8786 = vmatprep.subr.mxu0 0.0
    %8787 = vmatpush1.msra.mxu0 0.0
    %8788 = vmatprep.subr.mxu0 0.0
    %8789 = vmatpush1.msra.mxu0 0.0
    %8790 = vmatprep.subr.mxu0 0.0
    %8791 = vmatpush1.msra.mxu0 0.0
    %8792 = vmatprep.subr.mxu0 0.0
    %8793 = vmatpush1.msra.mxu0 0.0
    %8794 = vmatprep.subr.mxu0 0.0
    %8795 = vmatpush1.msra.mxu0 0.0
    %8796 = vmatprep.subr.mxu0 0.0
    %8797 = vmatpush1.msra.mxu0 0.0
    %8798 = vmatprep.subr.mxu0 0.0
    %8799 = vmatpush1.msra.mxu0 0.0
    %8800 = vmatprep.subr.mxu0 0.0
    %8801 = vmatpush1.msra.mxu0 0.0
    %8802 = vmatprep.subr.mxu0 0.0
    %8803 = vmatpush1.msra.mxu0 0.0
    %8804 = vmatprep.subr.mxu0 0.0
    %8805 = vmatpush1.msra.mxu0 0.0
    %8806 = vmatprep.subr.mxu0 0.0
    %8807 = vmatpush1.msra.mxu0 0.0
    %8808 = vmatprep.subr.mxu0 0.0
    %8809 = vmatpush1.msra.mxu0 0.0
    %8810 = vmatprep.subr.mxu0 0.0
    %8811 = vmatpush1.msra.mxu0 0.0
    %8812 = vmatprep.subr.mxu0 0.0
    %8813 = vmatpush1.msra.mxu0 0.0
    %8814 = vmatprep.mubr.f32.mxu0 0.0
    %8815 = vmatmul.mubr.f32.gmra.mrb[0].mxu0 %v8748
    %v8816 = vpop.f32.mrb[0].mxu0
    %v8817 = vadd.f32 %v8087, %v8816
    %v8818 = vpop.f32.mrb[0].mxu0
    %8819 = vdwg.mxu0
    %v8821 = vsel %vm7578, %v6525, 0
    %8823 = vmatprep.subr.mxu0 0.0
    %8824 = vmatpush1.msra.mxu0 %v5446
    %8825 = vmatprep.subr.mxu0 0.0
    %8826 = vmatpush1.msra.mxu0 %v5447
    %8827 = vmatprep.subr.mxu0 0.0
    %8828 = vmatpush1.msra.mxu0 %v5448
    %8829 = vmatprep.subr.mxu0 0.0
    %8830 = vmatpush1.msra.mxu0 %v5449
    %8831 = vmatprep.subr.mxu0 0.0
    %8832 = vmatpush1.msra.mxu0 0.0
    %8833 = vmatprep.subr.mxu0 0.0
    %8834 = vmatpush1.msra.mxu0 0.0
    %8835 = vmatprep.subr.mxu0 0.0
    %8836 = vmatpush1.msra.mxu0 0.0
    %8837 = vmatprep.subr.mxu0 0.0
    %8838 = vmatpush1.msra.mxu0 0.0
    %8839 = vmatprep.subr.mxu0 0.0
    %8840 = vmatpush1.msra.mxu0 0.0
    %8841 = vmatprep.subr.mxu0 0.0
    %8842 = vmatpush1.msra.mxu0 0.0
    %8843 = vmatprep.subr.mxu0 0.0
    %8844 = vmatpush1.msra.mxu0 0.0
    %8845 = vmatprep.subr.mxu0 0.0
    %8846 = vmatpush1.msra.mxu0 0.0
    %8847 = vmatprep.subr.mxu0 0.0
    %8848 = vmatpush1.msra.mxu0 0.0
    %8849 = vmatprep.subr.mxu0 0.0
    %8850 = vmatpush1.msra.mxu0 0.0
    %8851 = vmatprep.subr.mxu0 0.0
    %8852 = vmatpush1.msra.mxu0 0.0
    %8853 = vmatprep.subr.mxu0 0.0
    %8854 = vmatpush1.msra.mxu0 0.0
    %8855 = vmatprep.subr.mxu0 0.0
    %8856 = vmatpush1.msra.mxu0 0.0
    %8857 = vmatprep.subr.mxu0 0.0
    %8858 = vmatpush1.msra.mxu0 0.0
    %8859 = vmatprep.subr.mxu0 0.0
    %8860 = vmatpush1.msra.mxu0 0.0
    %8861 = vmatprep.subr.mxu0 0.0
    %8862 = vmatpush1.msra.mxu0 0.0
    %8863 = vmatprep.subr.mxu0 0.0
    %8864 = vmatpush1.msra.mxu0 0.0
    %8865 = vmatprep.subr.mxu0 0.0
    %8866 = vmatpush1.msra.mxu0 0.0
    %8867 = vmatprep.subr.mxu0 0.0
    %8868 = vmatpush1.msra.mxu0 0.0
    %8869 = vmatprep.subr.mxu0 0.0
    %8870 = vmatpush1.msra.mxu0 0.0
    %8871 = vmatprep.subr.mxu0 0.0
    %8872 = vmatpush1.msra.mxu0 0.0
    %8873 = vmatprep.subr.mxu0 0.0
    %8874 = vmatpush1.msra.mxu0 0.0
    %8875 = vmatprep.subr.mxu0 0.0
    %8876 = vmatpush1.msra.mxu0 0.0
    %8877 = vmatprep.subr.mxu0 0.0
    %8878 = vmatpush1.msra.mxu0 0.0
    %8879 = vmatprep.subr.mxu0 0.0
    %8880 = vmatpush1.msra.mxu0 0.0
    %8881 = vmatprep.subr.mxu0 0.0
    %8882 = vmatpush1.msra.mxu0 0.0
    %8883 = vmatprep.subr.mxu0 0.0
    %8884 = vmatpush1.msra.mxu0 0.0
    %8885 = vmatprep.subr.mxu0 0.0
    %8886 = vmatpush1.msra.mxu0 0.0
    %8887 = vmatprep.mubr.f32.mxu0 0.0
    %8888 = vmatmul.mubr.f32.gmra.mrb[0].mxu0 %v8821
    %v8889 = vpop.f32.mrb[0].mxu0
    %v8890 = vadd.f32 %v8160, %v8889
    %v8891 = vpop.f32.mrb[0].mxu0
    %8892 = vdwg.mxu0
    %v8894 = vsel %vm7578, %v6526, 0
    %8896 = vmatprep.subr.mxu0 0.0
    %8897 = vmatpush1.msra.mxu0 %v5446
    %8898 = vmatprep.subr.mxu0 0.0
    %8899 = vmatpush1.msra.mxu0 %v5447
    %8900 = vmatprep.subr.mxu0 0.0
    %8901 = vmatpush1.msra.mxu0 %v5448
    %8902 = vmatprep.subr.mxu0 0.0
    %8903 = vmatpush1.msra.mxu0 %v5449
    %8904 = vmatprep.subr.mxu0 0.0
    %8905 = vmatpush1.msra.mxu0 0.0
    %8906 = vmatprep.subr.mxu0 0.0
    %8907 = vmatpush1.msra.mxu0 0.0
    %8908 = vmatprep.subr.mxu0 0.0
    %8909 = vmatpush1.msra.mxu0 0.0
    %8910 = vmatprep.subr.mxu0 0.0
    %8911 = vmatpush1.msra.mxu0 0.0
    %8912 = vmatprep.subr.mxu0 0.0
    %8913 = vmatpush1.msra.mxu0 0.0
    %8914 = vmatprep.subr.mxu0 0.0
    %8915 = vmatpush1.msra.mxu0 0.0
    %8916 = vmatprep.subr.mxu0 0.0
    %8917 = vmatpush1.msra.mxu0 0.0
    %8918 = vmatprep.subr.mxu0 0.0
    %8919 = vmatpush1.msra.mxu0 0.0
    %8920 = vmatprep.subr.mxu0 0.0
    %8921 = vmatpush1.msra.mxu0 0.0
    %8922 = vmatprep.subr.mxu0 0.0
    %8923 = vmatpush1.msra.mxu0 0.0
    %8924 = vmatprep.subr.mxu0 0.0
    %8925 = vmatpush1.msra.mxu0 0.0
    %8926 = vmatprep.subr.mxu0 0.0
    %8927 = vmatpush1.msra.mxu0 0.0
    %8928 = vmatprep.subr.mxu0 0.0
    %8929 = vmatpush1.msra.mxu0 0.0
    %8930 = vmatprep.subr.mxu0 0.0
    %8931 = vmatpush1.msra.mxu0 0.0
    %8932 = vmatprep.subr.mxu0 0.0
    %8933 = vmatpush1.msra.mxu0 0.0
    %8934 = vmatprep.subr.mxu0 0.0
    %8935 = vmatpush1.msra.mxu0 0.0
    %8936 = vmatprep.subr.mxu0 0.0
    %8937 = vmatpush1.msra.mxu0 0.0
    %8938 = vmatprep.subr.mxu0 0.0
    %8939 = vmatpush1.msra.mxu0 0.0
    %8940 = vmatprep.subr.mxu0 0.0
    %8941 = vmatpush1.msra.mxu0 0.0
    %8942 = vmatprep.subr.mxu0 0.0
    %8943 = vmatpush1.msra.mxu0 0.0
    %8944 = vmatprep.subr.mxu0 0.0
    %8945 = vmatpush1.msra.mxu0 0.0
    %8946 = vmatprep.subr.mxu0 0.0
    %8947 = vmatpush1.msra.mxu0 0.0
    %8948 = vmatprep.subr.mxu0 0.0
    %8949 = vmatpush1.msra.mxu0 0.0
    %8950 = vmatprep.subr.mxu0 0.0
    %8951 = vmatpush1.msra.mxu0 0.0
    %8952 = vmatprep.subr.mxu0 0.0
    %8953 = vmatpush1.msra.mxu0 0.0
    %8954 = vmatprep.subr.mxu0 0.0
    %8955 = vmatpush1.msra.mxu0 0.0
    %8956 = vmatprep.subr.mxu0 0.0
    %8957 = vmatpush1.msra.mxu0 0.0
    %8958 = vmatprep.subr.mxu0 0.0
    %8959 = vmatpush1.msra.mxu0 0.0
    %8960 = vmatprep.mubr.f32.mxu0 0.0
    %8961 = vmatmul.mubr.f32.gmra.mrb[0].mxu0 %v8894
    %v8962 = vpop.f32.mrb[0].mxu0
    %v8963 = vadd.f32 %v8233, %v8962
    %v8964 = vpop.f32.mrb[0].mxu0
    %8965 = vdwg.mxu0
    %v8967 = vsel %vm7578, %v6527, 0
    %8969 = vmatprep.subr.mxu0 0.0
    %8970 = vmatpush1.msra.mxu0 %v5446
    %8971 = vmatprep.subr.mxu0 0.0
    %8972 = vmatpush1.msra.mxu0 %v5447
    %8973 = vmatprep.subr.mxu0 0.0
    %8974 = vmatpush1.msra.mxu0 %v5448
    %8975 = vmatprep.subr.mxu0 0.0
    %8976 = vmatpush1.msra.mxu0 %v5449
    %8977 = vmatprep.subr.mxu0 0.0
    %8978 = vmatpush1.msra.mxu0 0.0
    %8979 = vmatprep.subr.mxu0 0.0
    %8980 = vmatpush1.msra.mxu0 0.0
    %8981 = vmatprep.subr.mxu0 0.0
    %8982 = vmatpush1.msra.mxu0 0.0
    %8983 = vmatprep.subr.mxu0 0.0
    %8984 = vmatpush1.msra.mxu0 0.0
    %8985 = vmatprep.subr.mxu0 0.0
    %8986 = vmatpush1.msra.mxu0 0.0
    %8987 = vmatprep.subr.mxu0 0.0
    %8988 = vmatpush1.msra.mxu0 0.0
    %8989 = vmatprep.subr.mxu0 0.0
    %8990 = vmatpush1.msra.mxu0 0.0
    %8991 = vmatprep.subr.mxu0 0.0
    %8992 = vmatpush1.msra.mxu0 0.0
    %8993 = vmatprep.subr.mxu0 0.0
    %8994 = vmatpush1.msra.mxu0 0.0
    %8995 = vmatprep.subr.mxu0 0.0
    %8996 = vmatpush1.msra.mxu0 0.0
    %8997 = vmatprep.subr.mxu0 0.0
    %8998 = vmatpush1.msra.mxu0 0.0
    %8999 = vmatprep.subr.mxu0 0.0
    %9000 = vmatpush1.msra.mxu0 0.0
    %9001 = vmatprep.subr.mxu0 0.0
    %9002 = vmatpush1.msra.mxu0 0.0
    %9003 = vmatprep.subr.mxu0 0.0
    %9004 = vmatpush1.msra.mxu0 0.0
    %9005 = vmatprep.subr.mxu0 0.0
    %9006 = vmatpush1.msra.mxu0 0.0
    %9007 = vmatprep.subr.mxu0 0.0
    %9008 = vmatpush1.msra.mxu0 0.0
    %9009 = vmatprep.subr.mxu0 0.0
    %9010 = vmatpush1.msra.mxu0 0.0
    %9011 = vmatprep.subr.mxu0 0.0
    %9012 = vmatpush1.msra.mxu0 0.0
    %9013 = vmatprep.subr.mxu0 0.0
    %9014 = vmatpush1.msra.mxu0 0.0
    %9015 = vmatprep.subr.mxu0 0.0
    %9016 = vmatpush1.msra.mxu0 0.0
    %9017 = vmatprep.subr.mxu0 0.0
    %9018 = vmatpush1.msra.mxu0 0.0
    %9019 = vmatprep.subr.mxu0 0.0
    %9020 = vmatpush1.msra.mxu0 0.0
    %9021 = vmatprep.subr.mxu0 0.0
    %9022 = vmatpush1.msra.mxu0 0.0
    %9023 = vmatprep.subr.mxu0 0.0
    %9024 = vmatpush1.msra.mxu0 0.0
    %9025 = vmatprep.subr.mxu0 0.0
    %9026 = vmatpush1.msra.mxu0 0.0
    %9027 = vmatprep.subr.mxu0 0.0
    %9028 = vmatpush1.msra.mxu0 0.0
    %9029 = vmatprep.subr.mxu0 0.0
    %9030 = vmatpush1.msra.mxu0 0.0
    %9031 = vmatprep.subr.mxu0 0.0
    %9032 = vmatpush1.msra.mxu0 0.0
    %9033 = vmatprep.mubr.f32.mxu0 0.0
    %9034 = vmatmul.mubr.f32.gmra.mrb[0].mxu0 %v8967
    %v9035 = vpop.f32.mrb[0].mxu0
    %v9036 = vadd.f32 %v8306, %v9035
    %v9037 = vpop.f32.mrb[0].mxu0
    %9038 = vdwg.mxu0
    %v9040 = vsel %vm5472, %v5390, 0
    %9042 = vmatprep.subr.mxu0 0.0
    %9043 = vmatpush1.msra.mxu0 %v5387
    %9044 = vmatprep.subr.mxu0 0.0
    %9045 = vmatpush1.msra.mxu0 %v5388
    %9046 = vmatprep.subr.mxu0 0.0
    %9047 = vmatpush1.msra.mxu0 %v5389
    %9048 = vmatprep.subr.mxu0 0.0
    %9049 = vmatpush1.msra.mxu0 %v9040
    %9050 = vmatprep.subr.mxu0 0.0
    %9051 = vmatpush1.msra.mxu0 0.0
    %9052 = vmatprep.subr.mxu0 0.0
    %9053 = vmatpush1.msra.mxu0 0.0
    %9054 = vmatprep.subr.mxu0 0.0
    %9055 = vmatpush1.msra.mxu0 0.0
    %9056 = vmatprep.subr.mxu0 0.0
    %9057 = vmatpush1.msra.mxu0 0.0
    %9058 = vmatprep.subr.mxu0 0.0
    %9059 = vmatpush1.msra.mxu0 0.0
    %9060 = vmatprep.subr.mxu0 0.0
    %9061 = vmatpush1.msra.mxu0 0.0
    %9062 = vmatprep.subr.mxu0 0.0
    %9063 = vmatpush1.msra.mxu0 0.0
    %9064 = vmatprep.subr.mxu0 0.0
    %9065 = vmatpush1.msra.mxu0 0.0
    %9066 = vmatprep.subr.mxu0 0.0
    %9067 = vmatpush1.msra.mxu0 0.0
    %9068 = vmatprep.subr.mxu0 0.0
    %9069 = vmatpush1.msra.mxu0 0.0
    %9070 = vmatprep.subr.mxu0 0.0
    %9071 = vmatpush1.msra.mxu0 0.0
    %9072 = vmatprep.subr.mxu0 0.0
    %9073 = vmatpush1.msra.mxu0 0.0
    %9074 = vmatprep.subr.mxu0 0.0
    %9075 = vmatpush1.msra.mxu0 0.0
    %9076 = vmatprep.subr.mxu0 0.0
    %9077 = vmatpush1.msra.mxu0 0.0
    %9078 = vmatprep.subr.mxu0 0.0
    %9079 = vmatpush1.msra.mxu0 0.0
    %9080 = vmatprep.subr.mxu0 0.0
    %9081 = vmatpush1.msra.mxu0 0.0
    %9082 = vmatprep.subr.mxu0 0.0
    %9083 = vmatpush1.msra.mxu0 0.0
    %9084 = vmatprep.subr.mxu0 0.0
    %9085 = vmatpush1.msra.mxu0 0.0
    %9086 = vmatprep.subr.mxu0 0.0
    %9087 = vmatpush1.msra.mxu0 0.0
    %9088 = vmatprep.subr.mxu0 0.0
    %9089 = vmatpush1.msra.mxu0 0.0
    %9090 = vmatprep.subr.mxu0 0.0
    %9091 = vmatpush1.msra.mxu0 0.0
    %9092 = vmatprep.subr.mxu0 0.0
    %9093 = vmatpush1.msra.mxu0 0.0
    %9094 = vmatprep.subr.mxu0 0.0
    %9095 = vmatpush1.msra.mxu0 0.0
    %9096 = vmatprep.subr.mxu0 0.0
    %9097 = vmatpush1.msra.mxu0 0.0
    %9098 = vmatprep.subr.mxu0 0.0
    %9099 = vmatpush1.msra.mxu0 0.0
    %9100 = vmatprep.subr.mxu0 0.0
    %9101 = vmatpush1.msra.mxu0 0.0
    %9102 = vmatprep.subr.mxu0 0.0
    %9103 = vmatpush1.msra.mxu0 0.0
    %9104 = vmatprep.subr.mxu0 0.0
    %9105 = vmatpush1.msra.mxu0 0.0
    %9106 = vmatprep.mubr.f32.mxu0 0.0
    %9107 = vmatmul.mubr.f32.gmra.mrb[0].mxu0 %v5464
    %v9108 = vpop.f32.mrb[0].mxu0
    %v9109 = vadd.f32 0.0, %v9108
    %v9110 = vpop.f32.mrb[0].mxu0
    %9111 = vmatprep.mubr.f32.mxu0 0.0
    %9112 = vmatmul.mubr.f32.gmra.mrb[0].mxu0 %v5467
    %v9113 = vpop.f32.mrb[0].mxu0
    %v9114 = vadd.f32 0.0, %v9113
    %v9115 = vpop.f32.mrb[0].mxu0
    %9116 = vmatprep.mubr.f32.mxu0 0.0
    %9117 = vmatmul.mubr.f32.gmra.mrb[0].mxu0 %v5470
    %v9118 = vpop.f32.mrb[0].mxu0
    %v9119 = vadd.f32 0.0, %v9118
    %v9120 = vpop.f32.mrb[0].mxu0
    %9121 = vdwg.mxu0
    %v9123 = vsel %vm5472, %v5438, 0
    %9125 = vmatprep.subr.mxu0 0.0
    %9126 = vmatpush1.msra.mxu0 %v5435
    %9127 = vmatprep.subr.mxu0 0.0
    %9128 = vmatpush1.msra.mxu0 %v5436
    %9129 = vmatprep.subr.mxu0 0.0
    %9130 = vmatpush1.msra.mxu0 %v5437
    %9131 = vmatprep.subr.mxu0 0.0
    %9132 = vmatpush1.msra.mxu0 %v9123
    %9133 = vmatprep.subr.mxu0 0.0
    %9134 = vmatpush1.msra.mxu0 0.0
    %9135 = vmatprep.subr.mxu0 0.0
    %9136 = vmatpush1.msra.mxu0 0.0
    %9137 = vmatprep.subr.mxu0 0.0
    %9138 = vmatpush1.msra.mxu0 0.0
    %9139 = vmatprep.subr.mxu0 0.0
    %9140 = vmatpush1.msra.mxu0 0.0
    %9141 = vmatprep.subr.mxu0 0.0
    %9142 = vmatpush1.msra.mxu0 0.0
    %9143 = vmatprep.subr.mxu0 0.0
    %9144 = vmatpush1.msra.mxu0 0.0
    %9145 = vmatprep.subr.mxu0 0.0
    %9146 = vmatpush1.msra.mxu0 0.0
    %9147 = vmatprep.subr.mxu0 0.0
    %9148 = vmatpush1.msra.mxu0 0.0
    %9149 = vmatprep.subr.mxu0 0.0
    %9150 = vmatpush1.msra.mxu0 0.0
    %9151 = vmatprep.subr.mxu0 0.0
    %9152 = vmatpush1.msra.mxu0 0.0
    %9153 = vmatprep.subr.mxu0 0.0
    %9154 = vmatpush1.msra.mxu0 0.0
    %9155 = vmatprep.subr.mxu0 0.0
    %9156 = vmatpush1.msra.mxu0 0.0
    %9157 = vmatprep.subr.mxu0 0.0
    %9158 = vmatpush1.msra.mxu0 0.0
    %9159 = vmatprep.subr.mxu0 0.0
    %9160 = vmatpush1.msra.mxu0 0.0
    %9161 = vmatprep.subr.mxu0 0.0
    %9162 = vmatpush1.msra.mxu0 0.0
    %9163 = vmatprep.subr.mxu0 0.0
    %9164 = vmatpush1.msra.mxu0 0.0
    %9165 = vmatprep.subr.mxu0 0.0
    %9166 = vmatpush1.msra.mxu0 0.0
    %9167 = vmatprep.subr.mxu0 0.0
    %9168 = vmatpush1.msra.mxu0 0.0
    %9169 = vmatprep.subr.mxu0 0.0
    %9170 = vmatpush1.msra.mxu0 0.0
    %9171 = vmatprep.subr.mxu0 0.0
    %9172 = vmatpush1.msra.mxu0 0.0
    %9173 = vmatprep.subr.mxu0 0.0
    %9174 = vmatpush1.msra.mxu0 0.0
    %9175 = vmatprep.subr.mxu0 0.0
    %9176 = vmatpush1.msra.mxu0 0.0
    %9177 = vmatprep.subr.mxu0 0.0
    %9178 = vmatpush1.msra.mxu0 0.0
    %9179 = vmatprep.subr.mxu0 0.0
    %9180 = vmatpush1.msra.mxu0 0.0
    %9181 = vmatprep.subr.mxu0 0.0
    %9182 = vmatpush1.msra.mxu0 0.0
    %9183 = vmatprep.subr.mxu0 0.0
    %9184 = vmatpush1.msra.mxu0 0.0
    %9185 = vmatprep.subr.mxu0 0.0
    %9186 = vmatpush1.msra.mxu0 0.0
    %9187 = vmatprep.subr.mxu0 0.0
    %9188 = vmatpush1.msra.mxu0 0.0
    %9189 = vmatprep.mubr.f32.mxu0 0.0
    %9190 = vmatmul.mubr.f32.gmra.mrb[0].mxu0 %v5464
    %v9191 = vpop.f32.mrb[0].mxu0
    %v9192 = vadd.f32 0.0, %v9191
    %v9193 = vpop.f32.mrb[0].mxu0
    %9194 = vmatprep.mubr.f32.mxu0 0.0
    %9195 = vmatmul.mubr.f32.gmra.mrb[0].mxu0 %v5467
    %v9196 = vpop.f32.mrb[0].mxu0
    %v9197 = vadd.f32 0.0, %v9196
    %v9198 = vpop.f32.mrb[0].mxu0
    %9199 = vmatprep.mubr.f32.mxu0 0.0
    %9200 = vmatmul.mubr.f32.gmra.mrb[0].mxu0 %v5470
    %v9201 = vpop.f32.mrb[0].mxu0
    %v9202 = vadd.f32 0.0, %v9201
    %v9203 = vpop.f32.mrb[0].mxu0
    %9204 = vdwg.mxu0
    %v9209 = vrot.slane %v9109, 5
    %v9210 = vrot.slane %v9114, 5
    %v9211 = vsel %vm6323, %v9209, %v9210
    %v9212 = vrot.slane %v9192, 5
    %v9213 = vrot.slane %v9197, 5
    %v9214 = vsel %vm6323, %v9212, %v9213
    %9215 = vrot.lane.b32.xlu0 %v9211, 8
    %v9216 = vpop.permute.xlu0 %9215
    %9217 = vrot.lane.b32.xlu0 %v9214, 8
    %v9218 = vpop.permute.xlu0 %9217
    %v9221 = vrot.slane %v9114, 2
    %v9222 = vrot.slane %v9197, 2
    %9223 = vrot.lane.b32.xlu0 %v9221, 16
    %v9224 = vpop.permute.xlu0 %9223
    %9225 = vrot.lane.b32.xlu0 %v9222, 16
    %v9226 = vpop.permute.xlu0 %9225
    %v9231 = vrot.slane %v9114, 7
    %v9232 = vrot.slane %v9119, 7
    %v9233 = vsel %vm6434, %v9231, %v9232
    %v9234 = vrot.slane %v9197, 7
    %v9235 = vrot.slane %v9202, 7
    %v9236 = vsel %vm6434, %v9234, %v9235
    %9237 = vrot.lane.b32.xlu0 %v9233, 24
    %v9238 = vpop.permute.xlu0 %9237
    %9239 = vrot.lane.b32.xlu0 %v9236, 24
    %v9240 = vpop.permute.xlu0 %9239
    %v9243 = vsel %vm6495, %v9109, %v9216
    %v9244 = vsel %vm6495, %v9192, %v9218
    %v9245 = vsel %vm6506, %v9243, %v9224
    %v9246 = vsel %vm6506, %v9244, %v9226
    %v9247 = vsel %vm6517, %v9245, %v9238
    %v9248 = vsel %vm6517, %v9246, %v9240
    %9249 = vmatprep.subr.mxu0 0.0
    %9250 = vmatpush1.msra.mxu0 %v5454
    %9251 = vmatprep.subr.mxu0 0.0
    %9252 = vmatpush1.msra.mxu0 %v5455
    %9253 = vmatprep.subr.mxu0 0.0
    %9254 = vmatpush1.msra.mxu0 %v5456
    %9255 = vmatprep.subr.mxu0 0.0
    %9256 = vmatpush1.msra.mxu0 %v5457
    %9257 = vmatprep.subr.mxu0 0.0
    %9258 = vmatpush1.msra.mxu0 0.0
    %9259 = vmatprep.subr.mxu0 0.0
    %9260 = vmatpush1.msra.mxu0 0.0
    %9261 = vmatprep.subr.mxu0 0.0
    %9262 = vmatpush1.msra.mxu0 0.0
    %9263 = vmatprep.subr.mxu0 0.0
    %9264 = vmatpush1.msra.mxu0 0.0
    %9265 = vmatprep.subr.mxu0 0.0
    %9266 = vmatpush1.msra.mxu0 0.0
    %9267 = vmatprep.subr.mxu0 0.0
    %9268 = vmatpush1.msra.mxu0 0.0
    %9269 = vmatprep.subr.mxu0 0.0
    %9270 = vmatpush1.msra.mxu0 0.0
    %9271 = vmatprep.subr.mxu0 0.0
    %9272 = vmatpush1.msra.mxu0 0.0
    %9273 = vmatprep.subr.mxu0 0.0
    %9274 = vmatpush1.msra.mxu0 0.0
    %9275 = vmatprep.subr.mxu0 0.0
    %9276 = vmatpush1.msra.mxu0 0.0
    %9277 = vmatprep.subr.mxu0 0.0
    %9278 = vmatpush1.msra.mxu0 0.0
    %9279 = vmatprep.subr.mxu0 0.0
    %9280 = vmatpush1.msra.mxu0 0.0
    %9281 = vmatprep.subr.mxu0 0.0
    %9282 = vmatpush1.msra.mxu0 0.0
    %9283 = vmatprep.subr.mxu0 0.0
    %9284 = vmatpush1.msra.mxu0 0.0
    %9285 = vmatprep.subr.mxu0 0.0
    %9286 = vmatpush1.msra.mxu0 0.0
    %9287 = vmatprep.subr.mxu0 0.0
    %9288 = vmatpush1.msra.mxu0 0.0
    %9289 = vmatprep.subr.mxu0 0.0
    %9290 = vmatpush1.msra.mxu0 0.0
    %9291 = vmatprep.subr.mxu0 0.0
    %9292 = vmatpush1.msra.mxu0 0.0
    %9293 = vmatprep.subr.mxu0 0.0
    %9294 = vmatpush1.msra.mxu0 0.0
    %9295 = vmatprep.subr.mxu0 0.0
    %9296 = vmatpush1.msra.mxu0 0.0
    %9297 = vmatprep.subr.mxu0 0.0
    %9298 = vmatpush1.msra.mxu0 0.0
    %9299 = vmatprep.subr.mxu0 0.0
    %9300 = vmatpush1.msra.mxu0 0.0
    %9301 = vmatprep.subr.mxu0 0.0
    %9302 = vmatpush1.msra.mxu0 0.0
    %9303 = vmatprep.subr.mxu0 0.0
    %9304 = vmatpush1.msra.mxu0 0.0
    %9305 = vmatprep.subr.mxu0 0.0
    %9306 = vmatpush1.msra.mxu0 0.0
    %9307 = vmatprep.subr.mxu0 0.0
    %9308 = vmatpush1.msra.mxu0 0.0
    %9309 = vmatprep.subr.mxu0 0.0
    %9310 = vmatpush1.msra.mxu0 0.0
    %9311 = vmatprep.subr.mxu0 0.0
    %9312 = vmatpush1.msra.mxu0 0.0
    %9313 = vmatprep.mubr.f32.mxu0 0.0
    %9314 = vmatmul.mubr.f32.gmra.mrb[0].mxu0 %v8383
    %v9315 = vpop.f32.mrb[0].mxu0
    %v9316 = vadd.f32 0.0, %v9315
    %v9317 = vpop.f32.mrb[0].mxu0
    %9318 = vdwg.mxu0
    %9319 = vmatprep.subr.mxu0 0.0
    %9320 = vmatpush1.msra.mxu0 %v5454
    %9321 = vmatprep.subr.mxu0 0.0
    %9322 = vmatpush1.msra.mxu0 %v5455
    %9323 = vmatprep.subr.mxu0 0.0
    %9324 = vmatpush1.msra.mxu0 %v5456
    %9325 = vmatprep.subr.mxu0 0.0
    %9326 = vmatpush1.msra.mxu0 %v5457
    %9327 = vmatprep.subr.mxu0 0.0
    %9328 = vmatpush1.msra.mxu0 0.0
    %9329 = vmatprep.subr.mxu0 0.0
    %9330 = vmatpush1.msra.mxu0 0.0
    %9331 = vmatprep.subr.mxu0 0.0
    %9332 = vmatpush1.msra.mxu0 0.0
    %9333 = vmatprep.subr.mxu0 0.0
    %9334 = vmatpush1.msra.mxu0 0.0
    %9335 = vmatprep.subr.mxu0 0.0
    %9336 = vmatpush1.msra.mxu0 0.0
    %9337 = vmatprep.subr.mxu0 0.0
    %9338 = vmatpush1.msra.mxu0 0.0
    %9339 = vmatprep.subr.mxu0 0.0
    %9340 = vmatpush1.msra.mxu0 0.0
    %9341 = vmatprep.subr.mxu0 0.0
    %9342 = vmatpush1.msra.mxu0 0.0
    %9343 = vmatprep.subr.mxu0 0.0
    %9344 = vmatpush1.msra.mxu0 0.0
    %9345 = vmatprep.subr.mxu0 0.0
    %9346 = vmatpush1.msra.mxu0 0.0
    %9347 = vmatprep.subr.mxu0 0.0
    %9348 = vmatpush1.msra.mxu0 0.0
    %9349 = vmatprep.subr.mxu0 0.0
    %9350 = vmatpush1.msra.mxu0 0.0
    %9351 = vmatprep.subr.mxu0 0.0
    %9352 = vmatpush1.msra.mxu0 0.0
    %9353 = vmatprep.subr.mxu0 0.0
    %9354 = vmatpush1.msra.mxu0 0.0
    %9355 = vmatprep.subr.mxu0 0.0
    %9356 = vmatpush1.msra.mxu0 0.0
    %9357 = vmatprep.subr.mxu0 0.0
    %9358 = vmatpush1.msra.mxu0 0.0
    %9359 = vmatprep.subr.mxu0 0.0
    %9360 = vmatpush1.msra.mxu0 0.0
    %9361 = vmatprep.subr.mxu0 0.0
    %9362 = vmatpush1.msra.mxu0 0.0
    %9363 = vmatprep.subr.mxu0 0.0
    %9364 = vmatpush1.msra.mxu0 0.0
    %9365 = vmatprep.subr.mxu0 0.0
    %9366 = vmatpush1.msra.mxu0 0.0
    %9367 = vmatprep.subr.mxu0 0.0
    %9368 = vmatpush1.msra.mxu0 0.0
    %9369 = vmatprep.subr.mxu0 0.0
    %9370 = vmatpush1.msra.mxu0 0.0
    %9371 = vmatprep.subr.mxu0 0.0
    %9372 = vmatpush1.msra.mxu0 0.0
    %9373 = vmatprep.subr.mxu0 0.0
    %9374 = vmatpush1.msra.mxu0 0.0
    %9375 = vmatprep.subr.mxu0 0.0
    %9376 = vmatpush1.msra.mxu0 0.0
    %9377 = vmatprep.subr.mxu0 0.0
    %9378 = vmatpush1.msra.mxu0 0.0
    %9379 = vmatprep.subr.mxu0 0.0
    %9380 = vmatpush1.msra.mxu0 0.0
    %9381 = vmatprep.subr.mxu0 0.0
    %9382 = vmatpush1.msra.mxu0 0.0
    %9383 = vmatprep.mubr.f32.mxu0 0.0
    %9384 = vmatmul.mubr.f32.gmra.mrb[0].mxu0 %v8456
    %v9385 = vpop.f32.mrb[0].mxu0
    %v9386 = vadd.f32 0.0, %v9385
    %v9387 = vpop.f32.mrb[0].mxu0
    %9388 = vdwg.mxu0
    %9389 = vmatprep.subr.mxu0 0.0
    %9390 = vmatpush1.msra.mxu0 %v5454
    %9391 = vmatprep.subr.mxu0 0.0
    %9392 = vmatpush1.msra.mxu0 %v5455
    %9393 = vmatprep.subr.mxu0 0.0
    %9394 = vmatpush1.msra.mxu0 %v5456
    %9395 = vmatprep.subr.mxu0 0.0
    %9396 = vmatpush1.msra.mxu0 %v5457
    %9397 = vmatprep.subr.mxu0 0.0
    %9398 = vmatpush1.msra.mxu0 0.0
    %9399 = vmatprep.subr.mxu0 0.0
    %9400 = vmatpush1.msra.mxu0 0.0
    %9401 = vmatprep.subr.mxu0 0.0
    %9402 = vmatpush1.msra.mxu0 0.0
    %9403 = vmatprep.subr.mxu0 0.0
    %9404 = vmatpush1.msra.mxu0 0.0
    %9405 = vmatprep.subr.mxu0 0.0
    %9406 = vmatpush1.msra.mxu0 0.0
    %9407 = vmatprep.subr.mxu0 0.0
    %9408 = vmatpush1.msra.mxu0 0.0
    %9409 = vmatprep.subr.mxu0 0.0
    %9410 = vmatpush1.msra.mxu0 0.0
    %9411 = vmatprep.subr.mxu0 0.0
    %9412 = vmatpush1.msra.mxu0 0.0
    %9413 = vmatprep.subr.mxu0 0.0
    %9414 = vmatpush1.msra.mxu0 0.0
    %9415 = vmatprep.subr.mxu0 0.0
    %9416 = vmatpush1.msra.mxu0 0.0
    %9417 = vmatprep.subr.mxu0 0.0
    %9418 = vmatpush1.msra.mxu0 0.0
    %9419 = vmatprep.subr.mxu0 0.0
    %9420 = vmatpush1.msra.mxu0 0.0
    %9421 = vmatprep.subr.mxu0 0.0
    %9422 = vmatpush1.msra.mxu0 0.0
    %9423 = vmatprep.subr.mxu0 0.0
    %9424 = vmatpush1.msra.mxu0 0.0
    %9425 = vmatprep.subr.mxu0 0.0
    %9426 = vmatpush1.msra.mxu0 0.0
    %9427 = vmatprep.subr.mxu0 0.0
    %9428 = vmatpush1.msra.mxu0 0.0
    %9429 = vmatprep.subr.mxu0 0.0
    %9430 = vmatpush1.msra.mxu0 0.0
    %9431 = vmatprep.subr.mxu0 0.0
    %9432 = vmatpush1.msra.mxu0 0.0
    %9433 = vmatprep.subr.mxu0 0.0
    %9434 = vmatpush1.msra.mxu0 0.0
    %9435 = vmatprep.subr.mxu0 0.0
    %9436 = vmatpush1.msra.mxu0 0.0
    %9437 = vmatprep.subr.mxu0 0.0
    %9438 = vmatpush1.msra.mxu0 0.0
    %9439 = vmatprep.subr.mxu0 0.0
    %9440 = vmatpush1.msra.mxu0 0.0
    %9441 = vmatprep.subr.mxu0 0.0
    %9442 = vmatpush1.msra.mxu0 0.0
    %9443 = vmatprep.subr.mxu0 0.0
    %9444 = vmatpush1.msra.mxu0 0.0
    %9445 = vmatprep.subr.mxu0 0.0
    %9446 = vmatpush1.msra.mxu0 0.0
    %9447 = vmatprep.subr.mxu0 0.0
    %9448 = vmatpush1.msra.mxu0 0.0
    %9449 = vmatprep.subr.mxu0 0.0
    %9450 = vmatpush1.msra.mxu0 0.0
    %9451 = vmatprep.subr.mxu0 0.0
    %9452 = vmatpush1.msra.mxu0 0.0
    %9453 = vmatprep.mubr.f32.mxu0 0.0
    %9454 = vmatmul.mubr.f32.gmra.mrb[0].mxu0 %v8529
    %v9455 = vpop.f32.mrb[0].mxu0
    %v9456 = vadd.f32 0.0, %v9455
    %v9457 = vpop.f32.mrb[0].mxu0
    %9458 = vdwg.mxu0
    %9459 = vmatprep.subr.mxu0 0.0
    %9460 = vmatpush1.msra.mxu0 %v5454
    %9461 = vmatprep.subr.mxu0 0.0
    %9462 = vmatpush1.msra.mxu0 %v5455
    %9463 = vmatprep.subr.mxu0 0.0
    %9464 = vmatpush1.msra.mxu0 %v5456
    %9465 = vmatprep.subr.mxu0 0.0
    %9466 = vmatpush1.msra.mxu0 %v5457
    %9467 = vmatprep.subr.mxu0 0.0
    %9468 = vmatpush1.msra.mxu0 0.0
    %9469 = vmatprep.subr.mxu0 0.0
    %9470 = vmatpush1.msra.mxu0 0.0
    %9471 = vmatprep.subr.mxu0 0.0
    %9472 = vmatpush1.msra.mxu0 0.0
    %9473 = vmatprep.subr.mxu0 0.0
    %9474 = vmatpush1.msra.mxu0 0.0
    %9475 = vmatprep.subr.mxu0 0.0
    %9476 = vmatpush1.msra.mxu0 0.0
    %9477 = vmatprep.subr.mxu0 0.0
    %9478 = vmatpush1.msra.mxu0 0.0
    %9479 = vmatprep.subr.mxu0 0.0
    %9480 = vmatpush1.msra.mxu0 0.0
    %9481 = vmatprep.subr.mxu0 0.0
    %9482 = vmatpush1.msra.mxu0 0.0
    %9483 = vmatprep.subr.mxu0 0.0
    %9484 = vmatpush1.msra.mxu0 0.0
    %9485 = vmatprep.subr.mxu0 0.0
    %9486 = vmatpush1.msra.mxu0 0.0
    %9487 = vmatprep.subr.mxu0 0.0
    %9488 = vmatpush1.msra.mxu0 0.0
    %9489 = vmatprep.subr.mxu0 0.0
    %9490 = vmatpush1.msra.mxu0 0.0
    %9491 = vmatprep.subr.mxu0 0.0
    %9492 = vmatpush1.msra.mxu0 0.0
    %9493 = vmatprep.subr.mxu0 0.0
    %9494 = vmatpush1.msra.mxu0 0.0
    %9495 = vmatprep.subr.mxu0 0.0
    %9496 = vmatpush1.msra.mxu0 0.0
    %9497 = vmatprep.subr.mxu0 0.0
    %9498 = vmatpush1.msra.mxu0 0.0
    %9499 = vmatprep.subr.mxu0 0.0
    %9500 = vmatpush1.msra.mxu0 0.0
    %9501 = vmatprep.subr.mxu0 0.0
    %9502 = vmatpush1.msra.mxu0 0.0
    %9503 = vmatprep.subr.mxu0 0.0
    %9504 = vmatpush1.msra.mxu0 0.0
    %9505 = vmatprep.subr.mxu0 0.0
    %9506 = vmatpush1.msra.mxu0 0.0
    %9507 = vmatprep.subr.mxu0 0.0
    %9508 = vmatpush1.msra.mxu0 0.0
    %9509 = vmatprep.subr.mxu0 0.0
    %9510 = vmatpush1.msra.mxu0 0.0
    %9511 = vmatprep.subr.mxu0 0.0
    %9512 = vmatpush1.msra.mxu0 0.0
    %9513 = vmatprep.subr.mxu0 0.0
    %9514 = vmatpush1.msra.mxu0 0.0
    %9515 = vmatprep.subr.mxu0 0.0
    %9516 = vmatpush1.msra.mxu0 0.0
    %9517 = vmatprep.subr.mxu0 0.0
    %9518 = vmatpush1.msra.mxu0 0.0
    %9519 = vmatprep.subr.mxu0 0.0
    %9520 = vmatpush1.msra.mxu0 0.0
    %9521 = vmatprep.subr.mxu0 0.0
    %9522 = vmatpush1.msra.mxu0 0.0
    %9523 = vmatprep.mubr.f32.mxu0 0.0
    %9524 = vmatmul.mubr.f32.gmra.mrb[0].mxu0 %v8602
    %v9525 = vpop.f32.mrb[0].mxu0
    %v9526 = vadd.f32 0.0, %v9525
    %v9527 = vpop.f32.mrb[0].mxu0
    %9528 = vdwg.mxu0
    %v9530 = vsel %vm7578, %v9247, 0
    %9532 = vmatprep.subr.mxu0 0.0
    %9533 = vmatpush1.msra.mxu0 %v5454
    %9534 = vmatprep.subr.mxu0 0.0
    %9535 = vmatpush1.msra.mxu0 %v5455
    %9536 = vmatprep.subr.mxu0 0.0
    %9537 = vmatpush1.msra.mxu0 %v5456
    %9538 = vmatprep.subr.mxu0 0.0
    %9539 = vmatpush1.msra.mxu0 %v5457
    %9540 = vmatprep.subr.mxu0 0.0
    %9541 = vmatpush1.msra.mxu0 0.0
    %9542 = vmatprep.subr.mxu0 0.0
    %9543 = vmatpush1.msra.mxu0 0.0
    %9544 = vmatprep.subr.mxu0 0.0
    %9545 = vmatpush1.msra.mxu0 0.0
    %9546 = vmatprep.subr.mxu0 0.0
    %9547 = vmatpush1.msra.mxu0 0.0
    %9548 = vmatprep.subr.mxu0 0.0
    %9549 = vmatpush1.msra.mxu0 0.0
    %9550 = vmatprep.subr.mxu0 0.0
    %9551 = vmatpush1.msra.mxu0 0.0
    %9552 = vmatprep.subr.mxu0 0.0
    %9553 = vmatpush1.msra.mxu0 0.0
    %9554 = vmatprep.subr.mxu0 0.0
    %9555 = vmatpush1.msra.mxu0 0.0
    %9556 = vmatprep.subr.mxu0 0.0
    %9557 = vmatpush1.msra.mxu0 0.0
    %9558 = vmatprep.subr.mxu0 0.0
    %9559 = vmatpush1.msra.mxu0 0.0
    %9560 = vmatprep.subr.mxu0 0.0
    %9561 = vmatpush1.msra.mxu0 0.0
    %9562 = vmatprep.subr.mxu0 0.0
    %9563 = vmatpush1.msra.mxu0 0.0
    %9564 = vmatprep.subr.mxu0 0.0
    %9565 = vmatpush1.msra.mxu0 0.0
    %9566 = vmatprep.subr.mxu0 0.0
    %9567 = vmatpush1.msra.mxu0 0.0
    %9568 = vmatprep.subr.mxu0 0.0
    %9569 = vmatpush1.msra.mxu0 0.0
    %9570 = vmatprep.subr.mxu0 0.0
    %9571 = vmatpush1.msra.mxu0 0.0
    %9572 = vmatprep.subr.mxu0 0.0
    %9573 = vmatpush1.msra.mxu0 0.0
    %9574 = vmatprep.subr.mxu0 0.0
    %9575 = vmatpush1.msra.mxu0 0.0
    %9576 = vmatprep.subr.mxu0 0.0
    %9577 = vmatpush1.msra.mxu0 0.0
    %9578 = vmatprep.subr.mxu0 0.0
    %9579 = vmatpush1.msra.mxu0 0.0
    %9580 = vmatprep.subr.mxu0 0.0
    %9581 = vmatpush1.msra.mxu0 0.0
    %9582 = vmatprep.subr.mxu0 0.0
    %9583 = vmatpush1.msra.mxu0 0.0
    %9584 = vmatprep.subr.mxu0 0.0
    %9585 = vmatpush1.msra.mxu0 0.0
    %9586 = vmatprep.subr.mxu0 0.0
    %9587 = vmatpush1.msra.mxu0 0.0
    %9588 = vmatprep.subr.mxu0 0.0
    %9589 = vmatpush1.msra.mxu0 0.0
    %9590 = vmatprep.subr.mxu0 0.0
    %9591 = vmatpush1.msra.mxu0 0.0
    %9592 = vmatprep.subr.mxu0 0.0
    %9593 = vmatpush1.msra.mxu0 0.0
    %9594 = vmatprep.subr.mxu0 0.0
    %9595 = vmatpush1.msra.mxu0 0.0
    %9596 = vmatprep.mubr.f32.mxu0 0.0
    %9597 = vmatmul.mubr.f32.gmra.mrb[0].mxu0 %v9530
    %v9598 = vpop.f32.mrb[0].mxu0
    %v9599 = vadd.f32 0.0, %v9598
    %v9600 = vpop.f32.mrb[0].mxu0
    %9601 = vdwg.mxu0
    %9602 = vmatprep.subr.mxu0 0.0
    %9603 = vmatpush1.msra.mxu0 %v5454
    %9604 = vmatprep.subr.mxu0 0.0
    %9605 = vmatpush1.msra.mxu0 %v5455
    %9606 = vmatprep.subr.mxu0 0.0
    %9607 = vmatpush1.msra.mxu0 %v5456
    %9608 = vmatprep.subr.mxu0 0.0
    %9609 = vmatpush1.msra.mxu0 %v5457
    %9610 = vmatprep.subr.mxu0 0.0
    %9611 = vmatpush1.msra.mxu0 0.0
    %9612 = vmatprep.subr.mxu0 0.0
    %9613 = vmatpush1.msra.mxu0 0.0
    %9614 = vmatprep.subr.mxu0 0.0
    %9615 = vmatpush1.msra.mxu0 0.0
    %9616 = vmatprep.subr.mxu0 0.0
    %9617 = vmatpush1.msra.mxu0 0.0
    %9618 = vmatprep.subr.mxu0 0.0
    %9619 = vmatpush1.msra.mxu0 0.0
    %9620 = vmatprep.subr.mxu0 0.0
    %9621 = vmatpush1.msra.mxu0 0.0
    %9622 = vmatprep.subr.mxu0 0.0
    %9623 = vmatpush1.msra.mxu0 0.0
    %9624 = vmatprep.subr.mxu0 0.0
    %9625 = vmatpush1.msra.mxu0 0.0
    %9626 = vmatprep.subr.mxu0 0.0
    %9627 = vmatpush1.msra.mxu0 0.0
    %9628 = vmatprep.subr.mxu0 0.0
    %9629 = vmatpush1.msra.mxu0 0.0
    %9630 = vmatprep.subr.mxu0 0.0
    %9631 = vmatpush1.msra.mxu0 0.0
    %9632 = vmatprep.subr.mxu0 0.0
    %9633 = vmatpush1.msra.mxu0 0.0
    %9634 = vmatprep.subr.mxu0 0.0
    %9635 = vmatpush1.msra.mxu0 0.0
    %9636 = vmatprep.subr.mxu0 0.0
    %9637 = vmatpush1.msra.mxu0 0.0
    %9638 = vmatprep.subr.mxu0 0.0
    %9639 = vmatpush1.msra.mxu0 0.0
    %9640 = vmatprep.subr.mxu0 0.0
    %9641 = vmatpush1.msra.mxu0 0.0
    %9642 = vmatprep.subr.mxu0 0.0
    %9643 = vmatpush1.msra.mxu0 0.0
    %9644 = vmatprep.subr.mxu0 0.0
    %9645 = vmatpush1.msra.mxu0 0.0
    %9646 = vmatprep.subr.mxu0 0.0
    %9647 = vmatpush1.msra.mxu0 0.0
    %9648 = vmatprep.subr.mxu0 0.0
    %9649 = vmatpush1.msra.mxu0 0.0
    %9650 = vmatprep.subr.mxu0 0.0
    %9651 = vmatpush1.msra.mxu0 0.0
    %9652 = vmatprep.subr.mxu0 0.0
    %9653 = vmatpush1.msra.mxu0 0.0
    %9654 = vmatprep.subr.mxu0 0.0
    %9655 = vmatpush1.msra.mxu0 0.0
    %9656 = vmatprep.subr.mxu0 0.0
    %9657 = vmatpush1.msra.mxu0 0.0
    %9658 = vmatprep.subr.mxu0 0.0
    %9659 = vmatpush1.msra.mxu0 0.0
    %9660 = vmatprep.subr.mxu0 0.0
    %9661 = vmatpush1.msra.mxu0 0.0
    %9662 = vmatprep.subr.mxu0 0.0
    %9663 = vmatpush1.msra.mxu0 0.0
    %9664 = vmatprep.subr.mxu0 0.0
    %9665 = vmatpush1.msra.mxu0 0.0
    %9666 = vmatprep.mubr.f32.mxu0 0.0
    %9667 = vmatmul.mubr.f32.gmra.mrb[0].mxu0 %v8748
    %v9668 = vpop.f32.mrb[0].mxu0
    %v9669 = vadd.f32 0.0, %v9668
    %v9670 = vpop.f32.mrb[0].mxu0
    %9671 = vdwg.mxu0
    %9672 = vmatprep.subr.mxu0 0.0
    %9673 = vmatpush1.msra.mxu0 %v5454
    %9674 = vmatprep.subr.mxu0 0.0
    %9675 = vmatpush1.msra.mxu0 %v5455
    %9676 = vmatprep.subr.mxu0 0.0
    %9677 = vmatpush1.msra.mxu0 %v5456
    %9678 = vmatprep.subr.mxu0 0.0
    %9679 = vmatpush1.msra.mxu0 %v5457
    %9680 = vmatprep.subr.mxu0 0.0
    %9681 = vmatpush1.msra.mxu0 0.0
    %9682 = vmatprep.subr.mxu0 0.0
    %9683 = vmatpush1.msra.mxu0 0.0
    %9684 = vmatprep.subr.mxu0 0.0
    %9685 = vmatpush1.msra.mxu0 0.0
    %9686 = vmatprep.subr.mxu0 0.0
    %9687 = vmatpush1.msra.mxu0 0.0
    %9688 = vmatprep.subr.mxu0 0.0
    %9689 = vmatpush1.msra.mxu0 0.0
    %9690 = vmatprep.subr.mxu0 0.0
    %9691 = vmatpush1.msra.mxu0 0.0
    %9692 = vmatprep.subr.mxu0 0.0
    %9693 = vmatpush1.msra.mxu0 0.0
    %9694 = vmatprep.subr.mxu0 0.0
    %9695 = vmatpush1.msra.mxu0 0.0
    %9696 = vmatprep.subr.mxu0 0.0
    %9697 = vmatpush1.msra.mxu0 0.0
    %9698 = vmatprep.subr.mxu0 0.0
    %9699 = vmatpush1.msra.mxu0 0.0
    %9700 = vmatprep.subr.mxu0 0.0
    %9701 = vmatpush1.msra.mxu0 0.0
    %9702 = vmatprep.subr.mxu0 0.0
    %9703 = vmatpush1.msra.mxu0 0.0
    %9704 = vmatprep.subr.mxu0 0.0
    %9705 = vmatpush1.msra.mxu0 0.0
    %9706 = vmatprep.subr.mxu0 0.0
    %9707 = vmatpush1.msra.mxu0 0.0
    %9708 = vmatprep.subr.mxu0 0.0
    %9709 = vmatpush1.msra.mxu0 0.0
    %9710 = vmatprep.subr.mxu0 0.0
    %9711 = vmatpush1.msra.mxu0 0.0
    %9712 = vmatprep.subr.mxu0 0.0
    %9713 = vmatpush1.msra.mxu0 0.0
    %9714 = vmatprep.subr.mxu0 0.0
    %9715 = vmatpush1.msra.mxu0 0.0
    %9716 = vmatprep.subr.mxu0 0.0
    %9717 = vmatpush1.msra.mxu0 0.0
    %9718 = vmatprep.subr.mxu0 0.0
    %9719 = vmatpush1.msra.mxu0 0.0
    %9720 = vmatprep.subr.mxu0 0.0
    %9721 = vmatpush1.msra.mxu0 0.0
    %9722 = vmatprep.subr.mxu0 0.0
    %9723 = vmatpush1.msra.mxu0 0.0
    %9724 = vmatprep.subr.mxu0 0.0
    %9725 = vmatpush1.msra.mxu0 0.0
    %9726 = vmatprep.subr.mxu0 0.0
    %9727 = vmatpush1.msra.mxu0 0.0
    %9728 = vmatprep.subr.mxu0 0.0
    %9729 = vmatpush1.msra.mxu0 0.0
    %9730 = vmatprep.subr.mxu0 0.0
    %9731 = vmatpush1.msra.mxu0 0.0
    %9732 = vmatprep.subr.mxu0 0.0
    %9733 = vmatpush1.msra.mxu0 0.0
    %9734 = vmatprep.subr.mxu0 0.0
    %9735 = vmatpush1.msra.mxu0 0.0
    %9736 = vmatprep.mubr.f32.mxu0 0.0
    %9737 = vmatmul.mubr.f32.gmra.mrb[0].mxu0 %v8821
    %v9738 = vpop.f32.mrb[0].mxu0
    %v9739 = vadd.f32 0.0, %v9738
    %v9740 = vpop.f32.mrb[0].mxu0
    %9741 = vdwg.mxu0
    %9742 = vmatprep.subr.mxu0 0.0
    %9743 = vmatpush1.msra.mxu0 %v5454
    %9744 = vmatprep.subr.mxu0 0.0
    %9745 = vmatpush1.msra.mxu0 %v5455
    %9746 = vmatprep.subr.mxu0 0.0
    %9747 = vmatpush1.msra.mxu0 %v5456
    %9748 = vmatprep.subr.mxu0 0.0
    %9749 = vmatpush1.msra.mxu0 %v5457
    %9750 = vmatprep.subr.mxu0 0.0
    %9751 = vmatpush1.msra.mxu0 0.0
    %9752 = vmatprep.subr.mxu0 0.0
    %9753 = vmatpush1.msra.mxu0 0.0
    %9754 = vmatprep.subr.mxu0 0.0
    %9755 = vmatpush1.msra.mxu0 0.0
    %9756 = vmatprep.subr.mxu0 0.0
    %9757 = vmatpush1.msra.mxu0 0.0
    %9758 = vmatprep.subr.mxu0 0.0
    %9759 = vmatpush1.msra.mxu0 0.0
    %9760 = vmatprep.subr.mxu0 0.0
    %9761 = vmatpush1.msra.mxu0 0.0
    %9762 = vmatprep.subr.mxu0 0.0
    %9763 = vmatpush1.msra.mxu0 0.0
    %9764 = vmatprep.subr.mxu0 0.0
    %9765 = vmatpush1.msra.mxu0 0.0
    %9766 = vmatprep.subr.mxu0 0.0
    %9767 = vmatpush1.msra.mxu0 0.0
    %9768 = vmatprep.subr.mxu0 0.0
    %9769 = vmatpush1.msra.mxu0 0.0
    %9770 = vmatprep.subr.mxu0 0.0
    %9771 = vmatpush1.msra.mxu0 0.0
    %9772 = vmatprep.subr.mxu0 0.0
    %9773 = vmatpush1.msra.mxu0 0.0
    %9774 = vmatprep.subr.mxu0 0.0
    %9775 = vmatpush1.msra.mxu0 0.0
    %9776 = vmatprep.subr.mxu0 0.0
    %9777 = vmatpush1.msra.mxu0 0.0
    %9778 = vmatprep.subr.mxu0 0.0
    %9779 = vmatpush1.msra.mxu0 0.0
    %9780 = vmatprep.subr.mxu0 0.0
    %9781 = vmatpush1.msra.mxu0 0.0
    %9782 = vmatprep.subr.mxu0 0.0
    %9783 = vmatpush1.msra.mxu0 0.0
    %9784 = vmatprep.subr.mxu0 0.0
    %9785 = vmatpush1.msra.mxu0 0.0
    %9786 = vmatprep.subr.mxu0 0.0
    %9787 = vmatpush1.msra.mxu0 0.0
    %9788 = vmatprep.subr.mxu0 0.0
    %9789 = vmatpush1.msra.mxu0 0.0
    %9790 = vmatprep.subr.mxu0 0.0
    %9791 = vmatpush1.msra.mxu0 0.0
    %9792 = vmatprep.subr.mxu0 0.0
    %9793 = vmatpush1.msra.mxu0 0.0
    %9794 = vmatprep.subr.mxu0 0.0
    %9795 = vmatpush1.msra.mxu0 0.0
    %9796 = vmatprep.subr.mxu0 0.0
    %9797 = vmatpush1.msra.mxu0 0.0
    %9798 = vmatprep.subr.mxu0 0.0
    %9799 = vmatpush1.msra.mxu0 0.0
    %9800 = vmatprep.subr.mxu0 0.0
    %9801 = vmatpush1.msra.mxu0 0.0
    %9802 = vmatprep.subr.mxu0 0.0
    %9803 = vmatpush1.msra.mxu0 0.0
    %9804 = vmatprep.subr.mxu0 0.0
    %9805 = vmatpush1.msra.mxu0 0.0
    %9806 = vmatprep.mubr.f32.mxu0 0.0
    %9807 = vmatmul.mubr.f32.gmra.mrb[0].mxu0 %v8894
    %v9808 = vpop.f32.mrb[0].mxu0
    %v9809 = vadd.f32 0.0, %v9808
    %v9810 = vpop.f32.mrb[0].mxu0
    %9811 = vdwg.mxu0
    %9812 = vmatprep.subr.mxu0 0.0
    %9813 = vmatpush1.msra.mxu0 %v5454
    %9814 = vmatprep.subr.mxu0 0.0
    %9815 = vmatpush1.msra.mxu0 %v5455
    %9816 = vmatprep.subr.mxu0 0.0
    %9817 = vmatpush1.msra.mxu0 %v5456
    %9818 = vmatprep.subr.mxu0 0.0
    %9819 = vmatpush1.msra.mxu0 %v5457
    %9820 = vmatprep.subr.mxu0 0.0
    %9821 = vmatpush1.msra.mxu0 0.0
    %9822 = vmatprep.subr.mxu0 0.0
    %9823 = vmatpush1.msra.mxu0 0.0
    %9824 = vmatprep.subr.mxu0 0.0
    %9825 = vmatpush1.msra.mxu0 0.0
    %9826 = vmatprep.subr.mxu0 0.0
    %9827 = vmatpush1.msra.mxu0 0.0
    %9828 = vmatprep.subr.mxu0 0.0
    %9829 = vmatpush1.msra.mxu0 0.0
    %9830 = vmatprep.subr.mxu0 0.0
    %9831 = vmatpush1.msra.mxu0 0.0
    %9832 = vmatprep.subr.mxu0 0.0
    %9833 = vmatpush1.msra.mxu0 0.0
    %9834 = vmatprep.subr.mxu0 0.0
    %9835 = vmatpush1.msra.mxu0 0.0
    %9836 = vmatprep.subr.mxu0 0.0
    %9837 = vmatpush1.msra.mxu0 0.0
    %9838 = vmatprep.subr.mxu0 0.0
    %9839 = vmatpush1.msra.mxu0 0.0
    %9840 = vmatprep.subr.mxu0 0.0
    %9841 = vmatpush1.msra.mxu0 0.0
    %9842 = vmatprep.subr.mxu0 0.0
    %9843 = vmatpush1.msra.mxu0 0.0
    %9844 = vmatprep.subr.mxu0 0.0
    %9845 = vmatpush1.msra.mxu0 0.0
    %9846 = vmatprep.subr.mxu0 0.0
    %9847 = vmatpush1.msra.mxu0 0.0
    %9848 = vmatprep.subr.mxu0 0.0
    %9849 = vmatpush1.msra.mxu0 0.0
    %9850 = vmatprep.subr.mxu0 0.0
    %9851 = vmatpush1.msra.mxu0 0.0
    %9852 = vmatprep.subr.mxu0 0.0
    %9853 = vmatpush1.msra.mxu0 0.0
    %9854 = vmatprep.subr.mxu0 0.0
    %9855 = vmatpush1.msra.mxu0 0.0
    %9856 = vmatprep.subr.mxu0 0.0
    %9857 = vmatpush1.msra.mxu0 0.0
    %9858 = vmatprep.subr.mxu0 0.0
    %9859 = vmatpush1.msra.mxu0 0.0
    %9860 = vmatprep.subr.mxu0 0.0
    %9861 = vmatpush1.msra.mxu0 0.0
    %9862 = vmatprep.subr.mxu0 0.0
    %9863 = vmatpush1.msra.mxu0 0.0
    %9864 = vmatprep.subr.mxu0 0.0
    %9865 = vmatpush1.msra.mxu0 0.0
    %9866 = vmatprep.subr.mxu0 0.0
    %9867 = vmatpush1.msra.mxu0 0.0
    %9868 = vmatprep.subr.mxu0 0.0
    %9869 = vmatpush1.msra.mxu0 0.0
    %9870 = vmatprep.subr.mxu0 0.0
    %9871 = vmatpush1.msra.mxu0 0.0
    %9872 = vmatprep.subr.mxu0 0.0
    %9873 = vmatpush1.msra.mxu0 0.0
    %9874 = vmatprep.subr.mxu0 0.0
    %9875 = vmatpush1.msra.mxu0 0.0
    %9876 = vmatprep.mubr.f32.mxu0 0.0
    %9877 = vmatmul.mubr.f32.gmra.mrb[0].mxu0 %v8967
    %v9878 = vpop.f32.mrb[0].mxu0
    %v9879 = vadd.f32 0.0, %v9878
    %v9880 = vpop.f32.mrb[0].mxu0
    %9881 = vdwg.mxu0
    %v9883 = vsel %vm7578, %v9248, 0
    %9885 = vmatprep.subr.mxu0 0.0
    %9886 = vmatpush1.msra.mxu0 %v5454
    %9887 = vmatprep.subr.mxu0 0.0
    %9888 = vmatpush1.msra.mxu0 %v5455
    %9889 = vmatprep.subr.mxu0 0.0
    %9890 = vmatpush1.msra.mxu0 %v5456
    %9891 = vmatprep.subr.mxu0 0.0
    %9892 = vmatpush1.msra.mxu0 %v5457
    %9893 = vmatprep.subr.mxu0 0.0
    %9894 = vmatpush1.msra.mxu0 0.0
    %9895 = vmatprep.subr.mxu0 0.0
    %9896 = vmatpush1.msra.mxu0 0.0
    %9897 = vmatprep.subr.mxu0 0.0
    %9898 = vmatpush1.msra.mxu0 0.0
    %9899 = vmatprep.subr.mxu0 0.0
    %9900 = vmatpush1.msra.mxu0 0.0
    %9901 = vmatprep.subr.mxu0 0.0
    %9902 = vmatpush1.msra.mxu0 0.0
    %9903 = vmatprep.subr.mxu0 0.0
    %9904 = vmatpush1.msra.mxu0 0.0
    %9905 = vmatprep.subr.mxu0 0.0
    %9906 = vmatpush1.msra.mxu0 0.0
    %9907 = vmatprep.subr.mxu0 0.0
    %9908 = vmatpush1.msra.mxu0 0.0
    %9909 = vmatprep.subr.mxu0 0.0
    %9910 = vmatpush1.msra.mxu0 0.0
    %9911 = vmatprep.subr.mxu0 0.0
    %9912 = vmatpush1.msra.mxu0 0.0
    %9913 = vmatprep.subr.mxu0 0.0
    %9914 = vmatpush1.msra.mxu0 0.0
    %9915 = vmatprep.subr.mxu0 0.0
    %9916 = vmatpush1.msra.mxu0 0.0
    %9917 = vmatprep.subr.mxu0 0.0
    %9918 = vmatpush1.msra.mxu0 0.0
    %9919 = vmatprep.subr.mxu0 0.0
    %9920 = vmatpush1.msra.mxu0 0.0
    %9921 = vmatprep.subr.mxu0 0.0
    %9922 = vmatpush1.msra.mxu0 0.0
    %9923 = vmatprep.subr.mxu0 0.0
    %9924 = vmatpush1.msra.mxu0 0.0
    %9925 = vmatprep.subr.mxu0 0.0
    %9926 = vmatpush1.msra.mxu0 0.0
    %9927 = vmatprep.subr.mxu0 0.0
    %9928 = vmatpush1.msra.mxu0 0.0
    %9929 = vmatprep.subr.mxu0 0.0
    %9930 = vmatpush1.msra.mxu0 0.0
    %9931 = vmatprep.subr.mxu0 0.0
    %9932 = vmatpush1.msra.mxu0 0.0
    %9933 = vmatprep.subr.mxu0 0.0
    %9934 = vmatpush1.msra.mxu0 0.0
    %9935 = vmatprep.subr.mxu0 0.0
    %9936 = vmatpush1.msra.mxu0 0.0
    %9937 = vmatprep.subr.mxu0 0.0
    %9938 = vmatpush1.msra.mxu0 0.0
    %9939 = vmatprep.subr.mxu0 0.0
    %9940 = vmatpush1.msra.mxu0 0.0
    %9941 = vmatprep.subr.mxu0 0.0
    %9942 = vmatpush1.msra.mxu0 0.0
    %9943 = vmatprep.subr.mxu0 0.0
    %9944 = vmatpush1.msra.mxu0 0.0
    %9945 = vmatprep.subr.mxu0 0.0
    %9946 = vmatpush1.msra.mxu0 0.0
    %9947 = vmatprep.subr.mxu0 0.0
    %9948 = vmatpush1.msra.mxu0 0.0
    %9949 = vmatprep.mubr.f32.mxu0 0.0
    %9950 = vmatmul.mubr.f32.gmra.mrb[0].mxu0 %v9883
    %v9951 = vpop.f32.mrb[0].mxu0
    %v9952 = vadd.f32 0.0, %v9951
    %v9953 = vpop.f32.mrb[0].mxu0
    %9954 = vdwg.mxu0
    %v9955 = vadd.f32 %v8379, %v9316
    %v9956 = vadd.f32 %v8452, %v9386
    %v9957 = vadd.f32 %v8525, %v9456
    %v9958 = vadd.f32 %v8598, %v9526
    %v9959 = vadd.f32 %v8671, %v9599
    %v9960 = vadd.f32 %v8744, %v9669
    %v9961 = vadd.f32 %v8817, %v9739
    %v9962 = vadd.f32 %v8890, %v9809
    %v9963 = vadd.f32 %v8963, %v9879
    %v9964 = vadd.f32 %v9036, %v9952
    %v9966 = vsel %vm5472, %v5394, 0
    %9968 = vmatprep.subr.mxu0 0.0
    %9969 = vmatpush1.msra.mxu0 %v5391
    %9970 = vmatprep.subr.mxu0 0.0
    %9971 = vmatpush1.msra.mxu0 %v5392
    %9972 = vmatprep.subr.mxu0 0.0
    %9973 = vmatpush1.msra.mxu0 %v5393
    %9974 = vmatprep.subr.mxu0 0.0
    %9975 = vmatpush1.msra.mxu0 %v9966
    %9976 = vmatprep.subr.mxu0 0.0
    %9977 = vmatpush1.msra.mxu0 0.0
    %9978 = vmatprep.subr.mxu0 0.0
    %9979 = vmatpush1.msra.mxu0 0.0
    %9980 = vmatprep.subr.mxu0 0.0
    %9981 = vmatpush1.msra.mxu0 0.0
    %9982 = vmatprep.subr.mxu0 0.0
    %9983 = vmatpush1.msra.mxu0 0.0
    %9984 = vmatprep.subr.mxu0 0.0
    %9985 = vmatpush1.msra.mxu0 0.0
    %9986 = vmatprep.subr.mxu0 0.0
    %9987 = vmatpush1.msra.mxu0 0.0
    %9988 = vmatprep.subr.mxu0 0.0
    %9989 = vmatpush1.msra.mxu0 0.0
    %9990 = vmatprep.subr.mxu0 0.0
    %9991 = vmatpush1.msra.mxu0 0.0
    %9992 = vmatprep.subr.mxu0 0.0
    %9993 = vmatpush1.msra.mxu0 0.0
    %9994 = vmatprep.subr.mxu0 0.0
    %9995 = vmatpush1.msra.mxu0 0.0
    %9996 = vmatprep.subr.mxu0 0.0
    %9997 = vmatpush1.msra.mxu0 0.0
    %9998 = vmatprep.subr.mxu0 0.0
    %9999 = vmatpush1.msra.mxu0 0.0
    %10000 = vmatprep.subr.mxu0 0.0
    %10001 = vmatpush1.msra.mxu0 0.0
    %10002 = vmatprep.subr.mxu0 0.0
    %10003 = vmatpush1.msra.mxu0 0.0
    %10004 = vmatprep.subr.mxu0 0.0
    %10005 = vmatpush1.msra.mxu0 0.0
    %10006 = vmatprep.subr.mxu0 0.0
    %10007 = vmatpush1.msra.mxu0 0.0
    %10008 = vmatprep.subr.mxu0 0.0
    %10009 = vmatpush1.msra.mxu0 0.0
    %10010 = vmatprep.subr.mxu0 0.0
    %10011 = vmatpush1.msra.mxu0 0.0
    %10012 = vmatprep.subr.mxu0 0.0
    %10013 = vmatpush1.msra.mxu0 0.0
    %10014 = vmatprep.subr.mxu0 0.0
    %10015 = vmatpush1.msra.mxu0 0.0
    %10016 = vmatprep.subr.mxu0 0.0
    %10017 = vmatpush1.msra.mxu0 0.0
    %10018 = vmatprep.subr.mxu0 0.0
    %10019 = vmatpush1.msra.mxu0 0.0
    %10020 = vmatprep.subr.mxu0 0.0
    %10021 = vmatpush1.msra.mxu0 0.0
    %10022 = vmatprep.subr.mxu0 0.0
    %10023 = vmatpush1.msra.mxu0 0.0
    %10024 = vmatprep.subr.mxu0 0.0
    %10025 = vmatpush1.msra.mxu0 0.0
    %10026 = vmatprep.subr.mxu0 0.0
    %10027 = vmatpush1.msra.mxu0 0.0
    %10028 = vmatprep.subr.mxu0 0.0
    %10029 = vmatpush1.msra.mxu0 0.0
    %10030 = vmatprep.subr.mxu0 0.0
    %10031 = vmatpush1.msra.mxu0 0.0
    %10032 = vmatprep.mubr.f32.mxu0 0.0
    %10033 = vmatmul.mubr.f32.gmra.mrb[0].mxu0 %v5464
    %v10034 = vpop.f32.mrb[0].mxu0
    %v10035 = vadd.f32 0.0, %v10034
    %v10036 = vpop.f32.mrb[0].mxu0
    %10037 = vmatprep.mubr.f32.mxu0 0.0
    %10038 = vmatmul.mubr.f32.gmra.mrb[0].mxu0 %v5467
    %v10039 = vpop.f32.mrb[0].mxu0
    %v10040 = vadd.f32 0.0, %v10039
    %v10041 = vpop.f32.mrb[0].mxu0
    %10042 = vmatprep.mubr.f32.mxu0 0.0
    %10043 = vmatmul.mubr.f32.gmra.mrb[0].mxu0 %v5470
    %v10044 = vpop.f32.mrb[0].mxu0
    %v10045 = vadd.f32 0.0, %v10044
    %v10046 = vpop.f32.mrb[0].mxu0
    %10047 = vdwg.mxu0
    %v10049 = vsel %vm5472, %v5442, 0
    %10051 = vmatprep.subr.mxu0 0.0
    %10052 = vmatpush1.msra.mxu0 %v5439
    %10053 = vmatprep.subr.mxu0 0.0
    %10054 = vmatpush1.msra.mxu0 %v5440
    %10055 = vmatprep.subr.mxu0 0.0
    %10056 = vmatpush1.msra.mxu0 %v5441
    %10057 = vmatprep.subr.mxu0 0.0
    %10058 = vmatpush1.msra.mxu0 %v10049
    %10059 = vmatprep.subr.mxu0 0.0
    %10060 = vmatpush1.msra.mxu0 0.0
    %10061 = vmatprep.subr.mxu0 0.0
    %10062 = vmatpush1.msra.mxu0 0.0
    %10063 = vmatprep.subr.mxu0 0.0
    %10064 = vmatpush1.msra.mxu0 0.0
    %10065 = vmatprep.subr.mxu0 0.0
    %10066 = vmatpush1.msra.mxu0 0.0
    %10067 = vmatprep.subr.mxu0 0.0
    %10068 = vmatpush1.msra.mxu0 0.0
    %10069 = vmatprep.subr.mxu0 0.0
    %10070 = vmatpush1.msra.mxu0 0.0
    %10071 = vmatprep.subr.mxu0 0.0
    %10072 = vmatpush1.msra.mxu0 0.0
    %10073 = vmatprep.subr.mxu0 0.0
    %10074 = vmatpush1.msra.mxu0 0.0
    %10075 = vmatprep.subr.mxu0 0.0
    %10076 = vmatpush1.msra.mxu0 0.0
    %10077 = vmatprep.subr.mxu0 0.0
    %10078 = vmatpush1.msra.mxu0 0.0
    %10079 = vmatprep.subr.mxu0 0.0
    %10080 = vmatpush1.msra.mxu0 0.0
    %10081 = vmatprep.subr.mxu0 0.0
    %10082 = vmatpush1.msra.mxu0 0.0
    %10083 = vmatprep.subr.mxu0 0.0
    %10084 = vmatpush1.msra.mxu0 0.0
    %10085 = vmatprep.subr.mxu0 0.0
    %10086 = vmatpush1.msra.mxu0 0.0
    %10087 = vmatprep.subr.mxu0 0.0
    %10088 = vmatpush1.msra.mxu0 0.0
    %10089 = vmatprep.subr.mxu0 0.0
    %10090 = vmatpush1.msra.mxu0 0.0
    %10091 = vmatprep.subr.mxu0 0.0
    %10092 = vmatpush1.msra.mxu0 0.0
    %10093 = vmatprep.subr.mxu0 0.0
    %10094 = vmatpush1.msra.mxu0 0.0
    %10095 = vmatprep.subr.mxu0 0.0
    %10096 = vmatpush1.msra.mxu0 0.0
    %10097 = vmatprep.subr.mxu0 0.0
    %10098 = vmatpush1.msra.mxu0 0.0
    %10099 = vmatprep.subr.mxu0 0.0
    %10100 = vmatpush1.msra.mxu0 0.0
    %10101 = vmatprep.subr.mxu0 0.0
    %10102 = vmatpush1.msra.mxu0 0.0
    %10103 = vmatprep.subr.mxu0 0.0
    %10104 = vmatpush1.msra.mxu0 0.0
    %10105 = vmatprep.subr.mxu0 0.0
    %10106 = vmatpush1.msra.mxu0 0.0
    %10107 = vmatprep.subr.mxu0 0.0
    %10108 = vmatpush1.msra.mxu0 0.0
    %10109 = vmatprep.subr.mxu0 0.0
    %10110 = vmatpush1.msra.mxu0 0.0
    %10111 = vmatprep.subr.mxu0 0.0
    %10112 = vmatpush1.msra.mxu0 0.0
    %10113 = vmatprep.subr.mxu0 0.0
    %10114 = vmatpush1.msra.mxu0 0.0
    %10115 = vmatprep.mubr.f32.mxu0 0.0
    %10116 = vmatmul.mubr.f32.gmra.mrb[0].mxu0 %v5464
    %v10117 = vpop.f32.mrb[0].mxu0
    %v10118 = vadd.f32 0.0, %v10117
    %v10119 = vpop.f32.mrb[0].mxu0
    %10120 = vmatprep.mubr.f32.mxu0 0.0
    %10121 = vmatmul.mubr.f32.gmra.mrb[0].mxu0 %v5467
    %v10122 = vpop.f32.mrb[0].mxu0
    %v10123 = vadd.f32 0.0, %v10122
    %v10124 = vpop.f32.mrb[0].mxu0
    %10125 = vmatprep.mubr.f32.mxu0 0.0
    %10126 = vmatmul.mubr.f32.gmra.mrb[0].mxu0 %v5470
    %v10127 = vpop.f32.mrb[0].mxu0
    %v10128 = vadd.f32 0.0, %v10127
    %v10129 = vpop.f32.mrb[0].mxu0
    %10130 = vdwg.mxu0
    %v10135 = vrot.slane %v10035, 5
    %v10136 = vrot.slane %v10040, 5
    %v10137 = vsel %vm6323, %v10135, %v10136
    %v10138 = vrot.slane %v10118, 5
    %v10139 = vrot.slane %v10123, 5
    %v10140 = vsel %vm6323, %v10138, %v10139
    %10141 = vrot.lane.b32.xlu0 %v10137, 8
    %v10142 = vpop.permute.xlu0 %10141
    %10143 = vrot.lane.b32.xlu0 %v10140, 8
    %v10144 = vpop.permute.xlu0 %10143
    %v10147 = vrot.slane %v10040, 2
    %v10148 = vrot.slane %v10123, 2
    %10149 = vrot.lane.b32.xlu0 %v10147, 16
    %v10150 = vpop.permute.xlu0 %10149
    %10151 = vrot.lane.b32.xlu0 %v10148, 16
    %v10152 = vpop.permute.xlu0 %10151
    %v10157 = vrot.slane %v10040, 7
    %v10158 = vrot.slane %v10045, 7
    %v10159 = vsel %vm6434, %v10157, %v10158
    %v10160 = vrot.slane %v10123, 7
    %v10161 = vrot.slane %v10128, 7
    %v10162 = vsel %vm6434, %v10160, %v10161
    %10163 = vrot.lane.b32.xlu0 %v10159, 24
    %v10164 = vpop.permute.xlu0 %10163
    %10165 = vrot.lane.b32.xlu0 %v10162, 24
    %v10166 = vpop.permute.xlu0 %10165
    %v10169 = vsel %vm6495, %v10035, %v10142
    %v10170 = vsel %vm6495, %v10118, %v10144
    %v10171 = vsel %vm6506, %v10169, %v10150
    %v10172 = vsel %vm6506, %v10170, %v10152
    %v10173 = vsel %vm6517, %v10171, %v10164
    %v10174 = vsel %vm6517, %v10172, %v10166
    %10175 = vmatprep.subr.mxu0 0.0
    %10176 = vmatpush1.msra.mxu0 %v5458
    %10177 = vmatprep.subr.mxu0 0.0
    %10178 = vmatpush1.msra.mxu0 %v5459
    %10179 = vmatprep.subr.mxu0 0.0
    %10180 = vmatpush1.msra.mxu0 %v5460
    %10181 = vmatprep.subr.mxu0 0.0
    %10182 = vmatpush1.msra.mxu0 %v5461
    %10183 = vmatprep.subr.mxu0 0.0
    %10184 = vmatpush1.msra.mxu0 0.0
    %10185 = vmatprep.subr.mxu0 0.0
    %10186 = vmatpush1.msra.mxu0 0.0
    %10187 = vmatprep.subr.mxu0 0.0
    %10188 = vmatpush1.msra.mxu0 0.0
    %10189 = vmatprep.subr.mxu0 0.0
    %10190 = vmatpush1.msra.mxu0 0.0
    %10191 = vmatprep.subr.mxu0 0.0
    %10192 = vmatpush1.msra.mxu0 0.0
    %10193 = vmatprep.subr.mxu0 0.0
    %10194 = vmatpush1.msra.mxu0 0.0
    %10195 = vmatprep.subr.mxu0 0.0
    %10196 = vmatpush1.msra.mxu0 0.0
    %10197 = vmatprep.subr.mxu0 0.0
    %10198 = vmatpush1.msra.mxu0 0.0
    %10199 = vmatprep.subr.mxu0 0.0
    %10200 = vmatpush1.msra.mxu0 0.0
    %10201 = vmatprep.subr.mxu0 0.0
    %10202 = vmatpush1.msra.mxu0 0.0
    %10203 = vmatprep.subr.mxu0 0.0
    %10204 = vmatpush1.msra.mxu0 0.0
    %10205 = vmatprep.subr.mxu0 0.0
    %10206 = vmatpush1.msra.mxu0 0.0
    %10207 = vmatprep.subr.mxu0 0.0
    %10208 = vmatpush1.msra.mxu0 0.0
    %10209 = vmatprep.subr.mxu0 0.0
    %10210 = vmatpush1.msra.mxu0 0.0
    %10211 = vmatprep.subr.mxu0 0.0
    %10212 = vmatpush1.msra.mxu0 0.0
    %10213 = vmatprep.subr.mxu0 0.0
    %10214 = vmatpush1.msra.mxu0 0.0
    %10215 = vmatprep.subr.mxu0 0.0
    %10216 = vmatpush1.msra.mxu0 0.0
    %10217 = vmatprep.subr.mxu0 0.0
    %10218 = vmatpush1.msra.mxu0 0.0
    %10219 = vmatprep.subr.mxu0 0.0
    %10220 = vmatpush1.msra.mxu0 0.0
    %10221 = vmatprep.subr.mxu0 0.0
    %10222 = vmatpush1.msra.mxu0 0.0
    %10223 = vmatprep.subr.mxu0 0.0
    %10224 = vmatpush1.msra.mxu0 0.0
    %10225 = vmatprep.subr.mxu0 0.0
    %10226 = vmatpush1.msra.mxu0 0.0
    %10227 = vmatprep.subr.mxu0 0.0
    %10228 = vmatpush1.msra.mxu0 0.0
    %10229 = vmatprep.subr.mxu0 0.0
    %10230 = vmatpush1.msra.mxu0 0.0
    %10231 = vmatprep.subr.mxu0 0.0
    %10232 = vmatpush1.msra.mxu0 0.0
    %10233 = vmatprep.subr.mxu0 0.0
    %10234 = vmatpush1.msra.mxu0 0.0
    %10235 = vmatprep.subr.mxu0 0.0
    %10236 = vmatpush1.msra.mxu0 0.0
    %10237 = vmatprep.subr.mxu0 0.0
    %10238 = vmatpush1.msra.mxu0 0.0
    %10239 = vmatprep.mubr.f32.mxu0 0.0
    %10240 = vmatmul.mubr.f32.gmra.mrb[0].mxu0 %v7653
    %v10241 = vpop.f32.mrb[0].mxu0
    %v10242 = vadd.f32 0.0, %v10241
    %v10243 = vpop.f32.mrb[0].mxu0
    %10244 = vdwg.mxu0
    %10245 = vmatprep.subr.mxu0 0.0
    %10246 = vmatpush1.msra.mxu0 %v5458
    %10247 = vmatprep.subr.mxu0 0.0
    %10248 = vmatpush1.msra.mxu0 %v5459
    %10249 = vmatprep.subr.mxu0 0.0
    %10250 = vmatpush1.msra.mxu0 %v5460
    %10251 = vmatprep.subr.mxu0 0.0
    %10252 = vmatpush1.msra.mxu0 %v5461
    %10253 = vmatprep.subr.mxu0 0.0
    %10254 = vmatpush1.msra.mxu0 0.0
    %10255 = vmatprep.subr.mxu0 0.0
    %10256 = vmatpush1.msra.mxu0 0.0
    %10257 = vmatprep.subr.mxu0 0.0
    %10258 = vmatpush1.msra.mxu0 0.0
    %10259 = vmatprep.subr.mxu0 0.0
    %10260 = vmatpush1.msra.mxu0 0.0
    %10261 = vmatprep.subr.mxu0 0.0
    %10262 = vmatpush1.msra.mxu0 0.0
    %10263 = vmatprep.subr.mxu0 0.0
    %10264 = vmatpush1.msra.mxu0 0.0
    %10265 = vmatprep.subr.mxu0 0.0
    %10266 = vmatpush1.msra.mxu0 0.0
    %10267 = vmatprep.subr.mxu0 0.0
    %10268 = vmatpush1.msra.mxu0 0.0
    %10269 = vmatprep.subr.mxu0 0.0
    %10270 = vmatpush1.msra.mxu0 0.0
    %10271 = vmatprep.subr.mxu0 0.0
    %10272 = vmatpush1.msra.mxu0 0.0
    %10273 = vmatprep.subr.mxu0 0.0
    %10274 = vmatpush1.msra.mxu0 0.0
    %10275 = vmatprep.subr.mxu0 0.0
    %10276 = vmatpush1.msra.mxu0 0.0
    %10277 = vmatprep.subr.mxu0 0.0
    %10278 = vmatpush1.msra.mxu0 0.0
    %10279 = vmatprep.subr.mxu0 0.0
    %10280 = vmatpush1.msra.mxu0 0.0
    %10281 = vmatprep.subr.mxu0 0.0
    %10282 = vmatpush1.msra.mxu0 0.0
    %10283 = vmatprep.subr.mxu0 0.0
    %10284 = vmatpush1.msra.mxu0 0.0
    %10285 = vmatprep.subr.mxu0 0.0
    %10286 = vmatpush1.msra.mxu0 0.0
    %10287 = vmatprep.subr.mxu0 0.0
    %10288 = vmatpush1.msra.mxu0 0.0
    %10289 = vmatprep.subr.mxu0 0.0
    %10290 = vmatpush1.msra.mxu0 0.0
    %10291 = vmatprep.subr.mxu0 0.0
    %10292 = vmatpush1.msra.mxu0 0.0
    %10293 = vmatprep.subr.mxu0 0.0
    %10294 = vmatpush1.msra.mxu0 0.0
    %10295 = vmatprep.subr.mxu0 0.0
    %10296 = vmatpush1.msra.mxu0 0.0
    %10297 = vmatprep.subr.mxu0 0.0
    %10298 = vmatpush1.msra.mxu0 0.0
    %10299 = vmatprep.subr.mxu0 0.0
    %10300 = vmatpush1.msra.mxu0 0.0
    %10301 = vmatprep.subr.mxu0 0.0
    %10302 = vmatpush1.msra.mxu0 0.0
    %10303 = vmatprep.subr.mxu0 0.0
    %10304 = vmatpush1.msra.mxu0 0.0
    %10305 = vmatprep.subr.mxu0 0.0
    %10306 = vmatpush1.msra.mxu0 0.0
    %10307 = vmatprep.subr.mxu0 0.0
    %10308 = vmatpush1.msra.mxu0 0.0
    %10309 = vmatprep.mubr.f32.mxu0 0.0
    %10310 = vmatmul.mubr.f32.gmra.mrb[0].mxu0 %v7726
    %v10311 = vpop.f32.mrb[0].mxu0
    %v10312 = vadd.f32 0.0, %v10311
    %v10313 = vpop.f32.mrb[0].mxu0
    %10314 = vdwg.mxu0
    %10315 = vmatprep.subr.mxu0 0.0
    %10316 = vmatpush1.msra.mxu0 %v5458
    %10317 = vmatprep.subr.mxu0 0.0
    %10318 = vmatpush1.msra.mxu0 %v5459
    %10319 = vmatprep.subr.mxu0 0.0
    %10320 = vmatpush1.msra.mxu0 %v5460
    %10321 = vmatprep.subr.mxu0 0.0
    %10322 = vmatpush1.msra.mxu0 %v5461
    %10323 = vmatprep.subr.mxu0 0.0
    %10324 = vmatpush1.msra.mxu0 0.0
    %10325 = vmatprep.subr.mxu0 0.0
    %10326 = vmatpush1.msra.mxu0 0.0
    %10327 = vmatprep.subr.mxu0 0.0
    %10328 = vmatpush1.msra.mxu0 0.0
    %10329 = vmatprep.subr.mxu0 0.0
    %10330 = vmatpush1.msra.mxu0 0.0
    %10331 = vmatprep.subr.mxu0 0.0
    %10332 = vmatpush1.msra.mxu0 0.0
    %10333 = vmatprep.subr.mxu0 0.0
    %10334 = vmatpush1.msra.mxu0 0.0
    %10335 = vmatprep.subr.mxu0 0.0
    %10336 = vmatpush1.msra.mxu0 0.0
    %10337 = vmatprep.subr.mxu0 0.0
    %10338 = vmatpush1.msra.mxu0 0.0
    %10339 = vmatprep.subr.mxu0 0.0
    %10340 = vmatpush1.msra.mxu0 0.0
    %10341 = vmatprep.subr.mxu0 0.0
    %10342 = vmatpush1.msra.mxu0 0.0
    %10343 = vmatprep.subr.mxu0 0.0
    %10344 = vmatpush1.msra.mxu0 0.0
    %10345 = vmatprep.subr.mxu0 0.0
    %10346 = vmatpush1.msra.mxu0 0.0
    %10347 = vmatprep.subr.mxu0 0.0
    %10348 = vmatpush1.msra.mxu0 0.0
    %10349 = vmatprep.subr.mxu0 0.0
    %10350 = vmatpush1.msra.mxu0 0.0
    %10351 = vmatprep.subr.mxu0 0.0
    %10352 = vmatpush1.msra.mxu0 0.0
    %10353 = vmatprep.subr.mxu0 0.0
    %10354 = vmatpush1.msra.mxu0 0.0
    %10355 = vmatprep.subr.mxu0 0.0
    %10356 = vmatpush1.msra.mxu0 0.0
    %10357 = vmatprep.subr.mxu0 0.0
    %10358 = vmatpush1.msra.mxu0 0.0
    %10359 = vmatprep.subr.mxu0 0.0
    %10360 = vmatpush1.msra.mxu0 0.0
    %10361 = vmatprep.subr.mxu0 0.0
    %10362 = vmatpush1.msra.mxu0 0.0
    %10363 = vmatprep.subr.mxu0 0.0
    %10364 = vmatpush1.msra.mxu0 0.0
    %10365 = vmatprep.subr.mxu0 0.0
    %10366 = vmatpush1.msra.mxu0 0.0
    %10367 = vmatprep.subr.mxu0 0.0
    %10368 = vmatpush1.msra.mxu0 0.0
    %10369 = vmatprep.subr.mxu0 0.0
    %10370 = vmatpush1.msra.mxu0 0.0
    %10371 = vmatprep.subr.mxu0 0.0
    %10372 = vmatpush1.msra.mxu0 0.0
    %10373 = vmatprep.subr.mxu0 0.0
    %10374 = vmatpush1.msra.mxu0 0.0
    %10375 = vmatprep.subr.mxu0 0.0
    %10376 = vmatpush1.msra.mxu0 0.0
    %10377 = vmatprep.subr.mxu0 0.0
    %10378 = vmatpush1.msra.mxu0 0.0
    %10379 = vmatprep.mubr.f32.mxu0 0.0
    %10380 = vmatmul.mubr.f32.gmra.mrb[0].mxu0 %v7799
    %v10381 = vpop.f32.mrb[0].mxu0
    %v10382 = vadd.f32 0.0, %v10381
    %v10383 = vpop.f32.mrb[0].mxu0
    %10384 = vdwg.mxu0
    %10385 = vmatprep.subr.mxu0 0.0
    %10386 = vmatpush1.msra.mxu0 %v5458
    %10387 = vmatprep.subr.mxu0 0.0
    %10388 = vmatpush1.msra.mxu0 %v5459
    %10389 = vmatprep.subr.mxu0 0.0
    %10390 = vmatpush1.msra.mxu0 %v5460
    %10391 = vmatprep.subr.mxu0 0.0
    %10392 = vmatpush1.msra.mxu0 %v5461
    %10393 = vmatprep.subr.mxu0 0.0
    %10394 = vmatpush1.msra.mxu0 0.0
    %10395 = vmatprep.subr.mxu0 0.0
    %10396 = vmatpush1.msra.mxu0 0.0
    %10397 = vmatprep.subr.mxu0 0.0
    %10398 = vmatpush1.msra.mxu0 0.0
    %10399 = vmatprep.subr.mxu0 0.0
    %10400 = vmatpush1.msra.mxu0 0.0
    %10401 = vmatprep.subr.mxu0 0.0
    %10402 = vmatpush1.msra.mxu0 0.0
    %10403 = vmatprep.subr.mxu0 0.0
    %10404 = vmatpush1.msra.mxu0 0.0
    %10405 = vmatprep.subr.mxu0 0.0
    %10406 = vmatpush1.msra.mxu0 0.0
    %10407 = vmatprep.subr.mxu0 0.0
    %10408 = vmatpush1.msra.mxu0 0.0
    %10409 = vmatprep.subr.mxu0 0.0
    %10410 = vmatpush1.msra.mxu0 0.0
    %10411 = vmatprep.subr.mxu0 0.0
    %10412 = vmatpush1.msra.mxu0 0.0
    %10413 = vmatprep.subr.mxu0 0.0
    %10414 = vmatpush1.msra.mxu0 0.0
    %10415 = vmatprep.subr.mxu0 0.0
    %10416 = vmatpush1.msra.mxu0 0.0
    %10417 = vmatprep.subr.mxu0 0.0
    %10418 = vmatpush1.msra.mxu0 0.0
    %10419 = vmatprep.subr.mxu0 0.0
    %10420 = vmatpush1.msra.mxu0 0.0
    %10421 = vmatprep.subr.mxu0 0.0
    %10422 = vmatpush1.msra.mxu0 0.0
    %10423 = vmatprep.subr.mxu0 0.0
    %10424 = vmatpush1.msra.mxu0 0.0
    %10425 = vmatprep.subr.mxu0 0.0
    %10426 = vmatpush1.msra.mxu0 0.0
    %10427 = vmatprep.subr.mxu0 0.0
    %10428 = vmatpush1.msra.mxu0 0.0
    %10429 = vmatprep.subr.mxu0 0.0
    %10430 = vmatpush1.msra.mxu0 0.0
    %10431 = vmatprep.subr.mxu0 0.0
    %10432 = vmatpush1.msra.mxu0 0.0
    %10433 = vmatprep.subr.mxu0 0.0
    %10434 = vmatpush1.msra.mxu0 0.0
    %10435 = vmatprep.subr.mxu0 0.0
    %10436 = vmatpush1.msra.mxu0 0.0
    %10437 = vmatprep.subr.mxu0 0.0
    %10438 = vmatpush1.msra.mxu0 0.0
    %10439 = vmatprep.subr.mxu0 0.0
    %10440 = vmatpush1.msra.mxu0 0.0
    %10441 = vmatprep.subr.mxu0 0.0
    %10442 = vmatpush1.msra.mxu0 0.0
    %10443 = vmatprep.subr.mxu0 0.0
    %10444 = vmatpush1.msra.mxu0 0.0
    %10445 = vmatprep.subr.mxu0 0.0
    %10446 = vmatpush1.msra.mxu0 0.0
    %10447 = vmatprep.subr.mxu0 0.0
    %10448 = vmatpush1.msra.mxu0 0.0
    %10449 = vmatprep.mubr.f32.mxu0 0.0
    %10450 = vmatmul.mubr.f32.gmra.mrb[0].mxu0 %v7872
    %v10451 = vpop.f32.mrb[0].mxu0
    %v10452 = vadd.f32 0.0, %v10451
    %v10453 = vpop.f32.mrb[0].mxu0
    %10454 = vdwg.mxu0
    %v10456 = vsel %vm7578, %v10173, 0
    %10458 = vmatprep.subr.mxu0 0.0
    %10459 = vmatpush1.msra.mxu0 %v5458
    %10460 = vmatprep.subr.mxu0 0.0
    %10461 = vmatpush1.msra.mxu0 %v5459
    %10462 = vmatprep.subr.mxu0 0.0
    %10463 = vmatpush1.msra.mxu0 %v5460
    %10464 = vmatprep.subr.mxu0 0.0
    %10465 = vmatpush1.msra.mxu0 %v5461
    %10466 = vmatprep.subr.mxu0 0.0
    %10467 = vmatpush1.msra.mxu0 0.0
    %10468 = vmatprep.subr.mxu0 0.0
    %10469 = vmatpush1.msra.mxu0 0.0
    %10470 = vmatprep.subr.mxu0 0.0
    %10471 = vmatpush1.msra.mxu0 0.0
    %10472 = vmatprep.subr.mxu0 0.0
    %10473 = vmatpush1.msra.mxu0 0.0
    %10474 = vmatprep.subr.mxu0 0.0
    %10475 = vmatpush1.msra.mxu0 0.0
    %10476 = vmatprep.subr.mxu0 0.0
    %10477 = vmatpush1.msra.mxu0 0.0
    %10478 = vmatprep.subr.mxu0 0.0
    %10479 = vmatpush1.msra.mxu0 0.0
    %10480 = vmatprep.subr.mxu0 0.0
    %10481 = vmatpush1.msra.mxu0 0.0
    %10482 = vmatprep.subr.mxu0 0.0
    %10483 = vmatpush1.msra.mxu0 0.0
    %10484 = vmatprep.subr.mxu0 0.0
    %10485 = vmatpush1.msra.mxu0 0.0
    %10486 = vmatprep.subr.mxu0 0.0
    %10487 = vmatpush1.msra.mxu0 0.0
    %10488 = vmatprep.subr.mxu0 0.0
    %10489 = vmatpush1.msra.mxu0 0.0
    %10490 = vmatprep.subr.mxu0 0.0
    %10491 = vmatpush1.msra.mxu0 0.0
    %10492 = vmatprep.subr.mxu0 0.0
    %10493 = vmatpush1.msra.mxu0 0.0
    %10494 = vmatprep.subr.mxu0 0.0
    %10495 = vmatpush1.msra.mxu0 0.0
    %10496 = vmatprep.subr.mxu0 0.0
    %10497 = vmatpush1.msra.mxu0 0.0
    %10498 = vmatprep.subr.mxu0 0.0
    %10499 = vmatpush1.msra.mxu0 0.0
    %10500 = vmatprep.subr.mxu0 0.0
    %10501 = vmatpush1.msra.mxu0 0.0
    %10502 = vmatprep.subr.mxu0 0.0
    %10503 = vmatpush1.msra.mxu0 0.0
    %10504 = vmatprep.subr.mxu0 0.0
    %10505 = vmatpush1.msra.mxu0 0.0
    %10506 = vmatprep.subr.mxu0 0.0
    %10507 = vmatpush1.msra.mxu0 0.0
    %10508 = vmatprep.subr.mxu0 0.0
    %10509 = vmatpush1.msra.mxu0 0.0
    %10510 = vmatprep.subr.mxu0 0.0
    %10511 = vmatpush1.msra.mxu0 0.0
    %10512 = vmatprep.subr.mxu0 0.0
    %10513 = vmatpush1.msra.mxu0 0.0
    %10514 = vmatprep.subr.mxu0 0.0
    %10515 = vmatpush1.msra.mxu0 0.0
    %10516 = vmatprep.subr.mxu0 0.0
    %10517 = vmatpush1.msra.mxu0 0.0
    %10518 = vmatprep.subr.mxu0 0.0
    %10519 = vmatpush1.msra.mxu0 0.0
    %10520 = vmatprep.subr.mxu0 0.0
    %10521 = vmatpush1.msra.mxu0 0.0
    %10522 = vmatprep.mubr.f32.mxu0 0.0
    %10523 = vmatmul.mubr.f32.gmra.mrb[0].mxu0 %v10456
    %v10524 = vpop.f32.mrb[0].mxu0
    %v10525 = vadd.f32 0.0, %v10524
    %v10526 = vpop.f32.mrb[0].mxu0
    %10527 = vdwg.mxu0
    %10528 = vmatprep.subr.mxu0 0.0
    %10529 = vmatpush1.msra.mxu0 %v5458
    %10530 = vmatprep.subr.mxu0 0.0
    %10531 = vmatpush1.msra.mxu0 %v5459
    %10532 = vmatprep.subr.mxu0 0.0
    %10533 = vmatpush1.msra.mxu0 %v5460
    %10534 = vmatprep.subr.mxu0 0.0
    %10535 = vmatpush1.msra.mxu0 %v5461
    %10536 = vmatprep.subr.mxu0 0.0
    %10537 = vmatpush1.msra.mxu0 0.0
    %10538 = vmatprep.subr.mxu0 0.0
    %10539 = vmatpush1.msra.mxu0 0.0
    %10540 = vmatprep.subr.mxu0 0.0
    %10541 = vmatpush1.msra.mxu0 0.0
    %10542 = vmatprep.subr.mxu0 0.0
    %10543 = vmatpush1.msra.mxu0 0.0
    %10544 = vmatprep.subr.mxu0 0.0
    %10545 = vmatpush1.msra.mxu0 0.0
    %10546 = vmatprep.subr.mxu0 0.0
    %10547 = vmatpush1.msra.mxu0 0.0
    %10548 = vmatprep.subr.mxu0 0.0
    %10549 = vmatpush1.msra.mxu0 0.0
    %10550 = vmatprep.subr.mxu0 0.0
    %10551 = vmatpush1.msra.mxu0 0.0
    %10552 = vmatprep.subr.mxu0 0.0
    %10553 = vmatpush1.msra.mxu0 0.0
    %10554 = vmatprep.subr.mxu0 0.0
    %10555 = vmatpush1.msra.mxu0 0.0
    %10556 = vmatprep.subr.mxu0 0.0
    %10557 = vmatpush1.msra.mxu0 0.0
    %10558 = vmatprep.subr.mxu0 0.0
    %10559 = vmatpush1.msra.mxu0 0.0
    %10560 = vmatprep.subr.mxu0 0.0
    %10561 = vmatpush1.msra.mxu0 0.0
    %10562 = vmatprep.subr.mxu0 0.0
    %10563 = vmatpush1.msra.mxu0 0.0
    %10564 = vmatprep.subr.mxu0 0.0
    %10565 = vmatpush1.msra.mxu0 0.0
    %10566 = vmatprep.subr.mxu0 0.0
    %10567 = vmatpush1.msra.mxu0 0.0
    %10568 = vmatprep.subr.mxu0 0.0
    %10569 = vmatpush1.msra.mxu0 0.0
    %10570 = vmatprep.subr.mxu0 0.0
    %10571 = vmatpush1.msra.mxu0 0.0
    %10572 = vmatprep.subr.mxu0 0.0
    %10573 = vmatpush1.msra.mxu0 0.0
    %10574 = vmatprep.subr.mxu0 0.0
    %10575 = vmatpush1.msra.mxu0 0.0
    %10576 = vmatprep.subr.mxu0 0.0
    %10577 = vmatpush1.msra.mxu0 0.0
    %10578 = vmatprep.subr.mxu0 0.0
    %10579 = vmatpush1.msra.mxu0 0.0
    %10580 = vmatprep.subr.mxu0 0.0
    %10581 = vmatpush1.msra.mxu0 0.0
    %10582 = vmatprep.subr.mxu0 0.0
    %10583 = vmatpush1.msra.mxu0 0.0
    %10584 = vmatprep.subr.mxu0 0.0
    %10585 = vmatpush1.msra.mxu0 0.0
    %10586 = vmatprep.subr.mxu0 0.0
    %10587 = vmatpush1.msra.mxu0 0.0
    %10588 = vmatprep.subr.mxu0 0.0
    %10589 = vmatpush1.msra.mxu0 0.0
    %10590 = vmatprep.subr.mxu0 0.0
    %10591 = vmatpush1.msra.mxu0 0.0
    %10592 = vmatprep.mubr.f32.mxu0 0.0
    %10593 = vmatmul.mubr.f32.gmra.mrb[0].mxu0 %v8018
    %v10594 = vpop.f32.mrb[0].mxu0
    %v10595 = vadd.f32 0.0, %v10594
    %v10596 = vpop.f32.mrb[0].mxu0
    %10597 = vdwg.mxu0
    %10598 = vmatprep.subr.mxu0 0.0
    %10599 = vmatpush1.msra.mxu0 %v5458
    %10600 = vmatprep.subr.mxu0 0.0
    %10601 = vmatpush1.msra.mxu0 %v5459
    %10602 = vmatprep.subr.mxu0 0.0
    %10603 = vmatpush1.msra.mxu0 %v5460
    %10604 = vmatprep.subr.mxu0 0.0
    %10605 = vmatpush1.msra.mxu0 %v5461
    %10606 = vmatprep.subr.mxu0 0.0
    %10607 = vmatpush1.msra.mxu0 0.0
    %10608 = vmatprep.subr.mxu0 0.0
    %10609 = vmatpush1.msra.mxu0 0.0
    %10610 = vmatprep.subr.mxu0 0.0
    %10611 = vmatpush1.msra.mxu0 0.0
    %10612 = vmatprep.subr.mxu0 0.0
    %10613 = vmatpush1.msra.mxu0 0.0
    %10614 = vmatprep.subr.mxu0 0.0
    %10615 = vmatpush1.msra.mxu0 0.0
    %10616 = vmatprep.subr.mxu0 0.0
    %10617 = vmatpush1.msra.mxu0 0.0
    %10618 = vmatprep.subr.mxu0 0.0
    %10619 = vmatpush1.msra.mxu0 0.0
    %10620 = vmatprep.subr.mxu0 0.0
    %10621 = vmatpush1.msra.mxu0 0.0
    %10622 = vmatprep.subr.mxu0 0.0
    %10623 = vmatpush1.msra.mxu0 0.0
    %10624 = vmatprep.subr.mxu0 0.0
    %10625 = vmatpush1.msra.mxu0 0.0
    %10626 = vmatprep.subr.mxu0 0.0
    %10627 = vmatpush1.msra.mxu0 0.0
    %10628 = vmatprep.subr.mxu0 0.0
    %10629 = vmatpush1.msra.mxu0 0.0
    %10630 = vmatprep.subr.mxu0 0.0
    %10631 = vmatpush1.msra.mxu0 0.0
    %10632 = vmatprep.subr.mxu0 0.0
    %10633 = vmatpush1.msra.mxu0 0.0
    %10634 = vmatprep.subr.mxu0 0.0
    %10635 = vmatpush1.msra.mxu0 0.0
    %10636 = vmatprep.subr.mxu0 0.0
    %10637 = vmatpush1.msra.mxu0 0.0
    %10638 = vmatprep.subr.mxu0 0.0
    %10639 = vmatpush1.msra.mxu0 0.0
    %10640 = vmatprep.subr.mxu0 0.0
    %10641 = vmatpush1.msra.mxu0 0.0
    %10642 = vmatprep.subr.mxu0 0.0
    %10643 = vmatpush1.msra.mxu0 0.0
    %10644 = vmatprep.subr.mxu0 0.0
    %10645 = vmatpush1.msra.mxu0 0.0
    %10646 = vmatprep.subr.mxu0 0.0
    %10647 = vmatpush1.msra.mxu0 0.0
    %10648 = vmatprep.subr.mxu0 0.0
    %10649 = vmatpush1.msra.mxu0 0.0
    %10650 = vmatprep.subr.mxu0 0.0
    %10651 = vmatpush1.msra.mxu0 0.0
    %10652 = vmatprep.subr.mxu0 0.0
    %10653 = vmatpush1.msra.mxu0 0.0
    %10654 = vmatprep.subr.mxu0 0.0
    %10655 = vmatpush1.msra.mxu0 0.0
    %10656 = vmatprep.subr.mxu0 0.0
    %10657 = vmatpush1.msra.mxu0 0.0
    %10658 = vmatprep.subr.mxu0 0.0
    %10659 = vmatpush1.msra.mxu0 0.0
    %10660 = vmatprep.subr.mxu0 0.0
    %10661 = vmatpush1.msra.mxu0 0.0
    %10662 = vmatprep.mubr.f32.mxu0 0.0
    %10663 = vmatmul.mubr.f32.gmra.mrb[0].mxu0 %v8091
    %v10664 = vpop.f32.mrb[0].mxu0
    %v10665 = vadd.f32 0.0, %v10664
    %v10666 = vpop.f32.mrb[0].mxu0
    %10667 = vdwg.mxu0
    %10668 = vmatprep.subr.mxu0 0.0
    %10669 = vmatpush1.msra.mxu0 %v5458
    %10670 = vmatprep.subr.mxu0 0.0
    %10671 = vmatpush1.msra.mxu0 %v5459
    %10672 = vmatprep.subr.mxu0 0.0
    %10673 = vmatpush1.msra.mxu0 %v5460
    %10674 = vmatprep.subr.mxu0 0.0
    %10675 = vmatpush1.msra.mxu0 %v5461
    %10676 = vmatprep.subr.mxu0 0.0
    %10677 = vmatpush1.msra.mxu0 0.0
    %10678 = vmatprep.subr.mxu0 0.0
    %10679 = vmatpush1.msra.mxu0 0.0
    %10680 = vmatprep.subr.mxu0 0.0
    %10681 = vmatpush1.msra.mxu0 0.0
    %10682 = vmatprep.subr.mxu0 0.0
    %10683 = vmatpush1.msra.mxu0 0.0
    %10684 = vmatprep.subr.mxu0 0.0
    %10685 = vmatpush1.msra.mxu0 0.0
    %10686 = vmatprep.subr.mxu0 0.0
    %10687 = vmatpush1.msra.mxu0 0.0
    %10688 = vmatprep.subr.mxu0 0.0
    %10689 = vmatpush1.msra.mxu0 0.0
    %10690 = vmatprep.subr.mxu0 0.0
    %10691 = vmatpush1.msra.mxu0 0.0
    %10692 = vmatprep.subr.mxu0 0.0
    %10693 = vmatpush1.msra.mxu0 0.0
    %10694 = vmatprep.subr.mxu0 0.0
    %10695 = vmatpush1.msra.mxu0 0.0
    %10696 = vmatprep.subr.mxu0 0.0
    %10697 = vmatpush1.msra.mxu0 0.0
    %10698 = vmatprep.subr.mxu0 0.0
    %10699 = vmatpush1.msra.mxu0 0.0
    %10700 = vmatprep.subr.mxu0 0.0
    %10701 = vmatpush1.msra.mxu0 0.0
    %10702 = vmatprep.subr.mxu0 0.0
    %10703 = vmatpush1.msra.mxu0 0.0
    %10704 = vmatprep.subr.mxu0 0.0
    %10705 = vmatpush1.msra.mxu0 0.0
    %10706 = vmatprep.subr.mxu0 0.0
    %10707 = vmatpush1.msra.mxu0 0.0
    %10708 = vmatprep.subr.mxu0 0.0
    %10709 = vmatpush1.msra.mxu0 0.0
    %10710 = vmatprep.subr.mxu0 0.0
    %10711 = vmatpush1.msra.mxu0 0.0
    %10712 = vmatprep.subr.mxu0 0.0
    %10713 = vmatpush1.msra.mxu0 0.0
    %10714 = vmatprep.subr.mxu0 0.0
    %10715 = vmatpush1.msra.mxu0 0.0
    %10716 = vmatprep.subr.mxu0 0.0
    %10717 = vmatpush1.msra.mxu0 0.0
    %10718 = vmatprep.subr.mxu0 0.0
    %10719 = vmatpush1.msra.mxu0 0.0
    %10720 = vmatprep.subr.mxu0 0.0
    %10721 = vmatpush1.msra.mxu0 0.0
    %10722 = vmatprep.subr.mxu0 0.0
    %10723 = vmatpush1.msra.mxu0 0.0
    %10724 = vmatprep.subr.mxu0 0.0
    %10725 = vmatpush1.msra.mxu0 0.0
    %10726 = vmatprep.subr.mxu0 0.0
    %10727 = vmatpush1.msra.mxu0 0.0
    %10728 = vmatprep.subr.mxu0 0.0
    %10729 = vmatpush1.msra.mxu0 0.0
    %10730 = vmatprep.subr.mxu0 0.0
    %10731 = vmatpush1.msra.mxu0 0.0
    %10732 = vmatprep.mubr.f32.mxu0 0.0
    %10733 = vmatmul.mubr.f32.gmra.mrb[0].mxu0 %v8164
    %v10734 = vpop.f32.mrb[0].mxu0
    %v10735 = vadd.f32 0.0, %v10734
    %v10736 = vpop.f32.mrb[0].mxu0
    %10737 = vdwg.mxu0
    %10738 = vmatprep.subr.mxu0 0.0
    %10739 = vmatpush1.msra.mxu0 %v5458
    %10740 = vmatprep.subr.mxu0 0.0
    %10741 = vmatpush1.msra.mxu0 %v5459
    %10742 = vmatprep.subr.mxu0 0.0
    %10743 = vmatpush1.msra.mxu0 %v5460
    %10744 = vmatprep.subr.mxu0 0.0
    %10745 = vmatpush1.msra.mxu0 %v5461
    %10746 = vmatprep.subr.mxu0 0.0
    %10747 = vmatpush1.msra.mxu0 0.0
    %10748 = vmatprep.subr.mxu0 0.0
    %10749 = vmatpush1.msra.mxu0 0.0
    %10750 = vmatprep.subr.mxu0 0.0
    %10751 = vmatpush1.msra.mxu0 0.0
    %10752 = vmatprep.subr.mxu0 0.0
    %10753 = vmatpush1.msra.mxu0 0.0
    %10754 = vmatprep.subr.mxu0 0.0
    %10755 = vmatpush1.msra.mxu0 0.0
    %10756 = vmatprep.subr.mxu0 0.0
    %10757 = vmatpush1.msra.mxu0 0.0
    %10758 = vmatprep.subr.mxu0 0.0
    %10759 = vmatpush1.msra.mxu0 0.0
    %10760 = vmatprep.subr.mxu0 0.0
    %10761 = vmatpush1.msra.mxu0 0.0
    %10762 = vmatprep.subr.mxu0 0.0
    %10763 = vmatpush1.msra.mxu0 0.0
    %10764 = vmatprep.subr.mxu0 0.0
    %10765 = vmatpush1.msra.mxu0 0.0
    %10766 = vmatprep.subr.mxu0 0.0
    %10767 = vmatpush1.msra.mxu0 0.0
    %10768 = vmatprep.subr.mxu0 0.0
    %10769 = vmatpush1.msra.mxu0 0.0
    %10770 = vmatprep.subr.mxu0 0.0
    %10771 = vmatpush1.msra.mxu0 0.0
    %10772 = vmatprep.subr.mxu0 0.0
    %10773 = vmatpush1.msra.mxu0 0.0
    %10774 = vmatprep.subr.mxu0 0.0
    %10775 = vmatpush1.msra.mxu0 0.0
    %10776 = vmatprep.subr.mxu0 0.0
    %10777 = vmatpush1.msra.mxu0 0.0
    %10778 = vmatprep.subr.mxu0 0.0
    %10779 = vmatpush1.msra.mxu0 0.0
    %10780 = vmatprep.subr.mxu0 0.0
    %10781 = vmatpush1.msra.mxu0 0.0
    %10782 = vmatprep.subr.mxu0 0.0
    %10783 = vmatpush1.msra.mxu0 0.0
    %10784 = vmatprep.subr.mxu0 0.0
    %10785 = vmatpush1.msra.mxu0 0.0
    %10786 = vmatprep.subr.mxu0 0.0
    %10787 = vmatpush1.msra.mxu0 0.0
    %10788 = vmatprep.subr.mxu0 0.0
    %10789 = vmatpush1.msra.mxu0 0.0
    %10790 = vmatprep.subr.mxu0 0.0
    %10791 = vmatpush1.msra.mxu0 0.0
    %10792 = vmatprep.subr.mxu0 0.0
    %10793 = vmatpush1.msra.mxu0 0.0
    %10794 = vmatprep.subr.mxu0 0.0
    %10795 = vmatpush1.msra.mxu0 0.0
    %10796 = vmatprep.subr.mxu0 0.0
    %10797 = vmatpush1.msra.mxu0 0.0
    %10798 = vmatprep.subr.mxu0 0.0
    %10799 = vmatpush1.msra.mxu0 0.0
    %10800 = vmatprep.subr.mxu0 0.0
    %10801 = vmatpush1.msra.mxu0 0.0
    %10802 = vmatprep.mubr.f32.mxu0 0.0
    %10803 = vmatmul.mubr.f32.gmra.mrb[0].mxu0 %v8237
    %v10804 = vpop.f32.mrb[0].mxu0
    %v10805 = vadd.f32 0.0, %v10804
    %v10806 = vpop.f32.mrb[0].mxu0
    %10807 = vdwg.mxu0
    %v10809 = vsel %vm7578, %v10174, 0
    %10811 = vmatprep.subr.mxu0 0.0
    %10812 = vmatpush1.msra.mxu0 %v5458
    %10813 = vmatprep.subr.mxu0 0.0
    %10814 = vmatpush1.msra.mxu0 %v5459
    %10815 = vmatprep.subr.mxu0 0.0
    %10816 = vmatpush1.msra.mxu0 %v5460
    %10817 = vmatprep.subr.mxu0 0.0
    %10818 = vmatpush1.msra.mxu0 %v5461
    %10819 = vmatprep.subr.mxu0 0.0
    %10820 = vmatpush1.msra.mxu0 0.0
    %10821 = vmatprep.subr.mxu0 0.0
    %10822 = vmatpush1.msra.mxu0 0.0
    %10823 = vmatprep.subr.mxu0 0.0
    %10824 = vmatpush1.msra.mxu0 0.0
    %10825 = vmatprep.subr.mxu0 0.0
    %10826 = vmatpush1.msra.mxu0 0.0
    %10827 = vmatprep.subr.mxu0 0.0
    %10828 = vmatpush1.msra.mxu0 0.0
    %10829 = vmatprep.subr.mxu0 0.0
    %10830 = vmatpush1.msra.mxu0 0.0
    %10831 = vmatprep.subr.mxu0 0.0
    %10832 = vmatpush1.msra.mxu0 0.0
    %10833 = vmatprep.subr.mxu0 0.0
    %10834 = vmatpush1.msra.mxu0 0.0
    %10835 = vmatprep.subr.mxu0 0.0
    %10836 = vmatpush1.msra.mxu0 0.0
    %10837 = vmatprep.subr.mxu0 0.0
    %10838 = vmatpush1.msra.mxu0 0.0
    %10839 = vmatprep.subr.mxu0 0.0
    %10840 = vmatpush1.msra.mxu0 0.0
    %10841 = vmatprep.subr.mxu0 0.0
    %10842 = vmatpush1.msra.mxu0 0.0
    %10843 = vmatprep.subr.mxu0 0.0
    %10844 = vmatpush1.msra.mxu0 0.0
    %10845 = vmatprep.subr.mxu0 0.0
    %10846 = vmatpush1.msra.mxu0 0.0
    %10847 = vmatprep.subr.mxu0 0.0
    %10848 = vmatpush1.msra.mxu0 0.0
    %10849 = vmatprep.subr.mxu0 0.0
    %10850 = vmatpush1.msra.mxu0 0.0
    %10851 = vmatprep.subr.mxu0 0.0
    %10852 = vmatpush1.msra.mxu0 0.0
    %10853 = vmatprep.subr.mxu0 0.0
    %10854 = vmatpush1.msra.mxu0 0.0
    %10855 = vmatprep.subr.mxu0 0.0
    %10856 = vmatpush1.msra.mxu0 0.0
    %10857 = vmatprep.subr.mxu0 0.0
    %10858 = vmatpush1.msra.mxu0 0.0
    %10859 = vmatprep.subr.mxu0 0.0
    %10860 = vmatpush1.msra.mxu0 0.0
    %10861 = vmatprep.subr.mxu0 0.0
    %10862 = vmatpush1.msra.mxu0 0.0
    %10863 = vmatprep.subr.mxu0 0.0
    %10864 = vmatpush1.msra.mxu0 0.0
    %10865 = vmatprep.subr.mxu0 0.0
    %10866 = vmatpush1.msra.mxu0 0.0
    %10867 = vmatprep.subr.mxu0 0.0
    %10868 = vmatpush1.msra.mxu0 0.0
    %10869 = vmatprep.subr.mxu0 0.0
    %10870 = vmatpush1.msra.mxu0 0.0
    %10871 = vmatprep.subr.mxu0 0.0
    %10872 = vmatpush1.msra.mxu0 0.0
    %10873 = vmatprep.subr.mxu0 0.0
    %10874 = vmatpush1.msra.mxu0 0.0
    %10875 = vmatprep.mubr.f32.mxu0 0.0
    %10876 = vmatmul.mubr.f32.gmra.mrb[0].mxu0 %v10809
    %v10877 = vpop.f32.mrb[0].mxu0
    %v10878 = vadd.f32 0.0, %v10877
    %v10879 = vpop.f32.mrb[0].mxu0
    %10880 = vdwg.mxu0
    %v10881 = vadd.f32 %v9955, %v10242
    %v10882 = vadd.f32 %v9956, %v10312
    %v10883 = vadd.f32 %v9957, %v10382
    %v10884 = vadd.f32 %v9958, %v10452
    %v10885 = vadd.f32 %v9959, %v10525
    %v10886 = vadd.f32 %v9960, %v10595
    %v10887 = vadd.f32 %v9961, %v10665
    %v10888 = vadd.f32 %v9962, %v10735
    %v10889 = vadd.f32 %v9963, %v10805
    %v10890 = vadd.f32 %v9964, %v10878
    %v10891 = vld [vmem:[%s5] sm:$0x1]
    %v10893 = vlaneseq
    %v10894 = vshrl.u32 %v10893, 7
    %v10895 = vsub.s32 0, %v10894
    %v10896 = vrot.slane %v10891, %v10895
    %v10898 = vadd.f32 %v10881, %v10896
    %v10899 = vadd.f32 %v10882, %v10896
    %v10900 = vadd.f32 %v10883, %v10896
    %v10901 = vadd.f32 %v10884, %v10896
    %v10902 = vadd.f32 %v10885, %v10896
    %v10903 = vadd.f32 %v10886, %v10896
    %v10904 = vadd.f32 %v10887, %v10896
    %v10905 = vadd.f32 %v10888, %v10896
    %v10906 = vadd.f32 %v10889, %v10896
    %v10907 = vadd.f32 %v10890, %v10896
    %v10908 = vmax.f32 %v10898, 0.0
    %v10909 = vmax.f32 %v10899, 0.0
    %v10910 = vmax.f32 %v10900, 0.0
    %v10911 = vmax.f32 %v10901, 0.0
    %v10912 = vmax.f32 %v10902, 0.0
    %v10913 = vmax.f32 %v10903, 0.0
    %v10914 = vmax.f32 %v10904, 0.0
    %v10915 = vmax.f32 %v10905, 0.0
    %v10916 = vmax.f32 %v10906, 0.0
    %v10917 = vmax.f32 %v10907, 0.0
    %v10918 = vmax.f32 %v10908, %v10909
    %v10919 = vmax.f32 %v10909, %v10910
    %v10920 = vmax.f32 %v10910, %v10911
    %v10921 = vmax.f32 %v10911, %v10912
    %v10922 = vmax.f32 %v10913, %v10914
    %v10923 = vmax.f32 %v10914, %v10915
    %v10924 = vmax.f32 %v10915, %v10916
    %v10925 = vmax.f32 %v10916, %v10917
    %v10934 = vrot.slane %v10918, 1
    %v10935 = vrot.slane %v10919, 1
    %v10936 = vrot.slane %v10920, 1
    %v10937 = vrot.slane %v10921, 1
    %v10938 = vrot.slane %v10922, 1
    %v10939 = vrot.slane %v10923, 1
    %v10940 = vrot.slane %v10924, 1
    %v10941 = vrot.slane %v10925, 1
    %v10950 = vmax.f32 %v10918, %v10934
    %v10951 = vmax.f32 %v10919, %v10935
    %v10952 = vmax.f32 %v10920, %v10936
    %v10953 = vmax.f32 %v10921, %v10937
    %v10954 = vmax.f32 %v10922, %v10938
    %v10955 = vmax.f32 %v10923, %v10939
    %v10956 = vmax.f32 %v10924, %v10940
    %v10957 = vmax.f32 %v10925, %v10941
    %v10960 = vrot.slane %v10950, 1
    %v10961 = vrot.slane %v10954, 1
    %10962 = vrot.lane.b32.xlu0 %v10960, 14
    %v10963 = vpop.permute.xlu0 %10962
    %10964 = vrot.lane.b32.xlu0 %v10961, 14
    %v10965 = vpop.permute.xlu0 %10964
    %v10968 = vrot.slane %v10950, 2
    %v10969 = vrot.slane %v10954, 2
    %10970 = vrot.lane.b32.xlu0 %v10968, 28
    %v10971 = vpop.permute.xlu0 %10970
    %10972 = vrot.lane.b32.xlu0 %v10969, 28
    %v10973 = vpop.permute.xlu0 %10972
    %v10976 = vrot.slane %v10950, 3
    %v10977 = vrot.slane %v10954, 3
    %10978 = vrot.lane.b32.xlu0 %v10976, 42
    %v10979 = vpop.permute.xlu0 %10978
    %10980 = vrot.lane.b32.xlu0 %v10977, 42
    %v10981 = vpop.permute.xlu0 %10980
    %10986 = vrot.lane.b32.xlu0 %v10951, 56
    %v10987 = vpop.permute.xlu0 %10986
    %10988 = vrot.lane.b32.xlu0 %v10955, 56
    %v10989 = vpop.permute.xlu0 %10988
    %v10992 = vrot.slane %v10951, 1
    %v10993 = vrot.slane %v10955, 1
    %10994 = vrot.lane.b32.xlu0 %v10992, 70
    %v10995 = vpop.permute.xlu0 %10994
    %10996 = vrot.lane.b32.xlu0 %v10993, 70
    %v10997 = vpop.permute.xlu0 %10996
    %v11000 = vrot.slane %v10951, 2
    %v11001 = vrot.slane %v10955, 2
    %11002 = vrot.lane.b32.xlu0 %v11000, 84
    %v11003 = vpop.permute.xlu0 %11002
    %11004 = vrot.lane.b32.xlu0 %v11001, 84
    %v11005 = vpop.permute.xlu0 %11004
    %v11008 = vrot.slane %v10951, 3
    %v11009 = vrot.slane %v10955, 3
    %11010 = vrot.lane.b32.xlu0 %v11008, 98
    %v11011 = vpop.permute.xlu0 %11010
    %11012 = vrot.lane.b32.xlu0 %v11009, 98
    %v11013 = vpop.permute.xlu0 %11012
    %11018 = vrot.lane.b32.xlu0 %v10952, 112
    %v11019 = vpop.permute.xlu0 %11018
    %11020 = vrot.lane.b32.xlu0 %v10956, 112
    %v11021 = vpop.permute.xlu0 %11020
    %v11024 = vrot.slane %v10952, 1
    %v11025 = vrot.slane %v10956, 1
    %11026 = vrot.lane.b32.xlu0 %v11024, 126
    %v11027 = vpop.permute.xlu0 %11026
    %11028 = vrot.lane.b32.xlu0 %v11025, 126
    %v11029 = vpop.permute.xlu0 %11028
    %v11032 = vrot.slane %v10952, 2
    %v11033 = vrot.slane %v10956, 2
    %11034 = vrot.lane.b32.xlu0 %v11032, 12
    %v11035 = vpop.permute.xlu0 %11034
    %11036 = vrot.lane.b32.xlu0 %v11033, 12
    %v11037 = vpop.permute.xlu0 %11036
    %v11040 = vrot.slane %v10952, 3
    %v11041 = vrot.slane %v10956, 3
    %11042 = vrot.lane.b32.xlu0 %v11040, 26
    %v11043 = vpop.permute.xlu0 %11042
    %11044 = vrot.lane.b32.xlu0 %v11041, 26
    %v11045 = vpop.permute.xlu0 %11044
    %11050 = vrot.lane.b32.xlu0 %v10953, 40
    %v11051 = vpop.permute.xlu0 %11050
    %11052 = vrot.lane.b32.xlu0 %v10957, 40
    %v11053 = vpop.permute.xlu0 %11052
    %v11056 = vrot.slane %v10953, 1
    %v11057 = vrot.slane %v10957, 1
    %11058 = vrot.lane.b32.xlu0 %v11056, 54
    %v11059 = vpop.permute.xlu0 %11058
    %11060 = vrot.lane.b32.xlu0 %v11057, 54
    %v11061 = vpop.permute.xlu0 %11060
    %v11064 = vrot.slane %v10953, 2
    %v11065 = vrot.slane %v10957, 2
    %11066 = vrot.lane.b32.xlu0 %v11064, 68
    %v11067 = vpop.permute.xlu0 %11066
    %11068 = vrot.lane.b32.xlu0 %v11065, 68
    %v11069 = vpop.permute.xlu0 %11068
    %v11072 = vrot.slane %v10953, 3
    %v11073 = vrot.slane %v10957, 3
    %11074 = vrot.lane.b32.xlu0 %v11072, 82
    %v11075 = vpop.permute.xlu0 %11074
    %11076 = vrot.lane.b32.xlu0 %v11073, 82
    %v11077 = vpop.permute.xlu0 %11076
    %vm11080 = vcmask 113664
    %v11081 = vsel %vm11080, %v10950, %v10963
    %v11082 = vsel %vm11080, %v10954, %v10965
    %vm11083 = vcmask 228352
    %v11084 = vsel %vm11083, %v11081, %v10971
    %v11085 = vsel %vm11083, %v11082, %v10973
    %vm11086 = vcmask 343040
    %v11087 = vsel %vm11086, %v11084, %v10979
    %v11088 = vsel %vm11086, %v11085, %v10981
    %vm11089 = vcmask 457728
    %v11090 = vsel %vm11089, %v11087, %v10987
    %v11091 = vsel %vm11089, %v11088, %v10989
    %vm11092 = vcmask 572416
    %v11093 = vsel %vm11092, %v11090, %v10995
    %v11094 = vsel %vm11092, %v11091, %v10997
    %vm11095 = vcmask 687104
    %v11096 = vsel %vm11095, %v11093, %v11003
    %v11097 = vsel %vm11095, %v11094, %v11005
    %vm11098 = vcmask 801792
    %v11099 = vsel %vm11098, %v11096, %v11011
    %v11100 = vsel %vm11098, %v11097, %v11013
    %vm11101 = vcmask 916480
    %v11102 = vsel %vm11101, %v11099, %v11019
    %v11103 = vsel %vm11101, %v11100, %v11021
    %vm11104 = vcmask 1031168
    %v11105 = vsel %vm11104, %v11102, %v11027
    %v11106 = vsel %vm11104, %v11103, %v11029
    %vm11107 = vcmask 97280
    %v11108 = vsel %vm11107, %v11027, %v11035
    %v11109 = vsel %vm11107, %v11029, %v11037
    %v11110 = vsel %vm5462, %v11108, %v11043
    %v11111 = vsel %vm5462, %v11109, %v11045
    %vm11112 = vcmask 326656
    %v11113 = vsel %vm11112, %v11110, %v11051
    %v11114 = vsel %vm11112, %v11111, %v11053
    %vm11115 = vcmask 441344
    %v11116 = vsel %vm11115, %v11113, %v11059
    %v11117 = vsel %vm11115, %v11114, %v11061
    %vm11118 = vcmask 556032
    %v11119 = vsel %vm11118, %v11116, %v11067
    %v11120 = vsel %vm11118, %v11117, %v11069
    %vm11121 = vcmask 670720
    %v11122 = vsel %vm11121, %v11119, %v11075
    %v11123 = vsel %vm11121, %v11120, %v11077
    %v11124 = vld [vmem:[%s6] sm:$0xff]
    %v11125 = vld [vmem:[%s6 + $0x8] sm:$0xff]
    %v11126 = vld [vmem:[%s6 + $0x10] sm:$0xff]
    %v11127 = vld [vmem:[%s6 + $0x18] sm:$0xff]
    %v11128 = vld [vmem:[%s6 + $0x20] sm:$0xff]
    %v11129 = vld [vmem:[%s6 + $0x28] sm:$0xff]
    %v11130 = vld [vmem:[%s6 + $0x30] sm:$0xff]
    %v11131 = vld [vmem:[%s6 + $0x38] sm:$0xff]
    %v11132 = vld [vmem:[%s6 + $0x40] sm:$0xff]
    %v11133 = vld [vmem:[%s6 + $0x48] sm:$0xff]
    %v11134 = vld [vmem:[%s6 + $0x50] sm:$0xff]
    %v11135 = vld [vmem:[%s6 + $0x58] sm:$0xff]
    %v11136 = vld [vmem:[%s6 + $0x60] sm:$0xff]
    %v11137 = vld [vmem:[%s6 + $0x68] sm:$0xff]
    %v11138 = vld [vmem:[%s6 + $0x70] sm:$0xff]
    %v11139 = vld [vmem:[%s6 + $0x78] sm:$0xff]
    %v11140 = vld [vmem:[%s6 + $0x80] sm:$0xff]
    %v11141 = vld [vmem:[%s6 + $0x88] sm:$0xff]
    %v11142 = vld [vmem:[%s6 + $0x90] sm:$0xff]
    %v11143 = vld [vmem:[%s6 + $0x98] sm:$0xff]
    %v11144 = vld [vmem:[%s6 + $0xa0] sm:$0xff]
    %v11145 = vld [vmem:[%s6 + $0xa8] sm:$0xff]
    %v11146 = vld [vmem:[%s6 + $0xb0] sm:$0xff]
    %v11147 = vld [vmem:[%s6 + $0xb8] sm:$0xff]
    %v11148 = vld [vmem:[%s6 + $0xc0] sm:$0xff]
    %v11149 = vld [vmem:[%s6 + $0xc8] sm:$0xff]
    %v11150 = vld [vmem:[%s6 + $0xd0] sm:$0xff]
    %v11151 = vld [vmem:[%s6 + $0xd8] sm:$0xff]
    %v11152 = vld [vmem:[%s7] sm:$0x1]
    %vm11153 = vcmask 785408
    %v11155 = vsel %vm11153, %v11122, 0
    %11157 = vmatprep.subr.mxu0 0.0
    %11158 = vmatpush1.msra.mxu0 %v11124
    %11159 = vmatprep.subr.mxu0 0.0
    %11160 = vmatpush1.msra.mxu0 %v11125
    %11161 = vmatprep.subr.mxu0 0.0
    %11162 = vmatpush1.msra.mxu0 %v11126
    %11163 = vmatprep.subr.mxu0 0.0
    %11164 = vmatpush1.msra.mxu0 %v11127
    %11165 = vmatprep.subr.mxu0 0.0
    %11166 = vmatpush1.msra.mxu0 %v11128
    %11167 = vmatprep.subr.mxu0 0.0
    %11168 = vmatpush1.msra.mxu0 %v11129
    %11169 = vmatprep.subr.mxu0 0.0
    %11170 = vmatpush1.msra.mxu0 %v11130
    %11171 = vmatprep.subr.mxu0 0.0
    %11172 = vmatpush1.msra.mxu0 %v11131
    %11173 = vmatprep.subr.mxu0 0.0
    %11174 = vmatpush1.msra.mxu0 %v11132
    %11175 = vmatprep.subr.mxu0 0.0
    %11176 = vmatpush1.msra.mxu0 %v11133
    %11177 = vmatprep.subr.mxu0 0.0
    %11178 = vmatpush1.msra.mxu0 %v11134
    %11179 = vmatprep.subr.mxu0 0.0
    %11180 = vmatpush1.msra.mxu0 %v11135
    %11181 = vmatprep.subr.mxu0 0.0
    %11182 = vmatpush1.msra.mxu0 %v11136
    %11183 = vmatprep.subr.mxu0 0.0
    %11184 = vmatpush1.msra.mxu0 %v11137
    %11185 = vmatprep.subr.mxu0 0.0
    %11186 = vmatpush1.msra.mxu0 %v11138
    %11187 = vmatprep.subr.mxu0 0.0
    %11188 = vmatpush1.msra.mxu0 %v11139
    %11189 = vmatprep.subr.mxu0 0.0
    %11190 = vmatpush1.msra.mxu0 %v11140
    %11191 = vmatprep.subr.mxu0 0.0
    %11192 = vmatpush1.msra.mxu0 %v11141
    %11193 = vmatprep.subr.mxu0 0.0
    %11194 = vmatpush1.msra.mxu0 %v11142
    %11195 = vmatprep.subr.mxu0 0.0
    %11196 = vmatpush1.msra.mxu0 %v11143
    %11197 = vmatprep.subr.mxu0 0.0
    %11198 = vmatpush1.msra.mxu0 %v11144
    %11199 = vmatprep.subr.mxu0 0.0
    %11200 = vmatpush1.msra.mxu0 %v11145
    %11201 = vmatprep.subr.mxu0 0.0
    %11202 = vmatpush1.msra.mxu0 %v11146
    %11203 = vmatprep.subr.mxu0 0.0
    %11204 = vmatpush1.msra.mxu0 %v11147
    %11205 = vmatprep.subr.mxu0 0.0
    %11206 = vmatpush1.msra.mxu0 %v11148
    %11207 = vmatprep.subr.mxu0 0.0
    %11208 = vmatpush1.msra.mxu0 %v11149
    %11209 = vmatprep.subr.mxu0 0.0
    %11210 = vmatpush1.msra.mxu0 %v11150
    %11211 = vmatprep.subr.mxu0 0.0
    %11212 = vmatpush1.msra.mxu0 %v11151
    %11213 = vmatprep.subr.mxu0 0.0
    %11214 = vmatpush1.msra.mxu0 0.0
    %11215 = vmatprep.subr.mxu0 0.0
    %11216 = vmatpush1.msra.mxu0 0.0
    %11217 = vmatprep.subr.mxu0 0.0
    %11218 = vmatpush1.msra.mxu0 0.0
    %11219 = vmatprep.subr.mxu0 0.0
    %11220 = vmatpush1.msra.mxu0 0.0
    %11221 = vmatprep.mubr.f32.mxu0 %v11155
    %11222 = vmatmul.mubr.f32.gmra.mrb[0].mxu0 %v11105
    %v11223 = vpop.f32.mrb[0].mxu0
    %v11224 = vadd.f32 %v11152, %v11223
    %v11225 = vpop.f32.mrb[0].mxu0
    %11226 = vdwg.mxu0
    %v11228 = vsel %vm11153, %v11123, 0
    %11230 = vmatprep.subr.mxu0 0.0
    %11231 = vmatpush1.msra.mxu0 %v11124
    %11232 = vmatprep.subr.mxu0 0.0
    %11233 = vmatpush1.msra.mxu0 %v11125
    %11234 = vmatprep.subr.mxu0 0.0
    %11235 = vmatpush1.msra.mxu0 %v11126
    %11236 = vmatprep.subr.mxu0 0.0
    %11237 = vmatpush1.msra.mxu0 %v11127
    %11238 = vmatprep.subr.mxu0 0.0
    %11239 = vmatpush1.msra.mxu0 %v11128
    %11240 = vmatprep.subr.mxu0 0.0
    %11241 = vmatpush1.msra.mxu0 %v11129
    %11242 = vmatprep.subr.mxu0 0.0
    %11243 = vmatpush1.msra.mxu0 %v11130
    %11244 = vmatprep.subr.mxu0 0.0
    %11245 = vmatpush1.msra.mxu0 %v11131
    %11246 = vmatprep.subr.mxu0 0.0
    %11247 = vmatpush1.msra.mxu0 %v11132
    %11248 = vmatprep.subr.mxu0 0.0
    %11249 = vmatpush1.msra.mxu0 %v11133
    %11250 = vmatprep.subr.mxu0 0.0
    %11251 = vmatpush1.msra.mxu0 %v11134
    %11252 = vmatprep.subr.mxu0 0.0
    %11253 = vmatpush1.msra.mxu0 %v11135
    %11254 = vmatprep.subr.mxu0 0.0
    %11255 = vmatpush1.msra.mxu0 %v11136
    %11256 = vmatprep.subr.mxu0 0.0
    %11257 = vmatpush1.msra.mxu0 %v11137
    %11258 = vmatprep.subr.mxu0 0.0
    %11259 = vmatpush1.msra.mxu0 %v11138
    %11260 = vmatprep.subr.mxu0 0.0
    %11261 = vmatpush1.msra.mxu0 %v11139
    %11262 = vmatprep.subr.mxu0 0.0
    %11263 = vmatpush1.msra.mxu0 %v11140
    %11264 = vmatprep.subr.mxu0 0.0
    %11265 = vmatpush1.msra.mxu0 %v11141
    %11266 = vmatprep.subr.mxu0 0.0
    %11267 = vmatpush1.msra.mxu0 %v11142
    %11268 = vmatprep.subr.mxu0 0.0
    %11269 = vmatpush1.msra.mxu0 %v11143
    %11270 = vmatprep.subr.mxu0 0.0
    %11271 = vmatpush1.msra.mxu0 %v11144
    %11272 = vmatprep.subr.mxu0 0.0
    %11273 = vmatpush1.msra.mxu0 %v11145
    %11274 = vmatprep.subr.mxu0 0.0
    %11275 = vmatpush1.msra.mxu0 %v11146
    %11276 = vmatprep.subr.mxu0 0.0
    %11277 = vmatpush1.msra.mxu0 %v11147
    %11278 = vmatprep.subr.mxu0 0.0
    %11279 = vmatpush1.msra.mxu0 %v11148
    %11280 = vmatprep.subr.mxu0 0.0
    %11281 = vmatpush1.msra.mxu0 %v11149
    %11282 = vmatprep.subr.mxu0 0.0
    %11283 = vmatpush1.msra.mxu0 %v11150
    %11284 = vmatprep.subr.mxu0 0.0
    %11285 = vmatpush1.msra.mxu0 %v11151
    %11286 = vmatprep.subr.mxu0 0.0
    %11287 = vmatpush1.msra.mxu0 0.0
    %11288 = vmatprep.subr.mxu0 0.0
    %11289 = vmatpush1.msra.mxu0 0.0
    %11290 = vmatprep.subr.mxu0 0.0
    %11291 = vmatpush1.msra.mxu0 0.0
    %11292 = vmatprep.subr.mxu0 0.0
    %11293 = vmatpush1.msra.mxu0 0.0
    %11294 = vmatprep.mubr.f32.mxu0 %v11228
    %11295 = vmatmul.mubr.f32.gmra.mrb[0].mxu0 %v11106
    %v11296 = vpop.f32.mrb[0].mxu0
    %v11297 = vadd.f32 %v11152, %v11296
    %v11298 = vpop.f32.mrb[0].mxu0
    %11299 = vdwg.mxu0
    %v11300 = vmax.f32 %v11224, 0.0
    %v11301 = vmax.f32 %v11297, 0.0
    %v11302 = vld [vmem:[%s8] sm:$0xff]
    %v11303 = vld [vmem:[%s8 + $0x8] sm:$0xff]
    %v11304 = vld [vmem:[%s8 + $0x10] sm:$0xff]
    %v11305 = vld [vmem:[%s8 + $0x18] sm:$0xff]
    %v11306 = vld [vmem:[%s8 + $0x20] sm:$0xff]
    %v11307 = vld [vmem:[%s8 + $0x28] sm:$0xff]
    %v11308 = vld [vmem:[%s8 + $0x30] sm:$0xff]
    %v11309 = vld [vmem:[%s8 + $0x38] sm:$0xff]
    %v11310 = vld [vmem:[%s8 + $0x40] sm:$0xff]
    %v11311 = vld [vmem:[%s8 + $0x48] sm:$0xff]
    %v11312 = vld [vmem:[%s8 + $0x50] sm:$0xff]
    %v11313 = vld [vmem:[%s8 + $0x58] sm:$0xff]
    %v11314 = vld [vmem:[%s8 + $0x60] sm:$0xff]
    %v11315 = vld [vmem:[%s8 + $0x68] sm:$0xff]
    %v11316 = vld [vmem:[%s8 + $0x70] sm:$0xff]
    %v11317 = vld [vmem:[%s9] sm:$0x1]
    %vm11318 = vcmask 982016
    %v11320 = vsel %vm11318, %v11300, 0
    %11322 = vmatprep.subr.mxu0 0.0
    %11323 = vmatpush1.msra.mxu0 %v11302
    %11324 = vmatprep.subr.mxu0 0.0
    %11325 = vmatpush1.msra.mxu0 %v11303
    %11326 = vmatprep.subr.mxu0 0.0
    %11327 = vmatpush1.msra.mxu0 %v11304
    %11328 = vmatprep.subr.mxu0 0.0
    %11329 = vmatpush1.msra.mxu0 %v11305
    %11330 = vmatprep.subr.mxu0 0.0
    %11331 = vmatpush1.msra.mxu0 %v11306
    %11332 = vmatprep.subr.mxu0 0.0
    %11333 = vmatpush1.msra.mxu0 %v11307
    %11334 = vmatprep.subr.mxu0 0.0
    %11335 = vmatpush1.msra.mxu0 %v11308
    %11336 = vmatprep.subr.mxu0 0.0
    %11337 = vmatpush1.msra.mxu0 %v11309
    %11338 = vmatprep.subr.mxu0 0.0
    %11339 = vmatpush1.msra.mxu0 %v11310
    %11340 = vmatprep.subr.mxu0 0.0
    %11341 = vmatpush1.msra.mxu0 %v11311
    %11342 = vmatprep.subr.mxu0 0.0
    %11343 = vmatpush1.msra.mxu0 %v11312
    %11344 = vmatprep.subr.mxu0 0.0
    %11345 = vmatpush1.msra.mxu0 %v11313
    %11346 = vmatprep.subr.mxu0 0.0
    %11347 = vmatpush1.msra.mxu0 %v11314
    %11348 = vmatprep.subr.mxu0 0.0
    %11349 = vmatpush1.msra.mxu0 %v11315
    %11350 = vmatprep.subr.mxu0 0.0
    %11351 = vmatpush1.msra.mxu0 %v11316
    %11352 = vmatprep.subr.mxu0 0.0
    %11353 = vmatpush1.msra.mxu0 0.0
    %11354 = vmatprep.subr.mxu0 0.0
    %11355 = vmatpush1.msra.mxu0 0.0
    %11356 = vmatprep.subr.mxu0 0.0
    %11357 = vmatpush1.msra.mxu0 0.0
    %11358 = vmatprep.subr.mxu0 0.0
    %11359 = vmatpush1.msra.mxu0 0.0
    %11360 = vmatprep.subr.mxu0 0.0
    %11361 = vmatpush1.msra.mxu0 0.0
    %11362 = vmatprep.subr.mxu0 0.0
    %11363 = vmatpush1.msra.mxu0 0.0
    %11364 = vmatprep.subr.mxu0 0.0
    %11365 = vmatpush1.msra.mxu0 0.0
    %11366 = vmatprep.subr.mxu0 0.0
    %11367 = vmatpush1.msra.mxu0 0.0
    %11368 = vmatprep.subr.mxu0 0.0
    %11369 = vmatpush1.msra.mxu0 0.0
    %11370 = vmatprep.subr.mxu0 0.0
    %11371 = vmatpush1.msra.mxu0 0.0
    %11372 = vmatprep.subr.mxu0 0.0
    %11373 = vmatpush1.msra.mxu0 0.0
    %11374 = vmatprep.subr.mxu0 0.0
    %11375 = vmatpush1.msra.mxu0 0.0
    %11376 = vmatprep.subr.mxu0 0.0
    %11377 = vmatpush1.msra.mxu0 0.0
    %11378 = vmatprep.subr.mxu0 0.0
    %11379 = vmatpush1.msra.mxu0 0.0
    %11380 = vmatprep.subr.mxu0 0.0
    %11381 = vmatpush1.msra.mxu0 0.0
    %11382 = vmatprep.subr.mxu0 0.0
    %11383 = vmatpush1.msra.mxu0 0.0
    %11384 = vmatprep.subr.mxu0 0.0
    %11385 = vmatpush1.msra.mxu0 0.0
    %11386 = vmatprep.mubr.f32.mxu0 0.0
    %11387 = vmatmul.mubr.f32.gmra.mrb[0].mxu0 %v11320
    %v11388 = vpop.f32.mrb[0].mxu0
    %v11389 = vadd.f32 %v11317, %v11388
    %v11390 = vpop.f32.mrb[0].mxu0
    %11391 = vdwg.mxu0
    %v11393 = vsel %vm11318, %v11301, 0
    %11395 = vmatprep.subr.mxu0 0.0
    %11396 = vmatpush1.msra.mxu0 %v11302
    %11397 = vmatprep.subr.mxu0 0.0
    %11398 = vmatpush1.msra.mxu0 %v11303
    %11399 = vmatprep.subr.mxu0 0.0
    %11400 = vmatpush1.msra.mxu0 %v11304
    %11401 = vmatprep.subr.mxu0 0.0
    %11402 = vmatpush1.msra.mxu0 %v11305
    %11403 = vmatprep.subr.mxu0 0.0
    %11404 = vmatpush1.msra.mxu0 %v11306
    %11405 = vmatprep.subr.mxu0 0.0
    %11406 = vmatpush1.msra.mxu0 %v11307
    %11407 = vmatprep.subr.mxu0 0.0
    %11408 = vmatpush1.msra.mxu0 %v11308
    %11409 = vmatprep.subr.mxu0 0.0
    %11410 = vmatpush1.msra.mxu0 %v11309
    %11411 = vmatprep.subr.mxu0 0.0
    %11412 = vmatpush1.msra.mxu0 %v11310
    %11413 = vmatprep.subr.mxu0 0.0
    %11414 = vmatpush1.msra.mxu0 %v11311
    %11415 = vmatprep.subr.mxu0 0.0
    %11416 = vmatpush1.msra.mxu0 %v11312
    %11417 = vmatprep.subr.mxu0 0.0
    %11418 = vmatpush1.msra.mxu0 %v11313
    %11419 = vmatprep.subr.mxu0 0.0
    %11420 = vmatpush1.msra.mxu0 %v11314
    %11421 = vmatprep.subr.mxu0 0.0
    %11422 = vmatpush1.msra.mxu0 %v11315
    %11423 = vmatprep.subr.mxu0 0.0
    %11424 = vmatpush1.msra.mxu0 %v11316
    %11425 = vmatprep.subr.mxu0 0.0
    %11426 = vmatpush1.msra.mxu0 0.0
    %11427 = vmatprep.subr.mxu0 0.0
    %11428 = vmatpush1.msra.mxu0 0.0
    %11429 = vmatprep.subr.mxu0 0.0
    %11430 = vmatpush1.msra.mxu0 0.0
    %11431 = vmatprep.subr.mxu0 0.0
    %11432 = vmatpush1.msra.mxu0 0.0
    %11433 = vmatprep.subr.mxu0 0.0
    %11434 = vmatpush1.msra.mxu0 0.0
    %11435 = vmatprep.subr.mxu0 0.0
    %11436 = vmatpush1.msra.mxu0 0.0
    %11437 = vmatprep.subr.mxu0 0.0
    %11438 = vmatpush1.msra.mxu0 0.0
    %11439 = vmatprep.subr.mxu0 0.0
    %11440 = vmatpush1.msra.mxu0 0.0
    %11441 = vmatprep.subr.mxu0 0.0
    %11442 = vmatpush1.msra.mxu0 0.0
    %11443 = vmatprep.subr.mxu0 0.0
    %11444 = vmatpush1.msra.mxu0 0.0
    %11445 = vmatprep.subr.mxu0 0.0
    %11446 = vmatpush1.msra.mxu0 0.0
    %11447 = vmatprep.subr.mxu0 0.0
    %11448 = vmatpush1.msra.mxu0 0.0
    %11449 = vmatprep.subr.mxu0 0.0
    %11450 = vmatpush1.msra.mxu0 0.0
    %11451 = vmatprep.subr.mxu0 0.0
    %11452 = vmatpush1.msra.mxu0 0.0
    %11453 = vmatprep.subr.mxu0 0.0
    %11454 = vmatpush1.msra.mxu0 0.0
    %11455 = vmatprep.subr.mxu0 0.0
    %11456 = vmatpush1.msra.mxu0 0.0
    %11457 = vmatprep.subr.mxu0 0.0
    %11458 = vmatpush1.msra.mxu0 0.0
    %11459 = vmatprep.mubr.f32.mxu0 0.0
    %11460 = vmatmul.mubr.f32.gmra.mrb[0].mxu0 %v11393
    %v11461 = vpop.f32.mrb[0].mxu0
    %v11462 = vadd.f32 %v11317, %v11461
    %v11463 = vpop.f32.mrb[0].mxu0
    %11464 = vdwg.mxu0
    %v11465 = vmax.f32 %v11389, 0.0
    %v11466 = vmax.f32 %v11462, 0.0
    %v11467 = vld [vmem:[%s10] sm:$0xff]
    %v11468 = vld [vmem:[%s10 + $0x8] sm:$0xff]
    %v11469 = vld [vmem:[%s10 + $0x10] sm:$0xff]
    %v11470 = vld [vmem:[%s10 + $0x18] sm:$0xff]
    %v11471 = vld [vmem:[%s10 + $0x20] sm:$0xff]
    %v11472 = vld [vmem:[%s10 + $0x28] sm:$0xff]
    %v11473 = vld [vmem:[%s10 + $0x30] sm:$0xff]
    %v11474 = vld [vmem:[%s10 + $0x38] sm:$0xff]
    %v11475 = vld [vmem:[%s10 + $0x40] sm:$0xff]
    %v11476 = vld [vmem:[%s10 + $0x48] sm:$0xff]
    %v11477 = vld [vmem:[%s10 + $0x50] sm:$0xf]
    %v11478 = vld [vmem:[%s11] sm:$0x1]
    %v11480 = vsel %vm11095, %v11465, 0
    %vm11482 = vcmask 1043456
    %v11484 = vsel %vm11482, %v11477, 0
    %11486 = vmatprep.subr.mxu0 0.0
    %11487 = vmatpush1.msra.mxu0 %v11467
    %11488 = vmatprep.subr.mxu0 0.0
    %11489 = vmatpush1.msra.mxu0 %v11468
    %11490 = vmatprep.subr.mxu0 0.0
    %11491 = vmatpush1.msra.mxu0 %v11469
    %11492 = vmatprep.subr.mxu0 0.0
    %11493 = vmatpush1.msra.mxu0 %v11470
    %11494 = vmatprep.subr.mxu0 0.0
    %11495 = vmatpush1.msra.mxu0 %v11471
    %11496 = vmatprep.subr.mxu0 0.0
    %11497 = vmatpush1.msra.mxu0 %v11472
    %11498 = vmatprep.subr.mxu0 0.0
    %11499 = vmatpush1.msra.mxu0 %v11473
    %11500 = vmatprep.subr.mxu0 0.0
    %11501 = vmatpush1.msra.mxu0 %v11474
    %11502 = vmatprep.subr.mxu0 0.0
    %11503 = vmatpush1.msra.mxu0 %v11475
    %11504 = vmatprep.subr.mxu0 0.0
    %11505 = vmatpush1.msra.mxu0 %v11476
    %11506 = vmatprep.subr.mxu0 0.0
    %11507 = vmatpush1.msra.mxu0 %v11484
    %11508 = vmatprep.subr.mxu0 0.0
    %11509 = vmatpush1.msra.mxu0 0.0
    %11510 = vmatprep.subr.mxu0 0.0
    %11511 = vmatpush1.msra.mxu0 0.0
    %11512 = vmatprep.subr.mxu0 0.0
    %11513 = vmatpush1.msra.mxu0 0.0
    %11514 = vmatprep.subr.mxu0 0.0
    %11515 = vmatpush1.msra.mxu0 0.0
    %11516 = vmatprep.subr.mxu0 0.0
    %11517 = vmatpush1.msra.mxu0 0.0
    %11518 = vmatprep.subr.mxu0 0.0
    %11519 = vmatpush1.msra.mxu0 0.0
    %11520 = vmatprep.subr.mxu0 0.0
    %11521 = vmatpush1.msra.mxu0 0.0
    %11522 = vmatprep.subr.mxu0 0.0
    %11523 = vmatpush1.msra.mxu0 0.0
    %11524 = vmatprep.subr.mxu0 0.0
    %11525 = vmatpush1.msra.mxu0 0.0
    %11526 = vmatprep.subr.mxu0 0.0
    %11527 = vmatpush1.msra.mxu0 0.0
    %11528 = vmatprep.subr.mxu0 0.0
    %11529 = vmatpush1.msra.mxu0 0.0
    %11530 = vmatprep.subr.mxu0 0.0
    %11531 = vmatpush1.msra.mxu0 0.0
    %11532 = vmatprep.subr.mxu0 0.0
    %11533 = vmatpush1.msra.mxu0 0.0
    %11534 = vmatprep.subr.mxu0 0.0
    %11535 = vmatpush1.msra.mxu0 0.0
    %11536 = vmatprep.subr.mxu0 0.0
    %11537 = vmatpush1.msra.mxu0 0.0
    %11538 = vmatprep.subr.mxu0 0.0
    %11539 = vmatpush1.msra.mxu0 0.0
    %11540 = vmatprep.subr.mxu0 0.0
    %11541 = vmatpush1.msra.mxu0 0.0
    %11542 = vmatprep.subr.mxu0 0.0
    %11543 = vmatpush1.msra.mxu0 0.0
    %11544 = vmatprep.subr.mxu0 0.0
    %11545 = vmatpush1.msra.mxu0 0.0
    %11546 = vmatprep.subr.mxu0 0.0
    %11547 = vmatpush1.msra.mxu0 0.0
    %11548 = vmatprep.subr.mxu0 0.0
    %11549 = vmatpush1.msra.mxu0 0.0
    %11550 = vmatprep.mubr.f32.mxu0 0.0
    %11551 = vmatmul.mubr.f32.gmra.mrb[0].mxu0 %v11480
    %v11552 = vpop.f32.mrb[0].mxu0
    %v11553 = vadd.f32 %v11478, %v11552
    %v11554 = vpop.f32.mrb[0].mxu0
    %11555 = vdwg.mxu0
    %v11557 = vsel %vm11095, %v11466, 0
    %11559 = vmatprep.subr.mxu0 0.0
    %11560 = vmatpush1.msra.mxu0 %v11467
    %11561 = vmatprep.subr.mxu0 0.0
    %11562 = vmatpush1.msra.mxu0 %v11468
    %11563 = vmatprep.subr.mxu0 0.0
    %11564 = vmatpush1.msra.mxu0 %v11469
    %11565 = vmatprep.subr.mxu0 0.0
    %11566 = vmatpush1.msra.mxu0 %v11470
    %11567 = vmatprep.subr.mxu0 0.0
    %11568 = vmatpush1.msra.mxu0 %v11471
    %11569 = vmatprep.subr.mxu0 0.0
    %11570 = vmatpush1.msra.mxu0 %v11472
    %11571 = vmatprep.subr.mxu0 0.0
    %11572 = vmatpush1.msra.mxu0 %v11473
    %11573 = vmatprep.subr.mxu0 0.0
    %11574 = vmatpush1.msra.mxu0 %v11474
    %11575 = vmatprep.subr.mxu0 0.0
    %11576 = vmatpush1.msra.mxu0 %v11475
    %11577 = vmatprep.subr.mxu0 0.0
    %11578 = vmatpush1.msra.mxu0 %v11476
    %11579 = vmatprep.subr.mxu0 0.0
    %11580 = vmatpush1.msra.mxu0 %v11484
    %11581 = vmatprep.subr.mxu0 0.0
    %11582 = vmatpush1.msra.mxu0 0.0
    %11583 = vmatprep.subr.mxu0 0.0
    %11584 = vmatpush1.msra.mxu0 0.0
    %11585 = vmatprep.subr.mxu0 0.0
    %11586 = vmatpush1.msra.mxu0 0.0
    %11587 = vmatprep.subr.mxu0 0.0
    %11588 = vmatpush1.msra.mxu0 0.0
    %11589 = vmatprep.subr.mxu0 0.0
    %11590 = vmatpush1.msra.mxu0 0.0
    %11591 = vmatprep.subr.mxu0 0.0
    %11592 = vmatpush1.msra.mxu0 0.0
    %11593 = vmatprep.subr.mxu0 0.0
    %11594 = vmatpush1.msra.mxu0 0.0
    %11595 = vmatprep.subr.mxu0 0.0
    %11596 = vmatpush1.msra.mxu0 0.0
    %11597 = vmatprep.subr.mxu0 0.0
    %11598 = vmatpush1.msra.mxu0 0.0
    %11599 = vmatprep.subr.mxu0 0.0
    %11600 = vmatpush1.msra.mxu0 0.0
    %11601 = vmatprep.subr.mxu0 0.0
    %11602 = vmatpush1.msra.mxu0 0.0
    %11603 = vmatprep.subr.mxu0 0.0
    %11604 = vmatpush1.msra.mxu0 0.0
    %11605 = vmatprep.subr.mxu0 0.0
    %11606 = vmatpush1.msra.mxu0 0.0
    %11607 = vmatprep.subr.mxu0 0.0
    %11608 = vmatpush1.msra.mxu0 0.0
    %11609 = vmatprep.subr.mxu0 0.0
    %11610 = vmatpush1.msra.mxu0 0.0
    %11611 = vmatprep.subr.mxu0 0.0
    %11612 = vmatpush1.msra.mxu0 0.0
    %11613 = vmatprep.subr.mxu0 0.0
    %11614 = vmatpush1.msra.mxu0 0.0
    %11615 = vmatprep.subr.mxu0 0.0
    %11616 = vmatpush1.msra.mxu0 0.0
    %11617 = vmatprep.subr.mxu0 0.0
    %11618 = vmatpush1.msra.mxu0 0.0
    %11619 = vmatprep.subr.mxu0 0.0
    %11620 = vmatpush1.msra.mxu0 0.0
    %11621 = vmatprep.subr.mxu0 0.0
    %11622 = vmatpush1.msra.mxu0 0.0
    %11623 = vmatprep.mubr.f32.mxu0 0.0
    %11624 = vmatmul.mubr.f32.gmra.mrb[0].mxu0 %v11557
    %v11625 = vpop.f32.mrb[0].mxu0
    %v11626 = vadd.f32 %v11478, %v11625
    %v11627 = vpop.f32.mrb[0].mxu0
    %11628 = vdwg.mxu0
    %vm11629 = vcmask 73728
    %v11630 = vsel %vm11629, %v11553, -inf
    %11631 = vmax.xlane.f32.xlu0 %v11630
    %v11632 = vpop.xlane.xlu0 %11631
    %v11633 = vsel %vm11629, %v11626, -inf
    %11634 = vmax.xlane.f32.xlu0 %v11633
    %v11635 = vpop.xlane.xlu0 %11634
    %v11636 = vsub.f32 %v11553, %v11632
    %v11637 = vsub.f32 %v11626, %v11635
    %v11638 = vmul.f32 %v11636, 1.442695
    %v11639 = vpow.pop %v11638
    %v11640 = vmul.f32 %v11637, 1.442695
    %v11641 = vpow.pop %v11640
    %v11642 = vsel %vm11629, %v11639, 0.0
    %11643 = vadd.xlane.f32.xlu0 %v11642
    %v11644 = vpop.xlane.xlu0 %11643
    %v11645 = vsel %vm11629, %v11641, 0.0
    %11646 = vadd.xlane.f32.xlu0 %v11645
    %v11647 = vpop.xlane.xlu0 %11646
    %v11648 = vlog2.pop %v11644
    %v11649 = vmul.f32 %v11648, 0.6931472
    %v11650 = vlog2.pop %v11647
    %v11651 = vmul.f32 %v11650, 0.6931472
    %v11652 = vsub.f32 %v11636, %v11649
    %v11653 = vsub.f32 %v11637, %v11651
    %11654 = vst.msk [vmem:[#allocation2] sm:$0x1] %vm11629, %v11652
    %11655 = vst.msk [vmem:[#allocation2 + $0x1] sm:$0x1] %vm11629, %v11653
    // Predicated region
    $region50: #{cnn_forward.1} parent=1 // pred_check
      _
    $region51: #{cnn_forward.1} parent=1 // pred_check_branch
      %11657 = sbr.rel (0) target = $region53
    $region52: #{cnn_forward.1} parent=1 // pred_region
      %s11659 = ssub.s32 32, 32
      %11660 = vsyncadd [#allocation3], %s11659
      %s11661 = sshll.u32 [#allocation2], 4
      %s11662 = int_to_ptr.vmem [resolvable:$true] %s11661
      %11667 = dma.vmem_to_hbm [thread:$0]  %s11662, 32, %s12, [#allocation3], 16, 16, 1
    $region53: #{cnn_forward.1} parent=1 // pred_fallthru
      _
    // Predicated region
    $region54: #{cnn_forward.1} parent=1 // pred_check
      _
    $region55: #{cnn_forward.1} parent=1 // pred_check_branch
      %11669 = sbr.rel (0) target = $region57
    $region56: #{cnn_forward.1} parent=1 // pred_region
      %11670 = dma.done [#allocation3], 32
    $region57: #{cnn_forward.1} parent=1 // pred_fallthru
      _
    %11671 = vsyncpa [#allocation3], 1

</llo_original>
